<compile_context>
chip_gen: v5e
topology: v5e:2x2
jax: 0.10.0
libtpu: 0.0.40
codegen_flags: <defaults>
</compile_context>

<pallas_src>
from functools import partial

import jax
import jax.numpy as jnp
from jax.experimental import pallas as pl
from jax.experimental.pallas import tpu as pltpu


# --------------------------- in-kernel helpers ------------------------------ #
def _accumulate_tile(ids_ref, embed_ref, acc_sum, acc_cnt, chunk):
    """Fused gather + masked sum for one (TB, TS) token tile.

    sum_s mask[b,s] * E[ids[b,s], :] == hist[b,:] @ E with
    hist[b,v] = sum_s mask[b,s] * [ids[b,s] == v].  The one-hot is built in
    small token chunks against a (1,1,V) iota (nothing (TB,TS,V)-sized is
    materialized) and the contraction runs on the bf16 MXU.
    """
    tb, ts = ids_ref.shape
    vocab = embed_ref.shape[0]
    vocab_iota = jax.lax.broadcasted_iota(jnp.int32, (1, 1, vocab), 2)

    hist = jnp.zeros((tb, vocab), jnp.float32)
    for c in range(ts // chunk):                      # short static loop
        ids_c = ids_ref[:, c * chunk:(c + 1) * chunk]             # (TB, C) i32
        mask_c = (ids_c != 1).astype(jnp.float32)                 # ids.ne(1)
        onehot = jnp.where(ids_c[:, :, None] == vocab_iota,
                           mask_c[:, :, None], 0.0)               # (TB, C, V)
        hist = hist + jnp.sum(onehot, axis=1)                     # (TB, V)

    # counts <= TS <= 256 are exactly representable in bf16 -> bf16 MXU matmul
    # with f32 accumulation is bit-equivalent to f32 math on the upcast table.
    acc_sum[...] += jnp.dot(hist.astype(jnp.bfloat16), embed_ref[...],
                            preferred_element_type=jnp.float32)
    # token count derived from hist (no second (TB,TS) mask reduction).
    acc_cnt[...] += jnp.sum(hist, axis=1, keepdims=True)


def _pooled_from_acc(acc_sum, acc_cnt, w_ref, b_ref):
    mean = acc_sum[...] / jnp.maximum(acc_cnt[...], 1.0)
    return jnp.tanh(
        jnp.dot(mean, w_ref[...].astype(jnp.float32),
                preferred_element_type=jnp.float32) + b_ref[...])


def _xent_loss(pooled):
    """CrossEntropyLoss(nl @ code^T, arange(B)) as a (1,1) value."""
    b = pooled.shape[0] // 2
    code = pooled[:b]
    nl = pooled[b:]
    # NOTE: Mosaic still relayouts one operand for this last-dim contraction;
    # it is negligible at (B, H) and runs once inside the finalize.
    scores = jax.lax.dot_general(nl, code, (((1,), (1,)), ((), ())),
                                 preferred_element_type=jnp.float32)  # (B, B)
    m = jnp.max(scores, axis=-1, keepdims=True)
    lse = m + jnp.log(jnp.sum(jnp.exp(scores - m), axis=-1, keepdims=True))
    row = jax.lax.broadcasted_iota(jnp.int32, scores.shape, 0)
    col = jax.lax.broadcasted_iota(jnp.int32, scores.shape, 1)
    diag = jnp.sum(jnp.where(row == col, scores, 0.0), axis=-1, keepdims=True)
    return jnp.mean(lse - diag, keepdims=True)                       # (1, 1)


# ------------------------------ kernels ------------------------------------- #
def encode_pool_loss_kernel(ids_ref, embed_ref, w_ref, b_ref,
                            out_ref, loss_ref, acc_sum, acc_cnt, *, chunk):
    """Single batch tile: pooled vectors AND the contrastive loss (fused)."""
    s = pl.program_id(1)

    @pl.when(s == 0)
    def _():
        acc_sum[...] = jnp.zeros_like(acc_sum)
        acc_cnt[...] = jnp.zeros_like(acc_cnt)

    _accumulate_tile(ids_ref, embed_ref, acc_sum, acc_cnt, chunk)

    @pl.when(s == pl.num_programs(1) - 1)
    def _():
        pooled = _pooled_from_acc(acc_sum, acc_cnt, w_ref, b_ref)
        out_ref[...] = pooled
        loss_ref[...] = _xent_loss(pooled)


def encode_pool_kernel(ids_ref, embed_ref, w_ref, b_ref,
                       out_ref, acc_sum, acc_cnt, *, chunk):
    """General path (multiple batch tiles): pooled vectors only."""
    s = pl.program_id(1)

    @pl.when(s == 0)
    def _():
        acc_sum[...] = jnp.zeros_like(acc_sum)
        acc_cnt[...] = jnp.zeros_like(acc_cnt)

    _accumulate_tile(ids_ref, embed_ref, acc_sum, acc_cnt, chunk)

    @pl.when(s == pl.num_programs(1) - 1)
    def _():
        out_ref[...] = _pooled_from_acc(acc_sum, acc_cnt, w_ref, b_ref)


def contrastive_loss_kernel(pooled_ref, loss_ref):
    loss_ref[...] = _xent_loss(pooled_ref[...])


# ------------------------------ tiling helpers ------------------------------ #
def _batch_tile(two_b):
    # Raise the batch tile (review): a single tile up to 128 rows keeps the
    # MXU M-dim busier and lets the loss fuse into the finalize.  Production
    # batches >128 keep >=2 "parallel" tiles so both v7x TCs get work.
    if two_b <= 128:
        return two_b
    for cand in (128, 64, 32, 16, 8):
        if two_b % cand == 0:
            return cand
    return two_b


def _seq_tile(seq):
    # lane-aligned seq tiles, capped at 256 so per-tile hist counts stay
    # bf16-exact and the chunked one-hot stays small.
    for cand in (256, 128):
        if seq % cand == 0 and seq >= cand:
            return cand
    return seq  # unaligned fallback: whole seq as one block (still correct)


def _token_chunk(tb, ts, vocab, budget_bytes=256 * 1024):
    # Bound the per-chunk (tb, chunk, vocab) f32 one-hot to roughly the vreg
    # file so it does not spill to VMEM.
    best = ts
    for cand in (64, 32, 16, 8):
        if ts % cand == 0:
            best = cand
            if tb * cand * vocab * 4 <= budget_bytes:
                return cand
    return best


def _vmem_limit_bytes(resident_bytes):
    # v5e/v6e: 128 MiB physical VMEM, v7x: 64 MiB.  Request enough for the
    # resident operands + pipeline buffers, never more than ~3/4 of physical.
    try:
        cap = int(pltpu.get_tpu_info().vmem_capacity_bytes)
    except Exception:
        cap = 64 * 1024 * 1024          # conservative (v7x-sized) fallback
    want = max(32 * 1024 * 1024, 4 * resident_bytes + 16 * 1024 * 1024)
    return min(want, (cap * 3) // 4)


# ------------------------------ wrappers ------------------------------------ #
def encode_pool(ids, embed, w_pool, b_pool):
    """Returns (pooled, loss_2d_or_None); loss is fused when 2B fits one tile."""
    two_b, seq = ids.shape
    vocab, hidden = embed.shape
    tb = _batch_tile(two_b)
    ts = _seq_tile(seq)
    chunk = _token_chunk(tb, ts, vocab)
    grid = (two_b // tb, seq // ts)
    fuse_loss = (tb == two_b)

    resident = (embed.size * embed.dtype.itemsize
                + w_pool.size * w_pool.dtype.itemsize
                + b_pool.size * b_pool.dtype.itemsize)
    cparams = pltpu.CompilerParams(
        dimension_semantics=("parallel", "arbitrary"),   # batch ||, seq reduce
        vmem_limit_bytes=_vmem_limit_bytes(resident),
    )
    in_specs = [
        pl.BlockSpec((tb, ts), lambda b, s: (b, s)),          # token ids
        pl.BlockSpec((vocab, hidden), lambda b, s: (0, 0)),   # bf16 table (resident)
        pl.BlockSpec((hidden, hidden), lambda b, s: (0, 0)),  # bf16 pooler W (resident)
        pl.BlockSpec((1, hidden), lambda b, s: (0, 0)),       # pooler bias
    ]
    scratch = [pltpu.VMEM((tb, hidden), jnp.float32),         # masked-sum acc
               pltpu.VMEM((tb, 1), jnp.float32)]              # token-count acc
    pooled_spec = pl.BlockSpec((tb, hidden), lambda b, s: (b, 0))
    pooled_shape = jax.ShapeDtypeStruct((two_b, hidden), jnp.float32)

    if fuse_loss:
        pooled, loss = pl.pallas_call(
            partial(encode_pool_loss_kernel, chunk=chunk),
            out_shape=(pooled_shape, jax.ShapeDtypeStruct((1, 1), jnp.float32)),
            grid=grid,
            in_specs=in_specs,
            out_specs=[pooled_spec, pl.BlockSpec((1, 1), lambda b, s: (0, 0))],
            scratch_shapes=scratch,
            compiler_params=cparams,
        )(ids, embed, w_pool, b_pool)
        return pooled, loss

    pooled = pl.pallas_call(
        partial(encode_pool_kernel, chunk=chunk),
        out_shape=pooled_shape,
        grid=grid,
        in_specs=in_specs,
        out_specs=pooled_spec,
        scratch_shapes=scratch,
        compiler_params=cparams,
    )(ids, embed, w_pool, b_pool)
    return pooled, None


def contrastive_loss(pooled):
    vmem = pl.BlockSpec(memory_space=pltpu.MemorySpace.VMEM)
    loss = pl.pallas_call(
        contrastive_loss_kernel,
        out_shape=jax.ShapeDtypeStruct((1, 1), jnp.float32),
        in_specs=[vmem],
        out_specs=vmem,
    )(pooled)
    return loss[0, 0]


def forward(params, code_inputs, nl_inputs, return_vec=False):
    """Mirrors Model.forward: concat, encode (mask = ids.ne(1) in-kernel),
    split, similarity scores, CrossEntropyLoss(arange(bs))."""
    bs = code_inputs.shape[0]
    inputs = jnp.concatenate([code_inputs, nl_inputs], axis=0)   # (2B, S) int32
    pooled, loss2d = encode_pool(inputs, params["embed"],
                                 params["w_pool"], params["b_pool"])
    code_vec = pooled[:bs]
    nl_vec = pooled[bs:]
    if return_vec:
        return code_vec, nl_vec
    loss = loss2d[0, 0] if loss2d is not None else contrastive_loss(pooled)
    return loss, code_vec, nl_vec


# ------------------------------ reference ------------------------------------ #
def forward_ref(params, code_inputs, nl_inputs):
    bs = code_inputs.shape[0]
    inputs = jnp.concatenate([code_inputs, nl_inputs], axis=0)
    mask = (inputs != 1).astype(jnp.float32)
    embed = params["embed"].astype(jnp.float32)
    w = params["w_pool"].astype(jnp.float32)
    emb = jnp.take(embed, inputs, axis=0)
    summed = jnp.sum(emb * mask[:, :, None], axis=1)
    denom = jnp.maximum(jnp.sum(mask, axis=1, keepdims=True), 1.0)
    pooled = jnp.tanh((summed / denom) @ w + params["b_pool"])
    code_vec, nl_vec = pooled[:bs], pooled[bs:]
    scores = nl_vec @ code_vec.T
    logp = jax.nn.log_softmax(scores, axis=-1)
    loss = -jnp.mean(jnp.diagonal(logp))
    return loss, code_vec, nl_vec


# --------------------------------- main --------------------------------------- #
if __name__ == "__main__":
    # lane/sublane-friendly small shapes: 2B=16 (single batch tile), S=256
    # (single seq tile of 256), H=V=128 (lane-dense MXU operands/stores).
    bs, seq, hidden, vocab = 8, 256, 128, 128
    key = jax.random.PRNGKey(0)
    k_emb, k_w, k_b, k_code, k_nl = jax.random.split(key, 5)

    params = {
        # bf16 storage halves the resident VMEM / DMA footprint of the table;
        # all contractions accumulate in f32 inside the kernel.
        "embed": (jax.random.normal(k_emb, (vocab, hidden), jnp.float32) * 0.5
                  ).astype(jnp.bfloat16),
        "w_pool": (jax.random.normal(k_w, (hidden, hidden), jnp.float32) * 0.2
                   ).astype(jnp.bfloat16),
        "b_pool": jax.random.normal(k_b, (1, hidden), jnp.float32) * 0.1,
    }

    code_inputs = jax.random.randint(k_code, (bs, seq), 2, vocab, dtype=jnp.int32)
    nl_inputs = jax.random.randint(k_nl, (bs, seq), 2, vocab, dtype=jnp.int32)
    # introduce padding (id 1) so the attention mask matters
    code_inputs = code_inputs.at[:, -64:].set(1)
    nl_inputs = nl_inputs.at[:, -32:].set(1)

    loss, code_vec, nl_vec = forward(params, code_inputs, nl_inputs)
    jax.block_until_ready((loss, code_vec, nl_vec))

    loss_r, code_r, nl_r = forward_ref(params, code_inputs, nl_inputs)
    assert jnp.allclose(loss, loss_r, atol=1e-4, rtol=1e-4), (loss, loss_r)
    assert jnp.allclose(code_vec, code_r, atol=1e-4, rtol=1e-4)
    assert jnp.allclose(nl_vec, nl_r, atol=1e-4, rtol=1e-4)

    print("KERNEL_OK")
</pallas_src>

<mosaic_0001>
module attributes {stable_mosaic.version = 11 : i64} {
  func.func @encode_pool_loss_kernel(%arg0: i32, %arg1: i32, %arg2: memref<16x256xi32, #tpu.memory_space<vmem>>, %arg3: memref<128x128xbf16, #tpu.memory_space<vmem>>, %arg4: memref<128x128xbf16, #tpu.memory_space<vmem>>, %arg5: memref<1x128xf32, #tpu.memory_space<vmem>>, %arg6: memref<16x128xf32, #tpu.memory_space<vmem>>, %arg7: memref<1x1xf32, #tpu.memory_space<vmem>>, %arg8: memref<16x128xf32, #tpu.memory_space<vmem>>, %arg9: memref<16x1xf32, #tpu.memory_space<vmem>>) attributes {dimension_semantics = [#tpu.dimension_semantics<parallel>, #tpu.dimension_semantics<arbitrary>], iteration_bounds = array<i64: 1, 1>, scalar_prefetch = 0 : i64, scratch_operands = 2 : i64, tpu.core_type = #tpu.core_type<tc>, window_params = [{transform_indices = @transform_0, window_bounds = array<i64: 16, 256>}, {pipeline_mode = #tpu.pipeline_mode<synchronous>, transform_indices = @transform_1, window_bounds = array<i64: 128, 128>}, {pipeline_mode = #tpu.pipeline_mode<synchronous>, transform_indices = @transform_2, window_bounds = array<i64: 128, 128>}, {pipeline_mode = #tpu.pipeline_mode<synchronous>, transform_indices = @transform_3, window_bounds = array<i64: 1, 128>}, {transform_indices = @transform_4, window_bounds = array<i64: 16, 128>}, {pipeline_mode = #tpu.pipeline_mode<synchronous>, transform_indices = @transform_5, window_bounds = array<i64: 1, 1>}]} {
    %c0_i32 = arith.constant 0 : i32
    %0 = arith.cmpi eq, %arg1, %c0_i32 : i32
    %1 = arith.extui %0 : i1 to i32
    %c0_i32_0 = arith.constant 0 : i32
    %2 = arith.cmpi ne, %1, %c0_i32_0 : i32
    scf.if %2 {
      %cst_46 = arith.constant 0.000000e+00 : f32
      %147 = vector.broadcast %cst_46 : f32 to vector<16x128xf32>
      %c0_47 = arith.constant 0 : index
      %c0_48 = arith.constant 0 : index
      %148 = vector.load %arg8[%c0_47, %c0_48] : memref<16x128xf32, #tpu.memory_space<vmem>>, vector<16x128xf32>
      tpu.vector_store %arg8[%c0_47, %c0_48], %147 {strides = array<i32>} : memref<16x128xf32, #tpu.memory_space<vmem>>, vector<16x128xf32>,
      %cst_49 = arith.constant 0.000000e+00 : f32
      %149 = vector.broadcast %cst_49 : f32 to vector<16x1xf32>
      %c0_50 = arith.constant 0 : index
      %c0_51 = arith.constant 0 : index
      %150 = vector.load %arg9[%c0_50, %c0_51] : memref<16x1xf32, #tpu.memory_space<vmem>>, vector<16x1xf32>
      tpu.vector_store %arg9[%c0_50, %c0_51], %149 {strides = array<i32>} : memref<16x1xf32, #tpu.memory_space<vmem>>, vector<16x1xf32>,
    } else {
    }
    %3 = tpu.iota {dimensions = array<i32: 2>} : vector<1x1x128xi32>
    %cst = arith.constant 0.000000e+00 : f32
    %4 = vector.broadcast %cst : f32 to vector<16x128xf32>
    %c0 = arith.constant 0 : index
    %c0_1 = arith.constant 0 : index
    %5 = vector.load %arg2[%c0, %c0_1] : memref<16x256xi32, #tpu.memory_space<vmem>>, vector<16x32xi32>
    %c1_i32 = arith.constant 1 : i32
    %6 = vector.broadcast %c1_i32 : i32 to vector<16x32xi32>
    %7 = arith.cmpi ne, %5, %6 : vector<16x32xi32>
    %8 = arith.extui %7 : vector<16x32xi1> to vector<16x32xi32>
    %9 = arith.sitofp %8 : vector<16x32xi32> to vector<16x32xf32>
    %10 = vector.shape_cast %5 : vector<16x32xi32> to vector<16x32x1xi32>
    %11 = vector.broadcast %10 : vector<16x32x1xi32> to vector<16x32x128xi32>
    %12 = vector.broadcast %3 : vector<1x1x128xi32> to vector<16x32x128xi32>
    %13 = arith.cmpi eq, %11, %12 : vector<16x32x128xi32>
    %14 = vector.shape_cast %9 : vector<16x32xf32> to vector<16x32x1xf32>
    %cst_2 = arith.constant 0.000000e+00 : f32
    %15 = vector.shape_cast %14 : vector<16x32x1xf32> to vector<16x32x1xf32>
    %16 = vector.broadcast %15 : vector<16x32x1xf32> to vector<16x32x128xf32>
    %17 = vector.broadcast %cst_2 : f32 to vector<16x32x128xf32>
    %18 = arith.select %13, %16, %17 : vector<16x32x128xi1>, vector<16x32x128xf32>
    %cst_3 = arith.constant dense<0.000000e+00> : vector<16x128xf32>
    %19 = vector.multi_reduction <add>, %18, %cst_3 [1] : vector<16x32x128xf32> to vector<16x128xf32>
    %20 = arith.addf %4, %19 : vector<16x128xf32>
    %c0_4 = arith.constant 0 : index
    %c32 = arith.constant 32 : index
    %21 = vector.load %arg2[%c0_4, %c32] : memref<16x256xi32, #tpu.memory_space<vmem>>, vector<16x32xi32>
    %c1_i32_5 = arith.constant 1 : i32
    %22 = vector.broadcast %c1_i32_5 : i32 to vector<16x32xi32>
    %23 = arith.cmpi ne, %21, %22 : vector<16x32xi32>
    %24 = arith.extui %23 : vector<16x32xi1> to vector<16x32xi32>
    %25 = arith.sitofp %24 : vector<16x32xi32> to vector<16x32xf32>
    %26 = vector.shape_cast %21 : vector<16x32xi32> to vector<16x32x1xi32>
    %27 = vector.broadcast %26 : vector<16x32x1xi32> to vector<16x32x128xi32>
    %28 = vector.broadcast %3 : vector<1x1x128xi32> to vector<16x32x128xi32>
    %29 = arith.cmpi eq, %27, %28 : vector<16x32x128xi32>
    %30 = vector.shape_cast %25 : vector<16x32xf32> to vector<16x32x1xf32>
    %cst_6 = arith.constant 0.000000e+00 : f32
    %31 = vector.shape_cast %30 : vector<16x32x1xf32> to vector<16x32x1xf32>
    %32 = vector.broadcast %31 : vector<16x32x1xf32> to vector<16x32x128xf32>
    %33 = vector.broadcast %cst_6 : f32 to vector<16x32x128xf32>
    %34 = arith.select %29, %32, %33 : vector<16x32x128xi1>, vector<16x32x128xf32>
    %cst_7 = arith.constant dense<0.000000e+00> : vector<16x128xf32>
    %35 = vector.multi_reduction <add>, %34, %cst_7 [1] : vector<16x32x128xf32> to vector<16x128xf32>
    %36 = arith.addf %20, %35 : vector<16x128xf32>
    %c0_8 = arith.constant 0 : index
    %c64 = arith.constant 64 : index
    %37 = vector.load %arg2[%c0_8, %c64] : memref<16x256xi32, #tpu.memory_space<vmem>>, vector<16x32xi32>
    %c1_i32_9 = arith.constant 1 : i32
    %38 = vector.broadcast %c1_i32_9 : i32 to vector<16x32xi32>
    %39 = arith.cmpi ne, %37, %38 : vector<16x32xi32>
    %40 = arith.extui %39 : vector<16x32xi1> to vector<16x32xi32>
    %41 = arith.sitofp %40 : vector<16x32xi32> to vector<16x32xf32>
    %42 = vector.shape_cast %37 : vector<16x32xi32> to vector<16x32x1xi32>
    %43 = vector.broadcast %42 : vector<16x32x1xi32> to vector<16x32x128xi32>
    %44 = vector.broadcast %3 : vector<1x1x128xi32> to vector<16x32x128xi32>
    %45 = arith.cmpi eq, %43, %44 : vector<16x32x128xi32>
    %46 = vector.shape_cast %41 : vector<16x32xf32> to vector<16x32x1xf32>
    %cst_10 = arith.constant 0.000000e+00 : f32
    %47 = vector.shape_cast %46 : vector<16x32x1xf32> to vector<16x32x1xf32>
    %48 = vector.broadcast %47 : vector<16x32x1xf32> to vector<16x32x128xf32>
    %49 = vector.broadcast %cst_10 : f32 to vector<16x32x128xf32>
    %50 = arith.select %45, %48, %49 : vector<16x32x128xi1>, vector<16x32x128xf32>
    %cst_11 = arith.constant dense<0.000000e+00> : vector<16x128xf32>
    %51 = vector.multi_reduction <add>, %50, %cst_11 [1] : vector<16x32x128xf32> to vector<16x128xf32>
    %52 = arith.addf %36, %51 : vector<16x128xf32>
    %c0_12 = arith.constant 0 : index
    %c96 = arith.constant 96 : index
    %53 = vector.load %arg2[%c0_12, %c96] : memref<16x256xi32, #tpu.memory_space<vmem>>, vector<16x32xi32>
    %c1_i32_13 = arith.constant 1 : i32
    %54 = vector.broadcast %c1_i32_13 : i32 to vector<16x32xi32>
    %55 = arith.cmpi ne, %53, %54 : vector<16x32xi32>
    %56 = arith.extui %55 : vector<16x32xi1> to vector<16x32xi32>
    %57 = arith.sitofp %56 : vector<16x32xi32> to vector<16x32xf32>
    %58 = vector.shape_cast %53 : vector<16x32xi32> to vector<16x32x1xi32>
    %59 = vector.broadcast %58 : vector<16x32x1xi32> to vector<16x32x128xi32>
    %60 = vector.broadcast %3 : vector<1x1x128xi32> to vector<16x32x128xi32>
    %61 = arith.cmpi eq, %59, %60 : vector<16x32x128xi32>
    %62 = vector.shape_cast %57 : vector<16x32xf32> to vector<16x32x1xf32>
    %cst_14 = arith.constant 0.000000e+00 : f32
    %63 = vector.shape_cast %62 : vector<16x32x1xf32> to vector<16x32x1xf32>
    %64 = vector.broadcast %63 : vector<16x32x1xf32> to vector<16x32x128xf32>
    %65 = vector.broadcast %cst_14 : f32 to vector<16x32x128xf32>
    %66 = arith.select %61, %64, %65 : vector<16x32x128xi1>, vector<16x32x128xf32>
    %cst_15 = arith.constant dense<0.000000e+00> : vector<16x128xf32>
    %67 = vector.multi_reduction <add>, %66, %cst_15 [1] : vector<16x32x128xf32> to vector<16x128xf32>
    %68 = arith.addf %52, %67 : vector<16x128xf32>
    %c0_16 = arith.constant 0 : index
    %c128 = arith.constant 128 : index
    %69 = vector.load %arg2[%c0_16, %c128] : memref<16x256xi32, #tpu.memory_space<vmem>>, vector<16x32xi32>
    %c1_i32_17 = arith.constant 1 : i32
    %70 = vector.broadcast %c1_i32_17 : i32 to vector<16x32xi32>
    %71 = arith.cmpi ne, %69, %70 : vector<16x32xi32>
    %72 = arith.extui %71 : vector<16x32xi1> to vector<16x32xi32>
    %73 = arith.sitofp %72 : vector<16x32xi32> to vector<16x32xf32>
    %74 = vector.shape_cast %69 : vector<16x32xi32> to vector<16x32x1xi32>
    %75 = vector.broadcast %74 : vector<16x32x1xi32> to vector<16x32x128xi32>
    %76 = vector.broadcast %3 : vector<1x1x128xi32> to vector<16x32x128xi32>
    %77 = arith.cmpi eq, %75, %76 : vector<16x32x128xi32>
    %78 = vector.shape_cast %73 : vector<16x32xf32> to vector<16x32x1xf32>
    %cst_18 = arith.constant 0.000000e+00 : f32
    %79 = vector.shape_cast %78 : vector<16x32x1xf32> to vector<16x32x1xf32>
    %80 = vector.broadcast %79 : vector<16x32x1xf32> to vector<16x32x128xf32>
    %81 = vector.broadcast %cst_18 : f32 to vector<16x32x128xf32>
    %82 = arith.select %77, %80, %81 : vector<16x32x128xi1>, vector<16x32x128xf32>
    %cst_19 = arith.constant dense<0.000000e+00> : vector<16x128xf32>
    %83 = vector.multi_reduction <add>, %82, %cst_19 [1] : vector<16x32x128xf32> to vector<16x128xf32>
    %84 = arith.addf %68, %83 : vector<16x128xf32>
    %c0_20 = arith.constant 0 : index
    %c160 = arith.constant 160 : index
    %85 = vector.load %arg2[%c0_20, %c160] : memref<16x256xi32, #tpu.memory_space<vmem>>, vector<16x32xi32>
    %c1_i32_21 = arith.constant 1 : i32
    %86 = vector.broadcast %c1_i32_21 : i32 to vector<16x32xi32>
    %87 = arith.cmpi ne, %85, %86 : vector<16x32xi32>
    %88 = arith.extui %87 : vector<16x32xi1> to vector<16x32xi32>
    %89 = arith.sitofp %88 : vector<16x32xi32> to vector<16x32xf32>
    %90 = vector.shape_cast %85 : vector<16x32xi32> to vector<16x32x1xi32>
    %91 = vector.broadcast %90 : vector<16x32x1xi32> to vector<16x32x128xi32>
    %92 = vector.broadcast %3 : vector<1x1x128xi32> to vector<16x32x128xi32>
    %93 = arith.cmpi eq, %91, %92 : vector<16x32x128xi32>
    %94 = vector.shape_cast %89 : vector<16x32xf32> to vector<16x32x1xf32>
    %cst_22 = arith.constant 0.000000e+00 : f32
    %95 = vector.shape_cast %94 : vector<16x32x1xf32> to vector<16x32x1xf32>
    %96 = vector.broadcast %95 : vector<16x32x1xf32> to vector<16x32x128xf32>
    %97 = vector.broadcast %cst_22 : f32 to vector<16x32x128xf32>
    %98 = arith.select %93, %96, %97 : vector<16x32x128xi1>, vector<16x32x128xf32>
    %cst_23 = arith.constant dense<0.000000e+00> : vector<16x128xf32>
    %99 = vector.multi_reduction <add>, %98, %cst_23 [1] : vector<16x32x128xf32> to vector<16x128xf32>
    %100 = arith.addf %84, %99 : vector<16x128xf32>
    %c0_24 = arith.constant 0 : index
    %c192 = arith.constant 192 : index
    %101 = vector.load %arg2[%c0_24, %c192] : memref<16x256xi32, #tpu.memory_space<vmem>>, vector<16x32xi32>
    %c1_i32_25 = arith.constant 1 : i32
    %102 = vector.broadcast %c1_i32_25 : i32 to vector<16x32xi32>
    %103 = arith.cmpi ne, %101, %102 : vector<16x32xi32>
    %104 = arith.extui %103 : vector<16x32xi1> to vector<16x32xi32>
    %105 = arith.sitofp %104 : vector<16x32xi32> to vector<16x32xf32>
    %106 = vector.shape_cast %101 : vector<16x32xi32> to vector<16x32x1xi32>
    %107 = vector.broadcast %106 : vector<16x32x1xi32> to vector<16x32x128xi32>
    %108 = vector.broadcast %3 : vector<1x1x128xi32> to vector<16x32x128xi32>
    %109 = arith.cmpi eq, %107, %108 : vector<16x32x128xi32>
    %110 = vector.shape_cast %105 : vector<16x32xf32> to vector<16x32x1xf32>
    %cst_26 = arith.constant 0.000000e+00 : f32
    %111 = vector.shape_cast %110 : vector<16x32x1xf32> to vector<16x32x1xf32>
    %112 = vector.broadcast %111 : vector<16x32x1xf32> to vector<16x32x128xf32>
    %113 = vector.broadcast %cst_26 : f32 to vector<16x32x128xf32>
    %114 = arith.select %109, %112, %113 : vector<16x32x128xi1>, vector<16x32x128xf32>
    %cst_27 = arith.constant dense<0.000000e+00> : vector<16x128xf32>
    %115 = vector.multi_reduction <add>, %114, %cst_27 [1] : vector<16x32x128xf32> to vector<16x128xf32>
    %116 = arith.addf %100, %115 : vector<16x128xf32>
    %c0_28 = arith.constant 0 : index
    %c224 = arith.constant 224 : index
    %117 = vector.load %arg2[%c0_28, %c224] : memref<16x256xi32, #tpu.memory_space<vmem>>, vector<16x32xi32>
    %c1_i32_29 = arith.constant 1 : i32
    %118 = vector.broadcast %c1_i32_29 : i32 to vector<16x32xi32>
    %119 = arith.cmpi ne, %117, %118 : vector<16x32xi32>
    %120 = arith.extui %119 : vector<16x32xi1> to vector<16x32xi32>
    %121 = arith.sitofp %120 : vector<16x32xi32> to vector<16x32xf32>
    %122 = vector.shape_cast %117 : vector<16x32xi32> to vector<16x32x1xi32>
    %123 = vector.broadcast %122 : vector<16x32x1xi32> to vector<16x32x128xi32>
    %124 = vector.broadcast %3 : vector<1x1x128xi32> to vector<16x32x128xi32>
    %125 = arith.cmpi eq, %123, %124 : vector<16x32x128xi32>
    %126 = vector.shape_cast %121 : vector<16x32xf32> to vector<16x32x1xf32>
    %cst_30 = arith.constant 0.000000e+00 : f32
    %127 = vector.shape_cast %126 : vector<16x32x1xf32> to vector<16x32x1xf32>
    %128 = vector.broadcast %127 : vector<16x32x1xf32> to vector<16x32x128xf32>
    %129 = vector.broadcast %cst_30 : f32 to vector<16x32x128xf32>
    %130 = arith.select %125, %128, %129 : vector<16x32x128xi1>, vector<16x32x128xf32>
    %cst_31 = arith.constant dense<0.000000e+00> : vector<16x128xf32>
    %131 = vector.multi_reduction <add>, %130, %cst_31 [1] : vector<16x32x128xf32> to vector<16x128xf32>
    %132 = arith.addf %116, %131 : vector<16x128xf32>
    %c0_32 = arith.constant 0 : index
    %c0_33 = arith.constant 0 : index
    %133 = vector.load %arg8[%c0_32, %c0_33] : memref<16x128xf32, #tpu.memory_space<vmem>>, vector<16x128xf32>
    %134 = arith.truncf %132 : vector<16x128xf32> to vector<16x128xbf16>
    %c0_34 = arith.constant 0 : index
    %c0_35 = arith.constant 0 : index
    %135 = vector.load %arg3[%c0_34, %c0_35] : memref<128x128xbf16, #tpu.memory_space<vmem>>, vector<128x128xbf16>
    %cst_36 = arith.constant dense<0.000000e+00> : vector<16x128xf32>
    %136 = tpu.matmul %134, %135, %cst_36 {dimension_numbers = #tpu.dot_dimension_numbers<[1], [0], [0], [1], [0, 0, 1, 1], [], []>} : vector<16x128xbf16>, vector<128x128xbf16>, vector<16x128xf32> -> vector<16x128xf32>
    %137 = arith.addf %133, %136 : vector<16x128xf32>
    %c0_37 = arith.constant 0 : index
    %c0_38 = arith.constant 0 : index
    %138 = vector.load %arg8[%c0_37, %c0_38] : memref<16x128xf32, #tpu.memory_space<vmem>>, vector<16x128xf32>
    tpu.vector_store %arg8[%c0_37, %c0_38], %137 {strides = array<i32>} : memref<16x128xf32, #tpu.memory_space<vmem>>, vector<16x128xf32>,
    %c0_39 = arith.constant 0 : index
    %c0_40 = arith.constant 0 : index
    %139 = vector.load %arg9[%c0_39, %c0_40] : memref<16x1xf32, #tpu.memory_space<vmem>>, vector<16x1xf32>
    %cst_41 = arith.constant dense<0.000000e+00> : vector<16xf32>
    %140 = vector.multi_reduction <add>, %132, %cst_41 [1] : vector<16x128xf32> to vector<16xf32>
    %141 = vector.shape_cast %140 : vector<16xf32> to vector<16x1xf32>
    %142 = arith.addf %139, %141 : vector<16x1xf32>
    %c0_42 = arith.constant 0 : index
    %c0_43 = arith.constant 0 : index
    %143 = vector.load %arg9[%c0_42, %c0_43] : memref<16x1xf32, #tpu.memory_space<vmem>>, vector<16x1xf32>
    tpu.vector_store %arg9[%c0_42, %c0_43], %142 {strides = array<i32>} : memref<16x1xf32, #tpu.memory_space<vmem>>, vector<16x1xf32>,
    %c0_i32_44 = arith.constant 0 : i32
    %144 = arith.cmpi eq, %arg1, %c0_i32_44 : i32
    %145 = arith.extui %144 : i1 to i32
    %c0_i32_45 = arith.constant 0 : i32
    %146 = arith.cmpi ne, %145, %c0_i32_45 : i32
    scf.if %146 {
      %c0_46 = arith.constant 0 : index
      %c0_47 = arith.constant 0 : index
      %147 = vector.load %arg8[%c0_46, %c0_47] : memref<16x128xf32, #tpu.memory_space<vmem>>, vector<16x128xf32>
      %c0_48 = arith.constant 0 : index
      %c0_49 = arith.constant 0 : index
      %148 = vector.load %arg9[%c0_48, %c0_49] : memref<16x1xf32, #tpu.memory_space<vmem>>, vector<16x1xf32>
      %cst_50 = arith.constant 1.000000e+00 : f32
      %149 = vector.broadcast %cst_50 : f32 to vector<16x1xf32>
      %150 = arith.maximumf %148, %149 : vector<16x1xf32>
      %151 = vector.broadcast %150 : vector<16x1xf32> to vector<16x128xf32>
      %152 = arith.divf %147, %151 : vector<16x128xf32>
      %c0_51 = arith.constant 0 : index
      %c0_52 = arith.constant 0 : index
      %153 = vector.load %arg4[%c0_51, %c0_52] : memref<128x128xbf16, #tpu.memory_space<vmem>>, vector<128x128xbf16>
      %154 = arith.extf %153 : vector<128x128xbf16> to vector<128x128xf32>
      %cst_53 = arith.constant dense<0.000000e+00> : vector<16x128xf32>
      %155 = tpu.matmul %152, %154, %cst_53 {dimension_numbers = #tpu.dot_dimension_numbers<[1], [0], [0], [1], [0, 0, 1, 1], [], []>} : vector<16x128xf32>, vector<128x128xf32>, vector<16x128xf32> -> vector<16x128xf32>
      %c0_54 = arith.constant 0 : index
      %c0_55 = arith.constant 0 : index
      %156 = vector.load %arg5[%c0_54, %c0_55] : memref<1x128xf32, #tpu.memory_space<vmem>>, vector<1x128xf32>
      %157 = vector.broadcast %156 : vector<1x128xf32> to vector<16x128xf32>
      %158 = arith.addf %155, %157 : vector<16x128xf32>
      %159 = math.tanh %158 : vector<16x128xf32>
      %c0_56 = arith.constant 0 : index
      %c0_57 = arith.constant 0 : index
      %160 = vector.load %arg6[%c0_56, %c0_57] : memref<16x128xf32, #tpu.memory_space<vmem>>, vector<16x128xf32>
      tpu.vector_store %arg6[%c0_56, %c0_57], %159 {strides = array<i32>} : memref<16x128xf32, #tpu.memory_space<vmem>>, vector<16x128xf32>,
      %161 = vector.extract_strided_slice %159 {offsets = [0, 0], sizes = [8, 128], strides = [1, 1]} : vector<16x128xf32> to vector<8x128xf32>
      %162 = vector.extract_strided_slice %159 {offsets = [8, 0], sizes = [8, 128], strides = [1, 1]} : vector<16x128xf32> to vector<8x128xf32>
      %cst_58 = arith.constant dense<0.000000e+00> : vector<8x8xf32>
      %163 = tpu.matmul %162, %161, %cst_58 {dimension_numbers = #tpu.dot_dimension_numbers<[1], [1], [0], [0], [0, 0, 1, 0], [], []>} : vector<8x128xf32>, vector<8x128xf32>, vector<8x8xf32> -> vector<8x8xf32>
      %cst_59 = arith.constant dense<0xFF800000> : vector<8xf32>
      %164 = vector.multi_reduction <maximumf>, %163, %cst_59 [1] : vector<8x8xf32> to vector<8xf32>
      %165 = vector.shape_cast %164 : vector<8xf32> to vector<8x1xf32>
      %166 = vector.broadcast %165 : vector<8x1xf32> to vector<8x8xf32>
      %167 = arith.subf %163, %166 : vector<8x8xf32>
      %168 = math.exp %167 : vector<8x8xf32>
      %cst_60 = arith.constant dense<0.000000e+00> : vector<8xf32>
      %169 = vector.multi_reduction <add>, %168, %cst_60 [1] : vector<8x8xf32> to vector<8xf32>
      %170 = vector.shape_cast %169 : vector<8xf32> to vector<8x1xf32>
      %171 = math.log %170 : vector<8x1xf32>
      %172 = arith.addf %165, %171 : vector<8x1xf32>
      %173 = tpu.iota {dimensions = array<i32: 0>} : vector<8x8xi32>
      %174 = tpu.iota {dimensions = array<i32: 1>} : vector<8x8xi32>
      %175 = arith.cmpi eq, %173, %174 : vector<8x8xi32>
      %cst_61 = arith.constant 0.000000e+00 : f32
      %176 = vector.broadcast %cst_61 : f32 to vector<8x8xf32>
      %177 = arith.select %175, %163, %176 : vector<8x8xi1>, vector<8x8xf32>
      %cst_62 = arith.constant dense<0.000000e+00> : vector<8xf32>
      %178 = vector.multi_reduction <add>, %177, %cst_62 [1] : vector<8x8xf32> to vector<8xf32>
      %179 = vector.shape_cast %178 : vector<8xf32> to vector<8x1xf32>
      %180 = arith.subf %172, %179 : vector<8x1xf32>
      %181 = vector.shape_cast %180 : vector<8x1xf32> to vector<1x8x1xf32>
      %cst_63 = arith.constant dense<0.000000e+00> : vector<1xf32>
      %182 = vector.multi_reduction <add>, %181, %cst_63 [1, 2] : vector<1x8x1xf32> to vector<1xf32>
      %183 = vector.shape_cast %182 : vector<1xf32> to vector<1x1x1xf32>
      %184 = vector.extract %183[0, 0, 0] : f32 from vector<1x1x1xf32>
      %185 = vector.broadcast %184 : f32 to vector<1x1xf32>
      %cst_64 = arith.constant 8.000000e+00 : f32
      %186 = vector.broadcast %cst_64 : f32 to vector<1x1xf32>
      %187 = arith.divf %185, %186 : vector<1x1xf32>
      %c0_65 = arith.constant 0 : index
      %c0_66 = arith.constant 0 : index
      %188 = vector.load %arg7[%c0_65, %c0_66] : memref<1x1xf32, #tpu.memory_space<vmem>>, vector<1x1xf32>
      tpu.vector_store %arg7[%c0_65, %c0_66], %187 {strides = array<i32>} : memref<1x1xf32, #tpu.memory_space<vmem>>, vector<1x1xf32>,
    } else {
    }
    return
  }
  func.func @transform_0(%arg0: i32, %arg1: i32) -> (i32, i32) {
    %c0_i32 = arith.constant 0 : i32
    return %arg0, %arg1 : i32, i32
  }
  func.func @transform_1(%arg0: i32, %arg1: i32) -> (i32, i32) {
    %c0_i32 = arith.constant 0 : i32
    %c0_i32_0 = arith.constant 0 : i32
    %c0_i32_1 = arith.constant 0 : i32
    return %c0_i32, %c0_i32_0 : i32, i32
  }
  func.func @transform_2(%arg0: i32, %arg1: i32) -> (i32, i32) {
    %c0_i32 = arith.constant 0 : i32
    %c0_i32_0 = arith.constant 0 : i32
    %c0_i32_1 = arith.constant 0 : i32
    return %c0_i32, %c0_i32_0 : i32, i32
  }
  func.func @transform_3(%arg0: i32, %arg1: i32) -> (i32, i32) {
    %c0_i32 = arith.constant 0 : i32
    %c0_i32_0 = arith.constant 0 : i32
    %c0_i32_1 = arith.constant 0 : i32
    return %c0_i32, %c0_i32_0 : i32, i32
  }
  func.func @transform_4(%arg0: i32, %arg1: i32) -> (i32, i32) {
    %c0_i32 = arith.constant 0 : i32
    %c0_i32_0 = arith.constant 0 : i32
    return %arg0, %c0_i32 : i32, i32
  }
  func.func @transform_5(%arg0: i32, %arg1: i32) -> (i32, i32) {
    %c0_i32 = arith.constant 0 : i32
    %c0_i32_0 = arith.constant 0 : i32
    %c0_i32_1 = arith.constant 0 : i32
    return %c0_i32, %c0_i32_0 : i32, i32
  }
}

</mosaic_0001>

<llo_original>
// kernel: tpu_custom_call.1
$region0: #{tpu_custom_call.1}
  #allocation0 [shape = 'u32[]', space=smem, size = 0x4, offset = 0x4, fixed_abs, tag = 'smem constant byte address 0x4 - core index']
  #allocation1 [shape = 'u32[72,128]{1,0:T(1,128)}', space=vmem, size = 0x9000, scoped, tag = 'internal scratch']
  #allocation2 [shape = 'f32[16,128]{1,0:T(8,128)}', space=vmem, size = 0x2000, scoped, tag = 'scratch operand']
  #allocation3 [shape = 'f32[16,1]{1,0:T(8,128)}', space=vmem, size = 0x2000, scoped, tag = 'scratch operand']
  %s0 = inlined_call_operand.hbm [shape: s32[16,256], index: 0, kind: input, shape index: {}]
  %s1 = inlined_call_operand.hbm [shape: bf16[128,128], index: 1, kind: input, shape index: {}]
  %s2 = inlined_call_operand.hbm [shape: bf16[128,128], index: 2, kind: input, shape index: {}]
  %s3 = inlined_call_operand.vmem [shape: f32[1,128], index: 3, kind: input, shape index: {}]
  %s4 = inlined_call_operand.hbm [shape: f32[16,128], index: 4, kind: output, shape index: {0}]
  %s5 = inlined_call_operand.hbm [shape: f32[1,1], index: 5, kind: output, shape index: {1}]
  %6 = xla_tuple %s4, %s5
  %s7 = sld [smem:[#allocation0]]
  $region54: #{tpu_custom_call.1} parent=0
    _
  %s9 = ssub.s32 1, %s7
  %s10 = scalar_select 0, %s9, %s7
  $region1: #{tpu_custom_call.1} parent=0
    #allocation4 [shape = 'u8[16384]{0}', space=vmem, size = 0x4000, scoped, tag = 'input window, operand 0, single buffered']
    #allocation5 [shape = 's32[1]{0}', space=sflag, size = 0x4, scoped, tag = 'scoped memory for tpu_custom_call.1']
    #allocation6 [shape = 's32[1]{0}', space=sflag, size = 0x4, scoped, tag = 'scoped memory for tpu_custom_call.1']
    #allocation7 [shape = 'u8[32768]{0}', space=vmem, size = 0x8000, scoped, tag = 'input window, operand 1, single buffered']
    #allocation8 [shape = 's32[1]{0}', space=sflag, size = 0x4, scoped, tag = 'scoped memory for tpu_custom_call.1']
    #allocation9 [shape = 'u8[32768]{0}', space=vmem, size = 0x8000, scoped, tag = 'input window, operand 2, single buffered']
    #allocation10 [shape = 'u8[8192]{0}', space=vmem, size = 0x2000, scoped, tag = 'output window, operand 0, single buffered']
    #allocation11 [shape = 'u8[512]{0}', space=vmem, size = 0x400, scoped, tag = 'output window, operand 1, single buffered']
    #allocation12 [shape = 's32[1]{0}', space=sflag, size = 0x4, scoped, tag = 'scoped memory for tpu_custom_call.1']
    %11 = vsyncpa [#allocation5], 0
    %12 = vsyncpa [#allocation8], 0
    %13 = vsyncpa [#allocation6], 0
    %14 = vsyncpa [#allocation12], 0
    // Predicated region
    $region2: #{tpu_custom_call.1} parent=1 // pred_check
      _
    $region3: #{tpu_custom_call.1} parent=1 // pred_check_branch
      %16 = sbr.rel (0) target = $region5
    $region4: #{tpu_custom_call.1} parent=1 // pred_region
      %18 = vsyncadd [#allocation5], 0
      %s19 = sshll.u32 %s0, 4
      %s20 = int_to_ptr.hbm [resolvable:$true] %s19
      %s21 = sshll.u32 [#allocation4], 4
      %s22 = int_to_ptr.vmem [resolvable:$true] %s21
      %27 = dma.hbm_to_vmem [thread:$0]  %s20, 512, %s22, [#allocation5], 256, 256, 16
    $region5: #{tpu_custom_call.1} parent=1 // pred_fallthru
      _
    // Predicated region
    $region6: #{tpu_custom_call.1} parent=1 // pred_check
      _
    $region7: #{tpu_custom_call.1} parent=1 // pred_check_branch
      %29 = sbr.rel (0) target = $region9
    $region8: #{tpu_custom_call.1} parent=1 // pred_region
      %31 = vsyncadd [#allocation8], 0
      %s32 = sshll.u32 %s1, 4
      %s33 = int_to_ptr.hbm [resolvable:$true] %s32
      %s34 = sshll.u32 [#allocation7], 4
      %s35 = int_to_ptr.vmem [resolvable:$true] %s34
      %40 = dma.hbm_to_vmem [thread:$0]  %s33, 1024, %s35, [#allocation8], 64, 64, 4
    $region9: #{tpu_custom_call.1} parent=1 // pred_fallthru
      _
    // Predicated region
    $region10: #{tpu_custom_call.1} parent=1 // pred_check
      _
    $region11: #{tpu_custom_call.1} parent=1 // pred_check_branch
      %42 = sbr.rel (0) target = $region13
    $region12: #{tpu_custom_call.1} parent=1 // pred_region
      %44 = vsyncadd [#allocation8], 0
      %s45 = sshll.u32 %s2, 4
      %s46 = int_to_ptr.hbm [resolvable:$true] %s45
      %s47 = sshll.u32 [#allocation9], 4
      %s48 = int_to_ptr.vmem [resolvable:$true] %s47
      %53 = dma.hbm_to_vmem [thread:$0]  %s46, 1024, %s48, [#allocation8], 64, 64, 4
    $region13: #{tpu_custom_call.1} parent=1 // pred_fallthru
      _
    // Predicated region
    $region14: #{tpu_custom_call.1} parent=1 // pred_check
      _
    $region15: #{tpu_custom_call.1} parent=1 // pred_check_branch
      %55 = sbr.rel (0) target = $region17
    $region16: #{tpu_custom_call.1} parent=1 // pred_region
      _
    $region17: #{tpu_custom_call.1} parent=1 // pred_fallthru
      _
    // Predicated region
    $region18: #{tpu_custom_call.1} parent=1 // pred_check
      _
    $region19: #{tpu_custom_call.1} parent=1 // pred_check_branch
      %57 = sbr.rel (0) target = $region21
    $region20: #{tpu_custom_call.1} parent=1 // pred_region
      %59 = dma.done [#allocation5], 512
    $region21: #{tpu_custom_call.1} parent=1 // pred_fallthru
      _
    // Predicated region
    $region22: #{tpu_custom_call.1} parent=1 // pred_check
      _
    $region23: #{tpu_custom_call.1} parent=1 // pred_check_branch
      %61 = sbr.rel (0) target = $region25
    $region24: #{tpu_custom_call.1} parent=1 // pred_region
      %63 = dma.done [#allocation8], 1024
    $region25: #{tpu_custom_call.1} parent=1 // pred_fallthru
      _
    // Predicated region
    $region26: #{tpu_custom_call.1} parent=1 // pred_check
      _
    $region27: #{tpu_custom_call.1} parent=1 // pred_check_branch
      %65 = sbr.rel (0) target = $region29
    $region28: #{tpu_custom_call.1} parent=1 // pred_region
      %67 = dma.done [#allocation8], 1024
    $region29: #{tpu_custom_call.1} parent=1 // pred_fallthru
      _
    %p68 = scmp.eq.s32.totalorder 0, 0
    // Predicated region
    $region30: #{tpu_custom_call.1} parent=1 // pred_check
      %p69 = pneg %p68
    $region31: #{tpu_custom_call.1} parent=1 // pred_check_branch
      %71 = sbr.rel (%p69) target = $region33
    $region32: #{tpu_custom_call.1} parent=1 // pred_region
      %72 = vst [vmem:[#allocation2] sm:$0xff] 0.0
      %73 = vst [vmem:[#allocation2 + $0x8] sm:$0xff] 0.0
      %vm74 = vcmask 7168
      %75 = vst.msk [vmem:[#allocation3] sm:$0xff] %vm74, 0.0
      %76 = vst.msk [vmem:[#allocation3 + $0x8] sm:$0xff] %vm74, 0.0
    $region33: #{tpu_custom_call.1} parent=1 // pred_fallthru
      _
    %v77 = vlaneseq
    %v78 = vand.u32 %v77, 127
    %v79 = vld [vmem:[#allocation4] sm:$0xff]
    %v80 = vld [vmem:[#allocation4 + $0x10] sm:$0xff]
    %vm81 = vcmp.ne.s32.totalorder %v79, 1
    %vm82 = vcmp.ne.s32.totalorder %v80, 1
    %v83 = vsel %vm81, 1, 0
    %v84 = vsel %vm82, 1, 0
    %v85 = vcvt.s32.f32 %v83
    %v86 = vcvt.s32.f32 %v84
    %v87 = vperm.slane %v79, 0
    %v88 = vlaneseq
    %v89 = vshrl.u32 %v88, 7
    %91 = vset.pattern.permute.xlu0 %v89
    %92 = vperm.xlu0 %91, %v87
    %v93 = vpop.permute.xlu0 %92
    %v94 = vlaneseq
    %v95 = vshrl.u32 %v94, 7
    %v96 = vadd.s32 %v95, 8
    %97 = vset.pattern.permute.xlu0 %v96
    %98 = vperm.xlu0 %97, %v87
    %v99 = vpop.permute.xlu0 %98
    %v100 = vlaneseq
    %v101 = vshrl.u32 %v100, 7
    %v102 = vadd.s32 %v101, 16
    %103 = vset.pattern.permute.xlu0 %v102
    %104 = vperm.xlu0 %103, %v87
    %v105 = vpop.permute.xlu0 %104
    %v106 = vlaneseq
    %v107 = vshrl.u32 %v106, 7
    %v108 = vadd.s32 %v107, 24
    %109 = vset.pattern.permute.xlu0 %v108
    %110 = vperm.xlu0 %109, %v87
    %v111 = vpop.permute.xlu0 %110
    %v112 = vperm.slane %v79, 1
    %v113 = vlaneseq
    %v114 = vshrl.u32 %v113, 7
    %116 = vset.pattern.permute.xlu0 %v114
    %117 = vperm.xlu0 %116, %v112
    %v118 = vpop.permute.xlu0 %117
    %v119 = vlaneseq
    %v120 = vshrl.u32 %v119, 7
    %v121 = vadd.s32 %v120, 8
    %122 = vset.pattern.permute.xlu0 %v121
    %123 = vperm.xlu0 %122, %v112
    %v124 = vpop.permute.xlu0 %123
    %v125 = vlaneseq
    %v126 = vshrl.u32 %v125, 7
    %v127 = vadd.s32 %v126, 16
    %128 = vset.pattern.permute.xlu0 %v127
    %129 = vperm.xlu0 %128, %v112
    %v130 = vpop.permute.xlu0 %129
    %v131 = vlaneseq
    %v132 = vshrl.u32 %v131, 7
    %v133 = vadd.s32 %v132, 24
    %134 = vset.pattern.permute.xlu0 %v133
    %135 = vperm.xlu0 %134, %v112
    %v136 = vpop.permute.xlu0 %135
    %v137 = vperm.slane %v79, 2
    %v138 = vlaneseq
    %v139 = vshrl.u32 %v138, 7
    %141 = vset.pattern.permute.xlu0 %v139
    %142 = vperm.xlu0 %141, %v137
    %v143 = vpop.permute.xlu0 %142
    %v144 = vlaneseq
    %v145 = vshrl.u32 %v144, 7
    %v146 = vadd.s32 %v145, 8
    %147 = vset.pattern.permute.xlu0 %v146
    %148 = vperm.xlu0 %147, %v137
    %v149 = vpop.permute.xlu0 %148
    %v150 = vlaneseq
    %v151 = vshrl.u32 %v150, 7
    %v152 = vadd.s32 %v151, 16
    %153 = vset.pattern.permute.xlu0 %v152
    %154 = vperm.xlu0 %153, %v137
    %v155 = vpop.permute.xlu0 %154
    %v156 = vlaneseq
    %v157 = vshrl.u32 %v156, 7
    %v158 = vadd.s32 %v157, 24
    %159 = vset.pattern.permute.xlu0 %v158
    %160 = vperm.xlu0 %159, %v137
    %v161 = vpop.permute.xlu0 %160
    %v162 = vperm.slane %v79, 3
    %v163 = vlaneseq
    %v164 = vshrl.u32 %v163, 7
    %166 = vset.pattern.permute.xlu0 %v164
    %167 = vperm.xlu0 %166, %v162
    %v168 = vpop.permute.xlu0 %167
    %v169 = vlaneseq
    %v170 = vshrl.u32 %v169, 7
    %v171 = vadd.s32 %v170, 8
    %172 = vset.pattern.permute.xlu0 %v171
    %173 = vperm.xlu0 %172, %v162
    %v174 = vpop.permute.xlu0 %173
    %v175 = vlaneseq
    %v176 = vshrl.u32 %v175, 7
    %v177 = vadd.s32 %v176, 16
    %178 = vset.pattern.permute.xlu0 %v177
    %179 = vperm.xlu0 %178, %v162
    %v180 = vpop.permute.xlu0 %179
    %v181 = vlaneseq
    %v182 = vshrl.u32 %v181, 7
    %v183 = vadd.s32 %v182, 24
    %184 = vset.pattern.permute.xlu0 %v183
    %185 = vperm.xlu0 %184, %v162
    %v186 = vpop.permute.xlu0 %185
    %v187 = vperm.slane %v79, 4
    %v188 = vlaneseq
    %v189 = vshrl.u32 %v188, 7
    %191 = vset.pattern.permute.xlu0 %v189
    %192 = vperm.xlu0 %191, %v187
    %v193 = vpop.permute.xlu0 %192
    %v194 = vlaneseq
    %v195 = vshrl.u32 %v194, 7
    %v196 = vadd.s32 %v195, 8
    %197 = vset.pattern.permute.xlu0 %v196
    %198 = vperm.xlu0 %197, %v187
    %v199 = vpop.permute.xlu0 %198
    %v200 = vlaneseq
    %v201 = vshrl.u32 %v200, 7
    %v202 = vadd.s32 %v201, 16
    %203 = vset.pattern.permute.xlu0 %v202
    %204 = vperm.xlu0 %203, %v187
    %v205 = vpop.permute.xlu0 %204
    %v206 = vlaneseq
    %v207 = vshrl.u32 %v206, 7
    %v208 = vadd.s32 %v207, 24
    %209 = vset.pattern.permute.xlu0 %v208
    %210 = vperm.xlu0 %209, %v187
    %v211 = vpop.permute.xlu0 %210
    %v212 = vperm.slane %v79, 5
    %v213 = vlaneseq
    %v214 = vshrl.u32 %v213, 7
    %216 = vset.pattern.permute.xlu0 %v214
    %217 = vperm.xlu0 %216, %v212
    %v218 = vpop.permute.xlu0 %217
    %v219 = vlaneseq
    %v220 = vshrl.u32 %v219, 7
    %v221 = vadd.s32 %v220, 8
    %222 = vset.pattern.permute.xlu0 %v221
    %223 = vperm.xlu0 %222, %v212
    %v224 = vpop.permute.xlu0 %223
    %v225 = vlaneseq
    %v226 = vshrl.u32 %v225, 7
    %v227 = vadd.s32 %v226, 16
    %228 = vset.pattern.permute.xlu0 %v227
    %229 = vperm.xlu0 %228, %v212
    %v230 = vpop.permute.xlu0 %229
    %v231 = vlaneseq
    %v232 = vshrl.u32 %v231, 7
    %v233 = vadd.s32 %v232, 24
    %234 = vset.pattern.permute.xlu0 %v233
    %235 = vperm.xlu0 %234, %v212
    %v236 = vpop.permute.xlu0 %235
    %v237 = vperm.slane %v79, 6
    %v238 = vlaneseq
    %v239 = vshrl.u32 %v238, 7
    %241 = vset.pattern.permute.xlu0 %v239
    %242 = vperm.xlu0 %241, %v237
    %v243 = vpop.permute.xlu0 %242
    %v244 = vlaneseq
    %v245 = vshrl.u32 %v244, 7
    %v246 = vadd.s32 %v245, 8
    %247 = vset.pattern.permute.xlu0 %v246
    %248 = vperm.xlu0 %247, %v237
    %v249 = vpop.permute.xlu0 %248
    %v250 = vlaneseq
    %v251 = vshrl.u32 %v250, 7
    %v252 = vadd.s32 %v251, 16
    %253 = vset.pattern.permute.xlu0 %v252
    %254 = vperm.xlu0 %253, %v237
    %v255 = vpop.permute.xlu0 %254
    %v256 = vlaneseq
    %v257 = vshrl.u32 %v256, 7
    %v258 = vadd.s32 %v257, 24
    %259 = vset.pattern.permute.xlu0 %v258
    %260 = vperm.xlu0 %259, %v237
    %v261 = vpop.permute.xlu0 %260
    %v262 = vperm.slane %v79, 7
    %v263 = vlaneseq
    %v264 = vshrl.u32 %v263, 7
    %266 = vset.pattern.permute.xlu0 %v264
    %267 = vperm.xlu0 %266, %v262
    %v268 = vpop.permute.xlu0 %267
    %v269 = vlaneseq
    %v270 = vshrl.u32 %v269, 7
    %v271 = vadd.s32 %v270, 8
    %272 = vset.pattern.permute.xlu0 %v271
    %273 = vperm.xlu0 %272, %v262
    %v274 = vpop.permute.xlu0 %273
    %v275 = vlaneseq
    %v276 = vshrl.u32 %v275, 7
    %v277 = vadd.s32 %v276, 16
    %278 = vset.pattern.permute.xlu0 %v277
    %279 = vperm.xlu0 %278, %v262
    %v280 = vpop.permute.xlu0 %279
    %v281 = vlaneseq
    %v282 = vshrl.u32 %v281, 7
    %v283 = vadd.s32 %v282, 24
    %284 = vset.pattern.permute.xlu0 %v283
    %285 = vperm.xlu0 %284, %v262
    %v286 = vpop.permute.xlu0 %285
    %v287 = vperm.slane %v80, 0
    %v288 = vlaneseq
    %v289 = vshrl.u32 %v288, 7
    %291 = vset.pattern.permute.xlu0 %v289
    %292 = vperm.xlu0 %291, %v287
    %v293 = vpop.permute.xlu0 %292
    %v294 = vlaneseq
    %v295 = vshrl.u32 %v294, 7
    %v296 = vadd.s32 %v295, 8
    %297 = vset.pattern.permute.xlu0 %v296
    %298 = vperm.xlu0 %297, %v287
    %v299 = vpop.permute.xlu0 %298
    %v300 = vlaneseq
    %v301 = vshrl.u32 %v300, 7
    %v302 = vadd.s32 %v301, 16
    %303 = vset.pattern.permute.xlu0 %v302
    %304 = vperm.xlu0 %303, %v287
    %v305 = vpop.permute.xlu0 %304
    %v306 = vlaneseq
    %v307 = vshrl.u32 %v306, 7
    %v308 = vadd.s32 %v307, 24
    %309 = vset.pattern.permute.xlu0 %v308
    %310 = vperm.xlu0 %309, %v287
    %v311 = vpop.permute.xlu0 %310
    %v312 = vperm.slane %v80, 1
    %v313 = vlaneseq
    %v314 = vshrl.u32 %v313, 7
    %316 = vset.pattern.permute.xlu0 %v314
    %317 = vperm.xlu0 %316, %v312
    %v318 = vpop.permute.xlu0 %317
    %v319 = vlaneseq
    %v320 = vshrl.u32 %v319, 7
    %v321 = vadd.s32 %v320, 8
    %322 = vset.pattern.permute.xlu0 %v321
    %323 = vperm.xlu0 %322, %v312
    %v324 = vpop.permute.xlu0 %323
    %v325 = vlaneseq
    %v326 = vshrl.u32 %v325, 7
    %v327 = vadd.s32 %v326, 16
    %328 = vset.pattern.permute.xlu0 %v327
    %329 = vperm.xlu0 %328, %v312
    %v330 = vpop.permute.xlu0 %329
    %v331 = vlaneseq
    %v332 = vshrl.u32 %v331, 7
    %v333 = vadd.s32 %v332, 24
    %334 = vset.pattern.permute.xlu0 %v333
    %335 = vperm.xlu0 %334, %v312
    %v336 = vpop.permute.xlu0 %335
    %v337 = vperm.slane %v80, 2
    %v338 = vlaneseq
    %v339 = vshrl.u32 %v338, 7
    %341 = vset.pattern.permute.xlu0 %v339
    %342 = vperm.xlu0 %341, %v337
    %v343 = vpop.permute.xlu0 %342
    %v344 = vlaneseq
    %v345 = vshrl.u32 %v344, 7
    %v346 = vadd.s32 %v345, 8
    %347 = vset.pattern.permute.xlu0 %v346
    %348 = vperm.xlu0 %347, %v337
    %v349 = vpop.permute.xlu0 %348
    %v350 = vlaneseq
    %v351 = vshrl.u32 %v350, 7
    %v352 = vadd.s32 %v351, 16
    %353 = vset.pattern.permute.xlu0 %v352
    %354 = vperm.xlu0 %353, %v337
    %v355 = vpop.permute.xlu0 %354
    %v356 = vlaneseq
    %v357 = vshrl.u32 %v356, 7
    %v358 = vadd.s32 %v357, 24
    %359 = vset.pattern.permute.xlu0 %v358
    %360 = vperm.xlu0 %359, %v337
    %v361 = vpop.permute.xlu0 %360
    %v362 = vperm.slane %v80, 3
    %v363 = vlaneseq
    %v364 = vshrl.u32 %v363, 7
    %366 = vset.pattern.permute.xlu0 %v364
    %367 = vperm.xlu0 %366, %v362
    %v368 = vpop.permute.xlu0 %367
    %v369 = vlaneseq
    %v370 = vshrl.u32 %v369, 7
    %v371 = vadd.s32 %v370, 8
    %372 = vset.pattern.permute.xlu0 %v371
    %373 = vperm.xlu0 %372, %v362
    %v374 = vpop.permute.xlu0 %373
    %v375 = vlaneseq
    %v376 = vshrl.u32 %v375, 7
    %v377 = vadd.s32 %v376, 16
    %378 = vset.pattern.permute.xlu0 %v377
    %379 = vperm.xlu0 %378, %v362
    %v380 = vpop.permute.xlu0 %379
    %v381 = vlaneseq
    %v382 = vshrl.u32 %v381, 7
    %v383 = vadd.s32 %v382, 24
    %384 = vset.pattern.permute.xlu0 %v383
    %385 = vperm.xlu0 %384, %v362
    %v386 = vpop.permute.xlu0 %385
    %v387 = vperm.slane %v80, 4
    %v388 = vlaneseq
    %v389 = vshrl.u32 %v388, 7
    %391 = vset.pattern.permute.xlu0 %v389
    %392 = vperm.xlu0 %391, %v387
    %v393 = vpop.permute.xlu0 %392
    %v394 = vlaneseq
    %v395 = vshrl.u32 %v394, 7
    %v396 = vadd.s32 %v395, 8
    %397 = vset.pattern.permute.xlu0 %v396
    %398 = vperm.xlu0 %397, %v387
    %v399 = vpop.permute.xlu0 %398
    %v400 = vlaneseq
    %v401 = vshrl.u32 %v400, 7
    %v402 = vadd.s32 %v401, 16
    %403 = vset.pattern.permute.xlu0 %v402
    %404 = vperm.xlu0 %403, %v387
    %v405 = vpop.permute.xlu0 %404
    %v406 = vlaneseq
    %v407 = vshrl.u32 %v406, 7
    %v408 = vadd.s32 %v407, 24
    %409 = vset.pattern.permute.xlu0 %v408
    %410 = vperm.xlu0 %409, %v387
    %v411 = vpop.permute.xlu0 %410
    %v412 = vperm.slane %v80, 5
    %v413 = vlaneseq
    %v414 = vshrl.u32 %v413, 7
    %416 = vset.pattern.permute.xlu0 %v414
    %417 = vperm.xlu0 %416, %v412
    %v418 = vpop.permute.xlu0 %417
    %v419 = vlaneseq
    %v420 = vshrl.u32 %v419, 7
    %v421 = vadd.s32 %v420, 8
    %422 = vset.pattern.permute.xlu0 %v421
    %423 = vperm.xlu0 %422, %v412
    %v424 = vpop.permute.xlu0 %423
    %v425 = vlaneseq
    %v426 = vshrl.u32 %v425, 7
    %v427 = vadd.s32 %v426, 16
    %428 = vset.pattern.permute.xlu0 %v427
    %429 = vperm.xlu0 %428, %v412
    %v430 = vpop.permute.xlu0 %429
    %v431 = vlaneseq
    %v432 = vshrl.u32 %v431, 7
    %v433 = vadd.s32 %v432, 24
    %434 = vset.pattern.permute.xlu0 %v433
    %435 = vperm.xlu0 %434, %v412
    %v436 = vpop.permute.xlu0 %435
    %v437 = vperm.slane %v80, 6
    %v438 = vlaneseq
    %v439 = vshrl.u32 %v438, 7
    %441 = vset.pattern.permute.xlu0 %v439
    %442 = vperm.xlu0 %441, %v437
    %v443 = vpop.permute.xlu0 %442
    %v444 = vlaneseq
    %v445 = vshrl.u32 %v444, 7
    %v446 = vadd.s32 %v445, 8
    %447 = vset.pattern.permute.xlu0 %v446
    %448 = vperm.xlu0 %447, %v437
    %v449 = vpop.permute.xlu0 %448
    %v450 = vlaneseq
    %v451 = vshrl.u32 %v450, 7
    %v452 = vadd.s32 %v451, 16
    %453 = vset.pattern.permute.xlu0 %v452
    %454 = vperm.xlu0 %453, %v437
    %v455 = vpop.permute.xlu0 %454
    %v456 = vlaneseq
    %v457 = vshrl.u32 %v456, 7
    %v458 = vadd.s32 %v457, 24
    %459 = vset.pattern.permute.xlu0 %v458
    %460 = vperm.xlu0 %459, %v437
    %v461 = vpop.permute.xlu0 %460
    %v462 = vperm.slane %v80, 7
    %v463 = vlaneseq
    %v464 = vshrl.u32 %v463, 7
    %466 = vset.pattern.permute.xlu0 %v464
    %467 = vperm.xlu0 %466, %v462
    %v468 = vpop.permute.xlu0 %467
    %v469 = vlaneseq
    %v470 = vshrl.u32 %v469, 7
    %v471 = vadd.s32 %v470, 8
    %472 = vset.pattern.permute.xlu0 %v471
    %473 = vperm.xlu0 %472, %v462
    %v474 = vpop.permute.xlu0 %473
    %v475 = vlaneseq
    %v476 = vshrl.u32 %v475, 7
    %v477 = vadd.s32 %v476, 16
    %478 = vset.pattern.permute.xlu0 %v477
    %479 = vperm.xlu0 %478, %v462
    %v480 = vpop.permute.xlu0 %479
    %v481 = vlaneseq
    %v482 = vshrl.u32 %v481, 7
    %v483 = vadd.s32 %v482, 24
    %484 = vset.pattern.permute.xlu0 %v483
    %485 = vperm.xlu0 %484, %v462
    %v486 = vpop.permute.xlu0 %485
    %vm487 = vcmp.eq.s32.totalorder %v93, %v78
    %vm488 = vcmp.eq.s32.totalorder %v99, %v78
    %vm489 = vcmp.eq.s32.totalorder %v105, %v78
    %vm490 = vcmp.eq.s32.totalorder %v111, %v78
    %vm491 = vcmp.eq.s32.totalorder %v118, %v78
    %vm492 = vcmp.eq.s32.totalorder %v124, %v78
    %vm493 = vcmp.eq.s32.totalorder %v130, %v78
    %vm494 = vcmp.eq.s32.totalorder %v136, %v78
    %vm495 = vcmp.eq.s32.totalorder %v143, %v78
    %vm496 = vcmp.eq.s32.totalorder %v149, %v78
    %vm497 = vcmp.eq.s32.totalorder %v155, %v78
    %vm498 = vcmp.eq.s32.totalorder %v161, %v78
    %vm499 = vcmp.eq.s32.totalorder %v168, %v78
    %vm500 = vcmp.eq.s32.totalorder %v174, %v78
    %vm501 = vcmp.eq.s32.totalorder %v180, %v78
    %vm502 = vcmp.eq.s32.totalorder %v186, %v78
    %vm503 = vcmp.eq.s32.totalorder %v193, %v78
    %vm504 = vcmp.eq.s32.totalorder %v199, %v78
    %vm505 = vcmp.eq.s32.totalorder %v205, %v78
    %vm506 = vcmp.eq.s32.totalorder %v211, %v78
    %vm507 = vcmp.eq.s32.totalorder %v218, %v78
    %vm508 = vcmp.eq.s32.totalorder %v224, %v78
    %vm509 = vcmp.eq.s32.totalorder %v230, %v78
    %vm510 = vcmp.eq.s32.totalorder %v236, %v78
    %vm511 = vcmp.eq.s32.totalorder %v243, %v78
    %vm512 = vcmp.eq.s32.totalorder %v249, %v78
    %vm513 = vcmp.eq.s32.totalorder %v255, %v78
    %vm514 = vcmp.eq.s32.totalorder %v261, %v78
    %vm515 = vcmp.eq.s32.totalorder %v268, %v78
    %vm516 = vcmp.eq.s32.totalorder %v274, %v78
    %vm517 = vcmp.eq.s32.totalorder %v280, %v78
    %vm518 = vcmp.eq.s32.totalorder %v286, %v78
    %vm519 = vcmp.eq.s32.totalorder %v293, %v78
    %vm520 = vcmp.eq.s32.totalorder %v299, %v78
    %vm521 = vcmp.eq.s32.totalorder %v305, %v78
    %vm522 = vcmp.eq.s32.totalorder %v311, %v78
    %vm523 = vcmp.eq.s32.totalorder %v318, %v78
    %vm524 = vcmp.eq.s32.totalorder %v324, %v78
    %vm525 = vcmp.eq.s32.totalorder %v330, %v78
    %vm526 = vcmp.eq.s32.totalorder %v336, %v78
    %vm527 = vcmp.eq.s32.totalorder %v343, %v78
    %vm528 = vcmp.eq.s32.totalorder %v349, %v78
    %vm529 = vcmp.eq.s32.totalorder %v355, %v78
    %vm530 = vcmp.eq.s32.totalorder %v361, %v78
    %vm531 = vcmp.eq.s32.totalorder %v368, %v78
    %vm532 = vcmp.eq.s32.totalorder %v374, %v78
    %vm533 = vcmp.eq.s32.totalorder %v380, %v78
    %vm534 = vcmp.eq.s32.totalorder %v386, %v78
    %vm535 = vcmp.eq.s32.totalorder %v393, %v78
    %vm536 = vcmp.eq.s32.totalorder %v399, %v78
    %vm537 = vcmp.eq.s32.totalorder %v405, %v78
    %vm538 = vcmp.eq.s32.totalorder %v411, %v78
    %vm539 = vcmp.eq.s32.totalorder %v418, %v78
    %vm540 = vcmp.eq.s32.totalorder %v424, %v78
    %vm541 = vcmp.eq.s32.totalorder %v430, %v78
    %vm542 = vcmp.eq.s32.totalorder %v436, %v78
    %vm543 = vcmp.eq.s32.totalorder %v443, %v78
    %vm544 = vcmp.eq.s32.totalorder %v449, %v78
    %vm545 = vcmp.eq.s32.totalorder %v455, %v78
    %vm546 = vcmp.eq.s32.totalorder %v461, %v78
    %vm547 = vcmp.eq.s32.totalorder %v468, %v78
    %vm548 = vcmp.eq.s32.totalorder %v474, %v78
    %vm549 = vcmp.eq.s32.totalorder %v480, %v78
    %vm550 = vcmp.eq.s32.totalorder %v486, %v78
    %v551 = vperm.slane %v85, 0
    %v552 = vlaneseq
    %v553 = vshrl.u32 %v552, 7
    %555 = vset.pattern.permute.xlu0 %v553
    %556 = vperm.xlu0 %555, %v551
    %v557 = vpop.permute.xlu0 %556
    %v558 = vlaneseq
    %v559 = vshrl.u32 %v558, 7
    %v560 = vadd.s32 %v559, 8
    %561 = vset.pattern.permute.xlu0 %v560
    %562 = vperm.xlu0 %561, %v551
    %v563 = vpop.permute.xlu0 %562
    %v564 = vlaneseq
    %v565 = vshrl.u32 %v564, 7
    %v566 = vadd.s32 %v565, 16
    %567 = vset.pattern.permute.xlu0 %v566
    %568 = vperm.xlu0 %567, %v551
    %v569 = vpop.permute.xlu0 %568
    %v570 = vlaneseq
    %v571 = vshrl.u32 %v570, 7
    %v572 = vadd.s32 %v571, 24
    %573 = vset.pattern.permute.xlu0 %v572
    %574 = vperm.xlu0 %573, %v551
    %v575 = vpop.permute.xlu0 %574
    %v576 = vperm.slane %v85, 1
    %v577 = vlaneseq
    %v578 = vshrl.u32 %v577, 7
    %580 = vset.pattern.permute.xlu0 %v578
    %581 = vperm.xlu0 %580, %v576
    %v582 = vpop.permute.xlu0 %581
    %v583 = vlaneseq
    %v584 = vshrl.u32 %v583, 7
    %v585 = vadd.s32 %v584, 8
    %586 = vset.pattern.permute.xlu0 %v585
    %587 = vperm.xlu0 %586, %v576
    %v588 = vpop.permute.xlu0 %587
    %v589 = vlaneseq
    %v590 = vshrl.u32 %v589, 7
    %v591 = vadd.s32 %v590, 16
    %592 = vset.pattern.permute.xlu0 %v591
    %593 = vperm.xlu0 %592, %v576
    %v594 = vpop.permute.xlu0 %593
    %v595 = vlaneseq
    %v596 = vshrl.u32 %v595, 7
    %v597 = vadd.s32 %v596, 24
    %598 = vset.pattern.permute.xlu0 %v597
    %599 = vperm.xlu0 %598, %v576
    %v600 = vpop.permute.xlu0 %599
    %v601 = vperm.slane %v85, 2
    %v602 = vlaneseq
    %v603 = vshrl.u32 %v602, 7
    %605 = vset.pattern.permute.xlu0 %v603
    %606 = vperm.xlu0 %605, %v601
    %v607 = vpop.permute.xlu0 %606
    %v608 = vlaneseq
    %v609 = vshrl.u32 %v608, 7
    %v610 = vadd.s32 %v609, 8
    %611 = vset.pattern.permute.xlu0 %v610
    %612 = vperm.xlu0 %611, %v601
    %v613 = vpop.permute.xlu0 %612
    %v614 = vlaneseq
    %v615 = vshrl.u32 %v614, 7
    %v616 = vadd.s32 %v615, 16
    %617 = vset.pattern.permute.xlu0 %v616
    %618 = vperm.xlu0 %617, %v601
    %v619 = vpop.permute.xlu0 %618
    %v620 = vlaneseq
    %v621 = vshrl.u32 %v620, 7
    %v622 = vadd.s32 %v621, 24
    %623 = vset.pattern.permute.xlu0 %v622
    %624 = vperm.xlu0 %623, %v601
    %v625 = vpop.permute.xlu0 %624
    %v626 = vperm.slane %v85, 3
    %v627 = vlaneseq
    %v628 = vshrl.u32 %v627, 7
    %630 = vset.pattern.permute.xlu0 %v628
    %631 = vperm.xlu0 %630, %v626
    %v632 = vpop.permute.xlu0 %631
    %v633 = vlaneseq
    %v634 = vshrl.u32 %v633, 7
    %v635 = vadd.s32 %v634, 8
    %636 = vset.pattern.permute.xlu0 %v635
    %637 = vperm.xlu0 %636, %v626
    %v638 = vpop.permute.xlu0 %637
    %v639 = vlaneseq
    %v640 = vshrl.u32 %v639, 7
    %v641 = vadd.s32 %v640, 16
    %642 = vset.pattern.permute.xlu0 %v641
    %643 = vperm.xlu0 %642, %v626
    %v644 = vpop.permute.xlu0 %643
    %v645 = vlaneseq
    %v646 = vshrl.u32 %v645, 7
    %v647 = vadd.s32 %v646, 24
    %648 = vset.pattern.permute.xlu0 %v647
    %649 = vperm.xlu0 %648, %v626
    %v650 = vpop.permute.xlu0 %649
    %v651 = vperm.slane %v85, 4
    %v652 = vlaneseq
    %v653 = vshrl.u32 %v652, 7
    %655 = vset.pattern.permute.xlu0 %v653
    %656 = vperm.xlu0 %655, %v651
    %v657 = vpop.permute.xlu0 %656
    %v658 = vlaneseq
    %v659 = vshrl.u32 %v658, 7
    %v660 = vadd.s32 %v659, 8
    %661 = vset.pattern.permute.xlu0 %v660
    %662 = vperm.xlu0 %661, %v651
    %v663 = vpop.permute.xlu0 %662
    %v664 = vlaneseq
    %v665 = vshrl.u32 %v664, 7
    %v666 = vadd.s32 %v665, 16
    %667 = vset.pattern.permute.xlu0 %v666
    %668 = vperm.xlu0 %667, %v651
    %v669 = vpop.permute.xlu0 %668
    %v670 = vlaneseq
    %v671 = vshrl.u32 %v670, 7
    %v672 = vadd.s32 %v671, 24
    %673 = vset.pattern.permute.xlu0 %v672
    %674 = vperm.xlu0 %673, %v651
    %v675 = vpop.permute.xlu0 %674
    %v676 = vperm.slane %v85, 5
    %v677 = vlaneseq
    %v678 = vshrl.u32 %v677, 7
    %680 = vset.pattern.permute.xlu0 %v678
    %681 = vperm.xlu0 %680, %v676
    %v682 = vpop.permute.xlu0 %681
    %v683 = vlaneseq
    %v684 = vshrl.u32 %v683, 7
    %v685 = vadd.s32 %v684, 8
    %686 = vset.pattern.permute.xlu0 %v685
    %687 = vperm.xlu0 %686, %v676
    %v688 = vpop.permute.xlu0 %687
    %v689 = vlaneseq
    %v690 = vshrl.u32 %v689, 7
    %v691 = vadd.s32 %v690, 16
    %692 = vset.pattern.permute.xlu0 %v691
    %693 = vperm.xlu0 %692, %v676
    %v694 = vpop.permute.xlu0 %693
    %v695 = vlaneseq
    %v696 = vshrl.u32 %v695, 7
    %v697 = vadd.s32 %v696, 24
    %698 = vset.pattern.permute.xlu0 %v697
    %699 = vperm.xlu0 %698, %v676
    %v700 = vpop.permute.xlu0 %699
    %v701 = vperm.slane %v85, 6
    %v702 = vlaneseq
    %v703 = vshrl.u32 %v702, 7
    %705 = vset.pattern.permute.xlu0 %v703
    %706 = vperm.xlu0 %705, %v701
    %v707 = vpop.permute.xlu0 %706
    %v708 = vlaneseq
    %v709 = vshrl.u32 %v708, 7
    %v710 = vadd.s32 %v709, 8
    %711 = vset.pattern.permute.xlu0 %v710
    %712 = vperm.xlu0 %711, %v701
    %v713 = vpop.permute.xlu0 %712
    %v714 = vlaneseq
    %v715 = vshrl.u32 %v714, 7
    %v716 = vadd.s32 %v715, 16
    %717 = vset.pattern.permute.xlu0 %v716
    %718 = vperm.xlu0 %717, %v701
    %v719 = vpop.permute.xlu0 %718
    %v720 = vlaneseq
    %v721 = vshrl.u32 %v720, 7
    %v722 = vadd.s32 %v721, 24
    %723 = vset.pattern.permute.xlu0 %v722
    %724 = vperm.xlu0 %723, %v701
    %v725 = vpop.permute.xlu0 %724
    %v726 = vperm.slane %v85, 7
    %v727 = vlaneseq
    %v728 = vshrl.u32 %v727, 7
    %730 = vset.pattern.permute.xlu0 %v728
    %731 = vperm.xlu0 %730, %v726
    %v732 = vpop.permute.xlu0 %731
    %v733 = vlaneseq
    %v734 = vshrl.u32 %v733, 7
    %v735 = vadd.s32 %v734, 8
    %736 = vset.pattern.permute.xlu0 %v735
    %737 = vperm.xlu0 %736, %v726
    %v738 = vpop.permute.xlu0 %737
    %v739 = vlaneseq
    %v740 = vshrl.u32 %v739, 7
    %v741 = vadd.s32 %v740, 16
    %742 = vset.pattern.permute.xlu0 %v741
    %743 = vperm.xlu0 %742, %v726
    %v744 = vpop.permute.xlu0 %743
    %v745 = vlaneseq
    %v746 = vshrl.u32 %v745, 7
    %v747 = vadd.s32 %v746, 24
    %748 = vset.pattern.permute.xlu0 %v747
    %749 = vperm.xlu0 %748, %v726
    %v750 = vpop.permute.xlu0 %749
    %v751 = vperm.slane %v86, 0
    %v752 = vlaneseq
    %v753 = vshrl.u32 %v752, 7
    %755 = vset.pattern.permute.xlu0 %v753
    %756 = vperm.xlu0 %755, %v751
    %v757 = vpop.permute.xlu0 %756
    %v758 = vlaneseq
    %v759 = vshrl.u32 %v758, 7
    %v760 = vadd.s32 %v759, 8
    %761 = vset.pattern.permute.xlu0 %v760
    %762 = vperm.xlu0 %761, %v751
    %v763 = vpop.permute.xlu0 %762
    %v764 = vlaneseq
    %v765 = vshrl.u32 %v764, 7
    %v766 = vadd.s32 %v765, 16
    %767 = vset.pattern.permute.xlu0 %v766
    %768 = vperm.xlu0 %767, %v751
    %v769 = vpop.permute.xlu0 %768
    %v770 = vlaneseq
    %v771 = vshrl.u32 %v770, 7
    %v772 = vadd.s32 %v771, 24
    %773 = vset.pattern.permute.xlu0 %v772
    %774 = vperm.xlu0 %773, %v751
    %v775 = vpop.permute.xlu0 %774
    %v776 = vperm.slane %v86, 1
    %v777 = vlaneseq
    %v778 = vshrl.u32 %v777, 7
    %780 = vset.pattern.permute.xlu0 %v778
    %781 = vperm.xlu0 %780, %v776
    %v782 = vpop.permute.xlu0 %781
    %v783 = vlaneseq
    %v784 = vshrl.u32 %v783, 7
    %v785 = vadd.s32 %v784, 8
    %786 = vset.pattern.permute.xlu0 %v785
    %787 = vperm.xlu0 %786, %v776
    %v788 = vpop.permute.xlu0 %787
    %v789 = vlaneseq
    %v790 = vshrl.u32 %v789, 7
    %v791 = vadd.s32 %v790, 16
    %792 = vset.pattern.permute.xlu0 %v791
    %793 = vperm.xlu0 %792, %v776
    %v794 = vpop.permute.xlu0 %793
    %v795 = vlaneseq
    %v796 = vshrl.u32 %v795, 7
    %v797 = vadd.s32 %v796, 24
    %798 = vset.pattern.permute.xlu0 %v797
    %799 = vperm.xlu0 %798, %v776
    %v800 = vpop.permute.xlu0 %799
    %v801 = vperm.slane %v86, 2
    %v802 = vlaneseq
    %v803 = vshrl.u32 %v802, 7
    %805 = vset.pattern.permute.xlu0 %v803
    %806 = vperm.xlu0 %805, %v801
    %v807 = vpop.permute.xlu0 %806
    %v808 = vlaneseq
    %v809 = vshrl.u32 %v808, 7
    %v810 = vadd.s32 %v809, 8
    %811 = vset.pattern.permute.xlu0 %v810
    %812 = vperm.xlu0 %811, %v801
    %v813 = vpop.permute.xlu0 %812
    %v814 = vlaneseq
    %v815 = vshrl.u32 %v814, 7
    %v816 = vadd.s32 %v815, 16
    %817 = vset.pattern.permute.xlu0 %v816
    %818 = vperm.xlu0 %817, %v801
    %v819 = vpop.permute.xlu0 %818
    %v820 = vlaneseq
    %v821 = vshrl.u32 %v820, 7
    %v822 = vadd.s32 %v821, 24
    %823 = vset.pattern.permute.xlu0 %v822
    %824 = vperm.xlu0 %823, %v801
    %v825 = vpop.permute.xlu0 %824
    %v826 = vperm.slane %v86, 3
    %v827 = vlaneseq
    %v828 = vshrl.u32 %v827, 7
    %830 = vset.pattern.permute.xlu0 %v828
    %831 = vperm.xlu0 %830, %v826
    %v832 = vpop.permute.xlu0 %831
    %v833 = vlaneseq
    %v834 = vshrl.u32 %v833, 7
    %v835 = vadd.s32 %v834, 8
    %836 = vset.pattern.permute.xlu0 %v835
    %837 = vperm.xlu0 %836, %v826
    %v838 = vpop.permute.xlu0 %837
    %v839 = vlaneseq
    %v840 = vshrl.u32 %v839, 7
    %v841 = vadd.s32 %v840, 16
    %842 = vset.pattern.permute.xlu0 %v841
    %843 = vperm.xlu0 %842, %v826
    %v844 = vpop.permute.xlu0 %843
    %v845 = vlaneseq
    %v846 = vshrl.u32 %v845, 7
    %v847 = vadd.s32 %v846, 24
    %848 = vset.pattern.permute.xlu0 %v847
    %849 = vperm.xlu0 %848, %v826
    %v850 = vpop.permute.xlu0 %849
    %v851 = vperm.slane %v86, 4
    %v852 = vlaneseq
    %v853 = vshrl.u32 %v852, 7
    %855 = vset.pattern.permute.xlu0 %v853
    %856 = vperm.xlu0 %855, %v851
    %v857 = vpop.permute.xlu0 %856
    %v858 = vlaneseq
    %v859 = vshrl.u32 %v858, 7
    %v860 = vadd.s32 %v859, 8
    %861 = vset.pattern.permute.xlu0 %v860
    %862 = vperm.xlu0 %861, %v851
    %v863 = vpop.permute.xlu0 %862
    %v864 = vlaneseq
    %v865 = vshrl.u32 %v864, 7
    %v866 = vadd.s32 %v865, 16
    %867 = vset.pattern.permute.xlu0 %v866
    %868 = vperm.xlu0 %867, %v851
    %v869 = vpop.permute.xlu0 %868
    %v870 = vlaneseq
    %v871 = vshrl.u32 %v870, 7
    %v872 = vadd.s32 %v871, 24
    %873 = vset.pattern.permute.xlu0 %v872
    %874 = vperm.xlu0 %873, %v851
    %v875 = vpop.permute.xlu0 %874
    %v876 = vperm.slane %v86, 5
    %v877 = vlaneseq
    %v878 = vshrl.u32 %v877, 7
    %880 = vset.pattern.permute.xlu0 %v878
    %881 = vperm.xlu0 %880, %v876
    %v882 = vpop.permute.xlu0 %881
    %v883 = vlaneseq
    %v884 = vshrl.u32 %v883, 7
    %v885 = vadd.s32 %v884, 8
    %886 = vset.pattern.permute.xlu0 %v885
    %887 = vperm.xlu0 %886, %v876
    %v888 = vpop.permute.xlu0 %887
    %v889 = vlaneseq
    %v890 = vshrl.u32 %v889, 7
    %v891 = vadd.s32 %v890, 16
    %892 = vset.pattern.permute.xlu0 %v891
    %893 = vperm.xlu0 %892, %v876
    %v894 = vpop.permute.xlu0 %893
    %v895 = vlaneseq
    %v896 = vshrl.u32 %v895, 7
    %v897 = vadd.s32 %v896, 24
    %898 = vset.pattern.permute.xlu0 %v897
    %899 = vperm.xlu0 %898, %v876
    %v900 = vpop.permute.xlu0 %899
    %v901 = vperm.slane %v86, 6
    %v902 = vlaneseq
    %v903 = vshrl.u32 %v902, 7
    %905 = vset.pattern.permute.xlu0 %v903
    %906 = vperm.xlu0 %905, %v901
    %v907 = vpop.permute.xlu0 %906
    %v908 = vlaneseq
    %v909 = vshrl.u32 %v908, 7
    %v910 = vadd.s32 %v909, 8
    %911 = vset.pattern.permute.xlu0 %v910
    %912 = vperm.xlu0 %911, %v901
    %v913 = vpop.permute.xlu0 %912
    %v914 = vlaneseq
    %v915 = vshrl.u32 %v914, 7
    %v916 = vadd.s32 %v915, 16
    %917 = vset.pattern.permute.xlu0 %v916
    %918 = vperm.xlu0 %917, %v901
    %v919 = vpop.permute.xlu0 %918
    %v920 = vlaneseq
    %v921 = vshrl.u32 %v920, 7
    %v922 = vadd.s32 %v921, 24
    %923 = vset.pattern.permute.xlu0 %v922
    %924 = vperm.xlu0 %923, %v901
    %v925 = vpop.permute.xlu0 %924
    %v926 = vperm.slane %v86, 7
    %v927 = vlaneseq
    %v928 = vshrl.u32 %v927, 7
    %930 = vset.pattern.permute.xlu0 %v928
    %931 = vperm.xlu0 %930, %v926
    %v932 = vpop.permute.xlu0 %931
    %v933 = vlaneseq
    %v934 = vshrl.u32 %v933, 7
    %v935 = vadd.s32 %v934, 8
    %936 = vset.pattern.permute.xlu0 %v935
    %937 = vperm.xlu0 %936, %v926
    %v938 = vpop.permute.xlu0 %937
    %v939 = vlaneseq
    %v940 = vshrl.u32 %v939, 7
    %v941 = vadd.s32 %v940, 16
    %942 = vset.pattern.permute.xlu0 %v941
    %943 = vperm.xlu0 %942, %v926
    %v944 = vpop.permute.xlu0 %943
    %v945 = vlaneseq
    %v946 = vshrl.u32 %v945, 7
    %v947 = vadd.s32 %v946, 24
    %948 = vset.pattern.permute.xlu0 %v947
    %949 = vperm.xlu0 %948, %v926
    %v950 = vpop.permute.xlu0 %949
    %v951 = vsel %vm487, %v557, 0.0
    %v952 = vsel %vm488, %v563, 0.0
    %v953 = vsel %vm489, %v569, 0.0
    %v954 = vsel %vm490, %v575, 0.0
    %v955 = vsel %vm491, %v582, 0.0
    %v956 = vsel %vm492, %v588, 0.0
    %v957 = vsel %vm493, %v594, 0.0
    %v958 = vsel %vm494, %v600, 0.0
    %v959 = vsel %vm495, %v607, 0.0
    %v960 = vsel %vm496, %v613, 0.0
    %v961 = vsel %vm497, %v619, 0.0
    %v962 = vsel %vm498, %v625, 0.0
    %v963 = vsel %vm499, %v632, 0.0
    %v964 = vsel %vm500, %v638, 0.0
    %v965 = vsel %vm501, %v644, 0.0
    %v966 = vsel %vm502, %v650, 0.0
    %v967 = vsel %vm503, %v657, 0.0
    %v968 = vsel %vm504, %v663, 0.0
    %v969 = vsel %vm505, %v669, 0.0
    %v970 = vsel %vm506, %v675, 0.0
    %v971 = vsel %vm507, %v682, 0.0
    %v972 = vsel %vm508, %v688, 0.0
    %v973 = vsel %vm509, %v694, 0.0
    %v974 = vsel %vm510, %v700, 0.0
    %v975 = vsel %vm511, %v707, 0.0
    %v976 = vsel %vm512, %v713, 0.0
    %v977 = vsel %vm513, %v719, 0.0
    %v978 = vsel %vm514, %v725, 0.0
    %v979 = vsel %vm515, %v732, 0.0
    %v980 = vsel %vm516, %v738, 0.0
    %v981 = vsel %vm517, %v744, 0.0
    %v982 = vsel %vm518, %v750, 0.0
    %v983 = vsel %vm519, %v757, 0.0
    %v984 = vsel %vm520, %v763, 0.0
    %v985 = vsel %vm521, %v769, 0.0
    %v986 = vsel %vm522, %v775, 0.0
    %v987 = vsel %vm523, %v782, 0.0
    %v988 = vsel %vm524, %v788, 0.0
    %v989 = vsel %vm525, %v794, 0.0
    %v990 = vsel %vm526, %v800, 0.0
    %v991 = vsel %vm527, %v807, 0.0
    %v992 = vsel %vm528, %v813, 0.0
    %v993 = vsel %vm529, %v819, 0.0
    %v994 = vsel %vm530, %v825, 0.0
    %v995 = vsel %vm531, %v832, 0.0
    %v996 = vsel %vm532, %v838, 0.0
    %v997 = vsel %vm533, %v844, 0.0
    %v998 = vsel %vm534, %v850, 0.0
    %v999 = vsel %vm535, %v857, 0.0
    %v1000 = vsel %vm536, %v863, 0.0
    %v1001 = vsel %vm537, %v869, 0.0
    %v1002 = vsel %vm538, %v875, 0.0
    %v1003 = vsel %vm539, %v882, 0.0
    %v1004 = vsel %vm540, %v888, 0.0
    %v1005 = vsel %vm541, %v894, 0.0
    %v1006 = vsel %vm542, %v900, 0.0
    %v1007 = vsel %vm543, %v907, 0.0
    %v1008 = vsel %vm544, %v913, 0.0
    %v1009 = vsel %vm545, %v919, 0.0
    %v1010 = vsel %vm546, %v925, 0.0
    %v1011 = vsel %vm547, %v932, 0.0
    %v1012 = vsel %vm548, %v938, 0.0
    %v1013 = vsel %vm549, %v944, 0.0
    %v1014 = vsel %vm550, %v950, 0.0
    %v1015 = vadd.f32 %v951, %v952
    %v1016 = vadd.f32 %v1015, %v953
    %v1017 = vadd.f32 %v1016, %v954
    %v1018 = vrot.slane %v1017, 4
    %v1019 = vadd.f32 %v1017, %v1018
    %v1020 = vrot.slane %v1019, 2
    %v1021 = vadd.f32 %v1019, %v1020
    %v1022 = vrot.slane %v1021, 1
    %v1023 = vadd.f32 %v1021, %v1022
    %v1024 = vadd.f32 %v955, %v956
    %v1025 = vadd.f32 %v1024, %v957
    %v1026 = vadd.f32 %v1025, %v958
    %v1027 = vrot.slane %v1026, 4
    %v1028 = vadd.f32 %v1026, %v1027
    %v1029 = vrot.slane %v1028, 2
    %v1030 = vadd.f32 %v1028, %v1029
    %v1031 = vrot.slane %v1030, 1
    %v1032 = vadd.f32 %v1030, %v1031
    %v1033 = vadd.f32 %v959, %v960
    %v1034 = vadd.f32 %v1033, %v961
    %v1035 = vadd.f32 %v1034, %v962
    %v1036 = vrot.slane %v1035, 4
    %v1037 = vadd.f32 %v1035, %v1036
    %v1038 = vrot.slane %v1037, 2
    %v1039 = vadd.f32 %v1037, %v1038
    %v1040 = vrot.slane %v1039, 1
    %v1041 = vadd.f32 %v1039, %v1040
    %v1042 = vadd.f32 %v963, %v964
    %v1043 = vadd.f32 %v1042, %v965
    %v1044 = vadd.f32 %v1043, %v966
    %v1045 = vrot.slane %v1044, 4
    %v1046 = vadd.f32 %v1044, %v1045
    %v1047 = vrot.slane %v1046, 2
    %v1048 = vadd.f32 %v1046, %v1047
    %v1049 = vrot.slane %v1048, 1
    %v1050 = vadd.f32 %v1048, %v1049
    %v1051 = vadd.f32 %v967, %v968
    %v1052 = vadd.f32 %v1051, %v969
    %v1053 = vadd.f32 %v1052, %v970
    %v1054 = vrot.slane %v1053, 4
    %v1055 = vadd.f32 %v1053, %v1054
    %v1056 = vrot.slane %v1055, 2
    %v1057 = vadd.f32 %v1055, %v1056
    %v1058 = vrot.slane %v1057, 1
    %v1059 = vadd.f32 %v1057, %v1058
    %v1060 = vadd.f32 %v971, %v972
    %v1061 = vadd.f32 %v1060, %v973
    %v1062 = vadd.f32 %v1061, %v974
    %v1063 = vrot.slane %v1062, 4
    %v1064 = vadd.f32 %v1062, %v1063
    %v1065 = vrot.slane %v1064, 2
    %v1066 = vadd.f32 %v1064, %v1065
    %v1067 = vrot.slane %v1066, 1
    %v1068 = vadd.f32 %v1066, %v1067
    %v1069 = vadd.f32 %v975, %v976
    %v1070 = vadd.f32 %v1069, %v977
    %v1071 = vadd.f32 %v1070, %v978
    %v1072 = vrot.slane %v1071, 4
    %v1073 = vadd.f32 %v1071, %v1072
    %v1074 = vrot.slane %v1073, 2
    %v1075 = vadd.f32 %v1073, %v1074
    %v1076 = vrot.slane %v1075, 1
    %v1077 = vadd.f32 %v1075, %v1076
    %v1078 = vadd.f32 %v979, %v980
    %v1079 = vadd.f32 %v1078, %v981
    %v1080 = vadd.f32 %v1079, %v982
    %v1081 = vrot.slane %v1080, 4
    %v1082 = vadd.f32 %v1080, %v1081
    %v1083 = vrot.slane %v1082, 2
    %v1084 = vadd.f32 %v1082, %v1083
    %v1085 = vrot.slane %v1084, 1
    %v1086 = vadd.f32 %v1084, %v1085
    %v1087 = vadd.f32 %v983, %v984
    %v1088 = vadd.f32 %v1087, %v985
    %v1089 = vadd.f32 %v1088, %v986
    %v1090 = vrot.slane %v1089, 4
    %v1091 = vadd.f32 %v1089, %v1090
    %v1092 = vrot.slane %v1091, 2
    %v1093 = vadd.f32 %v1091, %v1092
    %v1094 = vrot.slane %v1093, 1
    %v1095 = vadd.f32 %v1093, %v1094
    %v1096 = vadd.f32 %v987, %v988
    %v1097 = vadd.f32 %v1096, %v989
    %v1098 = vadd.f32 %v1097, %v990
    %v1099 = vrot.slane %v1098, 4
    %v1100 = vadd.f32 %v1098, %v1099
    %v1101 = vrot.slane %v1100, 2
    %v1102 = vadd.f32 %v1100, %v1101
    %v1103 = vrot.slane %v1102, 1
    %v1104 = vadd.f32 %v1102, %v1103
    %v1105 = vadd.f32 %v991, %v992
    %v1106 = vadd.f32 %v1105, %v993
    %v1107 = vadd.f32 %v1106, %v994
    %v1108 = vrot.slane %v1107, 4
    %v1109 = vadd.f32 %v1107, %v1108
    %v1110 = vrot.slane %v1109, 2
    %v1111 = vadd.f32 %v1109, %v1110
    %v1112 = vrot.slane %v1111, 1
    %v1113 = vadd.f32 %v1111, %v1112
    %v1114 = vadd.f32 %v995, %v996
    %v1115 = vadd.f32 %v1114, %v997
    %v1116 = vadd.f32 %v1115, %v998
    %v1117 = vrot.slane %v1116, 4
    %v1118 = vadd.f32 %v1116, %v1117
    %v1119 = vrot.slane %v1118, 2
    %v1120 = vadd.f32 %v1118, %v1119
    %v1121 = vrot.slane %v1120, 1
    %v1122 = vadd.f32 %v1120, %v1121
    %v1123 = vadd.f32 %v999, %v1000
    %v1124 = vadd.f32 %v1123, %v1001
    %v1125 = vadd.f32 %v1124, %v1002
    %v1126 = vrot.slane %v1125, 4
    %v1127 = vadd.f32 %v1125, %v1126
    %v1128 = vrot.slane %v1127, 2
    %v1129 = vadd.f32 %v1127, %v1128
    %v1130 = vrot.slane %v1129, 1
    %v1131 = vadd.f32 %v1129, %v1130
    %v1132 = vadd.f32 %v1003, %v1004
    %v1133 = vadd.f32 %v1132, %v1005
    %v1134 = vadd.f32 %v1133, %v1006
    %v1135 = vrot.slane %v1134, 4
    %v1136 = vadd.f32 %v1134, %v1135
    %v1137 = vrot.slane %v1136, 2
    %v1138 = vadd.f32 %v1136, %v1137
    %v1139 = vrot.slane %v1138, 1
    %v1140 = vadd.f32 %v1138, %v1139
    %v1141 = vadd.f32 %v1007, %v1008
    %v1142 = vadd.f32 %v1141, %v1009
    %v1143 = vadd.f32 %v1142, %v1010
    %v1144 = vrot.slane %v1143, 4
    %v1145 = vadd.f32 %v1143, %v1144
    %v1146 = vrot.slane %v1145, 2
    %v1147 = vadd.f32 %v1145, %v1146
    %v1148 = vrot.slane %v1147, 1
    %v1149 = vadd.f32 %v1147, %v1148
    %v1150 = vadd.f32 %v1011, %v1012
    %v1151 = vadd.f32 %v1150, %v1013
    %v1152 = vadd.f32 %v1151, %v1014
    %v1153 = vrot.slane %v1152, 4
    %v1154 = vadd.f32 %v1152, %v1153
    %v1155 = vrot.slane %v1154, 2
    %v1156 = vadd.f32 %v1154, %v1155
    %v1157 = vrot.slane %v1156, 1
    %v1158 = vadd.f32 %v1156, %v1157
    %v1159 = vadd.f32 %v1023, 0.0
    %v1160 = vadd.f32 %v1032, 0.0
    %v1161 = vadd.f32 %v1041, 0.0
    %v1162 = vadd.f32 %v1050, 0.0
    %v1163 = vadd.f32 %v1059, 0.0
    %v1164 = vadd.f32 %v1068, 0.0
    %v1165 = vadd.f32 %v1077, 0.0
    %v1166 = vadd.f32 %v1086, 0.0
    %v1167 = vadd.f32 %v1095, 0.0
    %v1168 = vadd.f32 %v1104, 0.0
    %v1169 = vadd.f32 %v1113, 0.0
    %v1170 = vadd.f32 %v1122, 0.0
    %v1171 = vadd.f32 %v1131, 0.0
    %v1172 = vadd.f32 %v1140, 0.0
    %v1173 = vadd.f32 %v1149, 0.0
    %v1174 = vadd.f32 %v1158, 0.0
    %v1175 = vlaneseq
    %v1176 = vshrl.u32 %v1175, 7
    %v1177 = vadd.s32 %v1176, 32
    %1178 = vset.pattern.permute.xlu0 %v1177
    %1179 = vperm.xlu0 %1178, %v87
    %v1180 = vpop.permute.xlu0 %1179
    %v1181 = vlaneseq
    %v1182 = vshrl.u32 %v1181, 7
    %v1183 = vadd.s32 %v1182, 40
    %1184 = vset.pattern.permute.xlu0 %v1183
    %1185 = vperm.xlu0 %1184, %v87
    %v1186 = vpop.permute.xlu0 %1185
    %v1187 = vlaneseq
    %v1188 = vshrl.u32 %v1187, 7
    %v1189 = vadd.s32 %v1188, 48
    %1190 = vset.pattern.permute.xlu0 %v1189
    %1191 = vperm.xlu0 %1190, %v87
    %v1192 = vpop.permute.xlu0 %1191
    %v1193 = vlaneseq
    %v1194 = vshrl.u32 %v1193, 7
    %v1195 = vadd.s32 %v1194, 56
    %1196 = vset.pattern.permute.xlu0 %v1195
    %1197 = vperm.xlu0 %1196, %v87
    %v1198 = vpop.permute.xlu0 %1197
    %v1199 = vlaneseq
    %v1200 = vshrl.u32 %v1199, 7
    %v1201 = vadd.s32 %v1200, 32
    %1202 = vset.pattern.permute.xlu0 %v1201
    %1203 = vperm.xlu0 %1202, %v112
    %v1204 = vpop.permute.xlu0 %1203
    %v1205 = vlaneseq
    %v1206 = vshrl.u32 %v1205, 7
    %v1207 = vadd.s32 %v1206, 40
    %1208 = vset.pattern.permute.xlu0 %v1207
    %1209 = vperm.xlu0 %1208, %v112
    %v1210 = vpop.permute.xlu0 %1209
    %v1211 = vlaneseq
    %v1212 = vshrl.u32 %v1211, 7
    %v1213 = vadd.s32 %v1212, 48
    %1214 = vset.pattern.permute.xlu0 %v1213
    %1215 = vperm.xlu0 %1214, %v112
    %v1216 = vpop.permute.xlu0 %1215
    %v1217 = vlaneseq
    %v1218 = vshrl.u32 %v1217, 7
    %v1219 = vadd.s32 %v1218, 56
    %1220 = vset.pattern.permute.xlu0 %v1219
    %1221 = vperm.xlu0 %1220, %v112
    %v1222 = vpop.permute.xlu0 %1221
    %v1223 = vlaneseq
    %v1224 = vshrl.u32 %v1223, 7
    %v1225 = vadd.s32 %v1224, 32
    %1226 = vset.pattern.permute.xlu0 %v1225
    %1227 = vperm.xlu0 %1226, %v137
    %v1228 = vpop.permute.xlu0 %1227
    %v1229 = vlaneseq
    %v1230 = vshrl.u32 %v1229, 7
    %v1231 = vadd.s32 %v1230, 40
    %1232 = vset.pattern.permute.xlu0 %v1231
    %1233 = vperm.xlu0 %1232, %v137
    %v1234 = vpop.permute.xlu0 %1233
    %v1235 = vlaneseq
    %v1236 = vshrl.u32 %v1235, 7
    %v1237 = vadd.s32 %v1236, 48
    %1238 = vset.pattern.permute.xlu0 %v1237
    %1239 = vperm.xlu0 %1238, %v137
    %v1240 = vpop.permute.xlu0 %1239
    %v1241 = vlaneseq
    %v1242 = vshrl.u32 %v1241, 7
    %v1243 = vadd.s32 %v1242, 56
    %1244 = vset.pattern.permute.xlu0 %v1243
    %1245 = vperm.xlu0 %1244, %v137
    %v1246 = vpop.permute.xlu0 %1245
    %v1247 = vlaneseq
    %v1248 = vshrl.u32 %v1247, 7
    %v1249 = vadd.s32 %v1248, 32
    %1250 = vset.pattern.permute.xlu0 %v1249
    %1251 = vperm.xlu0 %1250, %v162
    %v1252 = vpop.permute.xlu0 %1251
    %v1253 = vlaneseq
    %v1254 = vshrl.u32 %v1253, 7
    %v1255 = vadd.s32 %v1254, 40
    %1256 = vset.pattern.permute.xlu0 %v1255
    %1257 = vperm.xlu0 %1256, %v162
    %v1258 = vpop.permute.xlu0 %1257
    %v1259 = vlaneseq
    %v1260 = vshrl.u32 %v1259, 7
    %v1261 = vadd.s32 %v1260, 48
    %1262 = vset.pattern.permute.xlu0 %v1261
    %1263 = vperm.xlu0 %1262, %v162
    %v1264 = vpop.permute.xlu0 %1263
    %v1265 = vlaneseq
    %v1266 = vshrl.u32 %v1265, 7
    %v1267 = vadd.s32 %v1266, 56
    %1268 = vset.pattern.permute.xlu0 %v1267
    %1269 = vperm.xlu0 %1268, %v162
    %v1270 = vpop.permute.xlu0 %1269
    %v1271 = vlaneseq
    %v1272 = vshrl.u32 %v1271, 7
    %v1273 = vadd.s32 %v1272, 32
    %1274 = vset.pattern.permute.xlu0 %v1273
    %1275 = vperm.xlu0 %1274, %v187
    %v1276 = vpop.permute.xlu0 %1275
    %v1277 = vlaneseq
    %v1278 = vshrl.u32 %v1277, 7
    %v1279 = vadd.s32 %v1278, 40
    %1280 = vset.pattern.permute.xlu0 %v1279
    %1281 = vperm.xlu0 %1280, %v187
    %v1282 = vpop.permute.xlu0 %1281
    %v1283 = vlaneseq
    %v1284 = vshrl.u32 %v1283, 7
    %v1285 = vadd.s32 %v1284, 48
    %1286 = vset.pattern.permute.xlu0 %v1285
    %1287 = vperm.xlu0 %1286, %v187
    %v1288 = vpop.permute.xlu0 %1287
    %v1289 = vlaneseq
    %v1290 = vshrl.u32 %v1289, 7
    %v1291 = vadd.s32 %v1290, 56
    %1292 = vset.pattern.permute.xlu0 %v1291
    %1293 = vperm.xlu0 %1292, %v187
    %v1294 = vpop.permute.xlu0 %1293
    %v1295 = vlaneseq
    %v1296 = vshrl.u32 %v1295, 7
    %v1297 = vadd.s32 %v1296, 32
    %1298 = vset.pattern.permute.xlu0 %v1297
    %1299 = vperm.xlu0 %1298, %v212
    %v1300 = vpop.permute.xlu0 %1299
    %v1301 = vlaneseq
    %v1302 = vshrl.u32 %v1301, 7
    %v1303 = vadd.s32 %v1302, 40
    %1304 = vset.pattern.permute.xlu0 %v1303
    %1305 = vperm.xlu0 %1304, %v212
    %v1306 = vpop.permute.xlu0 %1305
    %v1307 = vlaneseq
    %v1308 = vshrl.u32 %v1307, 7
    %v1309 = vadd.s32 %v1308, 48
    %1310 = vset.pattern.permute.xlu0 %v1309
    %1311 = vperm.xlu0 %1310, %v212
    %v1312 = vpop.permute.xlu0 %1311
    %v1313 = vlaneseq
    %v1314 = vshrl.u32 %v1313, 7
    %v1315 = vadd.s32 %v1314, 56
    %1316 = vset.pattern.permute.xlu0 %v1315
    %1317 = vperm.xlu0 %1316, %v212
    %v1318 = vpop.permute.xlu0 %1317
    %v1319 = vlaneseq
    %v1320 = vshrl.u32 %v1319, 7
    %v1321 = vadd.s32 %v1320, 32
    %1322 = vset.pattern.permute.xlu0 %v1321
    %1323 = vperm.xlu0 %1322, %v237
    %v1324 = vpop.permute.xlu0 %1323
    %v1325 = vlaneseq
    %v1326 = vshrl.u32 %v1325, 7
    %v1327 = vadd.s32 %v1326, 40
    %1328 = vset.pattern.permute.xlu0 %v1327
    %1329 = vperm.xlu0 %1328, %v237
    %v1330 = vpop.permute.xlu0 %1329
    %v1331 = vlaneseq
    %v1332 = vshrl.u32 %v1331, 7
    %v1333 = vadd.s32 %v1332, 48
    %1334 = vset.pattern.permute.xlu0 %v1333
    %1335 = vperm.xlu0 %1334, %v237
    %v1336 = vpop.permute.xlu0 %1335
    %v1337 = vlaneseq
    %v1338 = vshrl.u32 %v1337, 7
    %v1339 = vadd.s32 %v1338, 56
    %1340 = vset.pattern.permute.xlu0 %v1339
    %1341 = vperm.xlu0 %1340, %v237
    %v1342 = vpop.permute.xlu0 %1341
    %v1343 = vlaneseq
    %v1344 = vshrl.u32 %v1343, 7
    %v1345 = vadd.s32 %v1344, 32
    %1346 = vset.pattern.permute.xlu0 %v1345
    %1347 = vperm.xlu0 %1346, %v262
    %v1348 = vpop.permute.xlu0 %1347
    %v1349 = vlaneseq
    %v1350 = vshrl.u32 %v1349, 7
    %v1351 = vadd.s32 %v1350, 40
    %1352 = vset.pattern.permute.xlu0 %v1351
    %1353 = vperm.xlu0 %1352, %v262
    %v1354 = vpop.permute.xlu0 %1353
    %v1355 = vlaneseq
    %v1356 = vshrl.u32 %v1355, 7
    %v1357 = vadd.s32 %v1356, 48
    %1358 = vset.pattern.permute.xlu0 %v1357
    %1359 = vperm.xlu0 %1358, %v262
    %v1360 = vpop.permute.xlu0 %1359
    %v1361 = vlaneseq
    %v1362 = vshrl.u32 %v1361, 7
    %v1363 = vadd.s32 %v1362, 56
    %1364 = vset.pattern.permute.xlu0 %v1363
    %1365 = vperm.xlu0 %1364, %v262
    %v1366 = vpop.permute.xlu0 %1365
    %v1367 = vlaneseq
    %v1368 = vshrl.u32 %v1367, 7
    %v1369 = vadd.s32 %v1368, 32
    %1370 = vset.pattern.permute.xlu0 %v1369
    %1371 = vperm.xlu0 %1370, %v287
    %v1372 = vpop.permute.xlu0 %1371
    %v1373 = vlaneseq
    %v1374 = vshrl.u32 %v1373, 7
    %v1375 = vadd.s32 %v1374, 40
    %1376 = vset.pattern.permute.xlu0 %v1375
    %1377 = vperm.xlu0 %1376, %v287
    %v1378 = vpop.permute.xlu0 %1377
    %v1379 = vlaneseq
    %v1380 = vshrl.u32 %v1379, 7
    %v1381 = vadd.s32 %v1380, 48
    %1382 = vset.pattern.permute.xlu0 %v1381
    %1383 = vperm.xlu0 %1382, %v287
    %v1384 = vpop.permute.xlu0 %1383
    %v1385 = vlaneseq
    %v1386 = vshrl.u32 %v1385, 7
    %v1387 = vadd.s32 %v1386, 56
    %1388 = vset.pattern.permute.xlu0 %v1387
    %1389 = vperm.xlu0 %1388, %v287
    %v1390 = vpop.permute.xlu0 %1389
    %v1391 = vlaneseq
    %v1392 = vshrl.u32 %v1391, 7
    %v1393 = vadd.s32 %v1392, 32
    %1394 = vset.pattern.permute.xlu0 %v1393
    %1395 = vperm.xlu0 %1394, %v312
    %v1396 = vpop.permute.xlu0 %1395
    %v1397 = vlaneseq
    %v1398 = vshrl.u32 %v1397, 7
    %v1399 = vadd.s32 %v1398, 40
    %1400 = vset.pattern.permute.xlu0 %v1399
    %1401 = vperm.xlu0 %1400, %v312
    %v1402 = vpop.permute.xlu0 %1401
    %v1403 = vlaneseq
    %v1404 = vshrl.u32 %v1403, 7
    %v1405 = vadd.s32 %v1404, 48
    %1406 = vset.pattern.permute.xlu0 %v1405
    %1407 = vperm.xlu0 %1406, %v312
    %v1408 = vpop.permute.xlu0 %1407
    %v1409 = vlaneseq
    %v1410 = vshrl.u32 %v1409, 7
    %v1411 = vadd.s32 %v1410, 56
    %1412 = vset.pattern.permute.xlu0 %v1411
    %1413 = vperm.xlu0 %1412, %v312
    %v1414 = vpop.permute.xlu0 %1413
    %v1415 = vlaneseq
    %v1416 = vshrl.u32 %v1415, 7
    %v1417 = vadd.s32 %v1416, 32
    %1418 = vset.pattern.permute.xlu0 %v1417
    %1419 = vperm.xlu0 %1418, %v337
    %v1420 = vpop.permute.xlu0 %1419
    %v1421 = vlaneseq
    %v1422 = vshrl.u32 %v1421, 7
    %v1423 = vadd.s32 %v1422, 40
    %1424 = vset.pattern.permute.xlu0 %v1423
    %1425 = vperm.xlu0 %1424, %v337
    %v1426 = vpop.permute.xlu0 %1425
    %v1427 = vlaneseq
    %v1428 = vshrl.u32 %v1427, 7
    %v1429 = vadd.s32 %v1428, 48
    %1430 = vset.pattern.permute.xlu0 %v1429
    %1431 = vperm.xlu0 %1430, %v337
    %v1432 = vpop.permute.xlu0 %1431
    %v1433 = vlaneseq
    %v1434 = vshrl.u32 %v1433, 7
    %v1435 = vadd.s32 %v1434, 56
    %1436 = vset.pattern.permute.xlu0 %v1435
    %1437 = vperm.xlu0 %1436, %v337
    %v1438 = vpop.permute.xlu0 %1437
    %v1439 = vlaneseq
    %v1440 = vshrl.u32 %v1439, 7
    %v1441 = vadd.s32 %v1440, 32
    %1442 = vset.pattern.permute.xlu0 %v1441
    %1443 = vperm.xlu0 %1442, %v362
    %v1444 = vpop.permute.xlu0 %1443
    %v1445 = vlaneseq
    %v1446 = vshrl.u32 %v1445, 7
    %v1447 = vadd.s32 %v1446, 40
    %1448 = vset.pattern.permute.xlu0 %v1447
    %1449 = vperm.xlu0 %1448, %v362
    %v1450 = vpop.permute.xlu0 %1449
    %v1451 = vlaneseq
    %v1452 = vshrl.u32 %v1451, 7
    %v1453 = vadd.s32 %v1452, 48
    %1454 = vset.pattern.permute.xlu0 %v1453
    %1455 = vperm.xlu0 %1454, %v362
    %v1456 = vpop.permute.xlu0 %1455
    %v1457 = vlaneseq
    %v1458 = vshrl.u32 %v1457, 7
    %v1459 = vadd.s32 %v1458, 56
    %1460 = vset.pattern.permute.xlu0 %v1459
    %1461 = vperm.xlu0 %1460, %v362
    %v1462 = vpop.permute.xlu0 %1461
    %v1463 = vlaneseq
    %v1464 = vshrl.u32 %v1463, 7
    %v1465 = vadd.s32 %v1464, 32
    %1466 = vset.pattern.permute.xlu0 %v1465
    %1467 = vperm.xlu0 %1466, %v387
    %v1468 = vpop.permute.xlu0 %1467
    %v1469 = vlaneseq
    %v1470 = vshrl.u32 %v1469, 7
    %v1471 = vadd.s32 %v1470, 40
    %1472 = vset.pattern.permute.xlu0 %v1471
    %1473 = vperm.xlu0 %1472, %v387
    %v1474 = vpop.permute.xlu0 %1473
    %v1475 = vlaneseq
    %v1476 = vshrl.u32 %v1475, 7
    %v1477 = vadd.s32 %v1476, 48
    %1478 = vset.pattern.permute.xlu0 %v1477
    %1479 = vperm.xlu0 %1478, %v387
    %v1480 = vpop.permute.xlu0 %1479
    %v1481 = vlaneseq
    %v1482 = vshrl.u32 %v1481, 7
    %v1483 = vadd.s32 %v1482, 56
    %1484 = vset.pattern.permute.xlu0 %v1483
    %1485 = vperm.xlu0 %1484, %v387
    %v1486 = vpop.permute.xlu0 %1485
    %v1487 = vlaneseq
    %v1488 = vshrl.u32 %v1487, 7
    %v1489 = vadd.s32 %v1488, 32
    %1490 = vset.pattern.permute.xlu0 %v1489
    %1491 = vperm.xlu0 %1490, %v412
    %v1492 = vpop.permute.xlu0 %1491
    %v1493 = vlaneseq
    %v1494 = vshrl.u32 %v1493, 7
    %v1495 = vadd.s32 %v1494, 40
    %1496 = vset.pattern.permute.xlu0 %v1495
    %1497 = vperm.xlu0 %1496, %v412
    %v1498 = vpop.permute.xlu0 %1497
    %v1499 = vlaneseq
    %v1500 = vshrl.u32 %v1499, 7
    %v1501 = vadd.s32 %v1500, 48
    %1502 = vset.pattern.permute.xlu0 %v1501
    %1503 = vperm.xlu0 %1502, %v412
    %v1504 = vpop.permute.xlu0 %1503
    %v1505 = vlaneseq
    %v1506 = vshrl.u32 %v1505, 7
    %v1507 = vadd.s32 %v1506, 56
    %1508 = vset.pattern.permute.xlu0 %v1507
    %1509 = vperm.xlu0 %1508, %v412
    %v1510 = vpop.permute.xlu0 %1509
    %v1511 = vlaneseq
    %v1512 = vshrl.u32 %v1511, 7
    %v1513 = vadd.s32 %v1512, 32
    %1514 = vset.pattern.permute.xlu0 %v1513
    %1515 = vperm.xlu0 %1514, %v437
    %v1516 = vpop.permute.xlu0 %1515
    %v1517 = vlaneseq
    %v1518 = vshrl.u32 %v1517, 7
    %v1519 = vadd.s32 %v1518, 40
    %1520 = vset.pattern.permute.xlu0 %v1519
    %1521 = vperm.xlu0 %1520, %v437
    %v1522 = vpop.permute.xlu0 %1521
    %v1523 = vlaneseq
    %v1524 = vshrl.u32 %v1523, 7
    %v1525 = vadd.s32 %v1524, 48
    %1526 = vset.pattern.permute.xlu0 %v1525
    %1527 = vperm.xlu0 %1526, %v437
    %v1528 = vpop.permute.xlu0 %1527
    %v1529 = vlaneseq
    %v1530 = vshrl.u32 %v1529, 7
    %v1531 = vadd.s32 %v1530, 56
    %1532 = vset.pattern.permute.xlu0 %v1531
    %1533 = vperm.xlu0 %1532, %v437
    %v1534 = vpop.permute.xlu0 %1533
    %v1535 = vlaneseq
    %v1536 = vshrl.u32 %v1535, 7
    %v1537 = vadd.s32 %v1536, 32
    %1538 = vset.pattern.permute.xlu0 %v1537
    %1539 = vperm.xlu0 %1538, %v462
    %v1540 = vpop.permute.xlu0 %1539
    %v1541 = vlaneseq
    %v1542 = vshrl.u32 %v1541, 7
    %v1543 = vadd.s32 %v1542, 40
    %1544 = vset.pattern.permute.xlu0 %v1543
    %1545 = vperm.xlu0 %1544, %v462
    %v1546 = vpop.permute.xlu0 %1545
    %v1547 = vlaneseq
    %v1548 = vshrl.u32 %v1547, 7
    %v1549 = vadd.s32 %v1548, 48
    %1550 = vset.pattern.permute.xlu0 %v1549
    %1551 = vperm.xlu0 %1550, %v462
    %v1552 = vpop.permute.xlu0 %1551
    %v1553 = vlaneseq
    %v1554 = vshrl.u32 %v1553, 7
    %v1555 = vadd.s32 %v1554, 56
    %1556 = vset.pattern.permute.xlu0 %v1555
    %1557 = vperm.xlu0 %1556, %v462
    %v1558 = vpop.permute.xlu0 %1557
    %vm1559 = vcmp.eq.s32.totalorder %v1180, %v78
    %vm1560 = vcmp.eq.s32.totalorder %v1186, %v78
    %vm1561 = vcmp.eq.s32.totalorder %v1192, %v78
    %vm1562 = vcmp.eq.s32.totalorder %v1198, %v78
    %vm1563 = vcmp.eq.s32.totalorder %v1204, %v78
    %vm1564 = vcmp.eq.s32.totalorder %v1210, %v78
    %vm1565 = vcmp.eq.s32.totalorder %v1216, %v78
    %vm1566 = vcmp.eq.s32.totalorder %v1222, %v78
    %vm1567 = vcmp.eq.s32.totalorder %v1228, %v78
    %vm1568 = vcmp.eq.s32.totalorder %v1234, %v78
    %vm1569 = vcmp.eq.s32.totalorder %v1240, %v78
    %vm1570 = vcmp.eq.s32.totalorder %v1246, %v78
    %vm1571 = vcmp.eq.s32.totalorder %v1252, %v78
    %vm1572 = vcmp.eq.s32.totalorder %v1258, %v78
    %vm1573 = vcmp.eq.s32.totalorder %v1264, %v78
    %vm1574 = vcmp.eq.s32.totalorder %v1270, %v78
    %vm1575 = vcmp.eq.s32.totalorder %v1276, %v78
    %vm1576 = vcmp.eq.s32.totalorder %v1282, %v78
    %vm1577 = vcmp.eq.s32.totalorder %v1288, %v78
    %vm1578 = vcmp.eq.s32.totalorder %v1294, %v78
    %vm1579 = vcmp.eq.s32.totalorder %v1300, %v78
    %vm1580 = vcmp.eq.s32.totalorder %v1306, %v78
    %vm1581 = vcmp.eq.s32.totalorder %v1312, %v78
    %vm1582 = vcmp.eq.s32.totalorder %v1318, %v78
    %vm1583 = vcmp.eq.s32.totalorder %v1324, %v78
    %vm1584 = vcmp.eq.s32.totalorder %v1330, %v78
    %vm1585 = vcmp.eq.s32.totalorder %v1336, %v78
    %vm1586 = vcmp.eq.s32.totalorder %v1342, %v78
    %vm1587 = vcmp.eq.s32.totalorder %v1348, %v78
    %vm1588 = vcmp.eq.s32.totalorder %v1354, %v78
    %vm1589 = vcmp.eq.s32.totalorder %v1360, %v78
    %vm1590 = vcmp.eq.s32.totalorder %v1366, %v78
    %vm1591 = vcmp.eq.s32.totalorder %v1372, %v78
    %vm1592 = vcmp.eq.s32.totalorder %v1378, %v78
    %vm1593 = vcmp.eq.s32.totalorder %v1384, %v78
    %vm1594 = vcmp.eq.s32.totalorder %v1390, %v78
    %vm1595 = vcmp.eq.s32.totalorder %v1396, %v78
    %vm1596 = vcmp.eq.s32.totalorder %v1402, %v78
    %vm1597 = vcmp.eq.s32.totalorder %v1408, %v78
    %vm1598 = vcmp.eq.s32.totalorder %v1414, %v78
    %vm1599 = vcmp.eq.s32.totalorder %v1420, %v78
    %vm1600 = vcmp.eq.s32.totalorder %v1426, %v78
    %vm1601 = vcmp.eq.s32.totalorder %v1432, %v78
    %vm1602 = vcmp.eq.s32.totalorder %v1438, %v78
    %vm1603 = vcmp.eq.s32.totalorder %v1444, %v78
    %vm1604 = vcmp.eq.s32.totalorder %v1450, %v78
    %vm1605 = vcmp.eq.s32.totalorder %v1456, %v78
    %vm1606 = vcmp.eq.s32.totalorder %v1462, %v78
    %vm1607 = vcmp.eq.s32.totalorder %v1468, %v78
    %vm1608 = vcmp.eq.s32.totalorder %v1474, %v78
    %vm1609 = vcmp.eq.s32.totalorder %v1480, %v78
    %vm1610 = vcmp.eq.s32.totalorder %v1486, %v78
    %vm1611 = vcmp.eq.s32.totalorder %v1492, %v78
    %vm1612 = vcmp.eq.s32.totalorder %v1498, %v78
    %vm1613 = vcmp.eq.s32.totalorder %v1504, %v78
    %vm1614 = vcmp.eq.s32.totalorder %v1510, %v78
    %vm1615 = vcmp.eq.s32.totalorder %v1516, %v78
    %vm1616 = vcmp.eq.s32.totalorder %v1522, %v78
    %vm1617 = vcmp.eq.s32.totalorder %v1528, %v78
    %vm1618 = vcmp.eq.s32.totalorder %v1534, %v78
    %vm1619 = vcmp.eq.s32.totalorder %v1540, %v78
    %vm1620 = vcmp.eq.s32.totalorder %v1546, %v78
    %vm1621 = vcmp.eq.s32.totalorder %v1552, %v78
    %vm1622 = vcmp.eq.s32.totalorder %v1558, %v78
    %v1623 = vlaneseq
    %v1624 = vshrl.u32 %v1623, 7
    %v1625 = vadd.s32 %v1624, 32
    %1626 = vset.pattern.permute.xlu0 %v1625
    %1627 = vperm.xlu0 %1626, %v551
    %v1628 = vpop.permute.xlu0 %1627
    %v1629 = vlaneseq
    %v1630 = vshrl.u32 %v1629, 7
    %v1631 = vadd.s32 %v1630, 40
    %1632 = vset.pattern.permute.xlu0 %v1631
    %1633 = vperm.xlu0 %1632, %v551
    %v1634 = vpop.permute.xlu0 %1633
    %v1635 = vlaneseq
    %v1636 = vshrl.u32 %v1635, 7
    %v1637 = vadd.s32 %v1636, 48
    %1638 = vset.pattern.permute.xlu0 %v1637
    %1639 = vperm.xlu0 %1638, %v551
    %v1640 = vpop.permute.xlu0 %1639
    %v1641 = vlaneseq
    %v1642 = vshrl.u32 %v1641, 7
    %v1643 = vadd.s32 %v1642, 56
    %1644 = vset.pattern.permute.xlu0 %v1643
    %1645 = vperm.xlu0 %1644, %v551
    %v1646 = vpop.permute.xlu0 %1645
    %v1647 = vlaneseq
    %v1648 = vshrl.u32 %v1647, 7
    %v1649 = vadd.s32 %v1648, 32
    %1650 = vset.pattern.permute.xlu0 %v1649
    %1651 = vperm.xlu0 %1650, %v576
    %v1652 = vpop.permute.xlu0 %1651
    %v1653 = vlaneseq
    %v1654 = vshrl.u32 %v1653, 7
    %v1655 = vadd.s32 %v1654, 40
    %1656 = vset.pattern.permute.xlu0 %v1655
    %1657 = vperm.xlu0 %1656, %v576
    %v1658 = vpop.permute.xlu0 %1657
    %v1659 = vlaneseq
    %v1660 = vshrl.u32 %v1659, 7
    %v1661 = vadd.s32 %v1660, 48
    %1662 = vset.pattern.permute.xlu0 %v1661
    %1663 = vperm.xlu0 %1662, %v576
    %v1664 = vpop.permute.xlu0 %1663
    %v1665 = vlaneseq
    %v1666 = vshrl.u32 %v1665, 7
    %v1667 = vadd.s32 %v1666, 56
    %1668 = vset.pattern.permute.xlu0 %v1667
    %1669 = vperm.xlu0 %1668, %v576
    %v1670 = vpop.permute.xlu0 %1669
    %v1671 = vlaneseq
    %v1672 = vshrl.u32 %v1671, 7
    %v1673 = vadd.s32 %v1672, 32
    %1674 = vset.pattern.permute.xlu0 %v1673
    %1675 = vperm.xlu0 %1674, %v601
    %v1676 = vpop.permute.xlu0 %1675
    %v1677 = vlaneseq
    %v1678 = vshrl.u32 %v1677, 7
    %v1679 = vadd.s32 %v1678, 40
    %1680 = vset.pattern.permute.xlu0 %v1679
    %1681 = vperm.xlu0 %1680, %v601
    %v1682 = vpop.permute.xlu0 %1681
    %v1683 = vlaneseq
    %v1684 = vshrl.u32 %v1683, 7
    %v1685 = vadd.s32 %v1684, 48
    %1686 = vset.pattern.permute.xlu0 %v1685
    %1687 = vperm.xlu0 %1686, %v601
    %v1688 = vpop.permute.xlu0 %1687
    %v1689 = vlaneseq
    %v1690 = vshrl.u32 %v1689, 7
    %v1691 = vadd.s32 %v1690, 56
    %1692 = vset.pattern.permute.xlu0 %v1691
    %1693 = vperm.xlu0 %1692, %v601
    %v1694 = vpop.permute.xlu0 %1693
    %v1695 = vlaneseq
    %v1696 = vshrl.u32 %v1695, 7
    %v1697 = vadd.s32 %v1696, 32
    %1698 = vset.pattern.permute.xlu0 %v1697
    %1699 = vperm.xlu0 %1698, %v626
    %v1700 = vpop.permute.xlu0 %1699
    %v1701 = vlaneseq
    %v1702 = vshrl.u32 %v1701, 7
    %v1703 = vadd.s32 %v1702, 40
    %1704 = vset.pattern.permute.xlu0 %v1703
    %1705 = vperm.xlu0 %1704, %v626
    %v1706 = vpop.permute.xlu0 %1705
    %v1707 = vlaneseq
    %v1708 = vshrl.u32 %v1707, 7
    %v1709 = vadd.s32 %v1708, 48
    %1710 = vset.pattern.permute.xlu0 %v1709
    %1711 = vperm.xlu0 %1710, %v626
    %v1712 = vpop.permute.xlu0 %1711
    %v1713 = vlaneseq
    %v1714 = vshrl.u32 %v1713, 7
    %v1715 = vadd.s32 %v1714, 56
    %1716 = vset.pattern.permute.xlu0 %v1715
    %1717 = vperm.xlu0 %1716, %v626
    %v1718 = vpop.permute.xlu0 %1717
    %v1719 = vlaneseq
    %v1720 = vshrl.u32 %v1719, 7
    %v1721 = vadd.s32 %v1720, 32
    %1722 = vset.pattern.permute.xlu0 %v1721
    %1723 = vperm.xlu0 %1722, %v651
    %v1724 = vpop.permute.xlu0 %1723
    %v1725 = vlaneseq
    %v1726 = vshrl.u32 %v1725, 7
    %v1727 = vadd.s32 %v1726, 40
    %1728 = vset.pattern.permute.xlu0 %v1727
    %1729 = vperm.xlu0 %1728, %v651
    %v1730 = vpop.permute.xlu0 %1729
    %v1731 = vlaneseq
    %v1732 = vshrl.u32 %v1731, 7
    %v1733 = vadd.s32 %v1732, 48
    %1734 = vset.pattern.permute.xlu0 %v1733
    %1735 = vperm.xlu0 %1734, %v651
    %v1736 = vpop.permute.xlu0 %1735
    %v1737 = vlaneseq
    %v1738 = vshrl.u32 %v1737, 7
    %v1739 = vadd.s32 %v1738, 56
    %1740 = vset.pattern.permute.xlu0 %v1739
    %1741 = vperm.xlu0 %1740, %v651
    %v1742 = vpop.permute.xlu0 %1741
    %v1743 = vlaneseq
    %v1744 = vshrl.u32 %v1743, 7
    %v1745 = vadd.s32 %v1744, 32
    %1746 = vset.pattern.permute.xlu0 %v1745
    %1747 = vperm.xlu0 %1746, %v676
    %v1748 = vpop.permute.xlu0 %1747
    %v1749 = vlaneseq
    %v1750 = vshrl.u32 %v1749, 7
    %v1751 = vadd.s32 %v1750, 40
    %1752 = vset.pattern.permute.xlu0 %v1751
    %1753 = vperm.xlu0 %1752, %v676
    %v1754 = vpop.permute.xlu0 %1753
    %v1755 = vlaneseq
    %v1756 = vshrl.u32 %v1755, 7
    %v1757 = vadd.s32 %v1756, 48
    %1758 = vset.pattern.permute.xlu0 %v1757
    %1759 = vperm.xlu0 %1758, %v676
    %v1760 = vpop.permute.xlu0 %1759
    %v1761 = vlaneseq
    %v1762 = vshrl.u32 %v1761, 7
    %v1763 = vadd.s32 %v1762, 56
    %1764 = vset.pattern.permute.xlu0 %v1763
    %1765 = vperm.xlu0 %1764, %v676
    %v1766 = vpop.permute.xlu0 %1765
    %v1767 = vlaneseq
    %v1768 = vshrl.u32 %v1767, 7
    %v1769 = vadd.s32 %v1768, 32
    %1770 = vset.pattern.permute.xlu0 %v1769
    %1771 = vperm.xlu0 %1770, %v701
    %v1772 = vpop.permute.xlu0 %1771
    %v1773 = vlaneseq
    %v1774 = vshrl.u32 %v1773, 7
    %v1775 = vadd.s32 %v1774, 40
    %1776 = vset.pattern.permute.xlu0 %v1775
    %1777 = vperm.xlu0 %1776, %v701
    %v1778 = vpop.permute.xlu0 %1777
    %v1779 = vlaneseq
    %v1780 = vshrl.u32 %v1779, 7
    %v1781 = vadd.s32 %v1780, 48
    %1782 = vset.pattern.permute.xlu0 %v1781
    %1783 = vperm.xlu0 %1782, %v701
    %v1784 = vpop.permute.xlu0 %1783
    %v1785 = vlaneseq
    %v1786 = vshrl.u32 %v1785, 7
    %v1787 = vadd.s32 %v1786, 56
    %1788 = vset.pattern.permute.xlu0 %v1787
    %1789 = vperm.xlu0 %1788, %v701
    %v1790 = vpop.permute.xlu0 %1789
    %v1791 = vlaneseq
    %v1792 = vshrl.u32 %v1791, 7
    %v1793 = vadd.s32 %v1792, 32
    %1794 = vset.pattern.permute.xlu0 %v1793
    %1795 = vperm.xlu0 %1794, %v726
    %v1796 = vpop.permute.xlu0 %1795
    %v1797 = vlaneseq
    %v1798 = vshrl.u32 %v1797, 7
    %v1799 = vadd.s32 %v1798, 40
    %1800 = vset.pattern.permute.xlu0 %v1799
    %1801 = vperm.xlu0 %1800, %v726
    %v1802 = vpop.permute.xlu0 %1801
    %v1803 = vlaneseq
    %v1804 = vshrl.u32 %v1803, 7
    %v1805 = vadd.s32 %v1804, 48
    %1806 = vset.pattern.permute.xlu0 %v1805
    %1807 = vperm.xlu0 %1806, %v726
    %v1808 = vpop.permute.xlu0 %1807
    %v1809 = vlaneseq
    %v1810 = vshrl.u32 %v1809, 7
    %v1811 = vadd.s32 %v1810, 56
    %1812 = vset.pattern.permute.xlu0 %v1811
    %1813 = vperm.xlu0 %1812, %v726
    %v1814 = vpop.permute.xlu0 %1813
    %v1815 = vlaneseq
    %v1816 = vshrl.u32 %v1815, 7
    %v1817 = vadd.s32 %v1816, 32
    %1818 = vset.pattern.permute.xlu0 %v1817
    %1819 = vperm.xlu0 %1818, %v751
    %v1820 = vpop.permute.xlu0 %1819
    %v1821 = vlaneseq
    %v1822 = vshrl.u32 %v1821, 7
    %v1823 = vadd.s32 %v1822, 40
    %1824 = vset.pattern.permute.xlu0 %v1823
    %1825 = vperm.xlu0 %1824, %v751
    %v1826 = vpop.permute.xlu0 %1825
    %v1827 = vlaneseq
    %v1828 = vshrl.u32 %v1827, 7
    %v1829 = vadd.s32 %v1828, 48
    %1830 = vset.pattern.permute.xlu0 %v1829
    %1831 = vperm.xlu0 %1830, %v751
    %v1832 = vpop.permute.xlu0 %1831
    %v1833 = vlaneseq
    %v1834 = vshrl.u32 %v1833, 7
    %v1835 = vadd.s32 %v1834, 56
    %1836 = vset.pattern.permute.xlu0 %v1835
    %1837 = vperm.xlu0 %1836, %v751
    %v1838 = vpop.permute.xlu0 %1837
    %v1839 = vlaneseq
    %v1840 = vshrl.u32 %v1839, 7
    %v1841 = vadd.s32 %v1840, 32
    %1842 = vset.pattern.permute.xlu0 %v1841
    %1843 = vperm.xlu0 %1842, %v776
    %v1844 = vpop.permute.xlu0 %1843
    %v1845 = vlaneseq
    %v1846 = vshrl.u32 %v1845, 7
    %v1847 = vadd.s32 %v1846, 40
    %1848 = vset.pattern.permute.xlu0 %v1847
    %1849 = vperm.xlu0 %1848, %v776
    %v1850 = vpop.permute.xlu0 %1849
    %v1851 = vlaneseq
    %v1852 = vshrl.u32 %v1851, 7
    %v1853 = vadd.s32 %v1852, 48
    %1854 = vset.pattern.permute.xlu0 %v1853
    %1855 = vperm.xlu0 %1854, %v776
    %v1856 = vpop.permute.xlu0 %1855
    %v1857 = vlaneseq
    %v1858 = vshrl.u32 %v1857, 7
    %v1859 = vadd.s32 %v1858, 56
    %1860 = vset.pattern.permute.xlu0 %v1859
    %1861 = vperm.xlu0 %1860, %v776
    %v1862 = vpop.permute.xlu0 %1861
    %v1863 = vlaneseq
    %v1864 = vshrl.u32 %v1863, 7
    %v1865 = vadd.s32 %v1864, 32
    %1866 = vset.pattern.permute.xlu0 %v1865
    %1867 = vperm.xlu0 %1866, %v801
    %v1868 = vpop.permute.xlu0 %1867
    %v1869 = vlaneseq
    %v1870 = vshrl.u32 %v1869, 7
    %v1871 = vadd.s32 %v1870, 40
    %1872 = vset.pattern.permute.xlu0 %v1871
    %1873 = vperm.xlu0 %1872, %v801
    %v1874 = vpop.permute.xlu0 %1873
    %v1875 = vlaneseq
    %v1876 = vshrl.u32 %v1875, 7
    %v1877 = vadd.s32 %v1876, 48
    %1878 = vset.pattern.permute.xlu0 %v1877
    %1879 = vperm.xlu0 %1878, %v801
    %v1880 = vpop.permute.xlu0 %1879
    %v1881 = vlaneseq
    %v1882 = vshrl.u32 %v1881, 7
    %v1883 = vadd.s32 %v1882, 56
    %1884 = vset.pattern.permute.xlu0 %v1883
    %1885 = vperm.xlu0 %1884, %v801
    %v1886 = vpop.permute.xlu0 %1885
    %v1887 = vlaneseq
    %v1888 = vshrl.u32 %v1887, 7
    %v1889 = vadd.s32 %v1888, 32
    %1890 = vset.pattern.permute.xlu0 %v1889
    %1891 = vperm.xlu0 %1890, %v826
    %v1892 = vpop.permute.xlu0 %1891
    %v1893 = vlaneseq
    %v1894 = vshrl.u32 %v1893, 7
    %v1895 = vadd.s32 %v1894, 40
    %1896 = vset.pattern.permute.xlu0 %v1895
    %1897 = vperm.xlu0 %1896, %v826
    %v1898 = vpop.permute.xlu0 %1897
    %v1899 = vlaneseq
    %v1900 = vshrl.u32 %v1899, 7
    %v1901 = vadd.s32 %v1900, 48
    %1902 = vset.pattern.permute.xlu0 %v1901
    %1903 = vperm.xlu0 %1902, %v826
    %v1904 = vpop.permute.xlu0 %1903
    %v1905 = vlaneseq
    %v1906 = vshrl.u32 %v1905, 7
    %v1907 = vadd.s32 %v1906, 56
    %1908 = vset.pattern.permute.xlu0 %v1907
    %1909 = vperm.xlu0 %1908, %v826
    %v1910 = vpop.permute.xlu0 %1909
    %v1911 = vlaneseq
    %v1912 = vshrl.u32 %v1911, 7
    %v1913 = vadd.s32 %v1912, 32
    %1914 = vset.pattern.permute.xlu0 %v1913
    %1915 = vperm.xlu0 %1914, %v851
    %v1916 = vpop.permute.xlu0 %1915
    %v1917 = vlaneseq
    %v1918 = vshrl.u32 %v1917, 7
    %v1919 = vadd.s32 %v1918, 40
    %1920 = vset.pattern.permute.xlu0 %v1919
    %1921 = vperm.xlu0 %1920, %v851
    %v1922 = vpop.permute.xlu0 %1921
    %v1923 = vlaneseq
    %v1924 = vshrl.u32 %v1923, 7
    %v1925 = vadd.s32 %v1924, 48
    %1926 = vset.pattern.permute.xlu0 %v1925
    %1927 = vperm.xlu0 %1926, %v851
    %v1928 = vpop.permute.xlu0 %1927
    %v1929 = vlaneseq
    %v1930 = vshrl.u32 %v1929, 7
    %v1931 = vadd.s32 %v1930, 56
    %1932 = vset.pattern.permute.xlu0 %v1931
    %1933 = vperm.xlu0 %1932, %v851
    %v1934 = vpop.permute.xlu0 %1933
    %v1935 = vlaneseq
    %v1936 = vshrl.u32 %v1935, 7
    %v1937 = vadd.s32 %v1936, 32
    %1938 = vset.pattern.permute.xlu0 %v1937
    %1939 = vperm.xlu0 %1938, %v876
    %v1940 = vpop.permute.xlu0 %1939
    %v1941 = vlaneseq
    %v1942 = vshrl.u32 %v1941, 7
    %v1943 = vadd.s32 %v1942, 40
    %1944 = vset.pattern.permute.xlu0 %v1943
    %1945 = vperm.xlu0 %1944, %v876
    %v1946 = vpop.permute.xlu0 %1945
    %v1947 = vlaneseq
    %v1948 = vshrl.u32 %v1947, 7
    %v1949 = vadd.s32 %v1948, 48
    %1950 = vset.pattern.permute.xlu0 %v1949
    %1951 = vperm.xlu0 %1950, %v876
    %v1952 = vpop.permute.xlu0 %1951
    %v1953 = vlaneseq
    %v1954 = vshrl.u32 %v1953, 7
    %v1955 = vadd.s32 %v1954, 56
    %1956 = vset.pattern.permute.xlu0 %v1955
    %1957 = vperm.xlu0 %1956, %v876
    %v1958 = vpop.permute.xlu0 %1957
    %v1959 = vlaneseq
    %v1960 = vshrl.u32 %v1959, 7
    %v1961 = vadd.s32 %v1960, 32
    %1962 = vset.pattern.permute.xlu0 %v1961
    %1963 = vperm.xlu0 %1962, %v901
    %v1964 = vpop.permute.xlu0 %1963
    %v1965 = vlaneseq
    %v1966 = vshrl.u32 %v1965, 7
    %v1967 = vadd.s32 %v1966, 40
    %1968 = vset.pattern.permute.xlu0 %v1967
    %1969 = vperm.xlu0 %1968, %v901
    %v1970 = vpop.permute.xlu0 %1969
    %v1971 = vlaneseq
    %v1972 = vshrl.u32 %v1971, 7
    %v1973 = vadd.s32 %v1972, 48
    %1974 = vset.pattern.permute.xlu0 %v1973
    %1975 = vperm.xlu0 %1974, %v901
    %v1976 = vpop.permute.xlu0 %1975
    %v1977 = vlaneseq
    %v1978 = vshrl.u32 %v1977, 7
    %v1979 = vadd.s32 %v1978, 56
    %1980 = vset.pattern.permute.xlu0 %v1979
    %1981 = vperm.xlu0 %1980, %v901
    %v1982 = vpop.permute.xlu0 %1981
    %v1983 = vlaneseq
    %v1984 = vshrl.u32 %v1983, 7
    %v1985 = vadd.s32 %v1984, 32
    %1986 = vset.pattern.permute.xlu0 %v1985
    %1987 = vperm.xlu0 %1986, %v926
    %v1988 = vpop.permute.xlu0 %1987
    %v1989 = vlaneseq
    %v1990 = vshrl.u32 %v1989, 7
    %v1991 = vadd.s32 %v1990, 40
    %1992 = vset.pattern.permute.xlu0 %v1991
    %1993 = vperm.xlu0 %1992, %v926
    %v1994 = vpop.permute.xlu0 %1993
    %v1995 = vlaneseq
    %v1996 = vshrl.u32 %v1995, 7
    %v1997 = vadd.s32 %v1996, 48
    %1998 = vset.pattern.permute.xlu0 %v1997
    %1999 = vperm.xlu0 %1998, %v926
    %v2000 = vpop.permute.xlu0 %1999
    %v2001 = vlaneseq
    %v2002 = vshrl.u32 %v2001, 7
    %v2003 = vadd.s32 %v2002, 56
    %2004 = vset.pattern.permute.xlu0 %v2003
    %2005 = vperm.xlu0 %2004, %v926
    %v2006 = vpop.permute.xlu0 %2005
    %v2007 = vsel %vm1559, %v1628, 0.0
    %v2008 = vsel %vm1560, %v1634, 0.0
    %v2009 = vsel %vm1561, %v1640, 0.0
    %v2010 = vsel %vm1562, %v1646, 0.0
    %v2011 = vsel %vm1563, %v1652, 0.0
    %v2012 = vsel %vm1564, %v1658, 0.0
    %v2013 = vsel %vm1565, %v1664, 0.0
    %v2014 = vsel %vm1566, %v1670, 0.0
    %v2015 = vsel %vm1567, %v1676, 0.0
    %v2016 = vsel %vm1568, %v1682, 0.0
    %v2017 = vsel %vm1569, %v1688, 0.0
    %v2018 = vsel %vm1570, %v1694, 0.0
    %v2019 = vsel %vm1571, %v1700, 0.0
    %v2020 = vsel %vm1572, %v1706, 0.0
    %v2021 = vsel %vm1573, %v1712, 0.0
    %v2022 = vsel %vm1574, %v1718, 0.0
    %v2023 = vsel %vm1575, %v1724, 0.0
    %v2024 = vsel %vm1576, %v1730, 0.0
    %v2025 = vsel %vm1577, %v1736, 0.0
    %v2026 = vsel %vm1578, %v1742, 0.0
    %v2027 = vsel %vm1579, %v1748, 0.0
    %v2028 = vsel %vm1580, %v1754, 0.0
    %v2029 = vsel %vm1581, %v1760, 0.0
    %v2030 = vsel %vm1582, %v1766, 0.0
    %v2031 = vsel %vm1583, %v1772, 0.0
    %v2032 = vsel %vm1584, %v1778, 0.0
    %v2033 = vsel %vm1585, %v1784, 0.0
    %v2034 = vsel %vm1586, %v1790, 0.0
    %v2035 = vsel %vm1587, %v1796, 0.0
    %v2036 = vsel %vm1588, %v1802, 0.0
    %v2037 = vsel %vm1589, %v1808, 0.0
    %v2038 = vsel %vm1590, %v1814, 0.0
    %v2039 = vsel %vm1591, %v1820, 0.0
    %v2040 = vsel %vm1592, %v1826, 0.0
    %v2041 = vsel %vm1593, %v1832, 0.0
    %v2042 = vsel %vm1594, %v1838, 0.0
    %v2043 = vsel %vm1595, %v1844, 0.0
    %v2044 = vsel %vm1596, %v1850, 0.0
    %v2045 = vsel %vm1597, %v1856, 0.0
    %v2046 = vsel %vm1598, %v1862, 0.0
    %v2047 = vsel %vm1599, %v1868, 0.0
    %v2048 = vsel %vm1600, %v1874, 0.0
    %v2049 = vsel %vm1601, %v1880, 0.0
    %v2050 = vsel %vm1602, %v1886, 0.0
    %v2051 = vsel %vm1603, %v1892, 0.0
    %v2052 = vsel %vm1604, %v1898, 0.0
    %v2053 = vsel %vm1605, %v1904, 0.0
    %v2054 = vsel %vm1606, %v1910, 0.0
    %v2055 = vsel %vm1607, %v1916, 0.0
    %v2056 = vsel %vm1608, %v1922, 0.0
    %v2057 = vsel %vm1609, %v1928, 0.0
    %v2058 = vsel %vm1610, %v1934, 0.0
    %v2059 = vsel %vm1611, %v1940, 0.0
    %v2060 = vsel %vm1612, %v1946, 0.0
    %v2061 = vsel %vm1613, %v1952, 0.0
    %v2062 = vsel %vm1614, %v1958, 0.0
    %v2063 = vsel %vm1615, %v1964, 0.0
    %v2064 = vsel %vm1616, %v1970, 0.0
    %v2065 = vsel %vm1617, %v1976, 0.0
    %v2066 = vsel %vm1618, %v1982, 0.0
    %v2067 = vsel %vm1619, %v1988, 0.0
    %v2068 = vsel %vm1620, %v1994, 0.0
    %v2069 = vsel %vm1621, %v2000, 0.0
    %v2070 = vsel %vm1622, %v2006, 0.0
    %v2071 = vadd.f32 %v2007, %v2008
    %v2072 = vadd.f32 %v2071, %v2009
    %v2073 = vadd.f32 %v2072, %v2010
    %v2074 = vrot.slane %v2073, 4
    %v2075 = vadd.f32 %v2073, %v2074
    %v2076 = vrot.slane %v2075, 2
    %v2077 = vadd.f32 %v2075, %v2076
    %v2078 = vrot.slane %v2077, 1
    %v2079 = vadd.f32 %v2077, %v2078
    %v2080 = vadd.f32 %v2011, %v2012
    %v2081 = vadd.f32 %v2080, %v2013
    %v2082 = vadd.f32 %v2081, %v2014
    %v2083 = vrot.slane %v2082, 4
    %v2084 = vadd.f32 %v2082, %v2083
    %v2085 = vrot.slane %v2084, 2
    %v2086 = vadd.f32 %v2084, %v2085
    %v2087 = vrot.slane %v2086, 1
    %v2088 = vadd.f32 %v2086, %v2087
    %v2089 = vadd.f32 %v2015, %v2016
    %v2090 = vadd.f32 %v2089, %v2017
    %v2091 = vadd.f32 %v2090, %v2018
    %v2092 = vrot.slane %v2091, 4
    %v2093 = vadd.f32 %v2091, %v2092
    %v2094 = vrot.slane %v2093, 2
    %v2095 = vadd.f32 %v2093, %v2094
    %v2096 = vrot.slane %v2095, 1
    %v2097 = vadd.f32 %v2095, %v2096
    %v2098 = vadd.f32 %v2019, %v2020
    %v2099 = vadd.f32 %v2098, %v2021
    %v2100 = vadd.f32 %v2099, %v2022
    %v2101 = vrot.slane %v2100, 4
    %v2102 = vadd.f32 %v2100, %v2101
    %v2103 = vrot.slane %v2102, 2
    %v2104 = vadd.f32 %v2102, %v2103
    %v2105 = vrot.slane %v2104, 1
    %v2106 = vadd.f32 %v2104, %v2105
    %v2107 = vadd.f32 %v2023, %v2024
    %v2108 = vadd.f32 %v2107, %v2025
    %v2109 = vadd.f32 %v2108, %v2026
    %v2110 = vrot.slane %v2109, 4
    %v2111 = vadd.f32 %v2109, %v2110
    %v2112 = vrot.slane %v2111, 2
    %v2113 = vadd.f32 %v2111, %v2112
    %v2114 = vrot.slane %v2113, 1
    %v2115 = vadd.f32 %v2113, %v2114
    %v2116 = vadd.f32 %v2027, %v2028
    %v2117 = vadd.f32 %v2116, %v2029
    %v2118 = vadd.f32 %v2117, %v2030
    %v2119 = vrot.slane %v2118, 4
    %v2120 = vadd.f32 %v2118, %v2119
    %v2121 = vrot.slane %v2120, 2
    %v2122 = vadd.f32 %v2120, %v2121
    %v2123 = vrot.slane %v2122, 1
    %v2124 = vadd.f32 %v2122, %v2123
    %v2125 = vadd.f32 %v2031, %v2032
    %v2126 = vadd.f32 %v2125, %v2033
    %v2127 = vadd.f32 %v2126, %v2034
    %v2128 = vrot.slane %v2127, 4
    %v2129 = vadd.f32 %v2127, %v2128
    %v2130 = vrot.slane %v2129, 2
    %v2131 = vadd.f32 %v2129, %v2130
    %v2132 = vrot.slane %v2131, 1
    %v2133 = vadd.f32 %v2131, %v2132
    %v2134 = vadd.f32 %v2035, %v2036
    %v2135 = vadd.f32 %v2134, %v2037
    %v2136 = vadd.f32 %v2135, %v2038
    %v2137 = vrot.slane %v2136, 4
    %v2138 = vadd.f32 %v2136, %v2137
    %v2139 = vrot.slane %v2138, 2
    %v2140 = vadd.f32 %v2138, %v2139
    %v2141 = vrot.slane %v2140, 1
    %v2142 = vadd.f32 %v2140, %v2141
    %v2143 = vadd.f32 %v2039, %v2040
    %v2144 = vadd.f32 %v2143, %v2041
    %v2145 = vadd.f32 %v2144, %v2042
    %v2146 = vrot.slane %v2145, 4
    %v2147 = vadd.f32 %v2145, %v2146
    %v2148 = vrot.slane %v2147, 2
    %v2149 = vadd.f32 %v2147, %v2148
    %v2150 = vrot.slane %v2149, 1
    %v2151 = vadd.f32 %v2149, %v2150
    %v2152 = vadd.f32 %v2043, %v2044
    %v2153 = vadd.f32 %v2152, %v2045
    %v2154 = vadd.f32 %v2153, %v2046
    %v2155 = vrot.slane %v2154, 4
    %v2156 = vadd.f32 %v2154, %v2155
    %v2157 = vrot.slane %v2156, 2
    %v2158 = vadd.f32 %v2156, %v2157
    %v2159 = vrot.slane %v2158, 1
    %v2160 = vadd.f32 %v2158, %v2159
    %v2161 = vadd.f32 %v2047, %v2048
    %v2162 = vadd.f32 %v2161, %v2049
    %v2163 = vadd.f32 %v2162, %v2050
    %v2164 = vrot.slane %v2163, 4
    %v2165 = vadd.f32 %v2163, %v2164
    %v2166 = vrot.slane %v2165, 2
    %v2167 = vadd.f32 %v2165, %v2166
    %v2168 = vrot.slane %v2167, 1
    %v2169 = vadd.f32 %v2167, %v2168
    %v2170 = vadd.f32 %v2051, %v2052
    %v2171 = vadd.f32 %v2170, %v2053
    %v2172 = vadd.f32 %v2171, %v2054
    %v2173 = vrot.slane %v2172, 4
    %v2174 = vadd.f32 %v2172, %v2173
    %v2175 = vrot.slane %v2174, 2
    %v2176 = vadd.f32 %v2174, %v2175
    %v2177 = vrot.slane %v2176, 1
    %v2178 = vadd.f32 %v2176, %v2177
    %v2179 = vadd.f32 %v2055, %v2056
    %v2180 = vadd.f32 %v2179, %v2057
    %v2181 = vadd.f32 %v2180, %v2058
    %v2182 = vrot.slane %v2181, 4
    %v2183 = vadd.f32 %v2181, %v2182
    %v2184 = vrot.slane %v2183, 2
    %v2185 = vadd.f32 %v2183, %v2184
    %v2186 = vrot.slane %v2185, 1
    %v2187 = vadd.f32 %v2185, %v2186
    %v2188 = vadd.f32 %v2059, %v2060
    %v2189 = vadd.f32 %v2188, %v2061
    %v2190 = vadd.f32 %v2189, %v2062
    %v2191 = vrot.slane %v2190, 4
    %v2192 = vadd.f32 %v2190, %v2191
    %v2193 = vrot.slane %v2192, 2
    %v2194 = vadd.f32 %v2192, %v2193
    %v2195 = vrot.slane %v2194, 1
    %v2196 = vadd.f32 %v2194, %v2195
    %v2197 = vadd.f32 %v2063, %v2064
    %v2198 = vadd.f32 %v2197, %v2065
    %v2199 = vadd.f32 %v2198, %v2066
    %v2200 = vrot.slane %v2199, 4
    %v2201 = vadd.f32 %v2199, %v2200
    %v2202 = vrot.slane %v2201, 2
    %v2203 = vadd.f32 %v2201, %v2202
    %v2204 = vrot.slane %v2203, 1
    %v2205 = vadd.f32 %v2203, %v2204
    %v2206 = vadd.f32 %v2067, %v2068
    %v2207 = vadd.f32 %v2206, %v2069
    %v2208 = vadd.f32 %v2207, %v2070
    %v2209 = vrot.slane %v2208, 4
    %v2210 = vadd.f32 %v2208, %v2209
    %v2211 = vrot.slane %v2210, 2
    %v2212 = vadd.f32 %v2210, %v2211
    %v2213 = vrot.slane %v2212, 1
    %v2214 = vadd.f32 %v2212, %v2213
    %v2215 = vadd.f32 %v1159, %v2079
    %v2216 = vadd.f32 %v1160, %v2088
    %v2217 = vadd.f32 %v1161, %v2097
    %v2218 = vadd.f32 %v1162, %v2106
    %v2219 = vadd.f32 %v1163, %v2115
    %v2220 = vadd.f32 %v1164, %v2124
    %v2221 = vadd.f32 %v1165, %v2133
    %v2222 = vadd.f32 %v1166, %v2142
    %v2223 = vadd.f32 %v1167, %v2151
    %v2224 = vadd.f32 %v1168, %v2160
    %v2225 = vadd.f32 %v1169, %v2169
    %v2226 = vadd.f32 %v1170, %v2178
    %v2227 = vadd.f32 %v1171, %v2187
    %v2228 = vadd.f32 %v1172, %v2196
    %v2229 = vadd.f32 %v1173, %v2205
    %v2230 = vadd.f32 %v1174, %v2214
    %v2231 = vlaneseq
    %v2232 = vshrl.u32 %v2231, 7
    %v2233 = vadd.s32 %v2232, 64
    %2234 = vset.pattern.permute.xlu0 %v2233
    %2235 = vperm.xlu0 %2234, %v87
    %v2236 = vpop.permute.xlu0 %2235
    %v2237 = vlaneseq
    %v2238 = vshrl.u32 %v2237, 7
    %v2239 = vadd.s32 %v2238, 72
    %2240 = vset.pattern.permute.xlu0 %v2239
    %2241 = vperm.xlu0 %2240, %v87
    %v2242 = vpop.permute.xlu0 %2241
    %v2243 = vlaneseq
    %v2244 = vshrl.u32 %v2243, 7
    %v2245 = vadd.s32 %v2244, 80
    %2246 = vset.pattern.permute.xlu0 %v2245
    %2247 = vperm.xlu0 %2246, %v87
    %v2248 = vpop.permute.xlu0 %2247
    %v2249 = vlaneseq
    %v2250 = vshrl.u32 %v2249, 7
    %v2251 = vadd.s32 %v2250, 88
    %2252 = vset.pattern.permute.xlu0 %v2251
    %2253 = vperm.xlu0 %2252, %v87
    %v2254 = vpop.permute.xlu0 %2253
    %v2255 = vlaneseq
    %v2256 = vshrl.u32 %v2255, 7
    %v2257 = vadd.s32 %v2256, 64
    %2258 = vset.pattern.permute.xlu0 %v2257
    %2259 = vperm.xlu0 %2258, %v112
    %v2260 = vpop.permute.xlu0 %2259
    %v2261 = vlaneseq
    %v2262 = vshrl.u32 %v2261, 7
    %v2263 = vadd.s32 %v2262, 72
    %2264 = vset.pattern.permute.xlu0 %v2263
    %2265 = vperm.xlu0 %2264, %v112
    %v2266 = vpop.permute.xlu0 %2265
    %v2267 = vlaneseq
    %v2268 = vshrl.u32 %v2267, 7
    %v2269 = vadd.s32 %v2268, 80
    %2270 = vset.pattern.permute.xlu0 %v2269
    %2271 = vperm.xlu0 %2270, %v112
    %v2272 = vpop.permute.xlu0 %2271
    %v2273 = vlaneseq
    %v2274 = vshrl.u32 %v2273, 7
    %v2275 = vadd.s32 %v2274, 88
    %2276 = vset.pattern.permute.xlu0 %v2275
    %2277 = vperm.xlu0 %2276, %v112
    %v2278 = vpop.permute.xlu0 %2277
    %v2279 = vlaneseq
    %v2280 = vshrl.u32 %v2279, 7
    %v2281 = vadd.s32 %v2280, 64
    %2282 = vset.pattern.permute.xlu0 %v2281
    %2283 = vperm.xlu0 %2282, %v137
    %v2284 = vpop.permute.xlu0 %2283
    %v2285 = vlaneseq
    %v2286 = vshrl.u32 %v2285, 7
    %v2287 = vadd.s32 %v2286, 72
    %2288 = vset.pattern.permute.xlu0 %v2287
    %2289 = vperm.xlu0 %2288, %v137
    %v2290 = vpop.permute.xlu0 %2289
    %v2291 = vlaneseq
    %v2292 = vshrl.u32 %v2291, 7
    %v2293 = vadd.s32 %v2292, 80
    %2294 = vset.pattern.permute.xlu0 %v2293
    %2295 = vperm.xlu0 %2294, %v137
    %v2296 = vpop.permute.xlu0 %2295
    %v2297 = vlaneseq
    %v2298 = vshrl.u32 %v2297, 7
    %v2299 = vadd.s32 %v2298, 88
    %2300 = vset.pattern.permute.xlu0 %v2299
    %2301 = vperm.xlu0 %2300, %v137
    %v2302 = vpop.permute.xlu0 %2301
    %v2303 = vlaneseq
    %v2304 = vshrl.u32 %v2303, 7
    %v2305 = vadd.s32 %v2304, 64
    %2306 = vset.pattern.permute.xlu0 %v2305
    %2307 = vperm.xlu0 %2306, %v162
    %v2308 = vpop.permute.xlu0 %2307
    %v2309 = vlaneseq
    %v2310 = vshrl.u32 %v2309, 7
    %v2311 = vadd.s32 %v2310, 72
    %2312 = vset.pattern.permute.xlu0 %v2311
    %2313 = vperm.xlu0 %2312, %v162
    %v2314 = vpop.permute.xlu0 %2313
    %v2315 = vlaneseq
    %v2316 = vshrl.u32 %v2315, 7
    %v2317 = vadd.s32 %v2316, 80
    %2318 = vset.pattern.permute.xlu0 %v2317
    %2319 = vperm.xlu0 %2318, %v162
    %v2320 = vpop.permute.xlu0 %2319
    %v2321 = vlaneseq
    %v2322 = vshrl.u32 %v2321, 7
    %v2323 = vadd.s32 %v2322, 88
    %2324 = vset.pattern.permute.xlu0 %v2323
    %2325 = vperm.xlu0 %2324, %v162
    %v2326 = vpop.permute.xlu0 %2325
    %v2327 = vlaneseq
    %v2328 = vshrl.u32 %v2327, 7
    %v2329 = vadd.s32 %v2328, 64
    %2330 = vset.pattern.permute.xlu0 %v2329
    %2331 = vperm.xlu0 %2330, %v187
    %v2332 = vpop.permute.xlu0 %2331
    %v2333 = vlaneseq
    %v2334 = vshrl.u32 %v2333, 7
    %v2335 = vadd.s32 %v2334, 72
    %2336 = vset.pattern.permute.xlu0 %v2335
    %2337 = vperm.xlu0 %2336, %v187
    %v2338 = vpop.permute.xlu0 %2337
    %v2339 = vlaneseq
    %v2340 = vshrl.u32 %v2339, 7
    %v2341 = vadd.s32 %v2340, 80
    %2342 = vset.pattern.permute.xlu0 %v2341
    %2343 = vperm.xlu0 %2342, %v187
    %v2344 = vpop.permute.xlu0 %2343
    %v2345 = vlaneseq
    %v2346 = vshrl.u32 %v2345, 7
    %v2347 = vadd.s32 %v2346, 88
    %2348 = vset.pattern.permute.xlu0 %v2347
    %2349 = vperm.xlu0 %2348, %v187
    %v2350 = vpop.permute.xlu0 %2349
    %v2351 = vlaneseq
    %v2352 = vshrl.u32 %v2351, 7
    %v2353 = vadd.s32 %v2352, 64
    %2354 = vset.pattern.permute.xlu0 %v2353
    %2355 = vperm.xlu0 %2354, %v212
    %v2356 = vpop.permute.xlu0 %2355
    %v2357 = vlaneseq
    %v2358 = vshrl.u32 %v2357, 7
    %v2359 = vadd.s32 %v2358, 72
    %2360 = vset.pattern.permute.xlu0 %v2359
    %2361 = vperm.xlu0 %2360, %v212
    %v2362 = vpop.permute.xlu0 %2361
    %v2363 = vlaneseq
    %v2364 = vshrl.u32 %v2363, 7
    %v2365 = vadd.s32 %v2364, 80
    %2366 = vset.pattern.permute.xlu0 %v2365
    %2367 = vperm.xlu0 %2366, %v212
    %v2368 = vpop.permute.xlu0 %2367
    %v2369 = vlaneseq
    %v2370 = vshrl.u32 %v2369, 7
    %v2371 = vadd.s32 %v2370, 88
    %2372 = vset.pattern.permute.xlu0 %v2371
    %2373 = vperm.xlu0 %2372, %v212
    %v2374 = vpop.permute.xlu0 %2373
    %v2375 = vlaneseq
    %v2376 = vshrl.u32 %v2375, 7
    %v2377 = vadd.s32 %v2376, 64
    %2378 = vset.pattern.permute.xlu0 %v2377
    %2379 = vperm.xlu0 %2378, %v237
    %v2380 = vpop.permute.xlu0 %2379
    %v2381 = vlaneseq
    %v2382 = vshrl.u32 %v2381, 7
    %v2383 = vadd.s32 %v2382, 72
    %2384 = vset.pattern.permute.xlu0 %v2383
    %2385 = vperm.xlu0 %2384, %v237
    %v2386 = vpop.permute.xlu0 %2385
    %v2387 = vlaneseq
    %v2388 = vshrl.u32 %v2387, 7
    %v2389 = vadd.s32 %v2388, 80
    %2390 = vset.pattern.permute.xlu0 %v2389
    %2391 = vperm.xlu0 %2390, %v237
    %v2392 = vpop.permute.xlu0 %2391
    %v2393 = vlaneseq
    %v2394 = vshrl.u32 %v2393, 7
    %v2395 = vadd.s32 %v2394, 88
    %2396 = vset.pattern.permute.xlu0 %v2395
    %2397 = vperm.xlu0 %2396, %v237
    %v2398 = vpop.permute.xlu0 %2397
    %v2399 = vlaneseq
    %v2400 = vshrl.u32 %v2399, 7
    %v2401 = vadd.s32 %v2400, 64
    %2402 = vset.pattern.permute.xlu0 %v2401
    %2403 = vperm.xlu0 %2402, %v262
    %v2404 = vpop.permute.xlu0 %2403
    %v2405 = vlaneseq
    %v2406 = vshrl.u32 %v2405, 7
    %v2407 = vadd.s32 %v2406, 72
    %2408 = vset.pattern.permute.xlu0 %v2407
    %2409 = vperm.xlu0 %2408, %v262
    %v2410 = vpop.permute.xlu0 %2409
    %v2411 = vlaneseq
    %v2412 = vshrl.u32 %v2411, 7
    %v2413 = vadd.s32 %v2412, 80
    %2414 = vset.pattern.permute.xlu0 %v2413
    %2415 = vperm.xlu0 %2414, %v262
    %v2416 = vpop.permute.xlu0 %2415
    %v2417 = vlaneseq
    %v2418 = vshrl.u32 %v2417, 7
    %v2419 = vadd.s32 %v2418, 88
    %2420 = vset.pattern.permute.xlu0 %v2419
    %2421 = vperm.xlu0 %2420, %v262
    %v2422 = vpop.permute.xlu0 %2421
    %v2423 = vlaneseq
    %v2424 = vshrl.u32 %v2423, 7
    %v2425 = vadd.s32 %v2424, 64
    %2426 = vset.pattern.permute.xlu0 %v2425
    %2427 = vperm.xlu0 %2426, %v287
    %v2428 = vpop.permute.xlu0 %2427
    %v2429 = vlaneseq
    %v2430 = vshrl.u32 %v2429, 7
    %v2431 = vadd.s32 %v2430, 72
    %2432 = vset.pattern.permute.xlu0 %v2431
    %2433 = vperm.xlu0 %2432, %v287
    %v2434 = vpop.permute.xlu0 %2433
    %v2435 = vlaneseq
    %v2436 = vshrl.u32 %v2435, 7
    %v2437 = vadd.s32 %v2436, 80
    %2438 = vset.pattern.permute.xlu0 %v2437
    %2439 = vperm.xlu0 %2438, %v287
    %v2440 = vpop.permute.xlu0 %2439
    %v2441 = vlaneseq
    %v2442 = vshrl.u32 %v2441, 7
    %v2443 = vadd.s32 %v2442, 88
    %2444 = vset.pattern.permute.xlu0 %v2443
    %2445 = vperm.xlu0 %2444, %v287
    %v2446 = vpop.permute.xlu0 %2445
    %v2447 = vlaneseq
    %v2448 = vshrl.u32 %v2447, 7
    %v2449 = vadd.s32 %v2448, 64
    %2450 = vset.pattern.permute.xlu0 %v2449
    %2451 = vperm.xlu0 %2450, %v312
    %v2452 = vpop.permute.xlu0 %2451
    %v2453 = vlaneseq
    %v2454 = vshrl.u32 %v2453, 7
    %v2455 = vadd.s32 %v2454, 72
    %2456 = vset.pattern.permute.xlu0 %v2455
    %2457 = vperm.xlu0 %2456, %v312
    %v2458 = vpop.permute.xlu0 %2457
    %v2459 = vlaneseq
    %v2460 = vshrl.u32 %v2459, 7
    %v2461 = vadd.s32 %v2460, 80
    %2462 = vset.pattern.permute.xlu0 %v2461
    %2463 = vperm.xlu0 %2462, %v312
    %v2464 = vpop.permute.xlu0 %2463
    %v2465 = vlaneseq
    %v2466 = vshrl.u32 %v2465, 7
    %v2467 = vadd.s32 %v2466, 88
    %2468 = vset.pattern.permute.xlu0 %v2467
    %2469 = vperm.xlu0 %2468, %v312
    %v2470 = vpop.permute.xlu0 %2469
    %v2471 = vlaneseq
    %v2472 = vshrl.u32 %v2471, 7
    %v2473 = vadd.s32 %v2472, 64
    %2474 = vset.pattern.permute.xlu0 %v2473
    %2475 = vperm.xlu0 %2474, %v337
    %v2476 = vpop.permute.xlu0 %2475
    %v2477 = vlaneseq
    %v2478 = vshrl.u32 %v2477, 7
    %v2479 = vadd.s32 %v2478, 72
    %2480 = vset.pattern.permute.xlu0 %v2479
    %2481 = vperm.xlu0 %2480, %v337
    %v2482 = vpop.permute.xlu0 %2481
    %v2483 = vlaneseq
    %v2484 = vshrl.u32 %v2483, 7
    %v2485 = vadd.s32 %v2484, 80
    %2486 = vset.pattern.permute.xlu0 %v2485
    %2487 = vperm.xlu0 %2486, %v337
    %v2488 = vpop.permute.xlu0 %2487
    %v2489 = vlaneseq
    %v2490 = vshrl.u32 %v2489, 7
    %v2491 = vadd.s32 %v2490, 88
    %2492 = vset.pattern.permute.xlu0 %v2491
    %2493 = vperm.xlu0 %2492, %v337
    %v2494 = vpop.permute.xlu0 %2493
    %v2495 = vlaneseq
    %v2496 = vshrl.u32 %v2495, 7
    %v2497 = vadd.s32 %v2496, 64
    %2498 = vset.pattern.permute.xlu0 %v2497
    %2499 = vperm.xlu0 %2498, %v362
    %v2500 = vpop.permute.xlu0 %2499
    %v2501 = vlaneseq
    %v2502 = vshrl.u32 %v2501, 7
    %v2503 = vadd.s32 %v2502, 72
    %2504 = vset.pattern.permute.xlu0 %v2503
    %2505 = vperm.xlu0 %2504, %v362
    %v2506 = vpop.permute.xlu0 %2505
    %v2507 = vlaneseq
    %v2508 = vshrl.u32 %v2507, 7
    %v2509 = vadd.s32 %v2508, 80
    %2510 = vset.pattern.permute.xlu0 %v2509
    %2511 = vperm.xlu0 %2510, %v362
    %v2512 = vpop.permute.xlu0 %2511
    %v2513 = vlaneseq
    %v2514 = vshrl.u32 %v2513, 7
    %v2515 = vadd.s32 %v2514, 88
    %2516 = vset.pattern.permute.xlu0 %v2515
    %2517 = vperm.xlu0 %2516, %v362
    %v2518 = vpop.permute.xlu0 %2517
    %v2519 = vlaneseq
    %v2520 = vshrl.u32 %v2519, 7
    %v2521 = vadd.s32 %v2520, 64
    %2522 = vset.pattern.permute.xlu0 %v2521
    %2523 = vperm.xlu0 %2522, %v387
    %v2524 = vpop.permute.xlu0 %2523
    %v2525 = vlaneseq
    %v2526 = vshrl.u32 %v2525, 7
    %v2527 = vadd.s32 %v2526, 72
    %2528 = vset.pattern.permute.xlu0 %v2527
    %2529 = vperm.xlu0 %2528, %v387
    %v2530 = vpop.permute.xlu0 %2529
    %v2531 = vlaneseq
    %v2532 = vshrl.u32 %v2531, 7
    %v2533 = vadd.s32 %v2532, 80
    %2534 = vset.pattern.permute.xlu0 %v2533
    %2535 = vperm.xlu0 %2534, %v387
    %v2536 = vpop.permute.xlu0 %2535
    %v2537 = vlaneseq
    %v2538 = vshrl.u32 %v2537, 7
    %v2539 = vadd.s32 %v2538, 88
    %2540 = vset.pattern.permute.xlu0 %v2539
    %2541 = vperm.xlu0 %2540, %v387
    %v2542 = vpop.permute.xlu0 %2541
    %v2543 = vlaneseq
    %v2544 = vshrl.u32 %v2543, 7
    %v2545 = vadd.s32 %v2544, 64
    %2546 = vset.pattern.permute.xlu0 %v2545
    %2547 = vperm.xlu0 %2546, %v412
    %v2548 = vpop.permute.xlu0 %2547
    %v2549 = vlaneseq
    %v2550 = vshrl.u32 %v2549, 7
    %v2551 = vadd.s32 %v2550, 72
    %2552 = vset.pattern.permute.xlu0 %v2551
    %2553 = vperm.xlu0 %2552, %v412
    %v2554 = vpop.permute.xlu0 %2553
    %v2555 = vlaneseq
    %v2556 = vshrl.u32 %v2555, 7
    %v2557 = vadd.s32 %v2556, 80
    %2558 = vset.pattern.permute.xlu0 %v2557
    %2559 = vperm.xlu0 %2558, %v412
    %v2560 = vpop.permute.xlu0 %2559
    %v2561 = vlaneseq
    %v2562 = vshrl.u32 %v2561, 7
    %v2563 = vadd.s32 %v2562, 88
    %2564 = vset.pattern.permute.xlu0 %v2563
    %2565 = vperm.xlu0 %2564, %v412
    %v2566 = vpop.permute.xlu0 %2565
    %v2567 = vlaneseq
    %v2568 = vshrl.u32 %v2567, 7
    %v2569 = vadd.s32 %v2568, 64
    %2570 = vset.pattern.permute.xlu0 %v2569
    %2571 = vperm.xlu0 %2570, %v437
    %v2572 = vpop.permute.xlu0 %2571
    %v2573 = vlaneseq
    %v2574 = vshrl.u32 %v2573, 7
    %v2575 = vadd.s32 %v2574, 72
    %2576 = vset.pattern.permute.xlu0 %v2575
    %2577 = vperm.xlu0 %2576, %v437
    %v2578 = vpop.permute.xlu0 %2577
    %v2579 = vlaneseq
    %v2580 = vshrl.u32 %v2579, 7
    %v2581 = vadd.s32 %v2580, 80
    %2582 = vset.pattern.permute.xlu0 %v2581
    %2583 = vperm.xlu0 %2582, %v437
    %v2584 = vpop.permute.xlu0 %2583
    %v2585 = vlaneseq
    %v2586 = vshrl.u32 %v2585, 7
    %v2587 = vadd.s32 %v2586, 88
    %2588 = vset.pattern.permute.xlu0 %v2587
    %2589 = vperm.xlu0 %2588, %v437
    %v2590 = vpop.permute.xlu0 %2589
    %v2591 = vlaneseq
    %v2592 = vshrl.u32 %v2591, 7
    %v2593 = vadd.s32 %v2592, 64
    %2594 = vset.pattern.permute.xlu0 %v2593
    %2595 = vperm.xlu0 %2594, %v462
    %v2596 = vpop.permute.xlu0 %2595
    %v2597 = vlaneseq
    %v2598 = vshrl.u32 %v2597, 7
    %v2599 = vadd.s32 %v2598, 72
    %2600 = vset.pattern.permute.xlu0 %v2599
    %2601 = vperm.xlu0 %2600, %v462
    %v2602 = vpop.permute.xlu0 %2601
    %v2603 = vlaneseq
    %v2604 = vshrl.u32 %v2603, 7
    %v2605 = vadd.s32 %v2604, 80
    %2606 = vset.pattern.permute.xlu0 %v2605
    %2607 = vperm.xlu0 %2606, %v462
    %v2608 = vpop.permute.xlu0 %2607
    %v2609 = vlaneseq
    %v2610 = vshrl.u32 %v2609, 7
    %v2611 = vadd.s32 %v2610, 88
    %2612 = vset.pattern.permute.xlu0 %v2611
    %2613 = vperm.xlu0 %2612, %v462
    %v2614 = vpop.permute.xlu0 %2613
    %vm2615 = vcmp.eq.s32.totalorder %v2236, %v78
    %vm2616 = vcmp.eq.s32.totalorder %v2242, %v78
    %vm2617 = vcmp.eq.s32.totalorder %v2248, %v78
    %vm2618 = vcmp.eq.s32.totalorder %v2254, %v78
    %vm2619 = vcmp.eq.s32.totalorder %v2260, %v78
    %vm2620 = vcmp.eq.s32.totalorder %v2266, %v78
    %vm2621 = vcmp.eq.s32.totalorder %v2272, %v78
    %vm2622 = vcmp.eq.s32.totalorder %v2278, %v78
    %vm2623 = vcmp.eq.s32.totalorder %v2284, %v78
    %vm2624 = vcmp.eq.s32.totalorder %v2290, %v78
    %vm2625 = vcmp.eq.s32.totalorder %v2296, %v78
    %vm2626 = vcmp.eq.s32.totalorder %v2302, %v78
    %vm2627 = vcmp.eq.s32.totalorder %v2308, %v78
    %vm2628 = vcmp.eq.s32.totalorder %v2314, %v78
    %vm2629 = vcmp.eq.s32.totalorder %v2320, %v78
    %vm2630 = vcmp.eq.s32.totalorder %v2326, %v78
    %vm2631 = vcmp.eq.s32.totalorder %v2332, %v78
    %vm2632 = vcmp.eq.s32.totalorder %v2338, %v78
    %vm2633 = vcmp.eq.s32.totalorder %v2344, %v78
    %vm2634 = vcmp.eq.s32.totalorder %v2350, %v78
    %vm2635 = vcmp.eq.s32.totalorder %v2356, %v78
    %vm2636 = vcmp.eq.s32.totalorder %v2362, %v78
    %vm2637 = vcmp.eq.s32.totalorder %v2368, %v78
    %vm2638 = vcmp.eq.s32.totalorder %v2374, %v78
    %vm2639 = vcmp.eq.s32.totalorder %v2380, %v78
    %vm2640 = vcmp.eq.s32.totalorder %v2386, %v78
    %vm2641 = vcmp.eq.s32.totalorder %v2392, %v78
    %vm2642 = vcmp.eq.s32.totalorder %v2398, %v78
    %vm2643 = vcmp.eq.s32.totalorder %v2404, %v78
    %vm2644 = vcmp.eq.s32.totalorder %v2410, %v78
    %vm2645 = vcmp.eq.s32.totalorder %v2416, %v78
    %vm2646 = vcmp.eq.s32.totalorder %v2422, %v78
    %vm2647 = vcmp.eq.s32.totalorder %v2428, %v78
    %vm2648 = vcmp.eq.s32.totalorder %v2434, %v78
    %vm2649 = vcmp.eq.s32.totalorder %v2440, %v78
    %vm2650 = vcmp.eq.s32.totalorder %v2446, %v78
    %vm2651 = vcmp.eq.s32.totalorder %v2452, %v78
    %vm2652 = vcmp.eq.s32.totalorder %v2458, %v78
    %vm2653 = vcmp.eq.s32.totalorder %v2464, %v78
    %vm2654 = vcmp.eq.s32.totalorder %v2470, %v78
    %vm2655 = vcmp.eq.s32.totalorder %v2476, %v78
    %vm2656 = vcmp.eq.s32.totalorder %v2482, %v78
    %vm2657 = vcmp.eq.s32.totalorder %v2488, %v78
    %vm2658 = vcmp.eq.s32.totalorder %v2494, %v78
    %vm2659 = vcmp.eq.s32.totalorder %v2500, %v78
    %vm2660 = vcmp.eq.s32.totalorder %v2506, %v78
    %vm2661 = vcmp.eq.s32.totalorder %v2512, %v78
    %vm2662 = vcmp.eq.s32.totalorder %v2518, %v78
    %vm2663 = vcmp.eq.s32.totalorder %v2524, %v78
    %vm2664 = vcmp.eq.s32.totalorder %v2530, %v78
    %vm2665 = vcmp.eq.s32.totalorder %v2536, %v78
    %vm2666 = vcmp.eq.s32.totalorder %v2542, %v78
    %vm2667 = vcmp.eq.s32.totalorder %v2548, %v78
    %vm2668 = vcmp.eq.s32.totalorder %v2554, %v78
    %vm2669 = vcmp.eq.s32.totalorder %v2560, %v78
    %vm2670 = vcmp.eq.s32.totalorder %v2566, %v78
    %vm2671 = vcmp.eq.s32.totalorder %v2572, %v78
    %vm2672 = vcmp.eq.s32.totalorder %v2578, %v78
    %vm2673 = vcmp.eq.s32.totalorder %v2584, %v78
    %vm2674 = vcmp.eq.s32.totalorder %v2590, %v78
    %vm2675 = vcmp.eq.s32.totalorder %v2596, %v78
    %vm2676 = vcmp.eq.s32.totalorder %v2602, %v78
    %vm2677 = vcmp.eq.s32.totalorder %v2608, %v78
    %vm2678 = vcmp.eq.s32.totalorder %v2614, %v78
    %v2679 = vlaneseq
    %v2680 = vshrl.u32 %v2679, 7
    %v2681 = vadd.s32 %v2680, 64
    %2682 = vset.pattern.permute.xlu0 %v2681
    %2683 = vperm.xlu0 %2682, %v551
    %v2684 = vpop.permute.xlu0 %2683
    %v2685 = vlaneseq
    %v2686 = vshrl.u32 %v2685, 7
    %v2687 = vadd.s32 %v2686, 72
    %2688 = vset.pattern.permute.xlu0 %v2687
    %2689 = vperm.xlu0 %2688, %v551
    %v2690 = vpop.permute.xlu0 %2689
    %v2691 = vlaneseq
    %v2692 = vshrl.u32 %v2691, 7
    %v2693 = vadd.s32 %v2692, 80
    %2694 = vset.pattern.permute.xlu0 %v2693
    %2695 = vperm.xlu0 %2694, %v551
    %v2696 = vpop.permute.xlu0 %2695
    %v2697 = vlaneseq
    %v2698 = vshrl.u32 %v2697, 7
    %v2699 = vadd.s32 %v2698, 88
    %2700 = vset.pattern.permute.xlu0 %v2699
    %2701 = vperm.xlu0 %2700, %v551
    %v2702 = vpop.permute.xlu0 %2701
    %v2703 = vlaneseq
    %v2704 = vshrl.u32 %v2703, 7
    %v2705 = vadd.s32 %v2704, 64
    %2706 = vset.pattern.permute.xlu0 %v2705
    %2707 = vperm.xlu0 %2706, %v576
    %v2708 = vpop.permute.xlu0 %2707
    %v2709 = vlaneseq
    %v2710 = vshrl.u32 %v2709, 7
    %v2711 = vadd.s32 %v2710, 72
    %2712 = vset.pattern.permute.xlu0 %v2711
    %2713 = vperm.xlu0 %2712, %v576
    %v2714 = vpop.permute.xlu0 %2713
    %v2715 = vlaneseq
    %v2716 = vshrl.u32 %v2715, 7
    %v2717 = vadd.s32 %v2716, 80
    %2718 = vset.pattern.permute.xlu0 %v2717
    %2719 = vperm.xlu0 %2718, %v576
    %v2720 = vpop.permute.xlu0 %2719
    %v2721 = vlaneseq
    %v2722 = vshrl.u32 %v2721, 7
    %v2723 = vadd.s32 %v2722, 88
    %2724 = vset.pattern.permute.xlu0 %v2723
    %2725 = vperm.xlu0 %2724, %v576
    %v2726 = vpop.permute.xlu0 %2725
    %v2727 = vlaneseq
    %v2728 = vshrl.u32 %v2727, 7
    %v2729 = vadd.s32 %v2728, 64
    %2730 = vset.pattern.permute.xlu0 %v2729
    %2731 = vperm.xlu0 %2730, %v601
    %v2732 = vpop.permute.xlu0 %2731
    %v2733 = vlaneseq
    %v2734 = vshrl.u32 %v2733, 7
    %v2735 = vadd.s32 %v2734, 72
    %2736 = vset.pattern.permute.xlu0 %v2735
    %2737 = vperm.xlu0 %2736, %v601
    %v2738 = vpop.permute.xlu0 %2737
    %v2739 = vlaneseq
    %v2740 = vshrl.u32 %v2739, 7
    %v2741 = vadd.s32 %v2740, 80
    %2742 = vset.pattern.permute.xlu0 %v2741
    %2743 = vperm.xlu0 %2742, %v601
    %v2744 = vpop.permute.xlu0 %2743
    %v2745 = vlaneseq
    %v2746 = vshrl.u32 %v2745, 7
    %v2747 = vadd.s32 %v2746, 88
    %2748 = vset.pattern.permute.xlu0 %v2747
    %2749 = vperm.xlu0 %2748, %v601
    %v2750 = vpop.permute.xlu0 %2749
    %v2751 = vlaneseq
    %v2752 = vshrl.u32 %v2751, 7
    %v2753 = vadd.s32 %v2752, 64
    %2754 = vset.pattern.permute.xlu0 %v2753
    %2755 = vperm.xlu0 %2754, %v626
    %v2756 = vpop.permute.xlu0 %2755
    %v2757 = vlaneseq
    %v2758 = vshrl.u32 %v2757, 7
    %v2759 = vadd.s32 %v2758, 72
    %2760 = vset.pattern.permute.xlu0 %v2759
    %2761 = vperm.xlu0 %2760, %v626
    %v2762 = vpop.permute.xlu0 %2761
    %v2763 = vlaneseq
    %v2764 = vshrl.u32 %v2763, 7
    %v2765 = vadd.s32 %v2764, 80
    %2766 = vset.pattern.permute.xlu0 %v2765
    %2767 = vperm.xlu0 %2766, %v626
    %v2768 = vpop.permute.xlu0 %2767
    %v2769 = vlaneseq
    %v2770 = vshrl.u32 %v2769, 7
    %v2771 = vadd.s32 %v2770, 88
    %2772 = vset.pattern.permute.xlu0 %v2771
    %2773 = vperm.xlu0 %2772, %v626
    %v2774 = vpop.permute.xlu0 %2773
    %v2775 = vlaneseq
    %v2776 = vshrl.u32 %v2775, 7
    %v2777 = vadd.s32 %v2776, 64
    %2778 = vset.pattern.permute.xlu0 %v2777
    %2779 = vperm.xlu0 %2778, %v651
    %v2780 = vpop.permute.xlu0 %2779
    %v2781 = vlaneseq
    %v2782 = vshrl.u32 %v2781, 7
    %v2783 = vadd.s32 %v2782, 72
    %2784 = vset.pattern.permute.xlu0 %v2783
    %2785 = vperm.xlu0 %2784, %v651
    %v2786 = vpop.permute.xlu0 %2785
    %v2787 = vlaneseq
    %v2788 = vshrl.u32 %v2787, 7
    %v2789 = vadd.s32 %v2788, 80
    %2790 = vset.pattern.permute.xlu0 %v2789
    %2791 = vperm.xlu0 %2790, %v651
    %v2792 = vpop.permute.xlu0 %2791
    %v2793 = vlaneseq
    %v2794 = vshrl.u32 %v2793, 7
    %v2795 = vadd.s32 %v2794, 88
    %2796 = vset.pattern.permute.xlu0 %v2795
    %2797 = vperm.xlu0 %2796, %v651
    %v2798 = vpop.permute.xlu0 %2797
    %v2799 = vlaneseq
    %v2800 = vshrl.u32 %v2799, 7
    %v2801 = vadd.s32 %v2800, 64
    %2802 = vset.pattern.permute.xlu0 %v2801
    %2803 = vperm.xlu0 %2802, %v676
    %v2804 = vpop.permute.xlu0 %2803
    %v2805 = vlaneseq
    %v2806 = vshrl.u32 %v2805, 7
    %v2807 = vadd.s32 %v2806, 72
    %2808 = vset.pattern.permute.xlu0 %v2807
    %2809 = vperm.xlu0 %2808, %v676
    %v2810 = vpop.permute.xlu0 %2809
    %v2811 = vlaneseq
    %v2812 = vshrl.u32 %v2811, 7
    %v2813 = vadd.s32 %v2812, 80
    %2814 = vset.pattern.permute.xlu0 %v2813
    %2815 = vperm.xlu0 %2814, %v676
    %v2816 = vpop.permute.xlu0 %2815
    %v2817 = vlaneseq
    %v2818 = vshrl.u32 %v2817, 7
    %v2819 = vadd.s32 %v2818, 88
    %2820 = vset.pattern.permute.xlu0 %v2819
    %2821 = vperm.xlu0 %2820, %v676
    %v2822 = vpop.permute.xlu0 %2821
    %v2823 = vlaneseq
    %v2824 = vshrl.u32 %v2823, 7
    %v2825 = vadd.s32 %v2824, 64
    %2826 = vset.pattern.permute.xlu0 %v2825
    %2827 = vperm.xlu0 %2826, %v701
    %v2828 = vpop.permute.xlu0 %2827
    %v2829 = vlaneseq
    %v2830 = vshrl.u32 %v2829, 7
    %v2831 = vadd.s32 %v2830, 72
    %2832 = vset.pattern.permute.xlu0 %v2831
    %2833 = vperm.xlu0 %2832, %v701
    %v2834 = vpop.permute.xlu0 %2833
    %v2835 = vlaneseq
    %v2836 = vshrl.u32 %v2835, 7
    %v2837 = vadd.s32 %v2836, 80
    %2838 = vset.pattern.permute.xlu0 %v2837
    %2839 = vperm.xlu0 %2838, %v701
    %v2840 = vpop.permute.xlu0 %2839
    %v2841 = vlaneseq
    %v2842 = vshrl.u32 %v2841, 7
    %v2843 = vadd.s32 %v2842, 88
    %2844 = vset.pattern.permute.xlu0 %v2843
    %2845 = vperm.xlu0 %2844, %v701
    %v2846 = vpop.permute.xlu0 %2845
    %v2847 = vlaneseq
    %v2848 = vshrl.u32 %v2847, 7
    %v2849 = vadd.s32 %v2848, 64
    %2850 = vset.pattern.permute.xlu0 %v2849
    %2851 = vperm.xlu0 %2850, %v726
    %v2852 = vpop.permute.xlu0 %2851
    %v2853 = vlaneseq
    %v2854 = vshrl.u32 %v2853, 7
    %v2855 = vadd.s32 %v2854, 72
    %2856 = vset.pattern.permute.xlu0 %v2855
    %2857 = vperm.xlu0 %2856, %v726
    %v2858 = vpop.permute.xlu0 %2857
    %v2859 = vlaneseq
    %v2860 = vshrl.u32 %v2859, 7
    %v2861 = vadd.s32 %v2860, 80
    %2862 = vset.pattern.permute.xlu0 %v2861
    %2863 = vperm.xlu0 %2862, %v726
    %v2864 = vpop.permute.xlu0 %2863
    %v2865 = vlaneseq
    %v2866 = vshrl.u32 %v2865, 7
    %v2867 = vadd.s32 %v2866, 88
    %2868 = vset.pattern.permute.xlu0 %v2867
    %2869 = vperm.xlu0 %2868, %v726
    %v2870 = vpop.permute.xlu0 %2869
    %v2871 = vlaneseq
    %v2872 = vshrl.u32 %v2871, 7
    %v2873 = vadd.s32 %v2872, 64
    %2874 = vset.pattern.permute.xlu0 %v2873
    %2875 = vperm.xlu0 %2874, %v751
    %v2876 = vpop.permute.xlu0 %2875
    %v2877 = vlaneseq
    %v2878 = vshrl.u32 %v2877, 7
    %v2879 = vadd.s32 %v2878, 72
    %2880 = vset.pattern.permute.xlu0 %v2879
    %2881 = vperm.xlu0 %2880, %v751
    %v2882 = vpop.permute.xlu0 %2881
    %v2883 = vlaneseq
    %v2884 = vshrl.u32 %v2883, 7
    %v2885 = vadd.s32 %v2884, 80
    %2886 = vset.pattern.permute.xlu0 %v2885
    %2887 = vperm.xlu0 %2886, %v751
    %v2888 = vpop.permute.xlu0 %2887
    %v2889 = vlaneseq
    %v2890 = vshrl.u32 %v2889, 7
    %v2891 = vadd.s32 %v2890, 88
    %2892 = vset.pattern.permute.xlu0 %v2891
    %2893 = vperm.xlu0 %2892, %v751
    %v2894 = vpop.permute.xlu0 %2893
    %v2895 = vlaneseq
    %v2896 = vshrl.u32 %v2895, 7
    %v2897 = vadd.s32 %v2896, 64
    %2898 = vset.pattern.permute.xlu0 %v2897
    %2899 = vperm.xlu0 %2898, %v776
    %v2900 = vpop.permute.xlu0 %2899
    %v2901 = vlaneseq
    %v2902 = vshrl.u32 %v2901, 7
    %v2903 = vadd.s32 %v2902, 72
    %2904 = vset.pattern.permute.xlu0 %v2903
    %2905 = vperm.xlu0 %2904, %v776
    %v2906 = vpop.permute.xlu0 %2905
    %v2907 = vlaneseq
    %v2908 = vshrl.u32 %v2907, 7
    %v2909 = vadd.s32 %v2908, 80
    %2910 = vset.pattern.permute.xlu0 %v2909
    %2911 = vperm.xlu0 %2910, %v776
    %v2912 = vpop.permute.xlu0 %2911
    %v2913 = vlaneseq
    %v2914 = vshrl.u32 %v2913, 7
    %v2915 = vadd.s32 %v2914, 88
    %2916 = vset.pattern.permute.xlu0 %v2915
    %2917 = vperm.xlu0 %2916, %v776
    %v2918 = vpop.permute.xlu0 %2917
    %v2919 = vlaneseq
    %v2920 = vshrl.u32 %v2919, 7
    %v2921 = vadd.s32 %v2920, 64
    %2922 = vset.pattern.permute.xlu0 %v2921
    %2923 = vperm.xlu0 %2922, %v801
    %v2924 = vpop.permute.xlu0 %2923
    %v2925 = vlaneseq
    %v2926 = vshrl.u32 %v2925, 7
    %v2927 = vadd.s32 %v2926, 72
    %2928 = vset.pattern.permute.xlu0 %v2927
    %2929 = vperm.xlu0 %2928, %v801
    %v2930 = vpop.permute.xlu0 %2929
    %v2931 = vlaneseq
    %v2932 = vshrl.u32 %v2931, 7
    %v2933 = vadd.s32 %v2932, 80
    %2934 = vset.pattern.permute.xlu0 %v2933
    %2935 = vperm.xlu0 %2934, %v801
    %v2936 = vpop.permute.xlu0 %2935
    %v2937 = vlaneseq
    %v2938 = vshrl.u32 %v2937, 7
    %v2939 = vadd.s32 %v2938, 88
    %2940 = vset.pattern.permute.xlu0 %v2939
    %2941 = vperm.xlu0 %2940, %v801
    %v2942 = vpop.permute.xlu0 %2941
    %v2943 = vlaneseq
    %v2944 = vshrl.u32 %v2943, 7
    %v2945 = vadd.s32 %v2944, 64
    %2946 = vset.pattern.permute.xlu0 %v2945
    %2947 = vperm.xlu0 %2946, %v826
    %v2948 = vpop.permute.xlu0 %2947
    %v2949 = vlaneseq
    %v2950 = vshrl.u32 %v2949, 7
    %v2951 = vadd.s32 %v2950, 72
    %2952 = vset.pattern.permute.xlu0 %v2951
    %2953 = vperm.xlu0 %2952, %v826
    %v2954 = vpop.permute.xlu0 %2953
    %v2955 = vlaneseq
    %v2956 = vshrl.u32 %v2955, 7
    %v2957 = vadd.s32 %v2956, 80
    %2958 = vset.pattern.permute.xlu0 %v2957
    %2959 = vperm.xlu0 %2958, %v826
    %v2960 = vpop.permute.xlu0 %2959
    %v2961 = vlaneseq
    %v2962 = vshrl.u32 %v2961, 7
    %v2963 = vadd.s32 %v2962, 88
    %2964 = vset.pattern.permute.xlu0 %v2963
    %2965 = vperm.xlu0 %2964, %v826
    %v2966 = vpop.permute.xlu0 %2965
    %v2967 = vlaneseq
    %v2968 = vshrl.u32 %v2967, 7
    %v2969 = vadd.s32 %v2968, 64
    %2970 = vset.pattern.permute.xlu0 %v2969
    %2971 = vperm.xlu0 %2970, %v851
    %v2972 = vpop.permute.xlu0 %2971
    %v2973 = vlaneseq
    %v2974 = vshrl.u32 %v2973, 7
    %v2975 = vadd.s32 %v2974, 72
    %2976 = vset.pattern.permute.xlu0 %v2975
    %2977 = vperm.xlu0 %2976, %v851
    %v2978 = vpop.permute.xlu0 %2977
    %v2979 = vlaneseq
    %v2980 = vshrl.u32 %v2979, 7
    %v2981 = vadd.s32 %v2980, 80
    %2982 = vset.pattern.permute.xlu0 %v2981
    %2983 = vperm.xlu0 %2982, %v851
    %v2984 = vpop.permute.xlu0 %2983
    %v2985 = vlaneseq
    %v2986 = vshrl.u32 %v2985, 7
    %v2987 = vadd.s32 %v2986, 88
    %2988 = vset.pattern.permute.xlu0 %v2987
    %2989 = vperm.xlu0 %2988, %v851
    %v2990 = vpop.permute.xlu0 %2989
    %v2991 = vlaneseq
    %v2992 = vshrl.u32 %v2991, 7
    %v2993 = vadd.s32 %v2992, 64
    %2994 = vset.pattern.permute.xlu0 %v2993
    %2995 = vperm.xlu0 %2994, %v876
    %v2996 = vpop.permute.xlu0 %2995
    %v2997 = vlaneseq
    %v2998 = vshrl.u32 %v2997, 7
    %v2999 = vadd.s32 %v2998, 72
    %3000 = vset.pattern.permute.xlu0 %v2999
    %3001 = vperm.xlu0 %3000, %v876
    %v3002 = vpop.permute.xlu0 %3001
    %v3003 = vlaneseq
    %v3004 = vshrl.u32 %v3003, 7
    %v3005 = vadd.s32 %v3004, 80
    %3006 = vset.pattern.permute.xlu0 %v3005
    %3007 = vperm.xlu0 %3006, %v876
    %v3008 = vpop.permute.xlu0 %3007
    %v3009 = vlaneseq
    %v3010 = vshrl.u32 %v3009, 7
    %v3011 = vadd.s32 %v3010, 88
    %3012 = vset.pattern.permute.xlu0 %v3011
    %3013 = vperm.xlu0 %3012, %v876
    %v3014 = vpop.permute.xlu0 %3013
    %v3015 = vlaneseq
    %v3016 = vshrl.u32 %v3015, 7
    %v3017 = vadd.s32 %v3016, 64
    %3018 = vset.pattern.permute.xlu0 %v3017
    %3019 = vperm.xlu0 %3018, %v901
    %v3020 = vpop.permute.xlu0 %3019
    %v3021 = vlaneseq
    %v3022 = vshrl.u32 %v3021, 7
    %v3023 = vadd.s32 %v3022, 72
    %3024 = vset.pattern.permute.xlu0 %v3023
    %3025 = vperm.xlu0 %3024, %v901
    %v3026 = vpop.permute.xlu0 %3025
    %v3027 = vlaneseq
    %v3028 = vshrl.u32 %v3027, 7
    %v3029 = vadd.s32 %v3028, 80
    %3030 = vset.pattern.permute.xlu0 %v3029
    %3031 = vperm.xlu0 %3030, %v901
    %v3032 = vpop.permute.xlu0 %3031
    %v3033 = vlaneseq
    %v3034 = vshrl.u32 %v3033, 7
    %v3035 = vadd.s32 %v3034, 88
    %3036 = vset.pattern.permute.xlu0 %v3035
    %3037 = vperm.xlu0 %3036, %v901
    %v3038 = vpop.permute.xlu0 %3037
    %v3039 = vlaneseq
    %v3040 = vshrl.u32 %v3039, 7
    %v3041 = vadd.s32 %v3040, 64
    %3042 = vset.pattern.permute.xlu0 %v3041
    %3043 = vperm.xlu0 %3042, %v926
    %v3044 = vpop.permute.xlu0 %3043
    %v3045 = vlaneseq
    %v3046 = vshrl.u32 %v3045, 7
    %v3047 = vadd.s32 %v3046, 72
    %3048 = vset.pattern.permute.xlu0 %v3047
    %3049 = vperm.xlu0 %3048, %v926
    %v3050 = vpop.permute.xlu0 %3049
    %v3051 = vlaneseq
    %v3052 = vshrl.u32 %v3051, 7
    %v3053 = vadd.s32 %v3052, 80
    %3054 = vset.pattern.permute.xlu0 %v3053
    %3055 = vperm.xlu0 %3054, %v926
    %v3056 = vpop.permute.xlu0 %3055
    %v3057 = vlaneseq
    %v3058 = vshrl.u32 %v3057, 7
    %v3059 = vadd.s32 %v3058, 88
    %3060 = vset.pattern.permute.xlu0 %v3059
    %3061 = vperm.xlu0 %3060, %v926
    %v3062 = vpop.permute.xlu0 %3061
    %v3063 = vsel %vm2615, %v2684, 0.0
    %v3064 = vsel %vm2616, %v2690, 0.0
    %v3065 = vsel %vm2617, %v2696, 0.0
    %v3066 = vsel %vm2618, %v2702, 0.0
    %v3067 = vsel %vm2619, %v2708, 0.0
    %v3068 = vsel %vm2620, %v2714, 0.0
    %v3069 = vsel %vm2621, %v2720, 0.0
    %v3070 = vsel %vm2622, %v2726, 0.0
    %v3071 = vsel %vm2623, %v2732, 0.0
    %v3072 = vsel %vm2624, %v2738, 0.0
    %v3073 = vsel %vm2625, %v2744, 0.0
    %v3074 = vsel %vm2626, %v2750, 0.0
    %v3075 = vsel %vm2627, %v2756, 0.0
    %v3076 = vsel %vm2628, %v2762, 0.0
    %v3077 = vsel %vm2629, %v2768, 0.0
    %v3078 = vsel %vm2630, %v2774, 0.0
    %v3079 = vsel %vm2631, %v2780, 0.0
    %v3080 = vsel %vm2632, %v2786, 0.0
    %v3081 = vsel %vm2633, %v2792, 0.0
    %v3082 = vsel %vm2634, %v2798, 0.0
    %v3083 = vsel %vm2635, %v2804, 0.0
    %v3084 = vsel %vm2636, %v2810, 0.0
    %v3085 = vsel %vm2637, %v2816, 0.0
    %v3086 = vsel %vm2638, %v2822, 0.0
    %v3087 = vsel %vm2639, %v2828, 0.0
    %v3088 = vsel %vm2640, %v2834, 0.0
    %v3089 = vsel %vm2641, %v2840, 0.0
    %v3090 = vsel %vm2642, %v2846, 0.0
    %v3091 = vsel %vm2643, %v2852, 0.0
    %v3092 = vsel %vm2644, %v2858, 0.0
    %v3093 = vsel %vm2645, %v2864, 0.0
    %v3094 = vsel %vm2646, %v2870, 0.0
    %v3095 = vsel %vm2647, %v2876, 0.0
    %v3096 = vsel %vm2648, %v2882, 0.0
    %v3097 = vsel %vm2649, %v2888, 0.0
    %v3098 = vsel %vm2650, %v2894, 0.0
    %v3099 = vsel %vm2651, %v2900, 0.0
    %v3100 = vsel %vm2652, %v2906, 0.0
    %v3101 = vsel %vm2653, %v2912, 0.0
    %v3102 = vsel %vm2654, %v2918, 0.0
    %v3103 = vsel %vm2655, %v2924, 0.0
    %v3104 = vsel %vm2656, %v2930, 0.0
    %v3105 = vsel %vm2657, %v2936, 0.0
    %v3106 = vsel %vm2658, %v2942, 0.0
    %v3107 = vsel %vm2659, %v2948, 0.0
    %v3108 = vsel %vm2660, %v2954, 0.0
    %v3109 = vsel %vm2661, %v2960, 0.0
    %v3110 = vsel %vm2662, %v2966, 0.0
    %v3111 = vsel %vm2663, %v2972, 0.0
    %v3112 = vsel %vm2664, %v2978, 0.0
    %v3113 = vsel %vm2665, %v2984, 0.0
    %v3114 = vsel %vm2666, %v2990, 0.0
    %v3115 = vsel %vm2667, %v2996, 0.0
    %v3116 = vsel %vm2668, %v3002, 0.0
    %v3117 = vsel %vm2669, %v3008, 0.0
    %v3118 = vsel %vm2670, %v3014, 0.0
    %v3119 = vsel %vm2671, %v3020, 0.0
    %v3120 = vsel %vm2672, %v3026, 0.0
    %v3121 = vsel %vm2673, %v3032, 0.0
    %v3122 = vsel %vm2674, %v3038, 0.0
    %v3123 = vsel %vm2675, %v3044, 0.0
    %v3124 = vsel %vm2676, %v3050, 0.0
    %v3125 = vsel %vm2677, %v3056, 0.0
    %v3126 = vsel %vm2678, %v3062, 0.0
    %v3127 = vadd.f32 %v3063, %v3064
    %v3128 = vadd.f32 %v3127, %v3065
    %v3129 = vadd.f32 %v3128, %v3066
    %v3130 = vrot.slane %v3129, 4
    %v3131 = vadd.f32 %v3129, %v3130
    %v3132 = vrot.slane %v3131, 2
    %v3133 = vadd.f32 %v3131, %v3132
    %v3134 = vrot.slane %v3133, 1
    %v3135 = vadd.f32 %v3133, %v3134
    %v3136 = vadd.f32 %v3067, %v3068
    %v3137 = vadd.f32 %v3136, %v3069
    %v3138 = vadd.f32 %v3137, %v3070
    %v3139 = vrot.slane %v3138, 4
    %v3140 = vadd.f32 %v3138, %v3139
    %v3141 = vrot.slane %v3140, 2
    %v3142 = vadd.f32 %v3140, %v3141
    %v3143 = vrot.slane %v3142, 1
    %v3144 = vadd.f32 %v3142, %v3143
    %v3145 = vadd.f32 %v3071, %v3072
    %v3146 = vadd.f32 %v3145, %v3073
    %v3147 = vadd.f32 %v3146, %v3074
    %v3148 = vrot.slane %v3147, 4
    %v3149 = vadd.f32 %v3147, %v3148
    %v3150 = vrot.slane %v3149, 2
    %v3151 = vadd.f32 %v3149, %v3150
    %v3152 = vrot.slane %v3151, 1
    %v3153 = vadd.f32 %v3151, %v3152
    %v3154 = vadd.f32 %v3075, %v3076
    %v3155 = vadd.f32 %v3154, %v3077
    %v3156 = vadd.f32 %v3155, %v3078
    %v3157 = vrot.slane %v3156, 4
    %v3158 = vadd.f32 %v3156, %v3157
    %v3159 = vrot.slane %v3158, 2
    %v3160 = vadd.f32 %v3158, %v3159
    %v3161 = vrot.slane %v3160, 1
    %v3162 = vadd.f32 %v3160, %v3161
    %v3163 = vadd.f32 %v3079, %v3080
    %v3164 = vadd.f32 %v3163, %v3081
    %v3165 = vadd.f32 %v3164, %v3082
    %v3166 = vrot.slane %v3165, 4
    %v3167 = vadd.f32 %v3165, %v3166
    %v3168 = vrot.slane %v3167, 2
    %v3169 = vadd.f32 %v3167, %v3168
    %v3170 = vrot.slane %v3169, 1
    %v3171 = vadd.f32 %v3169, %v3170
    %v3172 = vadd.f32 %v3083, %v3084
    %v3173 = vadd.f32 %v3172, %v3085
    %v3174 = vadd.f32 %v3173, %v3086
    %v3175 = vrot.slane %v3174, 4
    %v3176 = vadd.f32 %v3174, %v3175
    %v3177 = vrot.slane %v3176, 2
    %v3178 = vadd.f32 %v3176, %v3177
    %v3179 = vrot.slane %v3178, 1
    %v3180 = vadd.f32 %v3178, %v3179
    %v3181 = vadd.f32 %v3087, %v3088
    %v3182 = vadd.f32 %v3181, %v3089
    %v3183 = vadd.f32 %v3182, %v3090
    %v3184 = vrot.slane %v3183, 4
    %v3185 = vadd.f32 %v3183, %v3184
    %v3186 = vrot.slane %v3185, 2
    %v3187 = vadd.f32 %v3185, %v3186
    %v3188 = vrot.slane %v3187, 1
    %v3189 = vadd.f32 %v3187, %v3188
    %v3190 = vadd.f32 %v3091, %v3092
    %v3191 = vadd.f32 %v3190, %v3093
    %v3192 = vadd.f32 %v3191, %v3094
    %v3193 = vrot.slane %v3192, 4
    %v3194 = vadd.f32 %v3192, %v3193
    %v3195 = vrot.slane %v3194, 2
    %v3196 = vadd.f32 %v3194, %v3195
    %v3197 = vrot.slane %v3196, 1
    %v3198 = vadd.f32 %v3196, %v3197
    %v3199 = vadd.f32 %v3095, %v3096
    %v3200 = vadd.f32 %v3199, %v3097
    %v3201 = vadd.f32 %v3200, %v3098
    %v3202 = vrot.slane %v3201, 4
    %v3203 = vadd.f32 %v3201, %v3202
    %v3204 = vrot.slane %v3203, 2
    %v3205 = vadd.f32 %v3203, %v3204
    %v3206 = vrot.slane %v3205, 1
    %v3207 = vadd.f32 %v3205, %v3206
    %v3208 = vadd.f32 %v3099, %v3100
    %v3209 = vadd.f32 %v3208, %v3101
    %v3210 = vadd.f32 %v3209, %v3102
    %v3211 = vrot.slane %v3210, 4
    %v3212 = vadd.f32 %v3210, %v3211
    %v3213 = vrot.slane %v3212, 2
    %v3214 = vadd.f32 %v3212, %v3213
    %v3215 = vrot.slane %v3214, 1
    %v3216 = vadd.f32 %v3214, %v3215
    %v3217 = vadd.f32 %v3103, %v3104
    %v3218 = vadd.f32 %v3217, %v3105
    %v3219 = vadd.f32 %v3218, %v3106
    %v3220 = vrot.slane %v3219, 4
    %v3221 = vadd.f32 %v3219, %v3220
    %v3222 = vrot.slane %v3221, 2
    %v3223 = vadd.f32 %v3221, %v3222
    %v3224 = vrot.slane %v3223, 1
    %v3225 = vadd.f32 %v3223, %v3224
    %v3226 = vadd.f32 %v3107, %v3108
    %v3227 = vadd.f32 %v3226, %v3109
    %v3228 = vadd.f32 %v3227, %v3110
    %v3229 = vrot.slane %v3228, 4
    %v3230 = vadd.f32 %v3228, %v3229
    %v3231 = vrot.slane %v3230, 2
    %v3232 = vadd.f32 %v3230, %v3231
    %v3233 = vrot.slane %v3232, 1
    %v3234 = vadd.f32 %v3232, %v3233
    %v3235 = vadd.f32 %v3111, %v3112
    %v3236 = vadd.f32 %v3235, %v3113
    %v3237 = vadd.f32 %v3236, %v3114
    %v3238 = vrot.slane %v3237, 4
    %v3239 = vadd.f32 %v3237, %v3238
    %v3240 = vrot.slane %v3239, 2
    %v3241 = vadd.f32 %v3239, %v3240
    %v3242 = vrot.slane %v3241, 1
    %v3243 = vadd.f32 %v3241, %v3242
    %v3244 = vadd.f32 %v3115, %v3116
    %v3245 = vadd.f32 %v3244, %v3117
    %v3246 = vadd.f32 %v3245, %v3118
    %v3247 = vrot.slane %v3246, 4
    %v3248 = vadd.f32 %v3246, %v3247
    %v3249 = vrot.slane %v3248, 2
    %v3250 = vadd.f32 %v3248, %v3249
    %v3251 = vrot.slane %v3250, 1
    %v3252 = vadd.f32 %v3250, %v3251
    %v3253 = vadd.f32 %v3119, %v3120
    %v3254 = vadd.f32 %v3253, %v3121
    %v3255 = vadd.f32 %v3254, %v3122
    %v3256 = vrot.slane %v3255, 4
    %v3257 = vadd.f32 %v3255, %v3256
    %v3258 = vrot.slane %v3257, 2
    %v3259 = vadd.f32 %v3257, %v3258
    %v3260 = vrot.slane %v3259, 1
    %v3261 = vadd.f32 %v3259, %v3260
    %v3262 = vadd.f32 %v3123, %v3124
    %v3263 = vadd.f32 %v3262, %v3125
    %v3264 = vadd.f32 %v3263, %v3126
    %v3265 = vrot.slane %v3264, 4
    %v3266 = vadd.f32 %v3264, %v3265
    %v3267 = vrot.slane %v3266, 2
    %v3268 = vadd.f32 %v3266, %v3267
    %v3269 = vrot.slane %v3268, 1
    %v3270 = vadd.f32 %v3268, %v3269
    %v3271 = vadd.f32 %v2215, %v3135
    %v3272 = vadd.f32 %v2216, %v3144
    %v3273 = vadd.f32 %v2217, %v3153
    %v3274 = vadd.f32 %v2218, %v3162
    %v3275 = vadd.f32 %v2219, %v3171
    %v3276 = vadd.f32 %v2220, %v3180
    %v3277 = vadd.f32 %v2221, %v3189
    %v3278 = vadd.f32 %v2222, %v3198
    %v3279 = vadd.f32 %v2223, %v3207
    %v3280 = vadd.f32 %v2224, %v3216
    %v3281 = vadd.f32 %v2225, %v3225
    %v3282 = vadd.f32 %v2226, %v3234
    %v3283 = vadd.f32 %v2227, %v3243
    %v3284 = vadd.f32 %v2228, %v3252
    %v3285 = vadd.f32 %v2229, %v3261
    %v3286 = vadd.f32 %v2230, %v3270
    %v3287 = vlaneseq
    %v3288 = vshrl.u32 %v3287, 7
    %v3289 = vadd.s32 %v3288, 96
    %3290 = vset.pattern.permute.xlu0 %v3289
    %3291 = vperm.xlu0 %3290, %v87
    %v3292 = vpop.permute.xlu0 %3291
    %v3293 = vlaneseq
    %v3294 = vshrl.u32 %v3293, 7
    %v3295 = vadd.s32 %v3294, 104
    %3296 = vset.pattern.permute.xlu0 %v3295
    %3297 = vperm.xlu0 %3296, %v87
    %v3298 = vpop.permute.xlu0 %3297
    %v3299 = vlaneseq
    %v3300 = vshrl.u32 %v3299, 7
    %v3301 = vadd.s32 %v3300, 112
    %3302 = vset.pattern.permute.xlu0 %v3301
    %3303 = vperm.xlu0 %3302, %v87
    %v3304 = vpop.permute.xlu0 %3303
    %v3305 = vlaneseq
    %v3306 = vshrl.u32 %v3305, 7
    %v3307 = vadd.s32 %v3306, 120
    %3308 = vset.pattern.permute.xlu0 %v3307
    %3309 = vperm.xlu0 %3308, %v87
    %v3310 = vpop.permute.xlu0 %3309
    %v3311 = vlaneseq
    %v3312 = vshrl.u32 %v3311, 7
    %v3313 = vadd.s32 %v3312, 96
    %3314 = vset.pattern.permute.xlu0 %v3313
    %3315 = vperm.xlu0 %3314, %v112
    %v3316 = vpop.permute.xlu0 %3315
    %v3317 = vlaneseq
    %v3318 = vshrl.u32 %v3317, 7
    %v3319 = vadd.s32 %v3318, 104
    %3320 = vset.pattern.permute.xlu0 %v3319
    %3321 = vperm.xlu0 %3320, %v112
    %v3322 = vpop.permute.xlu0 %3321
    %v3323 = vlaneseq
    %v3324 = vshrl.u32 %v3323, 7
    %v3325 = vadd.s32 %v3324, 112
    %3326 = vset.pattern.permute.xlu0 %v3325
    %3327 = vperm.xlu0 %3326, %v112
    %v3328 = vpop.permute.xlu0 %3327
    %v3329 = vlaneseq
    %v3330 = vshrl.u32 %v3329, 7
    %v3331 = vadd.s32 %v3330, 120
    %3332 = vset.pattern.permute.xlu0 %v3331
    %3333 = vperm.xlu0 %3332, %v112
    %v3334 = vpop.permute.xlu0 %3333
    %v3335 = vlaneseq
    %v3336 = vshrl.u32 %v3335, 7
    %v3337 = vadd.s32 %v3336, 96
    %3338 = vset.pattern.permute.xlu0 %v3337
    %3339 = vperm.xlu0 %3338, %v137
    %v3340 = vpop.permute.xlu0 %3339
    %v3341 = vlaneseq
    %v3342 = vshrl.u32 %v3341, 7
    %v3343 = vadd.s32 %v3342, 104
    %3344 = vset.pattern.permute.xlu0 %v3343
    %3345 = vperm.xlu0 %3344, %v137
    %v3346 = vpop.permute.xlu0 %3345
    %v3347 = vlaneseq
    %v3348 = vshrl.u32 %v3347, 7
    %v3349 = vadd.s32 %v3348, 112
    %3350 = vset.pattern.permute.xlu0 %v3349
    %3351 = vperm.xlu0 %3350, %v137
    %v3352 = vpop.permute.xlu0 %3351
    %v3353 = vlaneseq
    %v3354 = vshrl.u32 %v3353, 7
    %v3355 = vadd.s32 %v3354, 120
    %3356 = vset.pattern.permute.xlu0 %v3355
    %3357 = vperm.xlu0 %3356, %v137
    %v3358 = vpop.permute.xlu0 %3357
    %v3359 = vlaneseq
    %v3360 = vshrl.u32 %v3359, 7
    %v3361 = vadd.s32 %v3360, 96
    %3362 = vset.pattern.permute.xlu0 %v3361
    %3363 = vperm.xlu0 %3362, %v162
    %v3364 = vpop.permute.xlu0 %3363
    %v3365 = vlaneseq
    %v3366 = vshrl.u32 %v3365, 7
    %v3367 = vadd.s32 %v3366, 104
    %3368 = vset.pattern.permute.xlu0 %v3367
    %3369 = vperm.xlu0 %3368, %v162
    %v3370 = vpop.permute.xlu0 %3369
    %v3371 = vlaneseq
    %v3372 = vshrl.u32 %v3371, 7
    %v3373 = vadd.s32 %v3372, 112
    %3374 = vset.pattern.permute.xlu0 %v3373
    %3375 = vperm.xlu0 %3374, %v162
    %v3376 = vpop.permute.xlu0 %3375
    %v3377 = vlaneseq
    %v3378 = vshrl.u32 %v3377, 7
    %v3379 = vadd.s32 %v3378, 120
    %3380 = vset.pattern.permute.xlu0 %v3379
    %3381 = vperm.xlu0 %3380, %v162
    %v3382 = vpop.permute.xlu0 %3381
    %v3383 = vlaneseq
    %v3384 = vshrl.u32 %v3383, 7
    %v3385 = vadd.s32 %v3384, 96
    %3386 = vset.pattern.permute.xlu0 %v3385
    %3387 = vperm.xlu0 %3386, %v187
    %v3388 = vpop.permute.xlu0 %3387
    %v3389 = vlaneseq
    %v3390 = vshrl.u32 %v3389, 7
    %v3391 = vadd.s32 %v3390, 104
    %3392 = vset.pattern.permute.xlu0 %v3391
    %3393 = vperm.xlu0 %3392, %v187
    %v3394 = vpop.permute.xlu0 %3393
    %v3395 = vlaneseq
    %v3396 = vshrl.u32 %v3395, 7
    %v3397 = vadd.s32 %v3396, 112
    %3398 = vset.pattern.permute.xlu0 %v3397
    %3399 = vperm.xlu0 %3398, %v187
    %v3400 = vpop.permute.xlu0 %3399
    %v3401 = vlaneseq
    %v3402 = vshrl.u32 %v3401, 7
    %v3403 = vadd.s32 %v3402, 120
    %3404 = vset.pattern.permute.xlu0 %v3403
    %3405 = vperm.xlu0 %3404, %v187
    %v3406 = vpop.permute.xlu0 %3405
    %v3407 = vlaneseq
    %v3408 = vshrl.u32 %v3407, 7
    %v3409 = vadd.s32 %v3408, 96
    %3410 = vset.pattern.permute.xlu0 %v3409
    %3411 = vperm.xlu0 %3410, %v212
    %v3412 = vpop.permute.xlu0 %3411
    %v3413 = vlaneseq
    %v3414 = vshrl.u32 %v3413, 7
    %v3415 = vadd.s32 %v3414, 104
    %3416 = vset.pattern.permute.xlu0 %v3415
    %3417 = vperm.xlu0 %3416, %v212
    %v3418 = vpop.permute.xlu0 %3417
    %v3419 = vlaneseq
    %v3420 = vshrl.u32 %v3419, 7
    %v3421 = vadd.s32 %v3420, 112
    %3422 = vset.pattern.permute.xlu0 %v3421
    %3423 = vperm.xlu0 %3422, %v212
    %v3424 = vpop.permute.xlu0 %3423
    %v3425 = vlaneseq
    %v3426 = vshrl.u32 %v3425, 7
    %v3427 = vadd.s32 %v3426, 120
    %3428 = vset.pattern.permute.xlu0 %v3427
    %3429 = vperm.xlu0 %3428, %v212
    %v3430 = vpop.permute.xlu0 %3429
    %v3431 = vlaneseq
    %v3432 = vshrl.u32 %v3431, 7
    %v3433 = vadd.s32 %v3432, 96
    %3434 = vset.pattern.permute.xlu0 %v3433
    %3435 = vperm.xlu0 %3434, %v237
    %v3436 = vpop.permute.xlu0 %3435
    %v3437 = vlaneseq
    %v3438 = vshrl.u32 %v3437, 7
    %v3439 = vadd.s32 %v3438, 104
    %3440 = vset.pattern.permute.xlu0 %v3439
    %3441 = vperm.xlu0 %3440, %v237
    %v3442 = vpop.permute.xlu0 %3441
    %v3443 = vlaneseq
    %v3444 = vshrl.u32 %v3443, 7
    %v3445 = vadd.s32 %v3444, 112
    %3446 = vset.pattern.permute.xlu0 %v3445
    %3447 = vperm.xlu0 %3446, %v237
    %v3448 = vpop.permute.xlu0 %3447
    %v3449 = vlaneseq
    %v3450 = vshrl.u32 %v3449, 7
    %v3451 = vadd.s32 %v3450, 120
    %3452 = vset.pattern.permute.xlu0 %v3451
    %3453 = vperm.xlu0 %3452, %v237
    %v3454 = vpop.permute.xlu0 %3453
    %v3455 = vlaneseq
    %v3456 = vshrl.u32 %v3455, 7
    %v3457 = vadd.s32 %v3456, 96
    %3458 = vset.pattern.permute.xlu0 %v3457
    %3459 = vperm.xlu0 %3458, %v262
    %v3460 = vpop.permute.xlu0 %3459
    %v3461 = vlaneseq
    %v3462 = vshrl.u32 %v3461, 7
    %v3463 = vadd.s32 %v3462, 104
    %3464 = vset.pattern.permute.xlu0 %v3463
    %3465 = vperm.xlu0 %3464, %v262
    %v3466 = vpop.permute.xlu0 %3465
    %v3467 = vlaneseq
    %v3468 = vshrl.u32 %v3467, 7
    %v3469 = vadd.s32 %v3468, 112
    %3470 = vset.pattern.permute.xlu0 %v3469
    %3471 = vperm.xlu0 %3470, %v262
    %v3472 = vpop.permute.xlu0 %3471
    %v3473 = vlaneseq
    %v3474 = vshrl.u32 %v3473, 7
    %v3475 = vadd.s32 %v3474, 120
    %3476 = vset.pattern.permute.xlu0 %v3475
    %3477 = vperm.xlu0 %3476, %v262
    %v3478 = vpop.permute.xlu0 %3477
    %v3479 = vlaneseq
    %v3480 = vshrl.u32 %v3479, 7
    %v3481 = vadd.s32 %v3480, 96
    %3482 = vset.pattern.permute.xlu0 %v3481
    %3483 = vperm.xlu0 %3482, %v287
    %v3484 = vpop.permute.xlu0 %3483
    %v3485 = vlaneseq
    %v3486 = vshrl.u32 %v3485, 7
    %v3487 = vadd.s32 %v3486, 104
    %3488 = vset.pattern.permute.xlu0 %v3487
    %3489 = vperm.xlu0 %3488, %v287
    %v3490 = vpop.permute.xlu0 %3489
    %v3491 = vlaneseq
    %v3492 = vshrl.u32 %v3491, 7
    %v3493 = vadd.s32 %v3492, 112
    %3494 = vset.pattern.permute.xlu0 %v3493
    %3495 = vperm.xlu0 %3494, %v287
    %v3496 = vpop.permute.xlu0 %3495
    %v3497 = vlaneseq
    %v3498 = vshrl.u32 %v3497, 7
    %v3499 = vadd.s32 %v3498, 120
    %3500 = vset.pattern.permute.xlu0 %v3499
    %3501 = vperm.xlu0 %3500, %v287
    %v3502 = vpop.permute.xlu0 %3501
    %v3503 = vlaneseq
    %v3504 = vshrl.u32 %v3503, 7
    %v3505 = vadd.s32 %v3504, 96
    %3506 = vset.pattern.permute.xlu0 %v3505
    %3507 = vperm.xlu0 %3506, %v312
    %v3508 = vpop.permute.xlu0 %3507
    %v3509 = vlaneseq
    %v3510 = vshrl.u32 %v3509, 7
    %v3511 = vadd.s32 %v3510, 104
    %3512 = vset.pattern.permute.xlu0 %v3511
    %3513 = vperm.xlu0 %3512, %v312
    %v3514 = vpop.permute.xlu0 %3513
    %v3515 = vlaneseq
    %v3516 = vshrl.u32 %v3515, 7
    %v3517 = vadd.s32 %v3516, 112
    %3518 = vset.pattern.permute.xlu0 %v3517
    %3519 = vperm.xlu0 %3518, %v312
    %v3520 = vpop.permute.xlu0 %3519
    %v3521 = vlaneseq
    %v3522 = vshrl.u32 %v3521, 7
    %v3523 = vadd.s32 %v3522, 120
    %3524 = vset.pattern.permute.xlu0 %v3523
    %3525 = vperm.xlu0 %3524, %v312
    %v3526 = vpop.permute.xlu0 %3525
    %v3527 = vlaneseq
    %v3528 = vshrl.u32 %v3527, 7
    %v3529 = vadd.s32 %v3528, 96
    %3530 = vset.pattern.permute.xlu0 %v3529
    %3531 = vperm.xlu0 %3530, %v337
    %v3532 = vpop.permute.xlu0 %3531
    %v3533 = vlaneseq
    %v3534 = vshrl.u32 %v3533, 7
    %v3535 = vadd.s32 %v3534, 104
    %3536 = vset.pattern.permute.xlu0 %v3535
    %3537 = vperm.xlu0 %3536, %v337
    %v3538 = vpop.permute.xlu0 %3537
    %v3539 = vlaneseq
    %v3540 = vshrl.u32 %v3539, 7
    %v3541 = vadd.s32 %v3540, 112
    %3542 = vset.pattern.permute.xlu0 %v3541
    %3543 = vperm.xlu0 %3542, %v337
    %v3544 = vpop.permute.xlu0 %3543
    %v3545 = vlaneseq
    %v3546 = vshrl.u32 %v3545, 7
    %v3547 = vadd.s32 %v3546, 120
    %3548 = vset.pattern.permute.xlu0 %v3547
    %3549 = vperm.xlu0 %3548, %v337
    %v3550 = vpop.permute.xlu0 %3549
    %v3551 = vlaneseq
    %v3552 = vshrl.u32 %v3551, 7
    %v3553 = vadd.s32 %v3552, 96
    %3554 = vset.pattern.permute.xlu0 %v3553
    %3555 = vperm.xlu0 %3554, %v362
    %v3556 = vpop.permute.xlu0 %3555
    %v3557 = vlaneseq
    %v3558 = vshrl.u32 %v3557, 7
    %v3559 = vadd.s32 %v3558, 104
    %3560 = vset.pattern.permute.xlu0 %v3559
    %3561 = vperm.xlu0 %3560, %v362
    %v3562 = vpop.permute.xlu0 %3561
    %v3563 = vlaneseq
    %v3564 = vshrl.u32 %v3563, 7
    %v3565 = vadd.s32 %v3564, 112
    %3566 = vset.pattern.permute.xlu0 %v3565
    %3567 = vperm.xlu0 %3566, %v362
    %v3568 = vpop.permute.xlu0 %3567
    %v3569 = vlaneseq
    %v3570 = vshrl.u32 %v3569, 7
    %v3571 = vadd.s32 %v3570, 120
    %3572 = vset.pattern.permute.xlu0 %v3571
    %3573 = vperm.xlu0 %3572, %v362
    %v3574 = vpop.permute.xlu0 %3573
    %v3575 = vlaneseq
    %v3576 = vshrl.u32 %v3575, 7
    %v3577 = vadd.s32 %v3576, 96
    %3578 = vset.pattern.permute.xlu0 %v3577
    %3579 = vperm.xlu0 %3578, %v387
    %v3580 = vpop.permute.xlu0 %3579
    %v3581 = vlaneseq
    %v3582 = vshrl.u32 %v3581, 7
    %v3583 = vadd.s32 %v3582, 104
    %3584 = vset.pattern.permute.xlu0 %v3583
    %3585 = vperm.xlu0 %3584, %v387
    %v3586 = vpop.permute.xlu0 %3585
    %v3587 = vlaneseq
    %v3588 = vshrl.u32 %v3587, 7
    %v3589 = vadd.s32 %v3588, 112
    %3590 = vset.pattern.permute.xlu0 %v3589
    %3591 = vperm.xlu0 %3590, %v387
    %v3592 = vpop.permute.xlu0 %3591
    %v3593 = vlaneseq
    %v3594 = vshrl.u32 %v3593, 7
    %v3595 = vadd.s32 %v3594, 120
    %3596 = vset.pattern.permute.xlu0 %v3595
    %3597 = vperm.xlu0 %3596, %v387
    %v3598 = vpop.permute.xlu0 %3597
    %v3599 = vlaneseq
    %v3600 = vshrl.u32 %v3599, 7
    %v3601 = vadd.s32 %v3600, 96
    %3602 = vset.pattern.permute.xlu0 %v3601
    %3603 = vperm.xlu0 %3602, %v412
    %v3604 = vpop.permute.xlu0 %3603
    %v3605 = vlaneseq
    %v3606 = vshrl.u32 %v3605, 7
    %v3607 = vadd.s32 %v3606, 104
    %3608 = vset.pattern.permute.xlu0 %v3607
    %3609 = vperm.xlu0 %3608, %v412
    %v3610 = vpop.permute.xlu0 %3609
    %v3611 = vlaneseq
    %v3612 = vshrl.u32 %v3611, 7
    %v3613 = vadd.s32 %v3612, 112
    %3614 = vset.pattern.permute.xlu0 %v3613
    %3615 = vperm.xlu0 %3614, %v412
    %v3616 = vpop.permute.xlu0 %3615
    %v3617 = vlaneseq
    %v3618 = vshrl.u32 %v3617, 7
    %v3619 = vadd.s32 %v3618, 120
    %3620 = vset.pattern.permute.xlu0 %v3619
    %3621 = vperm.xlu0 %3620, %v412
    %v3622 = vpop.permute.xlu0 %3621
    %v3623 = vlaneseq
    %v3624 = vshrl.u32 %v3623, 7
    %v3625 = vadd.s32 %v3624, 96
    %3626 = vset.pattern.permute.xlu0 %v3625
    %3627 = vperm.xlu0 %3626, %v437
    %v3628 = vpop.permute.xlu0 %3627
    %v3629 = vlaneseq
    %v3630 = vshrl.u32 %v3629, 7
    %v3631 = vadd.s32 %v3630, 104
    %3632 = vset.pattern.permute.xlu0 %v3631
    %3633 = vperm.xlu0 %3632, %v437
    %v3634 = vpop.permute.xlu0 %3633
    %v3635 = vlaneseq
    %v3636 = vshrl.u32 %v3635, 7
    %v3637 = vadd.s32 %v3636, 112
    %3638 = vset.pattern.permute.xlu0 %v3637
    %3639 = vperm.xlu0 %3638, %v437
    %v3640 = vpop.permute.xlu0 %3639
    %v3641 = vlaneseq
    %v3642 = vshrl.u32 %v3641, 7
    %v3643 = vadd.s32 %v3642, 120
    %3644 = vset.pattern.permute.xlu0 %v3643
    %3645 = vperm.xlu0 %3644, %v437
    %v3646 = vpop.permute.xlu0 %3645
    %v3647 = vlaneseq
    %v3648 = vshrl.u32 %v3647, 7
    %v3649 = vadd.s32 %v3648, 96
    %3650 = vset.pattern.permute.xlu0 %v3649
    %3651 = vperm.xlu0 %3650, %v462
    %v3652 = vpop.permute.xlu0 %3651
    %v3653 = vlaneseq
    %v3654 = vshrl.u32 %v3653, 7
    %v3655 = vadd.s32 %v3654, 104
    %3656 = vset.pattern.permute.xlu0 %v3655
    %3657 = vperm.xlu0 %3656, %v462
    %v3658 = vpop.permute.xlu0 %3657
    %v3659 = vlaneseq
    %v3660 = vshrl.u32 %v3659, 7
    %v3661 = vadd.s32 %v3660, 112
    %3662 = vset.pattern.permute.xlu0 %v3661
    %3663 = vperm.xlu0 %3662, %v462
    %v3664 = vpop.permute.xlu0 %3663
    %v3665 = vlaneseq
    %v3666 = vshrl.u32 %v3665, 7
    %v3667 = vadd.s32 %v3666, 120
    %3668 = vset.pattern.permute.xlu0 %v3667
    %3669 = vperm.xlu0 %3668, %v462
    %v3670 = vpop.permute.xlu0 %3669
    %vm3671 = vcmp.eq.s32.totalorder %v3292, %v78
    %vm3672 = vcmp.eq.s32.totalorder %v3298, %v78
    %vm3673 = vcmp.eq.s32.totalorder %v3304, %v78
    %vm3674 = vcmp.eq.s32.totalorder %v3310, %v78
    %vm3675 = vcmp.eq.s32.totalorder %v3316, %v78
    %vm3676 = vcmp.eq.s32.totalorder %v3322, %v78
    %vm3677 = vcmp.eq.s32.totalorder %v3328, %v78
    %vm3678 = vcmp.eq.s32.totalorder %v3334, %v78
    %vm3679 = vcmp.eq.s32.totalorder %v3340, %v78
    %vm3680 = vcmp.eq.s32.totalorder %v3346, %v78
    %vm3681 = vcmp.eq.s32.totalorder %v3352, %v78
    %vm3682 = vcmp.eq.s32.totalorder %v3358, %v78
    %vm3683 = vcmp.eq.s32.totalorder %v3364, %v78
    %vm3684 = vcmp.eq.s32.totalorder %v3370, %v78
    %vm3685 = vcmp.eq.s32.totalorder %v3376, %v78
    %vm3686 = vcmp.eq.s32.totalorder %v3382, %v78
    %vm3687 = vcmp.eq.s32.totalorder %v3388, %v78
    %vm3688 = vcmp.eq.s32.totalorder %v3394, %v78
    %vm3689 = vcmp.eq.s32.totalorder %v3400, %v78
    %vm3690 = vcmp.eq.s32.totalorder %v3406, %v78
    %vm3691 = vcmp.eq.s32.totalorder %v3412, %v78
    %vm3692 = vcmp.eq.s32.totalorder %v3418, %v78
    %vm3693 = vcmp.eq.s32.totalorder %v3424, %v78
    %vm3694 = vcmp.eq.s32.totalorder %v3430, %v78
    %vm3695 = vcmp.eq.s32.totalorder %v3436, %v78
    %vm3696 = vcmp.eq.s32.totalorder %v3442, %v78
    %vm3697 = vcmp.eq.s32.totalorder %v3448, %v78
    %vm3698 = vcmp.eq.s32.totalorder %v3454, %v78
    %vm3699 = vcmp.eq.s32.totalorder %v3460, %v78
    %vm3700 = vcmp.eq.s32.totalorder %v3466, %v78
    %vm3701 = vcmp.eq.s32.totalorder %v3472, %v78
    %vm3702 = vcmp.eq.s32.totalorder %v3478, %v78
    %vm3703 = vcmp.eq.s32.totalorder %v3484, %v78
    %vm3704 = vcmp.eq.s32.totalorder %v3490, %v78
    %vm3705 = vcmp.eq.s32.totalorder %v3496, %v78
    %vm3706 = vcmp.eq.s32.totalorder %v3502, %v78
    %vm3707 = vcmp.eq.s32.totalorder %v3508, %v78
    %vm3708 = vcmp.eq.s32.totalorder %v3514, %v78
    %vm3709 = vcmp.eq.s32.totalorder %v3520, %v78
    %vm3710 = vcmp.eq.s32.totalorder %v3526, %v78
    %vm3711 = vcmp.eq.s32.totalorder %v3532, %v78
    %vm3712 = vcmp.eq.s32.totalorder %v3538, %v78
    %vm3713 = vcmp.eq.s32.totalorder %v3544, %v78
    %vm3714 = vcmp.eq.s32.totalorder %v3550, %v78
    %vm3715 = vcmp.eq.s32.totalorder %v3556, %v78
    %vm3716 = vcmp.eq.s32.totalorder %v3562, %v78
    %vm3717 = vcmp.eq.s32.totalorder %v3568, %v78
    %vm3718 = vcmp.eq.s32.totalorder %v3574, %v78
    %vm3719 = vcmp.eq.s32.totalorder %v3580, %v78
    %vm3720 = vcmp.eq.s32.totalorder %v3586, %v78
    %vm3721 = vcmp.eq.s32.totalorder %v3592, %v78
    %vm3722 = vcmp.eq.s32.totalorder %v3598, %v78
    %vm3723 = vcmp.eq.s32.totalorder %v3604, %v78
    %vm3724 = vcmp.eq.s32.totalorder %v3610, %v78
    %vm3725 = vcmp.eq.s32.totalorder %v3616, %v78
    %vm3726 = vcmp.eq.s32.totalorder %v3622, %v78
    %vm3727 = vcmp.eq.s32.totalorder %v3628, %v78
    %vm3728 = vcmp.eq.s32.totalorder %v3634, %v78
    %vm3729 = vcmp.eq.s32.totalorder %v3640, %v78
    %vm3730 = vcmp.eq.s32.totalorder %v3646, %v78
    %vm3731 = vcmp.eq.s32.totalorder %v3652, %v78
    %vm3732 = vcmp.eq.s32.totalorder %v3658, %v78
    %vm3733 = vcmp.eq.s32.totalorder %v3664, %v78
    %vm3734 = vcmp.eq.s32.totalorder %v3670, %v78
    %v3735 = vlaneseq
    %v3736 = vshrl.u32 %v3735, 7
    %v3737 = vadd.s32 %v3736, 96
    %3738 = vset.pattern.permute.xlu0 %v3737
    %3739 = vperm.xlu0 %3738, %v551
    %v3740 = vpop.permute.xlu0 %3739
    %v3741 = vlaneseq
    %v3742 = vshrl.u32 %v3741, 7
    %v3743 = vadd.s32 %v3742, 104
    %3744 = vset.pattern.permute.xlu0 %v3743
    %3745 = vperm.xlu0 %3744, %v551
    %v3746 = vpop.permute.xlu0 %3745
    %v3747 = vlaneseq
    %v3748 = vshrl.u32 %v3747, 7
    %v3749 = vadd.s32 %v3748, 112
    %3750 = vset.pattern.permute.xlu0 %v3749
    %3751 = vperm.xlu0 %3750, %v551
    %v3752 = vpop.permute.xlu0 %3751
    %v3753 = vlaneseq
    %v3754 = vshrl.u32 %v3753, 7
    %v3755 = vadd.s32 %v3754, 120
    %3756 = vset.pattern.permute.xlu0 %v3755
    %3757 = vperm.xlu0 %3756, %v551
    %v3758 = vpop.permute.xlu0 %3757
    %v3759 = vlaneseq
    %v3760 = vshrl.u32 %v3759, 7
    %v3761 = vadd.s32 %v3760, 96
    %3762 = vset.pattern.permute.xlu0 %v3761
    %3763 = vperm.xlu0 %3762, %v576
    %v3764 = vpop.permute.xlu0 %3763
    %v3765 = vlaneseq
    %v3766 = vshrl.u32 %v3765, 7
    %v3767 = vadd.s32 %v3766, 104
    %3768 = vset.pattern.permute.xlu0 %v3767
    %3769 = vperm.xlu0 %3768, %v576
    %v3770 = vpop.permute.xlu0 %3769
    %v3771 = vlaneseq
    %v3772 = vshrl.u32 %v3771, 7
    %v3773 = vadd.s32 %v3772, 112
    %3774 = vset.pattern.permute.xlu0 %v3773
    %3775 = vperm.xlu0 %3774, %v576
    %v3776 = vpop.permute.xlu0 %3775
    %v3777 = vlaneseq
    %v3778 = vshrl.u32 %v3777, 7
    %v3779 = vadd.s32 %v3778, 120
    %3780 = vset.pattern.permute.xlu0 %v3779
    %3781 = vperm.xlu0 %3780, %v576
    %v3782 = vpop.permute.xlu0 %3781
    %v3783 = vlaneseq
    %v3784 = vshrl.u32 %v3783, 7
    %v3785 = vadd.s32 %v3784, 96
    %3786 = vset.pattern.permute.xlu0 %v3785
    %3787 = vperm.xlu0 %3786, %v601
    %v3788 = vpop.permute.xlu0 %3787
    %v3789 = vlaneseq
    %v3790 = vshrl.u32 %v3789, 7
    %v3791 = vadd.s32 %v3790, 104
    %3792 = vset.pattern.permute.xlu0 %v3791
    %3793 = vperm.xlu0 %3792, %v601
    %v3794 = vpop.permute.xlu0 %3793
    %v3795 = vlaneseq
    %v3796 = vshrl.u32 %v3795, 7
    %v3797 = vadd.s32 %v3796, 112
    %3798 = vset.pattern.permute.xlu0 %v3797
    %3799 = vperm.xlu0 %3798, %v601
    %v3800 = vpop.permute.xlu0 %3799
    %v3801 = vlaneseq
    %v3802 = vshrl.u32 %v3801, 7
    %v3803 = vadd.s32 %v3802, 120
    %3804 = vset.pattern.permute.xlu0 %v3803
    %3805 = vperm.xlu0 %3804, %v601
    %v3806 = vpop.permute.xlu0 %3805
    %v3807 = vlaneseq
    %v3808 = vshrl.u32 %v3807, 7
    %v3809 = vadd.s32 %v3808, 96
    %3810 = vset.pattern.permute.xlu0 %v3809
    %3811 = vperm.xlu0 %3810, %v626
    %v3812 = vpop.permute.xlu0 %3811
    %v3813 = vlaneseq
    %v3814 = vshrl.u32 %v3813, 7
    %v3815 = vadd.s32 %v3814, 104
    %3816 = vset.pattern.permute.xlu0 %v3815
    %3817 = vperm.xlu0 %3816, %v626
    %v3818 = vpop.permute.xlu0 %3817
    %v3819 = vlaneseq
    %v3820 = vshrl.u32 %v3819, 7
    %v3821 = vadd.s32 %v3820, 112
    %3822 = vset.pattern.permute.xlu0 %v3821
    %3823 = vperm.xlu0 %3822, %v626
    %v3824 = vpop.permute.xlu0 %3823
    %v3825 = vlaneseq
    %v3826 = vshrl.u32 %v3825, 7
    %v3827 = vadd.s32 %v3826, 120
    %3828 = vset.pattern.permute.xlu0 %v3827
    %3829 = vperm.xlu0 %3828, %v626
    %v3830 = vpop.permute.xlu0 %3829
    %v3831 = vlaneseq
    %v3832 = vshrl.u32 %v3831, 7
    %v3833 = vadd.s32 %v3832, 96
    %3834 = vset.pattern.permute.xlu0 %v3833
    %3835 = vperm.xlu0 %3834, %v651
    %v3836 = vpop.permute.xlu0 %3835
    %v3837 = vlaneseq
    %v3838 = vshrl.u32 %v3837, 7
    %v3839 = vadd.s32 %v3838, 104
    %3840 = vset.pattern.permute.xlu0 %v3839
    %3841 = vperm.xlu0 %3840, %v651
    %v3842 = vpop.permute.xlu0 %3841
    %v3843 = vlaneseq
    %v3844 = vshrl.u32 %v3843, 7
    %v3845 = vadd.s32 %v3844, 112
    %3846 = vset.pattern.permute.xlu0 %v3845
    %3847 = vperm.xlu0 %3846, %v651
    %v3848 = vpop.permute.xlu0 %3847
    %v3849 = vlaneseq
    %v3850 = vshrl.u32 %v3849, 7
    %v3851 = vadd.s32 %v3850, 120
    %3852 = vset.pattern.permute.xlu0 %v3851
    %3853 = vperm.xlu0 %3852, %v651
    %v3854 = vpop.permute.xlu0 %3853
    %v3855 = vlaneseq
    %v3856 = vshrl.u32 %v3855, 7
    %v3857 = vadd.s32 %v3856, 96
    %3858 = vset.pattern.permute.xlu0 %v3857
    %3859 = vperm.xlu0 %3858, %v676
    %v3860 = vpop.permute.xlu0 %3859
    %v3861 = vlaneseq
    %v3862 = vshrl.u32 %v3861, 7
    %v3863 = vadd.s32 %v3862, 104
    %3864 = vset.pattern.permute.xlu0 %v3863
    %3865 = vperm.xlu0 %3864, %v676
    %v3866 = vpop.permute.xlu0 %3865
    %v3867 = vlaneseq
    %v3868 = vshrl.u32 %v3867, 7
    %v3869 = vadd.s32 %v3868, 112
    %3870 = vset.pattern.permute.xlu0 %v3869
    %3871 = vperm.xlu0 %3870, %v676
    %v3872 = vpop.permute.xlu0 %3871
    %v3873 = vlaneseq
    %v3874 = vshrl.u32 %v3873, 7
    %v3875 = vadd.s32 %v3874, 120
    %3876 = vset.pattern.permute.xlu0 %v3875
    %3877 = vperm.xlu0 %3876, %v676
    %v3878 = vpop.permute.xlu0 %3877
    %v3879 = vlaneseq
    %v3880 = vshrl.u32 %v3879, 7
    %v3881 = vadd.s32 %v3880, 96
    %3882 = vset.pattern.permute.xlu0 %v3881
    %3883 = vperm.xlu0 %3882, %v701
    %v3884 = vpop.permute.xlu0 %3883
    %v3885 = vlaneseq
    %v3886 = vshrl.u32 %v3885, 7
    %v3887 = vadd.s32 %v3886, 104
    %3888 = vset.pattern.permute.xlu0 %v3887
    %3889 = vperm.xlu0 %3888, %v701
    %v3890 = vpop.permute.xlu0 %3889
    %v3891 = vlaneseq
    %v3892 = vshrl.u32 %v3891, 7
    %v3893 = vadd.s32 %v3892, 112
    %3894 = vset.pattern.permute.xlu0 %v3893
    %3895 = vperm.xlu0 %3894, %v701
    %v3896 = vpop.permute.xlu0 %3895
    %v3897 = vlaneseq
    %v3898 = vshrl.u32 %v3897, 7
    %v3899 = vadd.s32 %v3898, 120
    %3900 = vset.pattern.permute.xlu0 %v3899
    %3901 = vperm.xlu0 %3900, %v701
    %v3902 = vpop.permute.xlu0 %3901
    %v3903 = vlaneseq
    %v3904 = vshrl.u32 %v3903, 7
    %v3905 = vadd.s32 %v3904, 96
    %3906 = vset.pattern.permute.xlu0 %v3905
    %3907 = vperm.xlu0 %3906, %v726
    %v3908 = vpop.permute.xlu0 %3907
    %v3909 = vlaneseq
    %v3910 = vshrl.u32 %v3909, 7
    %v3911 = vadd.s32 %v3910, 104
    %3912 = vset.pattern.permute.xlu0 %v3911
    %3913 = vperm.xlu0 %3912, %v726
    %v3914 = vpop.permute.xlu0 %3913
    %v3915 = vlaneseq
    %v3916 = vshrl.u32 %v3915, 7
    %v3917 = vadd.s32 %v3916, 112
    %3918 = vset.pattern.permute.xlu0 %v3917
    %3919 = vperm.xlu0 %3918, %v726
    %v3920 = vpop.permute.xlu0 %3919
    %v3921 = vlaneseq
    %v3922 = vshrl.u32 %v3921, 7
    %v3923 = vadd.s32 %v3922, 120
    %3924 = vset.pattern.permute.xlu0 %v3923
    %3925 = vperm.xlu0 %3924, %v726
    %v3926 = vpop.permute.xlu0 %3925
    %v3927 = vlaneseq
    %v3928 = vshrl.u32 %v3927, 7
    %v3929 = vadd.s32 %v3928, 96
    %3930 = vset.pattern.permute.xlu0 %v3929
    %3931 = vperm.xlu0 %3930, %v751
    %v3932 = vpop.permute.xlu0 %3931
    %v3933 = vlaneseq
    %v3934 = vshrl.u32 %v3933, 7
    %v3935 = vadd.s32 %v3934, 104
    %3936 = vset.pattern.permute.xlu0 %v3935
    %3937 = vperm.xlu0 %3936, %v751
    %v3938 = vpop.permute.xlu0 %3937
    %v3939 = vlaneseq
    %v3940 = vshrl.u32 %v3939, 7
    %v3941 = vadd.s32 %v3940, 112
    %3942 = vset.pattern.permute.xlu0 %v3941
    %3943 = vperm.xlu0 %3942, %v751
    %v3944 = vpop.permute.xlu0 %3943
    %v3945 = vlaneseq
    %v3946 = vshrl.u32 %v3945, 7
    %v3947 = vadd.s32 %v3946, 120
    %3948 = vset.pattern.permute.xlu0 %v3947
    %3949 = vperm.xlu0 %3948, %v751
    %v3950 = vpop.permute.xlu0 %3949
    %v3951 = vlaneseq
    %v3952 = vshrl.u32 %v3951, 7
    %v3953 = vadd.s32 %v3952, 96
    %3954 = vset.pattern.permute.xlu0 %v3953
    %3955 = vperm.xlu0 %3954, %v776
    %v3956 = vpop.permute.xlu0 %3955
    %v3957 = vlaneseq
    %v3958 = vshrl.u32 %v3957, 7
    %v3959 = vadd.s32 %v3958, 104
    %3960 = vset.pattern.permute.xlu0 %v3959
    %3961 = vperm.xlu0 %3960, %v776
    %v3962 = vpop.permute.xlu0 %3961
    %v3963 = vlaneseq
    %v3964 = vshrl.u32 %v3963, 7
    %v3965 = vadd.s32 %v3964, 112
    %3966 = vset.pattern.permute.xlu0 %v3965
    %3967 = vperm.xlu0 %3966, %v776
    %v3968 = vpop.permute.xlu0 %3967
    %v3969 = vlaneseq
    %v3970 = vshrl.u32 %v3969, 7
    %v3971 = vadd.s32 %v3970, 120
    %3972 = vset.pattern.permute.xlu0 %v3971
    %3973 = vperm.xlu0 %3972, %v776
    %v3974 = vpop.permute.xlu0 %3973
    %v3975 = vlaneseq
    %v3976 = vshrl.u32 %v3975, 7
    %v3977 = vadd.s32 %v3976, 96
    %3978 = vset.pattern.permute.xlu0 %v3977
    %3979 = vperm.xlu0 %3978, %v801
    %v3980 = vpop.permute.xlu0 %3979
    %v3981 = vlaneseq
    %v3982 = vshrl.u32 %v3981, 7
    %v3983 = vadd.s32 %v3982, 104
    %3984 = vset.pattern.permute.xlu0 %v3983
    %3985 = vperm.xlu0 %3984, %v801
    %v3986 = vpop.permute.xlu0 %3985
    %v3987 = vlaneseq
    %v3988 = vshrl.u32 %v3987, 7
    %v3989 = vadd.s32 %v3988, 112
    %3990 = vset.pattern.permute.xlu0 %v3989
    %3991 = vperm.xlu0 %3990, %v801
    %v3992 = vpop.permute.xlu0 %3991
    %v3993 = vlaneseq
    %v3994 = vshrl.u32 %v3993, 7
    %v3995 = vadd.s32 %v3994, 120
    %3996 = vset.pattern.permute.xlu0 %v3995
    %3997 = vperm.xlu0 %3996, %v801
    %v3998 = vpop.permute.xlu0 %3997
    %v3999 = vlaneseq
    %v4000 = vshrl.u32 %v3999, 7
    %v4001 = vadd.s32 %v4000, 96
    %4002 = vset.pattern.permute.xlu0 %v4001
    %4003 = vperm.xlu0 %4002, %v826
    %v4004 = vpop.permute.xlu0 %4003
    %v4005 = vlaneseq
    %v4006 = vshrl.u32 %v4005, 7
    %v4007 = vadd.s32 %v4006, 104
    %4008 = vset.pattern.permute.xlu0 %v4007
    %4009 = vperm.xlu0 %4008, %v826
    %v4010 = vpop.permute.xlu0 %4009
    %v4011 = vlaneseq
    %v4012 = vshrl.u32 %v4011, 7
    %v4013 = vadd.s32 %v4012, 112
    %4014 = vset.pattern.permute.xlu0 %v4013
    %4015 = vperm.xlu0 %4014, %v826
    %v4016 = vpop.permute.xlu0 %4015
    %v4017 = vlaneseq
    %v4018 = vshrl.u32 %v4017, 7
    %v4019 = vadd.s32 %v4018, 120
    %4020 = vset.pattern.permute.xlu0 %v4019
    %4021 = vperm.xlu0 %4020, %v826
    %v4022 = vpop.permute.xlu0 %4021
    %v4023 = vlaneseq
    %v4024 = vshrl.u32 %v4023, 7
    %v4025 = vadd.s32 %v4024, 96
    %4026 = vset.pattern.permute.xlu0 %v4025
    %4027 = vperm.xlu0 %4026, %v851
    %v4028 = vpop.permute.xlu0 %4027
    %v4029 = vlaneseq
    %v4030 = vshrl.u32 %v4029, 7
    %v4031 = vadd.s32 %v4030, 104
    %4032 = vset.pattern.permute.xlu0 %v4031
    %4033 = vperm.xlu0 %4032, %v851
    %v4034 = vpop.permute.xlu0 %4033
    %v4035 = vlaneseq
    %v4036 = vshrl.u32 %v4035, 7
    %v4037 = vadd.s32 %v4036, 112
    %4038 = vset.pattern.permute.xlu0 %v4037
    %4039 = vperm.xlu0 %4038, %v851
    %v4040 = vpop.permute.xlu0 %4039
    %v4041 = vlaneseq
    %v4042 = vshrl.u32 %v4041, 7
    %v4043 = vadd.s32 %v4042, 120
    %4044 = vset.pattern.permute.xlu0 %v4043
    %4045 = vperm.xlu0 %4044, %v851
    %v4046 = vpop.permute.xlu0 %4045
    %v4047 = vlaneseq
    %v4048 = vshrl.u32 %v4047, 7
    %v4049 = vadd.s32 %v4048, 96
    %4050 = vset.pattern.permute.xlu0 %v4049
    %4051 = vperm.xlu0 %4050, %v876
    %v4052 = vpop.permute.xlu0 %4051
    %v4053 = vlaneseq
    %v4054 = vshrl.u32 %v4053, 7
    %v4055 = vadd.s32 %v4054, 104
    %4056 = vset.pattern.permute.xlu0 %v4055
    %4057 = vperm.xlu0 %4056, %v876
    %v4058 = vpop.permute.xlu0 %4057
    %v4059 = vlaneseq
    %v4060 = vshrl.u32 %v4059, 7
    %v4061 = vadd.s32 %v4060, 112
    %4062 = vset.pattern.permute.xlu0 %v4061
    %4063 = vperm.xlu0 %4062, %v876
    %v4064 = vpop.permute.xlu0 %4063
    %v4065 = vlaneseq
    %v4066 = vshrl.u32 %v4065, 7
    %v4067 = vadd.s32 %v4066, 120
    %4068 = vset.pattern.permute.xlu0 %v4067
    %4069 = vperm.xlu0 %4068, %v876
    %v4070 = vpop.permute.xlu0 %4069
    %v4071 = vlaneseq
    %v4072 = vshrl.u32 %v4071, 7
    %v4073 = vadd.s32 %v4072, 96
    %4074 = vset.pattern.permute.xlu0 %v4073
    %4075 = vperm.xlu0 %4074, %v901
    %v4076 = vpop.permute.xlu0 %4075
    %v4077 = vlaneseq
    %v4078 = vshrl.u32 %v4077, 7
    %v4079 = vadd.s32 %v4078, 104
    %4080 = vset.pattern.permute.xlu0 %v4079
    %4081 = vperm.xlu0 %4080, %v901
    %v4082 = vpop.permute.xlu0 %4081
    %v4083 = vlaneseq
    %v4084 = vshrl.u32 %v4083, 7
    %v4085 = vadd.s32 %v4084, 112
    %4086 = vset.pattern.permute.xlu0 %v4085
    %4087 = vperm.xlu0 %4086, %v901
    %v4088 = vpop.permute.xlu0 %4087
    %v4089 = vlaneseq
    %v4090 = vshrl.u32 %v4089, 7
    %v4091 = vadd.s32 %v4090, 120
    %4092 = vset.pattern.permute.xlu0 %v4091
    %4093 = vperm.xlu0 %4092, %v901
    %v4094 = vpop.permute.xlu0 %4093
    %v4095 = vlaneseq
    %v4096 = vshrl.u32 %v4095, 7
    %v4097 = vadd.s32 %v4096, 96
    %4098 = vset.pattern.permute.xlu0 %v4097
    %4099 = vperm.xlu0 %4098, %v926
    %v4100 = vpop.permute.xlu0 %4099
    %v4101 = vlaneseq
    %v4102 = vshrl.u32 %v4101, 7
    %v4103 = vadd.s32 %v4102, 104
    %4104 = vset.pattern.permute.xlu0 %v4103
    %4105 = vperm.xlu0 %4104, %v926
    %v4106 = vpop.permute.xlu0 %4105
    %v4107 = vlaneseq
    %v4108 = vshrl.u32 %v4107, 7
    %v4109 = vadd.s32 %v4108, 112
    %4110 = vset.pattern.permute.xlu0 %v4109
    %4111 = vperm.xlu0 %4110, %v926
    %v4112 = vpop.permute.xlu0 %4111
    %v4113 = vlaneseq
    %v4114 = vshrl.u32 %v4113, 7
    %v4115 = vadd.s32 %v4114, 120
    %4116 = vset.pattern.permute.xlu0 %v4115
    %4117 = vperm.xlu0 %4116, %v926
    %v4118 = vpop.permute.xlu0 %4117
    %v4119 = vsel %vm3671, %v3740, 0.0
    %v4120 = vsel %vm3672, %v3746, 0.0
    %v4121 = vsel %vm3673, %v3752, 0.0
    %v4122 = vsel %vm3674, %v3758, 0.0
    %v4123 = vsel %vm3675, %v3764, 0.0
    %v4124 = vsel %vm3676, %v3770, 0.0
    %v4125 = vsel %vm3677, %v3776, 0.0
    %v4126 = vsel %vm3678, %v3782, 0.0
    %v4127 = vsel %vm3679, %v3788, 0.0
    %v4128 = vsel %vm3680, %v3794, 0.0
    %v4129 = vsel %vm3681, %v3800, 0.0
    %v4130 = vsel %vm3682, %v3806, 0.0
    %v4131 = vsel %vm3683, %v3812, 0.0
    %v4132 = vsel %vm3684, %v3818, 0.0
    %v4133 = vsel %vm3685, %v3824, 0.0
    %v4134 = vsel %vm3686, %v3830, 0.0
    %v4135 = vsel %vm3687, %v3836, 0.0
    %v4136 = vsel %vm3688, %v3842, 0.0
    %v4137 = vsel %vm3689, %v3848, 0.0
    %v4138 = vsel %vm3690, %v3854, 0.0
    %v4139 = vsel %vm3691, %v3860, 0.0
    %v4140 = vsel %vm3692, %v3866, 0.0
    %v4141 = vsel %vm3693, %v3872, 0.0
    %v4142 = vsel %vm3694, %v3878, 0.0
    %v4143 = vsel %vm3695, %v3884, 0.0
    %v4144 = vsel %vm3696, %v3890, 0.0
    %v4145 = vsel %vm3697, %v3896, 0.0
    %v4146 = vsel %vm3698, %v3902, 0.0
    %v4147 = vsel %vm3699, %v3908, 0.0
    %v4148 = vsel %vm3700, %v3914, 0.0
    %v4149 = vsel %vm3701, %v3920, 0.0
    %v4150 = vsel %vm3702, %v3926, 0.0
    %v4151 = vsel %vm3703, %v3932, 0.0
    %v4152 = vsel %vm3704, %v3938, 0.0
    %v4153 = vsel %vm3705, %v3944, 0.0
    %v4154 = vsel %vm3706, %v3950, 0.0
    %v4155 = vsel %vm3707, %v3956, 0.0
    %v4156 = vsel %vm3708, %v3962, 0.0
    %v4157 = vsel %vm3709, %v3968, 0.0
    %v4158 = vsel %vm3710, %v3974, 0.0
    %v4159 = vsel %vm3711, %v3980, 0.0
    %v4160 = vsel %vm3712, %v3986, 0.0
    %v4161 = vsel %vm3713, %v3992, 0.0
    %v4162 = vsel %vm3714, %v3998, 0.0
    %v4163 = vsel %vm3715, %v4004, 0.0
    %v4164 = vsel %vm3716, %v4010, 0.0
    %v4165 = vsel %vm3717, %v4016, 0.0
    %v4166 = vsel %vm3718, %v4022, 0.0
    %v4167 = vsel %vm3719, %v4028, 0.0
    %v4168 = vsel %vm3720, %v4034, 0.0
    %v4169 = vsel %vm3721, %v4040, 0.0
    %v4170 = vsel %vm3722, %v4046, 0.0
    %v4171 = vsel %vm3723, %v4052, 0.0
    %v4172 = vsel %vm3724, %v4058, 0.0
    %v4173 = vsel %vm3725, %v4064, 0.0
    %v4174 = vsel %vm3726, %v4070, 0.0
    %v4175 = vsel %vm3727, %v4076, 0.0
    %v4176 = vsel %vm3728, %v4082, 0.0
    %v4177 = vsel %vm3729, %v4088, 0.0
    %v4178 = vsel %vm3730, %v4094, 0.0
    %v4179 = vsel %vm3731, %v4100, 0.0
    %v4180 = vsel %vm3732, %v4106, 0.0
    %v4181 = vsel %vm3733, %v4112, 0.0
    %v4182 = vsel %vm3734, %v4118, 0.0
    %v4183 = vadd.f32 %v4119, %v4120
    %v4184 = vadd.f32 %v4183, %v4121
    %v4185 = vadd.f32 %v4184, %v4122
    %v4186 = vrot.slane %v4185, 4
    %v4187 = vadd.f32 %v4185, %v4186
    %v4188 = vrot.slane %v4187, 2
    %v4189 = vadd.f32 %v4187, %v4188
    %v4190 = vrot.slane %v4189, 1
    %v4191 = vadd.f32 %v4189, %v4190
    %v4192 = vadd.f32 %v4123, %v4124
    %v4193 = vadd.f32 %v4192, %v4125
    %v4194 = vadd.f32 %v4193, %v4126
    %v4195 = vrot.slane %v4194, 4
    %v4196 = vadd.f32 %v4194, %v4195
    %v4197 = vrot.slane %v4196, 2
    %v4198 = vadd.f32 %v4196, %v4197
    %v4199 = vrot.slane %v4198, 1
    %v4200 = vadd.f32 %v4198, %v4199
    %v4201 = vadd.f32 %v4127, %v4128
    %v4202 = vadd.f32 %v4201, %v4129
    %v4203 = vadd.f32 %v4202, %v4130
    %v4204 = vrot.slane %v4203, 4
    %v4205 = vadd.f32 %v4203, %v4204
    %v4206 = vrot.slane %v4205, 2
    %v4207 = vadd.f32 %v4205, %v4206
    %v4208 = vrot.slane %v4207, 1
    %v4209 = vadd.f32 %v4207, %v4208
    %v4210 = vadd.f32 %v4131, %v4132
    %v4211 = vadd.f32 %v4210, %v4133
    %v4212 = vadd.f32 %v4211, %v4134
    %v4213 = vrot.slane %v4212, 4
    %v4214 = vadd.f32 %v4212, %v4213
    %v4215 = vrot.slane %v4214, 2
    %v4216 = vadd.f32 %v4214, %v4215
    %v4217 = vrot.slane %v4216, 1
    %v4218 = vadd.f32 %v4216, %v4217
    %v4219 = vadd.f32 %v4135, %v4136
    %v4220 = vadd.f32 %v4219, %v4137
    %v4221 = vadd.f32 %v4220, %v4138
    %v4222 = vrot.slane %v4221, 4
    %v4223 = vadd.f32 %v4221, %v4222
    %v4224 = vrot.slane %v4223, 2
    %v4225 = vadd.f32 %v4223, %v4224
    %v4226 = vrot.slane %v4225, 1
    %v4227 = vadd.f32 %v4225, %v4226
    %v4228 = vadd.f32 %v4139, %v4140
    %v4229 = vadd.f32 %v4228, %v4141
    %v4230 = vadd.f32 %v4229, %v4142
    %v4231 = vrot.slane %v4230, 4
    %v4232 = vadd.f32 %v4230, %v4231
    %v4233 = vrot.slane %v4232, 2
    %v4234 = vadd.f32 %v4232, %v4233
    %v4235 = vrot.slane %v4234, 1
    %v4236 = vadd.f32 %v4234, %v4235
    %v4237 = vadd.f32 %v4143, %v4144
    %v4238 = vadd.f32 %v4237, %v4145
    %v4239 = vadd.f32 %v4238, %v4146
    %v4240 = vrot.slane %v4239, 4
    %v4241 = vadd.f32 %v4239, %v4240
    %v4242 = vrot.slane %v4241, 2
    %v4243 = vadd.f32 %v4241, %v4242
    %v4244 = vrot.slane %v4243, 1
    %v4245 = vadd.f32 %v4243, %v4244
    %v4246 = vadd.f32 %v4147, %v4148
    %v4247 = vadd.f32 %v4246, %v4149
    %v4248 = vadd.f32 %v4247, %v4150
    %v4249 = vrot.slane %v4248, 4
    %v4250 = vadd.f32 %v4248, %v4249
    %v4251 = vrot.slane %v4250, 2
    %v4252 = vadd.f32 %v4250, %v4251
    %v4253 = vrot.slane %v4252, 1
    %v4254 = vadd.f32 %v4252, %v4253
    %v4255 = vadd.f32 %v4151, %v4152
    %v4256 = vadd.f32 %v4255, %v4153
    %v4257 = vadd.f32 %v4256, %v4154
    %v4258 = vrot.slane %v4257, 4
    %v4259 = vadd.f32 %v4257, %v4258
    %v4260 = vrot.slane %v4259, 2
    %v4261 = vadd.f32 %v4259, %v4260
    %v4262 = vrot.slane %v4261, 1
    %v4263 = vadd.f32 %v4261, %v4262
    %v4264 = vadd.f32 %v4155, %v4156
    %v4265 = vadd.f32 %v4264, %v4157
    %v4266 = vadd.f32 %v4265, %v4158
    %v4267 = vrot.slane %v4266, 4
    %v4268 = vadd.f32 %v4266, %v4267
    %v4269 = vrot.slane %v4268, 2
    %v4270 = vadd.f32 %v4268, %v4269
    %v4271 = vrot.slane %v4270, 1
    %v4272 = vadd.f32 %v4270, %v4271
    %v4273 = vadd.f32 %v4159, %v4160
    %v4274 = vadd.f32 %v4273, %v4161
    %v4275 = vadd.f32 %v4274, %v4162
    %v4276 = vrot.slane %v4275, 4
    %v4277 = vadd.f32 %v4275, %v4276
    %v4278 = vrot.slane %v4277, 2
    %v4279 = vadd.f32 %v4277, %v4278
    %v4280 = vrot.slane %v4279, 1
    %v4281 = vadd.f32 %v4279, %v4280
    %v4282 = vadd.f32 %v4163, %v4164
    %v4283 = vadd.f32 %v4282, %v4165
    %v4284 = vadd.f32 %v4283, %v4166
    %v4285 = vrot.slane %v4284, 4
    %v4286 = vadd.f32 %v4284, %v4285
    %v4287 = vrot.slane %v4286, 2
    %v4288 = vadd.f32 %v4286, %v4287
    %v4289 = vrot.slane %v4288, 1
    %v4290 = vadd.f32 %v4288, %v4289
    %v4291 = vadd.f32 %v4167, %v4168
    %v4292 = vadd.f32 %v4291, %v4169
    %v4293 = vadd.f32 %v4292, %v4170
    %v4294 = vrot.slane %v4293, 4
    %v4295 = vadd.f32 %v4293, %v4294
    %v4296 = vrot.slane %v4295, 2
    %v4297 = vadd.f32 %v4295, %v4296
    %v4298 = vrot.slane %v4297, 1
    %v4299 = vadd.f32 %v4297, %v4298
    %v4300 = vadd.f32 %v4171, %v4172
    %v4301 = vadd.f32 %v4300, %v4173
    %v4302 = vadd.f32 %v4301, %v4174
    %v4303 = vrot.slane %v4302, 4
    %v4304 = vadd.f32 %v4302, %v4303
    %v4305 = vrot.slane %v4304, 2
    %v4306 = vadd.f32 %v4304, %v4305
    %v4307 = vrot.slane %v4306, 1
    %v4308 = vadd.f32 %v4306, %v4307
    %v4309 = vadd.f32 %v4175, %v4176
    %v4310 = vadd.f32 %v4309, %v4177
    %v4311 = vadd.f32 %v4310, %v4178
    %v4312 = vrot.slane %v4311, 4
    %v4313 = vadd.f32 %v4311, %v4312
    %v4314 = vrot.slane %v4313, 2
    %v4315 = vadd.f32 %v4313, %v4314
    %v4316 = vrot.slane %v4315, 1
    %v4317 = vadd.f32 %v4315, %v4316
    %v4318 = vadd.f32 %v4179, %v4180
    %v4319 = vadd.f32 %v4318, %v4181
    %v4320 = vadd.f32 %v4319, %v4182
    %v4321 = vrot.slane %v4320, 4
    %v4322 = vadd.f32 %v4320, %v4321
    %v4323 = vrot.slane %v4322, 2
    %v4324 = vadd.f32 %v4322, %v4323
    %v4325 = vrot.slane %v4324, 1
    %v4326 = vadd.f32 %v4324, %v4325
    %v4327 = vadd.f32 %v3271, %v4191
    %v4328 = vadd.f32 %v3272, %v4200
    %v4329 = vadd.f32 %v3273, %v4209
    %v4330 = vadd.f32 %v3274, %v4218
    %v4331 = vadd.f32 %v3275, %v4227
    %v4332 = vadd.f32 %v3276, %v4236
    %v4333 = vadd.f32 %v3277, %v4245
    %v4334 = vadd.f32 %v3278, %v4254
    %v4335 = vadd.f32 %v3279, %v4263
    %v4336 = vadd.f32 %v3280, %v4272
    %v4337 = vadd.f32 %v3281, %v4281
    %v4338 = vadd.f32 %v3282, %v4290
    %v4339 = vadd.f32 %v3283, %v4299
    %v4340 = vadd.f32 %v3284, %v4308
    %v4341 = vadd.f32 %v3285, %v4317
    %v4342 = vadd.f32 %v3286, %v4326
    %v4343 = vld [vmem:[#allocation4 + $0x8] sm:$0xff]
    %v4344 = vld [vmem:[#allocation4 + $0x18] sm:$0xff]
    %vm4345 = vcmp.ne.s32.totalorder %v4343, 1
    %vm4346 = vcmp.ne.s32.totalorder %v4344, 1
    %v4347 = vsel %vm4345, 1, 0
    %v4348 = vsel %vm4346, 1, 0
    %v4349 = vcvt.s32.f32 %v4347
    %v4350 = vcvt.s32.f32 %v4348
    %v4351 = vperm.slane %v4343, 0
    %v4352 = vlaneseq
    %v4353 = vshrl.u32 %v4352, 7
    %4355 = vset.pattern.permute.xlu0 %v4353
    %4356 = vperm.xlu0 %4355, %v4351
    %v4357 = vpop.permute.xlu0 %4356
    %v4358 = vlaneseq
    %v4359 = vshrl.u32 %v4358, 7
    %v4360 = vadd.s32 %v4359, 8
    %4361 = vset.pattern.permute.xlu0 %v4360
    %4362 = vperm.xlu0 %4361, %v4351
    %v4363 = vpop.permute.xlu0 %4362
    %v4364 = vlaneseq
    %v4365 = vshrl.u32 %v4364, 7
    %v4366 = vadd.s32 %v4365, 16
    %4367 = vset.pattern.permute.xlu0 %v4366
    %4368 = vperm.xlu0 %4367, %v4351
    %v4369 = vpop.permute.xlu0 %4368
    %v4370 = vlaneseq
    %v4371 = vshrl.u32 %v4370, 7
    %v4372 = vadd.s32 %v4371, 24
    %4373 = vset.pattern.permute.xlu0 %v4372
    %4374 = vperm.xlu0 %4373, %v4351
    %v4375 = vpop.permute.xlu0 %4374
    %v4376 = vperm.slane %v4343, 1
    %v4377 = vlaneseq
    %v4378 = vshrl.u32 %v4377, 7
    %4380 = vset.pattern.permute.xlu0 %v4378
    %4381 = vperm.xlu0 %4380, %v4376
    %v4382 = vpop.permute.xlu0 %4381
    %v4383 = vlaneseq
    %v4384 = vshrl.u32 %v4383, 7
    %v4385 = vadd.s32 %v4384, 8
    %4386 = vset.pattern.permute.xlu0 %v4385
    %4387 = vperm.xlu0 %4386, %v4376
    %v4388 = vpop.permute.xlu0 %4387
    %v4389 = vlaneseq
    %v4390 = vshrl.u32 %v4389, 7
    %v4391 = vadd.s32 %v4390, 16
    %4392 = vset.pattern.permute.xlu0 %v4391
    %4393 = vperm.xlu0 %4392, %v4376
    %v4394 = vpop.permute.xlu0 %4393
    %v4395 = vlaneseq
    %v4396 = vshrl.u32 %v4395, 7
    %v4397 = vadd.s32 %v4396, 24
    %4398 = vset.pattern.permute.xlu0 %v4397
    %4399 = vperm.xlu0 %4398, %v4376
    %v4400 = vpop.permute.xlu0 %4399
    %v4401 = vperm.slane %v4343, 2
    %v4402 = vlaneseq
    %v4403 = vshrl.u32 %v4402, 7
    %4405 = vset.pattern.permute.xlu0 %v4403
    %4406 = vperm.xlu0 %4405, %v4401
    %v4407 = vpop.permute.xlu0 %4406
    %v4408 = vlaneseq
    %v4409 = vshrl.u32 %v4408, 7
    %v4410 = vadd.s32 %v4409, 8
    %4411 = vset.pattern.permute.xlu0 %v4410
    %4412 = vperm.xlu0 %4411, %v4401
    %v4413 = vpop.permute.xlu0 %4412
    %v4414 = vlaneseq
    %v4415 = vshrl.u32 %v4414, 7
    %v4416 = vadd.s32 %v4415, 16
    %4417 = vset.pattern.permute.xlu0 %v4416
    %4418 = vperm.xlu0 %4417, %v4401
    %v4419 = vpop.permute.xlu0 %4418
    %v4420 = vlaneseq
    %v4421 = vshrl.u32 %v4420, 7
    %v4422 = vadd.s32 %v4421, 24
    %4423 = vset.pattern.permute.xlu0 %v4422
    %4424 = vperm.xlu0 %4423, %v4401
    %v4425 = vpop.permute.xlu0 %4424
    %v4426 = vperm.slane %v4343, 3
    %v4427 = vlaneseq
    %v4428 = vshrl.u32 %v4427, 7
    %4430 = vset.pattern.permute.xlu0 %v4428
    %4431 = vperm.xlu0 %4430, %v4426
    %v4432 = vpop.permute.xlu0 %4431
    %v4433 = vlaneseq
    %v4434 = vshrl.u32 %v4433, 7
    %v4435 = vadd.s32 %v4434, 8
    %4436 = vset.pattern.permute.xlu0 %v4435
    %4437 = vperm.xlu0 %4436, %v4426
    %v4438 = vpop.permute.xlu0 %4437
    %v4439 = vlaneseq
    %v4440 = vshrl.u32 %v4439, 7
    %v4441 = vadd.s32 %v4440, 16
    %4442 = vset.pattern.permute.xlu0 %v4441
    %4443 = vperm.xlu0 %4442, %v4426
    %v4444 = vpop.permute.xlu0 %4443
    %v4445 = vlaneseq
    %v4446 = vshrl.u32 %v4445, 7
    %v4447 = vadd.s32 %v4446, 24
    %4448 = vset.pattern.permute.xlu0 %v4447
    %4449 = vperm.xlu0 %4448, %v4426
    %v4450 = vpop.permute.xlu0 %4449
    %v4451 = vperm.slane %v4343, 4
    %v4452 = vlaneseq
    %v4453 = vshrl.u32 %v4452, 7
    %4455 = vset.pattern.permute.xlu0 %v4453
    %4456 = vperm.xlu0 %4455, %v4451
    %v4457 = vpop.permute.xlu0 %4456
    %v4458 = vlaneseq
    %v4459 = vshrl.u32 %v4458, 7
    %v4460 = vadd.s32 %v4459, 8
    %4461 = vset.pattern.permute.xlu0 %v4460
    %4462 = vperm.xlu0 %4461, %v4451
    %v4463 = vpop.permute.xlu0 %4462
    %v4464 = vlaneseq
    %v4465 = vshrl.u32 %v4464, 7
    %v4466 = vadd.s32 %v4465, 16
    %4467 = vset.pattern.permute.xlu0 %v4466
    %4468 = vperm.xlu0 %4467, %v4451
    %v4469 = vpop.permute.xlu0 %4468
    %v4470 = vlaneseq
    %v4471 = vshrl.u32 %v4470, 7
    %v4472 = vadd.s32 %v4471, 24
    %4473 = vset.pattern.permute.xlu0 %v4472
    %4474 = vperm.xlu0 %4473, %v4451
    %v4475 = vpop.permute.xlu0 %4474
    %v4476 = vperm.slane %v4343, 5
    %v4477 = vlaneseq
    %v4478 = vshrl.u32 %v4477, 7
    %4480 = vset.pattern.permute.xlu0 %v4478
    %4481 = vperm.xlu0 %4480, %v4476
    %v4482 = vpop.permute.xlu0 %4481
    %v4483 = vlaneseq
    %v4484 = vshrl.u32 %v4483, 7
    %v4485 = vadd.s32 %v4484, 8
    %4486 = vset.pattern.permute.xlu0 %v4485
    %4487 = vperm.xlu0 %4486, %v4476
    %v4488 = vpop.permute.xlu0 %4487
    %v4489 = vlaneseq
    %v4490 = vshrl.u32 %v4489, 7
    %v4491 = vadd.s32 %v4490, 16
    %4492 = vset.pattern.permute.xlu0 %v4491
    %4493 = vperm.xlu0 %4492, %v4476
    %v4494 = vpop.permute.xlu0 %4493
    %v4495 = vlaneseq
    %v4496 = vshrl.u32 %v4495, 7
    %v4497 = vadd.s32 %v4496, 24
    %4498 = vset.pattern.permute.xlu0 %v4497
    %4499 = vperm.xlu0 %4498, %v4476
    %v4500 = vpop.permute.xlu0 %4499
    %v4501 = vperm.slane %v4343, 6
    %v4502 = vlaneseq
    %v4503 = vshrl.u32 %v4502, 7
    %4505 = vset.pattern.permute.xlu0 %v4503
    %4506 = vperm.xlu0 %4505, %v4501
    %v4507 = vpop.permute.xlu0 %4506
    %v4508 = vlaneseq
    %v4509 = vshrl.u32 %v4508, 7
    %v4510 = vadd.s32 %v4509, 8
    %4511 = vset.pattern.permute.xlu0 %v4510
    %4512 = vperm.xlu0 %4511, %v4501
    %v4513 = vpop.permute.xlu0 %4512
    %v4514 = vlaneseq
    %v4515 = vshrl.u32 %v4514, 7
    %v4516 = vadd.s32 %v4515, 16
    %4517 = vset.pattern.permute.xlu0 %v4516
    %4518 = vperm.xlu0 %4517, %v4501
    %v4519 = vpop.permute.xlu0 %4518
    %v4520 = vlaneseq
    %v4521 = vshrl.u32 %v4520, 7
    %v4522 = vadd.s32 %v4521, 24
    %4523 = vset.pattern.permute.xlu0 %v4522
    %4524 = vperm.xlu0 %4523, %v4501
    %v4525 = vpop.permute.xlu0 %4524
    %v4526 = vperm.slane %v4343, 7
    %v4527 = vlaneseq
    %v4528 = vshrl.u32 %v4527, 7
    %4530 = vset.pattern.permute.xlu0 %v4528
    %4531 = vperm.xlu0 %4530, %v4526
    %v4532 = vpop.permute.xlu0 %4531
    %v4533 = vlaneseq
    %v4534 = vshrl.u32 %v4533, 7
    %v4535 = vadd.s32 %v4534, 8
    %4536 = vset.pattern.permute.xlu0 %v4535
    %4537 = vperm.xlu0 %4536, %v4526
    %v4538 = vpop.permute.xlu0 %4537
    %v4539 = vlaneseq
    %v4540 = vshrl.u32 %v4539, 7
    %v4541 = vadd.s32 %v4540, 16
    %4542 = vset.pattern.permute.xlu0 %v4541
    %4543 = vperm.xlu0 %4542, %v4526
    %v4544 = vpop.permute.xlu0 %4543
    %v4545 = vlaneseq
    %v4546 = vshrl.u32 %v4545, 7
    %v4547 = vadd.s32 %v4546, 24
    %4548 = vset.pattern.permute.xlu0 %v4547
    %4549 = vperm.xlu0 %4548, %v4526
    %v4550 = vpop.permute.xlu0 %4549
    %v4551 = vperm.slane %v4344, 0
    %v4552 = vlaneseq
    %v4553 = vshrl.u32 %v4552, 7
    %4555 = vset.pattern.permute.xlu0 %v4553
    %4556 = vperm.xlu0 %4555, %v4551
    %v4557 = vpop.permute.xlu0 %4556
    %v4558 = vlaneseq
    %v4559 = vshrl.u32 %v4558, 7
    %v4560 = vadd.s32 %v4559, 8
    %4561 = vset.pattern.permute.xlu0 %v4560
    %4562 = vperm.xlu0 %4561, %v4551
    %v4563 = vpop.permute.xlu0 %4562
    %v4564 = vlaneseq
    %v4565 = vshrl.u32 %v4564, 7
    %v4566 = vadd.s32 %v4565, 16
    %4567 = vset.pattern.permute.xlu0 %v4566
    %4568 = vperm.xlu0 %4567, %v4551
    %v4569 = vpop.permute.xlu0 %4568
    %v4570 = vlaneseq
    %v4571 = vshrl.u32 %v4570, 7
    %v4572 = vadd.s32 %v4571, 24
    %4573 = vset.pattern.permute.xlu0 %v4572
    %4574 = vperm.xlu0 %4573, %v4551
    %v4575 = vpop.permute.xlu0 %4574
    %v4576 = vperm.slane %v4344, 1
    %v4577 = vlaneseq
    %v4578 = vshrl.u32 %v4577, 7
    %4580 = vset.pattern.permute.xlu0 %v4578
    %4581 = vperm.xlu0 %4580, %v4576
    %v4582 = vpop.permute.xlu0 %4581
    %v4583 = vlaneseq
    %v4584 = vshrl.u32 %v4583, 7
    %v4585 = vadd.s32 %v4584, 8
    %4586 = vset.pattern.permute.xlu0 %v4585
    %4587 = vperm.xlu0 %4586, %v4576
    %v4588 = vpop.permute.xlu0 %4587
    %v4589 = vlaneseq
    %v4590 = vshrl.u32 %v4589, 7
    %v4591 = vadd.s32 %v4590, 16
    %4592 = vset.pattern.permute.xlu0 %v4591
    %4593 = vperm.xlu0 %4592, %v4576
    %v4594 = vpop.permute.xlu0 %4593
    %v4595 = vlaneseq
    %v4596 = vshrl.u32 %v4595, 7
    %v4597 = vadd.s32 %v4596, 24
    %4598 = vset.pattern.permute.xlu0 %v4597
    %4599 = vperm.xlu0 %4598, %v4576
    %v4600 = vpop.permute.xlu0 %4599
    %v4601 = vperm.slane %v4344, 2
    %v4602 = vlaneseq
    %v4603 = vshrl.u32 %v4602, 7
    %4605 = vset.pattern.permute.xlu0 %v4603
    %4606 = vperm.xlu0 %4605, %v4601
    %v4607 = vpop.permute.xlu0 %4606
    %v4608 = vlaneseq
    %v4609 = vshrl.u32 %v4608, 7
    %v4610 = vadd.s32 %v4609, 8
    %4611 = vset.pattern.permute.xlu0 %v4610
    %4612 = vperm.xlu0 %4611, %v4601
    %v4613 = vpop.permute.xlu0 %4612
    %v4614 = vlaneseq
    %v4615 = vshrl.u32 %v4614, 7
    %v4616 = vadd.s32 %v4615, 16
    %4617 = vset.pattern.permute.xlu0 %v4616
    %4618 = vperm.xlu0 %4617, %v4601
    %v4619 = vpop.permute.xlu0 %4618
    %v4620 = vlaneseq
    %v4621 = vshrl.u32 %v4620, 7
    %v4622 = vadd.s32 %v4621, 24
    %4623 = vset.pattern.permute.xlu0 %v4622
    %4624 = vperm.xlu0 %4623, %v4601
    %v4625 = vpop.permute.xlu0 %4624
    %v4626 = vperm.slane %v4344, 3
    %v4627 = vlaneseq
    %v4628 = vshrl.u32 %v4627, 7
    %4630 = vset.pattern.permute.xlu0 %v4628
    %4631 = vperm.xlu0 %4630, %v4626
    %v4632 = vpop.permute.xlu0 %4631
    %v4633 = vlaneseq
    %v4634 = vshrl.u32 %v4633, 7
    %v4635 = vadd.s32 %v4634, 8
    %4636 = vset.pattern.permute.xlu0 %v4635
    %4637 = vperm.xlu0 %4636, %v4626
    %v4638 = vpop.permute.xlu0 %4637
    %v4639 = vlaneseq
    %v4640 = vshrl.u32 %v4639, 7
    %v4641 = vadd.s32 %v4640, 16
    %4642 = vset.pattern.permute.xlu0 %v4641
    %4643 = vperm.xlu0 %4642, %v4626
    %v4644 = vpop.permute.xlu0 %4643
    %v4645 = vlaneseq
    %v4646 = vshrl.u32 %v4645, 7
    %v4647 = vadd.s32 %v4646, 24
    %4648 = vset.pattern.permute.xlu0 %v4647
    %4649 = vperm.xlu0 %4648, %v4626
    %v4650 = vpop.permute.xlu0 %4649
    %v4651 = vperm.slane %v4344, 4
    %v4652 = vlaneseq
    %v4653 = vshrl.u32 %v4652, 7
    %4655 = vset.pattern.permute.xlu0 %v4653
    %4656 = vperm.xlu0 %4655, %v4651
    %v4657 = vpop.permute.xlu0 %4656
    %v4658 = vlaneseq
    %v4659 = vshrl.u32 %v4658, 7
    %v4660 = vadd.s32 %v4659, 8
    %4661 = vset.pattern.permute.xlu0 %v4660
    %4662 = vperm.xlu0 %4661, %v4651
    %v4663 = vpop.permute.xlu0 %4662
    %v4664 = vlaneseq
    %v4665 = vshrl.u32 %v4664, 7
    %v4666 = vadd.s32 %v4665, 16
    %4667 = vset.pattern.permute.xlu0 %v4666
    %4668 = vperm.xlu0 %4667, %v4651
    %v4669 = vpop.permute.xlu0 %4668
    %v4670 = vlaneseq
    %v4671 = vshrl.u32 %v4670, 7
    %v4672 = vadd.s32 %v4671, 24
    %4673 = vset.pattern.permute.xlu0 %v4672
    %4674 = vperm.xlu0 %4673, %v4651
    %v4675 = vpop.permute.xlu0 %4674
    %v4676 = vperm.slane %v4344, 5
    %v4677 = vlaneseq
    %v4678 = vshrl.u32 %v4677, 7
    %4680 = vset.pattern.permute.xlu0 %v4678
    %4681 = vperm.xlu0 %4680, %v4676
    %v4682 = vpop.permute.xlu0 %4681
    %v4683 = vlaneseq
    %v4684 = vshrl.u32 %v4683, 7
    %v4685 = vadd.s32 %v4684, 8
    %4686 = vset.pattern.permute.xlu0 %v4685
    %4687 = vperm.xlu0 %4686, %v4676
    %v4688 = vpop.permute.xlu0 %4687
    %v4689 = vlaneseq
    %v4690 = vshrl.u32 %v4689, 7
    %v4691 = vadd.s32 %v4690, 16
    %4692 = vset.pattern.permute.xlu0 %v4691
    %4693 = vperm.xlu0 %4692, %v4676
    %v4694 = vpop.permute.xlu0 %4693
    %v4695 = vlaneseq
    %v4696 = vshrl.u32 %v4695, 7
    %v4697 = vadd.s32 %v4696, 24
    %4698 = vset.pattern.permute.xlu0 %v4697
    %4699 = vperm.xlu0 %4698, %v4676
    %v4700 = vpop.permute.xlu0 %4699
    %v4701 = vperm.slane %v4344, 6
    %v4702 = vlaneseq
    %v4703 = vshrl.u32 %v4702, 7
    %4705 = vset.pattern.permute.xlu0 %v4703
    %4706 = vperm.xlu0 %4705, %v4701
    %v4707 = vpop.permute.xlu0 %4706
    %v4708 = vlaneseq
    %v4709 = vshrl.u32 %v4708, 7
    %v4710 = vadd.s32 %v4709, 8
    %4711 = vset.pattern.permute.xlu0 %v4710
    %4712 = vperm.xlu0 %4711, %v4701
    %v4713 = vpop.permute.xlu0 %4712
    %v4714 = vlaneseq
    %v4715 = vshrl.u32 %v4714, 7
    %v4716 = vadd.s32 %v4715, 16
    %4717 = vset.pattern.permute.xlu0 %v4716
    %4718 = vperm.xlu0 %4717, %v4701
    %v4719 = vpop.permute.xlu0 %4718
    %v4720 = vlaneseq
    %v4721 = vshrl.u32 %v4720, 7
    %v4722 = vadd.s32 %v4721, 24
    %4723 = vset.pattern.permute.xlu0 %v4722
    %4724 = vperm.xlu0 %4723, %v4701
    %v4725 = vpop.permute.xlu0 %4724
    %v4726 = vperm.slane %v4344, 7
    %v4727 = vlaneseq
    %v4728 = vshrl.u32 %v4727, 7
    %4730 = vset.pattern.permute.xlu0 %v4728
    %4731 = vperm.xlu0 %4730, %v4726
    %v4732 = vpop.permute.xlu0 %4731
    %v4733 = vlaneseq
    %v4734 = vshrl.u32 %v4733, 7
    %v4735 = vadd.s32 %v4734, 8
    %4736 = vset.pattern.permute.xlu0 %v4735
    %4737 = vperm.xlu0 %4736, %v4726
    %v4738 = vpop.permute.xlu0 %4737
    %v4739 = vlaneseq
    %v4740 = vshrl.u32 %v4739, 7
    %v4741 = vadd.s32 %v4740, 16
    %4742 = vset.pattern.permute.xlu0 %v4741
    %4743 = vperm.xlu0 %4742, %v4726
    %v4744 = vpop.permute.xlu0 %4743
    %v4745 = vlaneseq
    %v4746 = vshrl.u32 %v4745, 7
    %v4747 = vadd.s32 %v4746, 24
    %4748 = vset.pattern.permute.xlu0 %v4747
    %4749 = vperm.xlu0 %4748, %v4726
    %v4750 = vpop.permute.xlu0 %4749
    %vm4751 = vcmp.eq.s32.totalorder %v4357, %v78
    %vm4752 = vcmp.eq.s32.totalorder %v4363, %v78
    %vm4753 = vcmp.eq.s32.totalorder %v4369, %v78
    %vm4754 = vcmp.eq.s32.totalorder %v4375, %v78
    %vm4755 = vcmp.eq.s32.totalorder %v4382, %v78
    %vm4756 = vcmp.eq.s32.totalorder %v4388, %v78
    %vm4757 = vcmp.eq.s32.totalorder %v4394, %v78
    %vm4758 = vcmp.eq.s32.totalorder %v4400, %v78
    %vm4759 = vcmp.eq.s32.totalorder %v4407, %v78
    %vm4760 = vcmp.eq.s32.totalorder %v4413, %v78
    %vm4761 = vcmp.eq.s32.totalorder %v4419, %v78
    %vm4762 = vcmp.eq.s32.totalorder %v4425, %v78
    %vm4763 = vcmp.eq.s32.totalorder %v4432, %v78
    %vm4764 = vcmp.eq.s32.totalorder %v4438, %v78
    %vm4765 = vcmp.eq.s32.totalorder %v4444, %v78
    %vm4766 = vcmp.eq.s32.totalorder %v4450, %v78
    %vm4767 = vcmp.eq.s32.totalorder %v4457, %v78
    %vm4768 = vcmp.eq.s32.totalorder %v4463, %v78
    %vm4769 = vcmp.eq.s32.totalorder %v4469, %v78
    %vm4770 = vcmp.eq.s32.totalorder %v4475, %v78
    %vm4771 = vcmp.eq.s32.totalorder %v4482, %v78
    %vm4772 = vcmp.eq.s32.totalorder %v4488, %v78
    %vm4773 = vcmp.eq.s32.totalorder %v4494, %v78
    %vm4774 = vcmp.eq.s32.totalorder %v4500, %v78
    %vm4775 = vcmp.eq.s32.totalorder %v4507, %v78
    %vm4776 = vcmp.eq.s32.totalorder %v4513, %v78
    %vm4777 = vcmp.eq.s32.totalorder %v4519, %v78
    %vm4778 = vcmp.eq.s32.totalorder %v4525, %v78
    %vm4779 = vcmp.eq.s32.totalorder %v4532, %v78
    %vm4780 = vcmp.eq.s32.totalorder %v4538, %v78
    %vm4781 = vcmp.eq.s32.totalorder %v4544, %v78
    %vm4782 = vcmp.eq.s32.totalorder %v4550, %v78
    %vm4783 = vcmp.eq.s32.totalorder %v4557, %v78
    %vm4784 = vcmp.eq.s32.totalorder %v4563, %v78
    %vm4785 = vcmp.eq.s32.totalorder %v4569, %v78
    %vm4786 = vcmp.eq.s32.totalorder %v4575, %v78
    %vm4787 = vcmp.eq.s32.totalorder %v4582, %v78
    %vm4788 = vcmp.eq.s32.totalorder %v4588, %v78
    %vm4789 = vcmp.eq.s32.totalorder %v4594, %v78
    %vm4790 = vcmp.eq.s32.totalorder %v4600, %v78
    %vm4791 = vcmp.eq.s32.totalorder %v4607, %v78
    %vm4792 = vcmp.eq.s32.totalorder %v4613, %v78
    %vm4793 = vcmp.eq.s32.totalorder %v4619, %v78
    %vm4794 = vcmp.eq.s32.totalorder %v4625, %v78
    %vm4795 = vcmp.eq.s32.totalorder %v4632, %v78
    %vm4796 = vcmp.eq.s32.totalorder %v4638, %v78
    %vm4797 = vcmp.eq.s32.totalorder %v4644, %v78
    %vm4798 = vcmp.eq.s32.totalorder %v4650, %v78
    %vm4799 = vcmp.eq.s32.totalorder %v4657, %v78
    %vm4800 = vcmp.eq.s32.totalorder %v4663, %v78
    %vm4801 = vcmp.eq.s32.totalorder %v4669, %v78
    %vm4802 = vcmp.eq.s32.totalorder %v4675, %v78
    %vm4803 = vcmp.eq.s32.totalorder %v4682, %v78
    %vm4804 = vcmp.eq.s32.totalorder %v4688, %v78
    %vm4805 = vcmp.eq.s32.totalorder %v4694, %v78
    %vm4806 = vcmp.eq.s32.totalorder %v4700, %v78
    %vm4807 = vcmp.eq.s32.totalorder %v4707, %v78
    %vm4808 = vcmp.eq.s32.totalorder %v4713, %v78
    %vm4809 = vcmp.eq.s32.totalorder %v4719, %v78
    %vm4810 = vcmp.eq.s32.totalorder %v4725, %v78
    %vm4811 = vcmp.eq.s32.totalorder %v4732, %v78
    %vm4812 = vcmp.eq.s32.totalorder %v4738, %v78
    %vm4813 = vcmp.eq.s32.totalorder %v4744, %v78
    %vm4814 = vcmp.eq.s32.totalorder %v4750, %v78
    %v4815 = vperm.slane %v4349, 0
    %v4816 = vlaneseq
    %v4817 = vshrl.u32 %v4816, 7
    %4819 = vset.pattern.permute.xlu0 %v4817
    %4820 = vperm.xlu0 %4819, %v4815
    %v4821 = vpop.permute.xlu0 %4820
    %v4822 = vlaneseq
    %v4823 = vshrl.u32 %v4822, 7
    %v4824 = vadd.s32 %v4823, 8
    %4825 = vset.pattern.permute.xlu0 %v4824
    %4826 = vperm.xlu0 %4825, %v4815
    %v4827 = vpop.permute.xlu0 %4826
    %v4828 = vlaneseq
    %v4829 = vshrl.u32 %v4828, 7
    %v4830 = vadd.s32 %v4829, 16
    %4831 = vset.pattern.permute.xlu0 %v4830
    %4832 = vperm.xlu0 %4831, %v4815
    %v4833 = vpop.permute.xlu0 %4832
    %v4834 = vlaneseq
    %v4835 = vshrl.u32 %v4834, 7
    %v4836 = vadd.s32 %v4835, 24
    %4837 = vset.pattern.permute.xlu0 %v4836
    %4838 = vperm.xlu0 %4837, %v4815
    %v4839 = vpop.permute.xlu0 %4838
    %v4840 = vperm.slane %v4349, 1
    %v4841 = vlaneseq
    %v4842 = vshrl.u32 %v4841, 7
    %4844 = vset.pattern.permute.xlu0 %v4842
    %4845 = vperm.xlu0 %4844, %v4840
    %v4846 = vpop.permute.xlu0 %4845
    %v4847 = vlaneseq
    %v4848 = vshrl.u32 %v4847, 7
    %v4849 = vadd.s32 %v4848, 8
    %4850 = vset.pattern.permute.xlu0 %v4849
    %4851 = vperm.xlu0 %4850, %v4840
    %v4852 = vpop.permute.xlu0 %4851
    %v4853 = vlaneseq
    %v4854 = vshrl.u32 %v4853, 7
    %v4855 = vadd.s32 %v4854, 16
    %4856 = vset.pattern.permute.xlu0 %v4855
    %4857 = vperm.xlu0 %4856, %v4840
    %v4858 = vpop.permute.xlu0 %4857
    %v4859 = vlaneseq
    %v4860 = vshrl.u32 %v4859, 7
    %v4861 = vadd.s32 %v4860, 24
    %4862 = vset.pattern.permute.xlu0 %v4861
    %4863 = vperm.xlu0 %4862, %v4840
    %v4864 = vpop.permute.xlu0 %4863
    %v4865 = vperm.slane %v4349, 2
    %v4866 = vlaneseq
    %v4867 = vshrl.u32 %v4866, 7
    %4869 = vset.pattern.permute.xlu0 %v4867
    %4870 = vperm.xlu0 %4869, %v4865
    %v4871 = vpop.permute.xlu0 %4870
    %v4872 = vlaneseq
    %v4873 = vshrl.u32 %v4872, 7
    %v4874 = vadd.s32 %v4873, 8
    %4875 = vset.pattern.permute.xlu0 %v4874
    %4876 = vperm.xlu0 %4875, %v4865
    %v4877 = vpop.permute.xlu0 %4876
    %v4878 = vlaneseq
    %v4879 = vshrl.u32 %v4878, 7
    %v4880 = vadd.s32 %v4879, 16
    %4881 = vset.pattern.permute.xlu0 %v4880
    %4882 = vperm.xlu0 %4881, %v4865
    %v4883 = vpop.permute.xlu0 %4882
    %v4884 = vlaneseq
    %v4885 = vshrl.u32 %v4884, 7
    %v4886 = vadd.s32 %v4885, 24
    %4887 = vset.pattern.permute.xlu0 %v4886
    %4888 = vperm.xlu0 %4887, %v4865
    %v4889 = vpop.permute.xlu0 %4888
    %v4890 = vperm.slane %v4349, 3
    %v4891 = vlaneseq
    %v4892 = vshrl.u32 %v4891, 7
    %4894 = vset.pattern.permute.xlu0 %v4892
    %4895 = vperm.xlu0 %4894, %v4890
    %v4896 = vpop.permute.xlu0 %4895
    %v4897 = vlaneseq
    %v4898 = vshrl.u32 %v4897, 7
    %v4899 = vadd.s32 %v4898, 8
    %4900 = vset.pattern.permute.xlu0 %v4899
    %4901 = vperm.xlu0 %4900, %v4890
    %v4902 = vpop.permute.xlu0 %4901
    %v4903 = vlaneseq
    %v4904 = vshrl.u32 %v4903, 7
    %v4905 = vadd.s32 %v4904, 16
    %4906 = vset.pattern.permute.xlu0 %v4905
    %4907 = vperm.xlu0 %4906, %v4890
    %v4908 = vpop.permute.xlu0 %4907
    %v4909 = vlaneseq
    %v4910 = vshrl.u32 %v4909, 7
    %v4911 = vadd.s32 %v4910, 24
    %4912 = vset.pattern.permute.xlu0 %v4911
    %4913 = vperm.xlu0 %4912, %v4890
    %v4914 = vpop.permute.xlu0 %4913
    %v4915 = vperm.slane %v4349, 4
    %v4916 = vlaneseq
    %v4917 = vshrl.u32 %v4916, 7
    %4919 = vset.pattern.permute.xlu0 %v4917
    %4920 = vperm.xlu0 %4919, %v4915
    %v4921 = vpop.permute.xlu0 %4920
    %v4922 = vlaneseq
    %v4923 = vshrl.u32 %v4922, 7
    %v4924 = vadd.s32 %v4923, 8
    %4925 = vset.pattern.permute.xlu0 %v4924
    %4926 = vperm.xlu0 %4925, %v4915
    %v4927 = vpop.permute.xlu0 %4926
    %v4928 = vlaneseq
    %v4929 = vshrl.u32 %v4928, 7
    %v4930 = vadd.s32 %v4929, 16
    %4931 = vset.pattern.permute.xlu0 %v4930
    %4932 = vperm.xlu0 %4931, %v4915
    %v4933 = vpop.permute.xlu0 %4932
    %v4934 = vlaneseq
    %v4935 = vshrl.u32 %v4934, 7
    %v4936 = vadd.s32 %v4935, 24
    %4937 = vset.pattern.permute.xlu0 %v4936
    %4938 = vperm.xlu0 %4937, %v4915
    %v4939 = vpop.permute.xlu0 %4938
    %v4940 = vperm.slane %v4349, 5
    %v4941 = vlaneseq
    %v4942 = vshrl.u32 %v4941, 7
    %4944 = vset.pattern.permute.xlu0 %v4942
    %4945 = vperm.xlu0 %4944, %v4940
    %v4946 = vpop.permute.xlu0 %4945
    %v4947 = vlaneseq
    %v4948 = vshrl.u32 %v4947, 7
    %v4949 = vadd.s32 %v4948, 8
    %4950 = vset.pattern.permute.xlu0 %v4949
    %4951 = vperm.xlu0 %4950, %v4940
    %v4952 = vpop.permute.xlu0 %4951
    %v4953 = vlaneseq
    %v4954 = vshrl.u32 %v4953, 7
    %v4955 = vadd.s32 %v4954, 16
    %4956 = vset.pattern.permute.xlu0 %v4955
    %4957 = vperm.xlu0 %4956, %v4940
    %v4958 = vpop.permute.xlu0 %4957
    %v4959 = vlaneseq
    %v4960 = vshrl.u32 %v4959, 7
    %v4961 = vadd.s32 %v4960, 24
    %4962 = vset.pattern.permute.xlu0 %v4961
    %4963 = vperm.xlu0 %4962, %v4940
    %v4964 = vpop.permute.xlu0 %4963
    %v4965 = vperm.slane %v4349, 6
    %v4966 = vlaneseq
    %v4967 = vshrl.u32 %v4966, 7
    %4969 = vset.pattern.permute.xlu0 %v4967
    %4970 = vperm.xlu0 %4969, %v4965
    %v4971 = vpop.permute.xlu0 %4970
    %v4972 = vlaneseq
    %v4973 = vshrl.u32 %v4972, 7
    %v4974 = vadd.s32 %v4973, 8
    %4975 = vset.pattern.permute.xlu0 %v4974
    %4976 = vperm.xlu0 %4975, %v4965
    %v4977 = vpop.permute.xlu0 %4976
    %v4978 = vlaneseq
    %v4979 = vshrl.u32 %v4978, 7
    %v4980 = vadd.s32 %v4979, 16
    %4981 = vset.pattern.permute.xlu0 %v4980
    %4982 = vperm.xlu0 %4981, %v4965
    %v4983 = vpop.permute.xlu0 %4982
    %v4984 = vlaneseq
    %v4985 = vshrl.u32 %v4984, 7
    %v4986 = vadd.s32 %v4985, 24
    %4987 = vset.pattern.permute.xlu0 %v4986
    %4988 = vperm.xlu0 %4987, %v4965
    %v4989 = vpop.permute.xlu0 %4988
    %v4990 = vperm.slane %v4349, 7
    %v4991 = vlaneseq
    %v4992 = vshrl.u32 %v4991, 7
    %4994 = vset.pattern.permute.xlu0 %v4992
    %4995 = vperm.xlu0 %4994, %v4990
    %v4996 = vpop.permute.xlu0 %4995
    %v4997 = vlaneseq
    %v4998 = vshrl.u32 %v4997, 7
    %v4999 = vadd.s32 %v4998, 8
    %5000 = vset.pattern.permute.xlu0 %v4999
    %5001 = vperm.xlu0 %5000, %v4990
    %v5002 = vpop.permute.xlu0 %5001
    %v5003 = vlaneseq
    %v5004 = vshrl.u32 %v5003, 7
    %v5005 = vadd.s32 %v5004, 16
    %5006 = vset.pattern.permute.xlu0 %v5005
    %5007 = vperm.xlu0 %5006, %v4990
    %v5008 = vpop.permute.xlu0 %5007
    %v5009 = vlaneseq
    %v5010 = vshrl.u32 %v5009, 7
    %v5011 = vadd.s32 %v5010, 24
    %5012 = vset.pattern.permute.xlu0 %v5011
    %5013 = vperm.xlu0 %5012, %v4990
    %v5014 = vpop.permute.xlu0 %5013
    %v5015 = vperm.slane %v4350, 0
    %v5016 = vlaneseq
    %v5017 = vshrl.u32 %v5016, 7
    %5019 = vset.pattern.permute.xlu0 %v5017
    %5020 = vperm.xlu0 %5019, %v5015
    %v5021 = vpop.permute.xlu0 %5020
    %v5022 = vlaneseq
    %v5023 = vshrl.u32 %v5022, 7
    %v5024 = vadd.s32 %v5023, 8
    %5025 = vset.pattern.permute.xlu0 %v5024
    %5026 = vperm.xlu0 %5025, %v5015
    %v5027 = vpop.permute.xlu0 %5026
    %v5028 = vlaneseq
    %v5029 = vshrl.u32 %v5028, 7
    %v5030 = vadd.s32 %v5029, 16
    %5031 = vset.pattern.permute.xlu0 %v5030
    %5032 = vperm.xlu0 %5031, %v5015
    %v5033 = vpop.permute.xlu0 %5032
    %v5034 = vlaneseq
    %v5035 = vshrl.u32 %v5034, 7
    %v5036 = vadd.s32 %v5035, 24
    %5037 = vset.pattern.permute.xlu0 %v5036
    %5038 = vperm.xlu0 %5037, %v5015
    %v5039 = vpop.permute.xlu0 %5038
    %v5040 = vperm.slane %v4350, 1
    %v5041 = vlaneseq
    %v5042 = vshrl.u32 %v5041, 7
    %5044 = vset.pattern.permute.xlu0 %v5042
    %5045 = vperm.xlu0 %5044, %v5040
    %v5046 = vpop.permute.xlu0 %5045
    %v5047 = vlaneseq
    %v5048 = vshrl.u32 %v5047, 7
    %v5049 = vadd.s32 %v5048, 8
    %5050 = vset.pattern.permute.xlu0 %v5049
    %5051 = vperm.xlu0 %5050, %v5040
    %v5052 = vpop.permute.xlu0 %5051
    %v5053 = vlaneseq
    %v5054 = vshrl.u32 %v5053, 7
    %v5055 = vadd.s32 %v5054, 16
    %5056 = vset.pattern.permute.xlu0 %v5055
    %5057 = vperm.xlu0 %5056, %v5040
    %v5058 = vpop.permute.xlu0 %5057
    %v5059 = vlaneseq
    %v5060 = vshrl.u32 %v5059, 7
    %v5061 = vadd.s32 %v5060, 24
    %5062 = vset.pattern.permute.xlu0 %v5061
    %5063 = vperm.xlu0 %5062, %v5040
    %v5064 = vpop.permute.xlu0 %5063
    %v5065 = vperm.slane %v4350, 2
    %v5066 = vlaneseq
    %v5067 = vshrl.u32 %v5066, 7
    %5069 = vset.pattern.permute.xlu0 %v5067
    %5070 = vperm.xlu0 %5069, %v5065
    %v5071 = vpop.permute.xlu0 %5070
    %v5072 = vlaneseq
    %v5073 = vshrl.u32 %v5072, 7
    %v5074 = vadd.s32 %v5073, 8
    %5075 = vset.pattern.permute.xlu0 %v5074
    %5076 = vperm.xlu0 %5075, %v5065
    %v5077 = vpop.permute.xlu0 %5076
    %v5078 = vlaneseq
    %v5079 = vshrl.u32 %v5078, 7
    %v5080 = vadd.s32 %v5079, 16
    %5081 = vset.pattern.permute.xlu0 %v5080
    %5082 = vperm.xlu0 %5081, %v5065
    %v5083 = vpop.permute.xlu0 %5082
    %v5084 = vlaneseq
    %v5085 = vshrl.u32 %v5084, 7
    %v5086 = vadd.s32 %v5085, 24
    %5087 = vset.pattern.permute.xlu0 %v5086
    %5088 = vperm.xlu0 %5087, %v5065
    %v5089 = vpop.permute.xlu0 %5088
    %v5090 = vperm.slane %v4350, 3
    %v5091 = vlaneseq
    %v5092 = vshrl.u32 %v5091, 7
    %5094 = vset.pattern.permute.xlu0 %v5092
    %5095 = vperm.xlu0 %5094, %v5090
    %v5096 = vpop.permute.xlu0 %5095
    %v5097 = vlaneseq
    %v5098 = vshrl.u32 %v5097, 7
    %v5099 = vadd.s32 %v5098, 8
    %5100 = vset.pattern.permute.xlu0 %v5099
    %5101 = vperm.xlu0 %5100, %v5090
    %v5102 = vpop.permute.xlu0 %5101
    %v5103 = vlaneseq
    %v5104 = vshrl.u32 %v5103, 7
    %v5105 = vadd.s32 %v5104, 16
    %5106 = vset.pattern.permute.xlu0 %v5105
    %5107 = vperm.xlu0 %5106, %v5090
    %v5108 = vpop.permute.xlu0 %5107
    %v5109 = vlaneseq
    %v5110 = vshrl.u32 %v5109, 7
    %v5111 = vadd.s32 %v5110, 24
    %5112 = vset.pattern.permute.xlu0 %v5111
    %5113 = vperm.xlu0 %5112, %v5090
    %v5114 = vpop.permute.xlu0 %5113
    %v5115 = vperm.slane %v4350, 4
    %v5116 = vlaneseq
    %v5117 = vshrl.u32 %v5116, 7
    %5119 = vset.pattern.permute.xlu0 %v5117
    %5120 = vperm.xlu0 %5119, %v5115
    %v5121 = vpop.permute.xlu0 %5120
    %v5122 = vlaneseq
    %v5123 = vshrl.u32 %v5122, 7
    %v5124 = vadd.s32 %v5123, 8
    %5125 = vset.pattern.permute.xlu0 %v5124
    %5126 = vperm.xlu0 %5125, %v5115
    %v5127 = vpop.permute.xlu0 %5126
    %v5128 = vlaneseq
    %v5129 = vshrl.u32 %v5128, 7
    %v5130 = vadd.s32 %v5129, 16
    %5131 = vset.pattern.permute.xlu0 %v5130
    %5132 = vperm.xlu0 %5131, %v5115
    %v5133 = vpop.permute.xlu0 %5132
    %v5134 = vlaneseq
    %v5135 = vshrl.u32 %v5134, 7
    %v5136 = vadd.s32 %v5135, 24
    %5137 = vset.pattern.permute.xlu0 %v5136
    %5138 = vperm.xlu0 %5137, %v5115
    %v5139 = vpop.permute.xlu0 %5138
    %v5140 = vperm.slane %v4350, 5
    %v5141 = vlaneseq
    %v5142 = vshrl.u32 %v5141, 7
    %5144 = vset.pattern.permute.xlu0 %v5142
    %5145 = vperm.xlu0 %5144, %v5140
    %v5146 = vpop.permute.xlu0 %5145
    %v5147 = vlaneseq
    %v5148 = vshrl.u32 %v5147, 7
    %v5149 = vadd.s32 %v5148, 8
    %5150 = vset.pattern.permute.xlu0 %v5149
    %5151 = vperm.xlu0 %5150, %v5140
    %v5152 = vpop.permute.xlu0 %5151
    %v5153 = vlaneseq
    %v5154 = vshrl.u32 %v5153, 7
    %v5155 = vadd.s32 %v5154, 16
    %5156 = vset.pattern.permute.xlu0 %v5155
    %5157 = vperm.xlu0 %5156, %v5140
    %v5158 = vpop.permute.xlu0 %5157
    %v5159 = vlaneseq
    %v5160 = vshrl.u32 %v5159, 7
    %v5161 = vadd.s32 %v5160, 24
    %5162 = vset.pattern.permute.xlu0 %v5161
    %5163 = vperm.xlu0 %5162, %v5140
    %v5164 = vpop.permute.xlu0 %5163
    %v5165 = vperm.slane %v4350, 6
    %v5166 = vlaneseq
    %v5167 = vshrl.u32 %v5166, 7
    %5169 = vset.pattern.permute.xlu0 %v5167
    %5170 = vperm.xlu0 %5169, %v5165
    %v5171 = vpop.permute.xlu0 %5170
    %v5172 = vlaneseq
    %v5173 = vshrl.u32 %v5172, 7
    %v5174 = vadd.s32 %v5173, 8
    %5175 = vset.pattern.permute.xlu0 %v5174
    %5176 = vperm.xlu0 %5175, %v5165
    %v5177 = vpop.permute.xlu0 %5176
    %v5178 = vlaneseq
    %v5179 = vshrl.u32 %v5178, 7
    %v5180 = vadd.s32 %v5179, 16
    %5181 = vset.pattern.permute.xlu0 %v5180
    %5182 = vperm.xlu0 %5181, %v5165
    %v5183 = vpop.permute.xlu0 %5182
    %v5184 = vlaneseq
    %v5185 = vshrl.u32 %v5184, 7
    %v5186 = vadd.s32 %v5185, 24
    %5187 = vset.pattern.permute.xlu0 %v5186
    %5188 = vperm.xlu0 %5187, %v5165
    %v5189 = vpop.permute.xlu0 %5188
    %v5190 = vperm.slane %v4350, 7
    %v5191 = vlaneseq
    %v5192 = vshrl.u32 %v5191, 7
    %5194 = vset.pattern.permute.xlu0 %v5192
    %5195 = vperm.xlu0 %5194, %v5190
    %v5196 = vpop.permute.xlu0 %5195
    %v5197 = vlaneseq
    %v5198 = vshrl.u32 %v5197, 7
    %v5199 = vadd.s32 %v5198, 8
    %5200 = vset.pattern.permute.xlu0 %v5199
    %5201 = vperm.xlu0 %5200, %v5190
    %v5202 = vpop.permute.xlu0 %5201
    %v5203 = vlaneseq
    %v5204 = vshrl.u32 %v5203, 7
    %v5205 = vadd.s32 %v5204, 16
    %5206 = vset.pattern.permute.xlu0 %v5205
    %5207 = vperm.xlu0 %5206, %v5190
    %v5208 = vpop.permute.xlu0 %5207
    %v5209 = vlaneseq
    %v5210 = vshrl.u32 %v5209, 7
    %v5211 = vadd.s32 %v5210, 24
    %5212 = vset.pattern.permute.xlu0 %v5211
    %5213 = vperm.xlu0 %5212, %v5190
    %v5214 = vpop.permute.xlu0 %5213
    %v5215 = vsel %vm4751, %v4821, 0.0
    %v5216 = vsel %vm4752, %v4827, 0.0
    %v5217 = vsel %vm4753, %v4833, 0.0
    %v5218 = vsel %vm4754, %v4839, 0.0
    %v5219 = vsel %vm4755, %v4846, 0.0
    %v5220 = vsel %vm4756, %v4852, 0.0
    %v5221 = vsel %vm4757, %v4858, 0.0
    %v5222 = vsel %vm4758, %v4864, 0.0
    %v5223 = vsel %vm4759, %v4871, 0.0
    %v5224 = vsel %vm4760, %v4877, 0.0
    %v5225 = vsel %vm4761, %v4883, 0.0
    %v5226 = vsel %vm4762, %v4889, 0.0
    %v5227 = vsel %vm4763, %v4896, 0.0
    %v5228 = vsel %vm4764, %v4902, 0.0
    %v5229 = vsel %vm4765, %v4908, 0.0
    %v5230 = vsel %vm4766, %v4914, 0.0
    %v5231 = vsel %vm4767, %v4921, 0.0
    %v5232 = vsel %vm4768, %v4927, 0.0
    %v5233 = vsel %vm4769, %v4933, 0.0
    %v5234 = vsel %vm4770, %v4939, 0.0
    %v5235 = vsel %vm4771, %v4946, 0.0
    %v5236 = vsel %vm4772, %v4952, 0.0
    %v5237 = vsel %vm4773, %v4958, 0.0
    %v5238 = vsel %vm4774, %v4964, 0.0
    %v5239 = vsel %vm4775, %v4971, 0.0
    %v5240 = vsel %vm4776, %v4977, 0.0
    %v5241 = vsel %vm4777, %v4983, 0.0
    %v5242 = vsel %vm4778, %v4989, 0.0
    %v5243 = vsel %vm4779, %v4996, 0.0
    %v5244 = vsel %vm4780, %v5002, 0.0
    %v5245 = vsel %vm4781, %v5008, 0.0
    %v5246 = vsel %vm4782, %v5014, 0.0
    %v5247 = vsel %vm4783, %v5021, 0.0
    %v5248 = vsel %vm4784, %v5027, 0.0
    %v5249 = vsel %vm4785, %v5033, 0.0
    %v5250 = vsel %vm4786, %v5039, 0.0
    %v5251 = vsel %vm4787, %v5046, 0.0
    %v5252 = vsel %vm4788, %v5052, 0.0
    %v5253 = vsel %vm4789, %v5058, 0.0
    %v5254 = vsel %vm4790, %v5064, 0.0
    %v5255 = vsel %vm4791, %v5071, 0.0
    %v5256 = vsel %vm4792, %v5077, 0.0
    %v5257 = vsel %vm4793, %v5083, 0.0
    %v5258 = vsel %vm4794, %v5089, 0.0
    %v5259 = vsel %vm4795, %v5096, 0.0
    %v5260 = vsel %vm4796, %v5102, 0.0
    %v5261 = vsel %vm4797, %v5108, 0.0
    %v5262 = vsel %vm4798, %v5114, 0.0
    %v5263 = vsel %vm4799, %v5121, 0.0
    %v5264 = vsel %vm4800, %v5127, 0.0
    %v5265 = vsel %vm4801, %v5133, 0.0
    %v5266 = vsel %vm4802, %v5139, 0.0
    %v5267 = vsel %vm4803, %v5146, 0.0
    %v5268 = vsel %vm4804, %v5152, 0.0
    %v5269 = vsel %vm4805, %v5158, 0.0
    %v5270 = vsel %vm4806, %v5164, 0.0
    %v5271 = vsel %vm4807, %v5171, 0.0
    %v5272 = vsel %vm4808, %v5177, 0.0
    %v5273 = vsel %vm4809, %v5183, 0.0
    %v5274 = vsel %vm4810, %v5189, 0.0
    %v5275 = vsel %vm4811, %v5196, 0.0
    %v5276 = vsel %vm4812, %v5202, 0.0
    %v5277 = vsel %vm4813, %v5208, 0.0
    %v5278 = vsel %vm4814, %v5214, 0.0
    %v5279 = vadd.f32 %v5215, %v5216
    %v5280 = vadd.f32 %v5279, %v5217
    %v5281 = vadd.f32 %v5280, %v5218
    %v5282 = vrot.slane %v5281, 4
    %v5283 = vadd.f32 %v5281, %v5282
    %v5284 = vrot.slane %v5283, 2
    %v5285 = vadd.f32 %v5283, %v5284
    %v5286 = vrot.slane %v5285, 1
    %v5287 = vadd.f32 %v5285, %v5286
    %v5288 = vadd.f32 %v5219, %v5220
    %v5289 = vadd.f32 %v5288, %v5221
    %v5290 = vadd.f32 %v5289, %v5222
    %v5291 = vrot.slane %v5290, 4
    %v5292 = vadd.f32 %v5290, %v5291
    %v5293 = vrot.slane %v5292, 2
    %v5294 = vadd.f32 %v5292, %v5293
    %v5295 = vrot.slane %v5294, 1
    %v5296 = vadd.f32 %v5294, %v5295
    %v5297 = vadd.f32 %v5223, %v5224
    %v5298 = vadd.f32 %v5297, %v5225
    %v5299 = vadd.f32 %v5298, %v5226
    %v5300 = vrot.slane %v5299, 4
    %v5301 = vadd.f32 %v5299, %v5300
    %v5302 = vrot.slane %v5301, 2
    %v5303 = vadd.f32 %v5301, %v5302
    %v5304 = vrot.slane %v5303, 1
    %v5305 = vadd.f32 %v5303, %v5304
    %v5306 = vadd.f32 %v5227, %v5228
    %v5307 = vadd.f32 %v5306, %v5229
    %v5308 = vadd.f32 %v5307, %v5230
    %v5309 = vrot.slane %v5308, 4
    %v5310 = vadd.f32 %v5308, %v5309
    %v5311 = vrot.slane %v5310, 2
    %v5312 = vadd.f32 %v5310, %v5311
    %v5313 = vrot.slane %v5312, 1
    %v5314 = vadd.f32 %v5312, %v5313
    %v5315 = vadd.f32 %v5231, %v5232
    %v5316 = vadd.f32 %v5315, %v5233
    %v5317 = vadd.f32 %v5316, %v5234
    %v5318 = vrot.slane %v5317, 4
    %v5319 = vadd.f32 %v5317, %v5318
    %v5320 = vrot.slane %v5319, 2
    %v5321 = vadd.f32 %v5319, %v5320
    %v5322 = vrot.slane %v5321, 1
    %v5323 = vadd.f32 %v5321, %v5322
    %v5324 = vadd.f32 %v5235, %v5236
    %v5325 = vadd.f32 %v5324, %v5237
    %v5326 = vadd.f32 %v5325, %v5238
    %v5327 = vrot.slane %v5326, 4
    %v5328 = vadd.f32 %v5326, %v5327
    %v5329 = vrot.slane %v5328, 2
    %v5330 = vadd.f32 %v5328, %v5329
    %v5331 = vrot.slane %v5330, 1
    %v5332 = vadd.f32 %v5330, %v5331
    %v5333 = vadd.f32 %v5239, %v5240
    %v5334 = vadd.f32 %v5333, %v5241
    %v5335 = vadd.f32 %v5334, %v5242
    %v5336 = vrot.slane %v5335, 4
    %v5337 = vadd.f32 %v5335, %v5336
    %v5338 = vrot.slane %v5337, 2
    %v5339 = vadd.f32 %v5337, %v5338
    %v5340 = vrot.slane %v5339, 1
    %v5341 = vadd.f32 %v5339, %v5340
    %v5342 = vadd.f32 %v5243, %v5244
    %v5343 = vadd.f32 %v5342, %v5245
    %v5344 = vadd.f32 %v5343, %v5246
    %v5345 = vrot.slane %v5344, 4
    %v5346 = vadd.f32 %v5344, %v5345
    %v5347 = vrot.slane %v5346, 2
    %v5348 = vadd.f32 %v5346, %v5347
    %v5349 = vrot.slane %v5348, 1
    %v5350 = vadd.f32 %v5348, %v5349
    %v5351 = vadd.f32 %v5247, %v5248
    %v5352 = vadd.f32 %v5351, %v5249
    %v5353 = vadd.f32 %v5352, %v5250
    %v5354 = vrot.slane %v5353, 4
    %v5355 = vadd.f32 %v5353, %v5354
    %v5356 = vrot.slane %v5355, 2
    %v5357 = vadd.f32 %v5355, %v5356
    %v5358 = vrot.slane %v5357, 1
    %v5359 = vadd.f32 %v5357, %v5358
    %v5360 = vadd.f32 %v5251, %v5252
    %v5361 = vadd.f32 %v5360, %v5253
    %v5362 = vadd.f32 %v5361, %v5254
    %v5363 = vrot.slane %v5362, 4
    %v5364 = vadd.f32 %v5362, %v5363
    %v5365 = vrot.slane %v5364, 2
    %v5366 = vadd.f32 %v5364, %v5365
    %v5367 = vrot.slane %v5366, 1
    %v5368 = vadd.f32 %v5366, %v5367
    %v5369 = vadd.f32 %v5255, %v5256
    %v5370 = vadd.f32 %v5369, %v5257
    %v5371 = vadd.f32 %v5370, %v5258
    %v5372 = vrot.slane %v5371, 4
    %v5373 = vadd.f32 %v5371, %v5372
    %v5374 = vrot.slane %v5373, 2
    %v5375 = vadd.f32 %v5373, %v5374
    %v5376 = vrot.slane %v5375, 1
    %v5377 = vadd.f32 %v5375, %v5376
    %v5378 = vadd.f32 %v5259, %v5260
    %v5379 = vadd.f32 %v5378, %v5261
    %v5380 = vadd.f32 %v5379, %v5262
    %v5381 = vrot.slane %v5380, 4
    %v5382 = vadd.f32 %v5380, %v5381
    %v5383 = vrot.slane %v5382, 2
    %v5384 = vadd.f32 %v5382, %v5383
    %v5385 = vrot.slane %v5384, 1
    %v5386 = vadd.f32 %v5384, %v5385
    %v5387 = vadd.f32 %v5263, %v5264
    %v5388 = vadd.f32 %v5387, %v5265
    %v5389 = vadd.f32 %v5388, %v5266
    %v5390 = vrot.slane %v5389, 4
    %v5391 = vadd.f32 %v5389, %v5390
    %v5392 = vrot.slane %v5391, 2
    %v5393 = vadd.f32 %v5391, %v5392
    %v5394 = vrot.slane %v5393, 1
    %v5395 = vadd.f32 %v5393, %v5394
    %v5396 = vadd.f32 %v5267, %v5268
    %v5397 = vadd.f32 %v5396, %v5269
    %v5398 = vadd.f32 %v5397, %v5270
    %v5399 = vrot.slane %v5398, 4
    %v5400 = vadd.f32 %v5398, %v5399
    %v5401 = vrot.slane %v5400, 2
    %v5402 = vadd.f32 %v5400, %v5401
    %v5403 = vrot.slane %v5402, 1
    %v5404 = vadd.f32 %v5402, %v5403
    %v5405 = vadd.f32 %v5271, %v5272
    %v5406 = vadd.f32 %v5405, %v5273
    %v5407 = vadd.f32 %v5406, %v5274
    %v5408 = vrot.slane %v5407, 4
    %v5409 = vadd.f32 %v5407, %v5408
    %v5410 = vrot.slane %v5409, 2
    %v5411 = vadd.f32 %v5409, %v5410
    %v5412 = vrot.slane %v5411, 1
    %v5413 = vadd.f32 %v5411, %v5412
    %v5414 = vadd.f32 %v5275, %v5276
    %v5415 = vadd.f32 %v5414, %v5277
    %v5416 = vadd.f32 %v5415, %v5278
    %v5417 = vrot.slane %v5416, 4
    %v5418 = vadd.f32 %v5416, %v5417
    %v5419 = vrot.slane %v5418, 2
    %v5420 = vadd.f32 %v5418, %v5419
    %v5421 = vrot.slane %v5420, 1
    %v5422 = vadd.f32 %v5420, %v5421
    %v5423 = vadd.f32 %v4327, %v5287
    %v5424 = vadd.f32 %v4328, %v5296
    %v5425 = vadd.f32 %v4329, %v5305
    %v5426 = vadd.f32 %v4330, %v5314
    %v5427 = vadd.f32 %v4331, %v5323
    %v5428 = vadd.f32 %v4332, %v5332
    %v5429 = vadd.f32 %v4333, %v5341
    %v5430 = vadd.f32 %v4334, %v5350
    %v5431 = vadd.f32 %v4335, %v5359
    %v5432 = vadd.f32 %v4336, %v5368
    %v5433 = vadd.f32 %v4337, %v5377
    %v5434 = vadd.f32 %v4338, %v5386
    %v5435 = vadd.f32 %v4339, %v5395
    %v5436 = vadd.f32 %v4340, %v5404
    %v5437 = vadd.f32 %v4341, %v5413
    %v5438 = vadd.f32 %v4342, %v5422
    %v5439 = vlaneseq
    %v5440 = vshrl.u32 %v5439, 7
    %v5441 = vadd.s32 %v5440, 32
    %5442 = vset.pattern.permute.xlu0 %v5441
    %5443 = vperm.xlu0 %5442, %v4351
    %v5444 = vpop.permute.xlu0 %5443
    %v5445 = vlaneseq
    %v5446 = vshrl.u32 %v5445, 7
    %v5447 = vadd.s32 %v5446, 40
    %5448 = vset.pattern.permute.xlu0 %v5447
    %5449 = vperm.xlu0 %5448, %v4351
    %v5450 = vpop.permute.xlu0 %5449
    %v5451 = vlaneseq
    %v5452 = vshrl.u32 %v5451, 7
    %v5453 = vadd.s32 %v5452, 48
    %5454 = vset.pattern.permute.xlu0 %v5453
    %5455 = vperm.xlu0 %5454, %v4351
    %v5456 = vpop.permute.xlu0 %5455
    %v5457 = vlaneseq
    %v5458 = vshrl.u32 %v5457, 7
    %v5459 = vadd.s32 %v5458, 56
    %5460 = vset.pattern.permute.xlu0 %v5459
    %5461 = vperm.xlu0 %5460, %v4351
    %v5462 = vpop.permute.xlu0 %5461
    %v5463 = vlaneseq
    %v5464 = vshrl.u32 %v5463, 7
    %v5465 = vadd.s32 %v5464, 32
    %5466 = vset.pattern.permute.xlu0 %v5465
    %5467 = vperm.xlu0 %5466, %v4376
    %v5468 = vpop.permute.xlu0 %5467
    %v5469 = vlaneseq
    %v5470 = vshrl.u32 %v5469, 7
    %v5471 = vadd.s32 %v5470, 40
    %5472 = vset.pattern.permute.xlu0 %v5471
    %5473 = vperm.xlu0 %5472, %v4376
    %v5474 = vpop.permute.xlu0 %5473
    %v5475 = vlaneseq
    %v5476 = vshrl.u32 %v5475, 7
    %v5477 = vadd.s32 %v5476, 48
    %5478 = vset.pattern.permute.xlu0 %v5477
    %5479 = vperm.xlu0 %5478, %v4376
    %v5480 = vpop.permute.xlu0 %5479
    %v5481 = vlaneseq
    %v5482 = vshrl.u32 %v5481, 7
    %v5483 = vadd.s32 %v5482, 56
    %5484 = vset.pattern.permute.xlu0 %v5483
    %5485 = vperm.xlu0 %5484, %v4376
    %v5486 = vpop.permute.xlu0 %5485
    %v5487 = vlaneseq
    %v5488 = vshrl.u32 %v5487, 7
    %v5489 = vadd.s32 %v5488, 32
    %5490 = vset.pattern.permute.xlu0 %v5489
    %5491 = vperm.xlu0 %5490, %v4401
    %v5492 = vpop.permute.xlu0 %5491
    %v5493 = vlaneseq
    %v5494 = vshrl.u32 %v5493, 7
    %v5495 = vadd.s32 %v5494, 40
    %5496 = vset.pattern.permute.xlu0 %v5495
    %5497 = vperm.xlu0 %5496, %v4401
    %v5498 = vpop.permute.xlu0 %5497
    %v5499 = vlaneseq
    %v5500 = vshrl.u32 %v5499, 7
    %v5501 = vadd.s32 %v5500, 48
    %5502 = vset.pattern.permute.xlu0 %v5501
    %5503 = vperm.xlu0 %5502, %v4401
    %v5504 = vpop.permute.xlu0 %5503
    %v5505 = vlaneseq
    %v5506 = vshrl.u32 %v5505, 7
    %v5507 = vadd.s32 %v5506, 56
    %5508 = vset.pattern.permute.xlu0 %v5507
    %5509 = vperm.xlu0 %5508, %v4401
    %v5510 = vpop.permute.xlu0 %5509
    %v5511 = vlaneseq
    %v5512 = vshrl.u32 %v5511, 7
    %v5513 = vadd.s32 %v5512, 32
    %5514 = vset.pattern.permute.xlu0 %v5513
    %5515 = vperm.xlu0 %5514, %v4426
    %v5516 = vpop.permute.xlu0 %5515
    %v5517 = vlaneseq
    %v5518 = vshrl.u32 %v5517, 7
    %v5519 = vadd.s32 %v5518, 40
    %5520 = vset.pattern.permute.xlu0 %v5519
    %5521 = vperm.xlu0 %5520, %v4426
    %v5522 = vpop.permute.xlu0 %5521
    %v5523 = vlaneseq
    %v5524 = vshrl.u32 %v5523, 7
    %v5525 = vadd.s32 %v5524, 48
    %5526 = vset.pattern.permute.xlu0 %v5525
    %5527 = vperm.xlu0 %5526, %v4426
    %v5528 = vpop.permute.xlu0 %5527
    %v5529 = vlaneseq
    %v5530 = vshrl.u32 %v5529, 7
    %v5531 = vadd.s32 %v5530, 56
    %5532 = vset.pattern.permute.xlu0 %v5531
    %5533 = vperm.xlu0 %5532, %v4426
    %v5534 = vpop.permute.xlu0 %5533
    %v5535 = vlaneseq
    %v5536 = vshrl.u32 %v5535, 7
    %v5537 = vadd.s32 %v5536, 32
    %5538 = vset.pattern.permute.xlu0 %v5537
    %5539 = vperm.xlu0 %5538, %v4451
    %v5540 = vpop.permute.xlu0 %5539
    %v5541 = vlaneseq
    %v5542 = vshrl.u32 %v5541, 7
    %v5543 = vadd.s32 %v5542, 40
    %5544 = vset.pattern.permute.xlu0 %v5543
    %5545 = vperm.xlu0 %5544, %v4451
    %v5546 = vpop.permute.xlu0 %5545
    %v5547 = vlaneseq
    %v5548 = vshrl.u32 %v5547, 7
    %v5549 = vadd.s32 %v5548, 48
    %5550 = vset.pattern.permute.xlu0 %v5549
    %5551 = vperm.xlu0 %5550, %v4451
    %v5552 = vpop.permute.xlu0 %5551
    %v5553 = vlaneseq
    %v5554 = vshrl.u32 %v5553, 7
    %v5555 = vadd.s32 %v5554, 56
    %5556 = vset.pattern.permute.xlu0 %v5555
    %5557 = vperm.xlu0 %5556, %v4451
    %v5558 = vpop.permute.xlu0 %5557
    %v5559 = vlaneseq
    %v5560 = vshrl.u32 %v5559, 7
    %v5561 = vadd.s32 %v5560, 32
    %5562 = vset.pattern.permute.xlu0 %v5561
    %5563 = vperm.xlu0 %5562, %v4476
    %v5564 = vpop.permute.xlu0 %5563
    %v5565 = vlaneseq
    %v5566 = vshrl.u32 %v5565, 7
    %v5567 = vadd.s32 %v5566, 40
    %5568 = vset.pattern.permute.xlu0 %v5567
    %5569 = vperm.xlu0 %5568, %v4476
    %v5570 = vpop.permute.xlu0 %5569
    %v5571 = vlaneseq
    %v5572 = vshrl.u32 %v5571, 7
    %v5573 = vadd.s32 %v5572, 48
    %5574 = vset.pattern.permute.xlu0 %v5573
    %5575 = vperm.xlu0 %5574, %v4476
    %v5576 = vpop.permute.xlu0 %5575
    %v5577 = vlaneseq
    %v5578 = vshrl.u32 %v5577, 7
    %v5579 = vadd.s32 %v5578, 56
    %5580 = vset.pattern.permute.xlu0 %v5579
    %5581 = vperm.xlu0 %5580, %v4476
    %v5582 = vpop.permute.xlu0 %5581
    %v5583 = vlaneseq
    %v5584 = vshrl.u32 %v5583, 7
    %v5585 = vadd.s32 %v5584, 32
    %5586 = vset.pattern.permute.xlu0 %v5585
    %5587 = vperm.xlu0 %5586, %v4501
    %v5588 = vpop.permute.xlu0 %5587
    %v5589 = vlaneseq
    %v5590 = vshrl.u32 %v5589, 7
    %v5591 = vadd.s32 %v5590, 40
    %5592 = vset.pattern.permute.xlu0 %v5591
    %5593 = vperm.xlu0 %5592, %v4501
    %v5594 = vpop.permute.xlu0 %5593
    %v5595 = vlaneseq
    %v5596 = vshrl.u32 %v5595, 7
    %v5597 = vadd.s32 %v5596, 48
    %5598 = vset.pattern.permute.xlu0 %v5597
    %5599 = vperm.xlu0 %5598, %v4501
    %v5600 = vpop.permute.xlu0 %5599
    %v5601 = vlaneseq
    %v5602 = vshrl.u32 %v5601, 7
    %v5603 = vadd.s32 %v5602, 56
    %5604 = vset.pattern.permute.xlu0 %v5603
    %5605 = vperm.xlu0 %5604, %v4501
    %v5606 = vpop.permute.xlu0 %5605
    %v5607 = vlaneseq
    %v5608 = vshrl.u32 %v5607, 7
    %v5609 = vadd.s32 %v5608, 32
    %5610 = vset.pattern.permute.xlu0 %v5609
    %5611 = vperm.xlu0 %5610, %v4526
    %v5612 = vpop.permute.xlu0 %5611
    %v5613 = vlaneseq
    %v5614 = vshrl.u32 %v5613, 7
    %v5615 = vadd.s32 %v5614, 40
    %5616 = vset.pattern.permute.xlu0 %v5615
    %5617 = vperm.xlu0 %5616, %v4526
    %v5618 = vpop.permute.xlu0 %5617
    %v5619 = vlaneseq
    %v5620 = vshrl.u32 %v5619, 7
    %v5621 = vadd.s32 %v5620, 48
    %5622 = vset.pattern.permute.xlu0 %v5621
    %5623 = vperm.xlu0 %5622, %v4526
    %v5624 = vpop.permute.xlu0 %5623
    %v5625 = vlaneseq
    %v5626 = vshrl.u32 %v5625, 7
    %v5627 = vadd.s32 %v5626, 56
    %5628 = vset.pattern.permute.xlu0 %v5627
    %5629 = vperm.xlu0 %5628, %v4526
    %v5630 = vpop.permute.xlu0 %5629
    %v5631 = vlaneseq
    %v5632 = vshrl.u32 %v5631, 7
    %v5633 = vadd.s32 %v5632, 32
    %5634 = vset.pattern.permute.xlu0 %v5633
    %5635 = vperm.xlu0 %5634, %v4551
    %v5636 = vpop.permute.xlu0 %5635
    %v5637 = vlaneseq
    %v5638 = vshrl.u32 %v5637, 7
    %v5639 = vadd.s32 %v5638, 40
    %5640 = vset.pattern.permute.xlu0 %v5639
    %5641 = vperm.xlu0 %5640, %v4551
    %v5642 = vpop.permute.xlu0 %5641
    %v5643 = vlaneseq
    %v5644 = vshrl.u32 %v5643, 7
    %v5645 = vadd.s32 %v5644, 48
    %5646 = vset.pattern.permute.xlu0 %v5645
    %5647 = vperm.xlu0 %5646, %v4551
    %v5648 = vpop.permute.xlu0 %5647
    %v5649 = vlaneseq
    %v5650 = vshrl.u32 %v5649, 7
    %v5651 = vadd.s32 %v5650, 56
    %5652 = vset.pattern.permute.xlu0 %v5651
    %5653 = vperm.xlu0 %5652, %v4551
    %v5654 = vpop.permute.xlu0 %5653
    %v5655 = vlaneseq
    %v5656 = vshrl.u32 %v5655, 7
    %v5657 = vadd.s32 %v5656, 32
    %5658 = vset.pattern.permute.xlu0 %v5657
    %5659 = vperm.xlu0 %5658, %v4576
    %v5660 = vpop.permute.xlu0 %5659
    %v5661 = vlaneseq
    %v5662 = vshrl.u32 %v5661, 7
    %v5663 = vadd.s32 %v5662, 40
    %5664 = vset.pattern.permute.xlu0 %v5663
    %5665 = vperm.xlu0 %5664, %v4576
    %v5666 = vpop.permute.xlu0 %5665
    %v5667 = vlaneseq
    %v5668 = vshrl.u32 %v5667, 7
    %v5669 = vadd.s32 %v5668, 48
    %5670 = vset.pattern.permute.xlu0 %v5669
    %5671 = vperm.xlu0 %5670, %v4576
    %v5672 = vpop.permute.xlu0 %5671
    %v5673 = vlaneseq
    %v5674 = vshrl.u32 %v5673, 7
    %v5675 = vadd.s32 %v5674, 56
    %5676 = vset.pattern.permute.xlu0 %v5675
    %5677 = vperm.xlu0 %5676, %v4576
    %v5678 = vpop.permute.xlu0 %5677
    %v5679 = vlaneseq
    %v5680 = vshrl.u32 %v5679, 7
    %v5681 = vadd.s32 %v5680, 32
    %5682 = vset.pattern.permute.xlu0 %v5681
    %5683 = vperm.xlu0 %5682, %v4601
    %v5684 = vpop.permute.xlu0 %5683
    %v5685 = vlaneseq
    %v5686 = vshrl.u32 %v5685, 7
    %v5687 = vadd.s32 %v5686, 40
    %5688 = vset.pattern.permute.xlu0 %v5687
    %5689 = vperm.xlu0 %5688, %v4601
    %v5690 = vpop.permute.xlu0 %5689
    %v5691 = vlaneseq
    %v5692 = vshrl.u32 %v5691, 7
    %v5693 = vadd.s32 %v5692, 48
    %5694 = vset.pattern.permute.xlu0 %v5693
    %5695 = vperm.xlu0 %5694, %v4601
    %v5696 = vpop.permute.xlu0 %5695
    %v5697 = vlaneseq
    %v5698 = vshrl.u32 %v5697, 7
    %v5699 = vadd.s32 %v5698, 56
    %5700 = vset.pattern.permute.xlu0 %v5699
    %5701 = vperm.xlu0 %5700, %v4601
    %v5702 = vpop.permute.xlu0 %5701
    %v5703 = vlaneseq
    %v5704 = vshrl.u32 %v5703, 7
    %v5705 = vadd.s32 %v5704, 32
    %5706 = vset.pattern.permute.xlu0 %v5705
    %5707 = vperm.xlu0 %5706, %v4626
    %v5708 = vpop.permute.xlu0 %5707
    %v5709 = vlaneseq
    %v5710 = vshrl.u32 %v5709, 7
    %v5711 = vadd.s32 %v5710, 40
    %5712 = vset.pattern.permute.xlu0 %v5711
    %5713 = vperm.xlu0 %5712, %v4626
    %v5714 = vpop.permute.xlu0 %5713
    %v5715 = vlaneseq
    %v5716 = vshrl.u32 %v5715, 7
    %v5717 = vadd.s32 %v5716, 48
    %5718 = vset.pattern.permute.xlu0 %v5717
    %5719 = vperm.xlu0 %5718, %v4626
    %v5720 = vpop.permute.xlu0 %5719
    %v5721 = vlaneseq
    %v5722 = vshrl.u32 %v5721, 7
    %v5723 = vadd.s32 %v5722, 56
    %5724 = vset.pattern.permute.xlu0 %v5723
    %5725 = vperm.xlu0 %5724, %v4626
    %v5726 = vpop.permute.xlu0 %5725
    %v5727 = vlaneseq
    %v5728 = vshrl.u32 %v5727, 7
    %v5729 = vadd.s32 %v5728, 32
    %5730 = vset.pattern.permute.xlu0 %v5729
    %5731 = vperm.xlu0 %5730, %v4651
    %v5732 = vpop.permute.xlu0 %5731
    %v5733 = vlaneseq
    %v5734 = vshrl.u32 %v5733, 7
    %v5735 = vadd.s32 %v5734, 40
    %5736 = vset.pattern.permute.xlu0 %v5735
    %5737 = vperm.xlu0 %5736, %v4651
    %v5738 = vpop.permute.xlu0 %5737
    %v5739 = vlaneseq
    %v5740 = vshrl.u32 %v5739, 7
    %v5741 = vadd.s32 %v5740, 48
    %5742 = vset.pattern.permute.xlu0 %v5741
    %5743 = vperm.xlu0 %5742, %v4651
    %v5744 = vpop.permute.xlu0 %5743
    %v5745 = vlaneseq
    %v5746 = vshrl.u32 %v5745, 7
    %v5747 = vadd.s32 %v5746, 56
    %5748 = vset.pattern.permute.xlu0 %v5747
    %5749 = vperm.xlu0 %5748, %v4651
    %v5750 = vpop.permute.xlu0 %5749
    %v5751 = vlaneseq
    %v5752 = vshrl.u32 %v5751, 7
    %v5753 = vadd.s32 %v5752, 32
    %5754 = vset.pattern.permute.xlu0 %v5753
    %5755 = vperm.xlu0 %5754, %v4676
    %v5756 = vpop.permute.xlu0 %5755
    %v5757 = vlaneseq
    %v5758 = vshrl.u32 %v5757, 7
    %v5759 = vadd.s32 %v5758, 40
    %5760 = vset.pattern.permute.xlu0 %v5759
    %5761 = vperm.xlu0 %5760, %v4676
    %v5762 = vpop.permute.xlu0 %5761
    %v5763 = vlaneseq
    %v5764 = vshrl.u32 %v5763, 7
    %v5765 = vadd.s32 %v5764, 48
    %5766 = vset.pattern.permute.xlu0 %v5765
    %5767 = vperm.xlu0 %5766, %v4676
    %v5768 = vpop.permute.xlu0 %5767
    %v5769 = vlaneseq
    %v5770 = vshrl.u32 %v5769, 7
    %v5771 = vadd.s32 %v5770, 56
    %5772 = vset.pattern.permute.xlu0 %v5771
    %5773 = vperm.xlu0 %5772, %v4676
    %v5774 = vpop.permute.xlu0 %5773
    %v5775 = vlaneseq
    %v5776 = vshrl.u32 %v5775, 7
    %v5777 = vadd.s32 %v5776, 32
    %5778 = vset.pattern.permute.xlu0 %v5777
    %5779 = vperm.xlu0 %5778, %v4701
    %v5780 = vpop.permute.xlu0 %5779
    %v5781 = vlaneseq
    %v5782 = vshrl.u32 %v5781, 7
    %v5783 = vadd.s32 %v5782, 40
    %5784 = vset.pattern.permute.xlu0 %v5783
    %5785 = vperm.xlu0 %5784, %v4701
    %v5786 = vpop.permute.xlu0 %5785
    %v5787 = vlaneseq
    %v5788 = vshrl.u32 %v5787, 7
    %v5789 = vadd.s32 %v5788, 48
    %5790 = vset.pattern.permute.xlu0 %v5789
    %5791 = vperm.xlu0 %5790, %v4701
    %v5792 = vpop.permute.xlu0 %5791
    %v5793 = vlaneseq
    %v5794 = vshrl.u32 %v5793, 7
    %v5795 = vadd.s32 %v5794, 56
    %5796 = vset.pattern.permute.xlu0 %v5795
    %5797 = vperm.xlu0 %5796, %v4701
    %v5798 = vpop.permute.xlu0 %5797
    %v5799 = vlaneseq
    %v5800 = vshrl.u32 %v5799, 7
    %v5801 = vadd.s32 %v5800, 32
    %5802 = vset.pattern.permute.xlu0 %v5801
    %5803 = vperm.xlu0 %5802, %v4726
    %v5804 = vpop.permute.xlu0 %5803
    %v5805 = vlaneseq
    %v5806 = vshrl.u32 %v5805, 7
    %v5807 = vadd.s32 %v5806, 40
    %5808 = vset.pattern.permute.xlu0 %v5807
    %5809 = vperm.xlu0 %5808, %v4726
    %v5810 = vpop.permute.xlu0 %5809
    %v5811 = vlaneseq
    %v5812 = vshrl.u32 %v5811, 7
    %v5813 = vadd.s32 %v5812, 48
    %5814 = vset.pattern.permute.xlu0 %v5813
    %5815 = vperm.xlu0 %5814, %v4726
    %v5816 = vpop.permute.xlu0 %5815
    %v5817 = vlaneseq
    %v5818 = vshrl.u32 %v5817, 7
    %v5819 = vadd.s32 %v5818, 56
    %5820 = vset.pattern.permute.xlu0 %v5819
    %5821 = vperm.xlu0 %5820, %v4726
    %v5822 = vpop.permute.xlu0 %5821
    %vm5823 = vcmp.eq.s32.totalorder %v5444, %v78
    %vm5824 = vcmp.eq.s32.totalorder %v5450, %v78
    %vm5825 = vcmp.eq.s32.totalorder %v5456, %v78
    %vm5826 = vcmp.eq.s32.totalorder %v5462, %v78
    %vm5827 = vcmp.eq.s32.totalorder %v5468, %v78
    %vm5828 = vcmp.eq.s32.totalorder %v5474, %v78
    %vm5829 = vcmp.eq.s32.totalorder %v5480, %v78
    %vm5830 = vcmp.eq.s32.totalorder %v5486, %v78
    %vm5831 = vcmp.eq.s32.totalorder %v5492, %v78
    %vm5832 = vcmp.eq.s32.totalorder %v5498, %v78
    %vm5833 = vcmp.eq.s32.totalorder %v5504, %v78
    %vm5834 = vcmp.eq.s32.totalorder %v5510, %v78
    %vm5835 = vcmp.eq.s32.totalorder %v5516, %v78
    %vm5836 = vcmp.eq.s32.totalorder %v5522, %v78
    %vm5837 = vcmp.eq.s32.totalorder %v5528, %v78
    %vm5838 = vcmp.eq.s32.totalorder %v5534, %v78
    %vm5839 = vcmp.eq.s32.totalorder %v5540, %v78
    %vm5840 = vcmp.eq.s32.totalorder %v5546, %v78
    %vm5841 = vcmp.eq.s32.totalorder %v5552, %v78
    %vm5842 = vcmp.eq.s32.totalorder %v5558, %v78
    %vm5843 = vcmp.eq.s32.totalorder %v5564, %v78
    %vm5844 = vcmp.eq.s32.totalorder %v5570, %v78
    %vm5845 = vcmp.eq.s32.totalorder %v5576, %v78
    %vm5846 = vcmp.eq.s32.totalorder %v5582, %v78
    %vm5847 = vcmp.eq.s32.totalorder %v5588, %v78
    %vm5848 = vcmp.eq.s32.totalorder %v5594, %v78
    %vm5849 = vcmp.eq.s32.totalorder %v5600, %v78
    %vm5850 = vcmp.eq.s32.totalorder %v5606, %v78
    %vm5851 = vcmp.eq.s32.totalorder %v5612, %v78
    %vm5852 = vcmp.eq.s32.totalorder %v5618, %v78
    %vm5853 = vcmp.eq.s32.totalorder %v5624, %v78
    %vm5854 = vcmp.eq.s32.totalorder %v5630, %v78
    %vm5855 = vcmp.eq.s32.totalorder %v5636, %v78
    %vm5856 = vcmp.eq.s32.totalorder %v5642, %v78
    %vm5857 = vcmp.eq.s32.totalorder %v5648, %v78
    %vm5858 = vcmp.eq.s32.totalorder %v5654, %v78
    %vm5859 = vcmp.eq.s32.totalorder %v5660, %v78
    %vm5860 = vcmp.eq.s32.totalorder %v5666, %v78
    %vm5861 = vcmp.eq.s32.totalorder %v5672, %v78
    %vm5862 = vcmp.eq.s32.totalorder %v5678, %v78
    %vm5863 = vcmp.eq.s32.totalorder %v5684, %v78
    %vm5864 = vcmp.eq.s32.totalorder %v5690, %v78
    %vm5865 = vcmp.eq.s32.totalorder %v5696, %v78
    %vm5866 = vcmp.eq.s32.totalorder %v5702, %v78
    %vm5867 = vcmp.eq.s32.totalorder %v5708, %v78
    %vm5868 = vcmp.eq.s32.totalorder %v5714, %v78
    %vm5869 = vcmp.eq.s32.totalorder %v5720, %v78
    %vm5870 = vcmp.eq.s32.totalorder %v5726, %v78
    %vm5871 = vcmp.eq.s32.totalorder %v5732, %v78
    %vm5872 = vcmp.eq.s32.totalorder %v5738, %v78
    %vm5873 = vcmp.eq.s32.totalorder %v5744, %v78
    %vm5874 = vcmp.eq.s32.totalorder %v5750, %v78
    %vm5875 = vcmp.eq.s32.totalorder %v5756, %v78
    %vm5876 = vcmp.eq.s32.totalorder %v5762, %v78
    %vm5877 = vcmp.eq.s32.totalorder %v5768, %v78
    %vm5878 = vcmp.eq.s32.totalorder %v5774, %v78
    %vm5879 = vcmp.eq.s32.totalorder %v5780, %v78
    %vm5880 = vcmp.eq.s32.totalorder %v5786, %v78
    %vm5881 = vcmp.eq.s32.totalorder %v5792, %v78
    %vm5882 = vcmp.eq.s32.totalorder %v5798, %v78
    %vm5883 = vcmp.eq.s32.totalorder %v5804, %v78
    %vm5884 = vcmp.eq.s32.totalorder %v5810, %v78
    %vm5885 = vcmp.eq.s32.totalorder %v5816, %v78
    %vm5886 = vcmp.eq.s32.totalorder %v5822, %v78
    %v5887 = vlaneseq
    %v5888 = vshrl.u32 %v5887, 7
    %v5889 = vadd.s32 %v5888, 32
    %5890 = vset.pattern.permute.xlu0 %v5889
    %5891 = vperm.xlu0 %5890, %v4815
    %v5892 = vpop.permute.xlu0 %5891
    %v5893 = vlaneseq
    %v5894 = vshrl.u32 %v5893, 7
    %v5895 = vadd.s32 %v5894, 40
    %5896 = vset.pattern.permute.xlu0 %v5895
    %5897 = vperm.xlu0 %5896, %v4815
    %v5898 = vpop.permute.xlu0 %5897
    %v5899 = vlaneseq
    %v5900 = vshrl.u32 %v5899, 7
    %v5901 = vadd.s32 %v5900, 48
    %5902 = vset.pattern.permute.xlu0 %v5901
    %5903 = vperm.xlu0 %5902, %v4815
    %v5904 = vpop.permute.xlu0 %5903
    %v5905 = vlaneseq
    %v5906 = vshrl.u32 %v5905, 7
    %v5907 = vadd.s32 %v5906, 56
    %5908 = vset.pattern.permute.xlu0 %v5907
    %5909 = vperm.xlu0 %5908, %v4815
    %v5910 = vpop.permute.xlu0 %5909
    %v5911 = vlaneseq
    %v5912 = vshrl.u32 %v5911, 7
    %v5913 = vadd.s32 %v5912, 32
    %5914 = vset.pattern.permute.xlu0 %v5913
    %5915 = vperm.xlu0 %5914, %v4840
    %v5916 = vpop.permute.xlu0 %5915
    %v5917 = vlaneseq
    %v5918 = vshrl.u32 %v5917, 7
    %v5919 = vadd.s32 %v5918, 40
    %5920 = vset.pattern.permute.xlu0 %v5919
    %5921 = vperm.xlu0 %5920, %v4840
    %v5922 = vpop.permute.xlu0 %5921
    %v5923 = vlaneseq
    %v5924 = vshrl.u32 %v5923, 7
    %v5925 = vadd.s32 %v5924, 48
    %5926 = vset.pattern.permute.xlu0 %v5925
    %5927 = vperm.xlu0 %5926, %v4840
    %v5928 = vpop.permute.xlu0 %5927
    %v5929 = vlaneseq
    %v5930 = vshrl.u32 %v5929, 7
    %v5931 = vadd.s32 %v5930, 56
    %5932 = vset.pattern.permute.xlu0 %v5931
    %5933 = vperm.xlu0 %5932, %v4840
    %v5934 = vpop.permute.xlu0 %5933
    %v5935 = vlaneseq
    %v5936 = vshrl.u32 %v5935, 7
    %v5937 = vadd.s32 %v5936, 32
    %5938 = vset.pattern.permute.xlu0 %v5937
    %5939 = vperm.xlu0 %5938, %v4865
    %v5940 = vpop.permute.xlu0 %5939
    %v5941 = vlaneseq
    %v5942 = vshrl.u32 %v5941, 7
    %v5943 = vadd.s32 %v5942, 40
    %5944 = vset.pattern.permute.xlu0 %v5943
    %5945 = vperm.xlu0 %5944, %v4865
    %v5946 = vpop.permute.xlu0 %5945
    %v5947 = vlaneseq
    %v5948 = vshrl.u32 %v5947, 7
    %v5949 = vadd.s32 %v5948, 48
    %5950 = vset.pattern.permute.xlu0 %v5949
    %5951 = vperm.xlu0 %5950, %v4865
    %v5952 = vpop.permute.xlu0 %5951
    %v5953 = vlaneseq
    %v5954 = vshrl.u32 %v5953, 7
    %v5955 = vadd.s32 %v5954, 56
    %5956 = vset.pattern.permute.xlu0 %v5955
    %5957 = vperm.xlu0 %5956, %v4865
    %v5958 = vpop.permute.xlu0 %5957
    %v5959 = vlaneseq
    %v5960 = vshrl.u32 %v5959, 7
    %v5961 = vadd.s32 %v5960, 32
    %5962 = vset.pattern.permute.xlu0 %v5961
    %5963 = vperm.xlu0 %5962, %v4890
    %v5964 = vpop.permute.xlu0 %5963
    %v5965 = vlaneseq
    %v5966 = vshrl.u32 %v5965, 7
    %v5967 = vadd.s32 %v5966, 40
    %5968 = vset.pattern.permute.xlu0 %v5967
    %5969 = vperm.xlu0 %5968, %v4890
    %v5970 = vpop.permute.xlu0 %5969
    %v5971 = vlaneseq
    %v5972 = vshrl.u32 %v5971, 7
    %v5973 = vadd.s32 %v5972, 48
    %5974 = vset.pattern.permute.xlu0 %v5973
    %5975 = vperm.xlu0 %5974, %v4890
    %v5976 = vpop.permute.xlu0 %5975
    %v5977 = vlaneseq
    %v5978 = vshrl.u32 %v5977, 7
    %v5979 = vadd.s32 %v5978, 56
    %5980 = vset.pattern.permute.xlu0 %v5979
    %5981 = vperm.xlu0 %5980, %v4890
    %v5982 = vpop.permute.xlu0 %5981
    %v5983 = vlaneseq
    %v5984 = vshrl.u32 %v5983, 7
    %v5985 = vadd.s32 %v5984, 32
    %5986 = vset.pattern.permute.xlu0 %v5985
    %5987 = vperm.xlu0 %5986, %v4915
    %v5988 = vpop.permute.xlu0 %5987
    %v5989 = vlaneseq
    %v5990 = vshrl.u32 %v5989, 7
    %v5991 = vadd.s32 %v5990, 40
    %5992 = vset.pattern.permute.xlu0 %v5991
    %5993 = vperm.xlu0 %5992, %v4915
    %v5994 = vpop.permute.xlu0 %5993
    %v5995 = vlaneseq
    %v5996 = vshrl.u32 %v5995, 7
    %v5997 = vadd.s32 %v5996, 48
    %5998 = vset.pattern.permute.xlu0 %v5997
    %5999 = vperm.xlu0 %5998, %v4915
    %v6000 = vpop.permute.xlu0 %5999
    %v6001 = vlaneseq
    %v6002 = vshrl.u32 %v6001, 7
    %v6003 = vadd.s32 %v6002, 56
    %6004 = vset.pattern.permute.xlu0 %v6003
    %6005 = vperm.xlu0 %6004, %v4915
    %v6006 = vpop.permute.xlu0 %6005
    %v6007 = vlaneseq
    %v6008 = vshrl.u32 %v6007, 7
    %v6009 = vadd.s32 %v6008, 32
    %6010 = vset.pattern.permute.xlu0 %v6009
    %6011 = vperm.xlu0 %6010, %v4940
    %v6012 = vpop.permute.xlu0 %6011
    %v6013 = vlaneseq
    %v6014 = vshrl.u32 %v6013, 7
    %v6015 = vadd.s32 %v6014, 40
    %6016 = vset.pattern.permute.xlu0 %v6015
    %6017 = vperm.xlu0 %6016, %v4940
    %v6018 = vpop.permute.xlu0 %6017
    %v6019 = vlaneseq
    %v6020 = vshrl.u32 %v6019, 7
    %v6021 = vadd.s32 %v6020, 48
    %6022 = vset.pattern.permute.xlu0 %v6021
    %6023 = vperm.xlu0 %6022, %v4940
    %v6024 = vpop.permute.xlu0 %6023
    %v6025 = vlaneseq
    %v6026 = vshrl.u32 %v6025, 7
    %v6027 = vadd.s32 %v6026, 56
    %6028 = vset.pattern.permute.xlu0 %v6027
    %6029 = vperm.xlu0 %6028, %v4940
    %v6030 = vpop.permute.xlu0 %6029
    %v6031 = vlaneseq
    %v6032 = vshrl.u32 %v6031, 7
    %v6033 = vadd.s32 %v6032, 32
    %6034 = vset.pattern.permute.xlu0 %v6033
    %6035 = vperm.xlu0 %6034, %v4965
    %v6036 = vpop.permute.xlu0 %6035
    %v6037 = vlaneseq
    %v6038 = vshrl.u32 %v6037, 7
    %v6039 = vadd.s32 %v6038, 40
    %6040 = vset.pattern.permute.xlu0 %v6039
    %6041 = vperm.xlu0 %6040, %v4965
    %v6042 = vpop.permute.xlu0 %6041
    %v6043 = vlaneseq
    %v6044 = vshrl.u32 %v6043, 7
    %v6045 = vadd.s32 %v6044, 48
    %6046 = vset.pattern.permute.xlu0 %v6045
    %6047 = vperm.xlu0 %6046, %v4965
    %v6048 = vpop.permute.xlu0 %6047
    %v6049 = vlaneseq
    %v6050 = vshrl.u32 %v6049, 7
    %v6051 = vadd.s32 %v6050, 56
    %6052 = vset.pattern.permute.xlu0 %v6051
    %6053 = vperm.xlu0 %6052, %v4965
    %v6054 = vpop.permute.xlu0 %6053
    %v6055 = vlaneseq
    %v6056 = vshrl.u32 %v6055, 7
    %v6057 = vadd.s32 %v6056, 32
    %6058 = vset.pattern.permute.xlu0 %v6057
    %6059 = vperm.xlu0 %6058, %v4990
    %v6060 = vpop.permute.xlu0 %6059
    %v6061 = vlaneseq
    %v6062 = vshrl.u32 %v6061, 7
    %v6063 = vadd.s32 %v6062, 40
    %6064 = vset.pattern.permute.xlu0 %v6063
    %6065 = vperm.xlu0 %6064, %v4990
    %v6066 = vpop.permute.xlu0 %6065
    %v6067 = vlaneseq
    %v6068 = vshrl.u32 %v6067, 7
    %v6069 = vadd.s32 %v6068, 48
    %6070 = vset.pattern.permute.xlu0 %v6069
    %6071 = vperm.xlu0 %6070, %v4990
    %v6072 = vpop.permute.xlu0 %6071
    %v6073 = vlaneseq
    %v6074 = vshrl.u32 %v6073, 7
    %v6075 = vadd.s32 %v6074, 56
    %6076 = vset.pattern.permute.xlu0 %v6075
    %6077 = vperm.xlu0 %6076, %v4990
    %v6078 = vpop.permute.xlu0 %6077
    %v6079 = vlaneseq
    %v6080 = vshrl.u32 %v6079, 7
    %v6081 = vadd.s32 %v6080, 32
    %6082 = vset.pattern.permute.xlu0 %v6081
    %6083 = vperm.xlu0 %6082, %v5015
    %v6084 = vpop.permute.xlu0 %6083
    %v6085 = vlaneseq
    %v6086 = vshrl.u32 %v6085, 7
    %v6087 = vadd.s32 %v6086, 40
    %6088 = vset.pattern.permute.xlu0 %v6087
    %6089 = vperm.xlu0 %6088, %v5015
    %v6090 = vpop.permute.xlu0 %6089
    %v6091 = vlaneseq
    %v6092 = vshrl.u32 %v6091, 7
    %v6093 = vadd.s32 %v6092, 48
    %6094 = vset.pattern.permute.xlu0 %v6093
    %6095 = vperm.xlu0 %6094, %v5015
    %v6096 = vpop.permute.xlu0 %6095
    %v6097 = vlaneseq
    %v6098 = vshrl.u32 %v6097, 7
    %v6099 = vadd.s32 %v6098, 56
    %6100 = vset.pattern.permute.xlu0 %v6099
    %6101 = vperm.xlu0 %6100, %v5015
    %v6102 = vpop.permute.xlu0 %6101
    %v6103 = vlaneseq
    %v6104 = vshrl.u32 %v6103, 7
    %v6105 = vadd.s32 %v6104, 32
    %6106 = vset.pattern.permute.xlu0 %v6105
    %6107 = vperm.xlu0 %6106, %v5040
    %v6108 = vpop.permute.xlu0 %6107
    %v6109 = vlaneseq
    %v6110 = vshrl.u32 %v6109, 7
    %v6111 = vadd.s32 %v6110, 40
    %6112 = vset.pattern.permute.xlu0 %v6111
    %6113 = vperm.xlu0 %6112, %v5040
    %v6114 = vpop.permute.xlu0 %6113
    %v6115 = vlaneseq
    %v6116 = vshrl.u32 %v6115, 7
    %v6117 = vadd.s32 %v6116, 48
    %6118 = vset.pattern.permute.xlu0 %v6117
    %6119 = vperm.xlu0 %6118, %v5040
    %v6120 = vpop.permute.xlu0 %6119
    %v6121 = vlaneseq
    %v6122 = vshrl.u32 %v6121, 7
    %v6123 = vadd.s32 %v6122, 56
    %6124 = vset.pattern.permute.xlu0 %v6123
    %6125 = vperm.xlu0 %6124, %v5040
    %v6126 = vpop.permute.xlu0 %6125
    %v6127 = vlaneseq
    %v6128 = vshrl.u32 %v6127, 7
    %v6129 = vadd.s32 %v6128, 32
    %6130 = vset.pattern.permute.xlu0 %v6129
    %6131 = vperm.xlu0 %6130, %v5065
    %v6132 = vpop.permute.xlu0 %6131
    %v6133 = vlaneseq
    %v6134 = vshrl.u32 %v6133, 7
    %v6135 = vadd.s32 %v6134, 40
    %6136 = vset.pattern.permute.xlu0 %v6135
    %6137 = vperm.xlu0 %6136, %v5065
    %v6138 = vpop.permute.xlu0 %6137
    %v6139 = vlaneseq
    %v6140 = vshrl.u32 %v6139, 7
    %v6141 = vadd.s32 %v6140, 48
    %6142 = vset.pattern.permute.xlu0 %v6141
    %6143 = vperm.xlu0 %6142, %v5065
    %v6144 = vpop.permute.xlu0 %6143
    %v6145 = vlaneseq
    %v6146 = vshrl.u32 %v6145, 7
    %v6147 = vadd.s32 %v6146, 56
    %6148 = vset.pattern.permute.xlu0 %v6147
    %6149 = vperm.xlu0 %6148, %v5065
    %v6150 = vpop.permute.xlu0 %6149
    %v6151 = vlaneseq
    %v6152 = vshrl.u32 %v6151, 7
    %v6153 = vadd.s32 %v6152, 32
    %6154 = vset.pattern.permute.xlu0 %v6153
    %6155 = vperm.xlu0 %6154, %v5090
    %v6156 = vpop.permute.xlu0 %6155
    %v6157 = vlaneseq
    %v6158 = vshrl.u32 %v6157, 7
    %v6159 = vadd.s32 %v6158, 40
    %6160 = vset.pattern.permute.xlu0 %v6159
    %6161 = vperm.xlu0 %6160, %v5090
    %v6162 = vpop.permute.xlu0 %6161
    %v6163 = vlaneseq
    %v6164 = vshrl.u32 %v6163, 7
    %v6165 = vadd.s32 %v6164, 48
    %6166 = vset.pattern.permute.xlu0 %v6165
    %6167 = vperm.xlu0 %6166, %v5090
    %v6168 = vpop.permute.xlu0 %6167
    %v6169 = vlaneseq
    %v6170 = vshrl.u32 %v6169, 7
    %v6171 = vadd.s32 %v6170, 56
    %6172 = vset.pattern.permute.xlu0 %v6171
    %6173 = vperm.xlu0 %6172, %v5090
    %v6174 = vpop.permute.xlu0 %6173
    %v6175 = vlaneseq
    %v6176 = vshrl.u32 %v6175, 7
    %v6177 = vadd.s32 %v6176, 32
    %6178 = vset.pattern.permute.xlu0 %v6177
    %6179 = vperm.xlu0 %6178, %v5115
    %v6180 = vpop.permute.xlu0 %6179
    %v6181 = vlaneseq
    %v6182 = vshrl.u32 %v6181, 7
    %v6183 = vadd.s32 %v6182, 40
    %6184 = vset.pattern.permute.xlu0 %v6183
    %6185 = vperm.xlu0 %6184, %v5115
    %v6186 = vpop.permute.xlu0 %6185
    %v6187 = vlaneseq
    %v6188 = vshrl.u32 %v6187, 7
    %v6189 = vadd.s32 %v6188, 48
    %6190 = vset.pattern.permute.xlu0 %v6189
    %6191 = vperm.xlu0 %6190, %v5115
    %v6192 = vpop.permute.xlu0 %6191
    %v6193 = vlaneseq
    %v6194 = vshrl.u32 %v6193, 7
    %v6195 = vadd.s32 %v6194, 56
    %6196 = vset.pattern.permute.xlu0 %v6195
    %6197 = vperm.xlu0 %6196, %v5115
    %v6198 = vpop.permute.xlu0 %6197
    %v6199 = vlaneseq
    %v6200 = vshrl.u32 %v6199, 7
    %v6201 = vadd.s32 %v6200, 32
    %6202 = vset.pattern.permute.xlu0 %v6201
    %6203 = vperm.xlu0 %6202, %v5140
    %v6204 = vpop.permute.xlu0 %6203
    %v6205 = vlaneseq
    %v6206 = vshrl.u32 %v6205, 7
    %v6207 = vadd.s32 %v6206, 40
    %6208 = vset.pattern.permute.xlu0 %v6207
    %6209 = vperm.xlu0 %6208, %v5140
    %v6210 = vpop.permute.xlu0 %6209
    %v6211 = vlaneseq
    %v6212 = vshrl.u32 %v6211, 7
    %v6213 = vadd.s32 %v6212, 48
    %6214 = vset.pattern.permute.xlu0 %v6213
    %6215 = vperm.xlu0 %6214, %v5140
    %v6216 = vpop.permute.xlu0 %6215
    %v6217 = vlaneseq
    %v6218 = vshrl.u32 %v6217, 7
    %v6219 = vadd.s32 %v6218, 56
    %6220 = vset.pattern.permute.xlu0 %v6219
    %6221 = vperm.xlu0 %6220, %v5140
    %v6222 = vpop.permute.xlu0 %6221
    %v6223 = vlaneseq
    %v6224 = vshrl.u32 %v6223, 7
    %v6225 = vadd.s32 %v6224, 32
    %6226 = vset.pattern.permute.xlu0 %v6225
    %6227 = vperm.xlu0 %6226, %v5165
    %v6228 = vpop.permute.xlu0 %6227
    %v6229 = vlaneseq
    %v6230 = vshrl.u32 %v6229, 7
    %v6231 = vadd.s32 %v6230, 40
    %6232 = vset.pattern.permute.xlu0 %v6231
    %6233 = vperm.xlu0 %6232, %v5165
    %v6234 = vpop.permute.xlu0 %6233
    %v6235 = vlaneseq
    %v6236 = vshrl.u32 %v6235, 7
    %v6237 = vadd.s32 %v6236, 48
    %6238 = vset.pattern.permute.xlu0 %v6237
    %6239 = vperm.xlu0 %6238, %v5165
    %v6240 = vpop.permute.xlu0 %6239
    %v6241 = vlaneseq
    %v6242 = vshrl.u32 %v6241, 7
    %v6243 = vadd.s32 %v6242, 56
    %6244 = vset.pattern.permute.xlu0 %v6243
    %6245 = vperm.xlu0 %6244, %v5165
    %v6246 = vpop.permute.xlu0 %6245
    %v6247 = vlaneseq
    %v6248 = vshrl.u32 %v6247, 7
    %v6249 = vadd.s32 %v6248, 32
    %6250 = vset.pattern.permute.xlu0 %v6249
    %6251 = vperm.xlu0 %6250, %v5190
    %v6252 = vpop.permute.xlu0 %6251
    %v6253 = vlaneseq
    %v6254 = vshrl.u32 %v6253, 7
    %v6255 = vadd.s32 %v6254, 40
    %6256 = vset.pattern.permute.xlu0 %v6255
    %6257 = vperm.xlu0 %6256, %v5190
    %v6258 = vpop.permute.xlu0 %6257
    %v6259 = vlaneseq
    %v6260 = vshrl.u32 %v6259, 7
    %v6261 = vadd.s32 %v6260, 48
    %6262 = vset.pattern.permute.xlu0 %v6261
    %6263 = vperm.xlu0 %6262, %v5190
    %v6264 = vpop.permute.xlu0 %6263
    %v6265 = vlaneseq
    %v6266 = vshrl.u32 %v6265, 7
    %v6267 = vadd.s32 %v6266, 56
    %6268 = vset.pattern.permute.xlu0 %v6267
    %6269 = vperm.xlu0 %6268, %v5190
    %v6270 = vpop.permute.xlu0 %6269
    %v6271 = vsel %vm5823, %v5892, 0.0
    %v6272 = vsel %vm5824, %v5898, 0.0
    %v6273 = vsel %vm5825, %v5904, 0.0
    %v6274 = vsel %vm5826, %v5910, 0.0
    %v6275 = vsel %vm5827, %v5916, 0.0
    %v6276 = vsel %vm5828, %v5922, 0.0
    %v6277 = vsel %vm5829, %v5928, 0.0
    %v6278 = vsel %vm5830, %v5934, 0.0
    %v6279 = vsel %vm5831, %v5940, 0.0
    %v6280 = vsel %vm5832, %v5946, 0.0
    %v6281 = vsel %vm5833, %v5952, 0.0
    %v6282 = vsel %vm5834, %v5958, 0.0
    %v6283 = vsel %vm5835, %v5964, 0.0
    %v6284 = vsel %vm5836, %v5970, 0.0
    %v6285 = vsel %vm5837, %v5976, 0.0
    %v6286 = vsel %vm5838, %v5982, 0.0
    %v6287 = vsel %vm5839, %v5988, 0.0
    %v6288 = vsel %vm5840, %v5994, 0.0
    %v6289 = vsel %vm5841, %v6000, 0.0
    %v6290 = vsel %vm5842, %v6006, 0.0
    %v6291 = vsel %vm5843, %v6012, 0.0
    %v6292 = vsel %vm5844, %v6018, 0.0
    %v6293 = vsel %vm5845, %v6024, 0.0
    %v6294 = vsel %vm5846, %v6030, 0.0
    %v6295 = vsel %vm5847, %v6036, 0.0
    %v6296 = vsel %vm5848, %v6042, 0.0
    %v6297 = vsel %vm5849, %v6048, 0.0
    %v6298 = vsel %vm5850, %v6054, 0.0
    %v6299 = vsel %vm5851, %v6060, 0.0
    %v6300 = vsel %vm5852, %v6066, 0.0
    %v6301 = vsel %vm5853, %v6072, 0.0
    %v6302 = vsel %vm5854, %v6078, 0.0
    %v6303 = vsel %vm5855, %v6084, 0.0
    %v6304 = vsel %vm5856, %v6090, 0.0
    %v6305 = vsel %vm5857, %v6096, 0.0
    %v6306 = vsel %vm5858, %v6102, 0.0
    %v6307 = vsel %vm5859, %v6108, 0.0
    %v6308 = vsel %vm5860, %v6114, 0.0
    %v6309 = vsel %vm5861, %v6120, 0.0
    %v6310 = vsel %vm5862, %v6126, 0.0
    %v6311 = vsel %vm5863, %v6132, 0.0
    %v6312 = vsel %vm5864, %v6138, 0.0
    %v6313 = vsel %vm5865, %v6144, 0.0
    %v6314 = vsel %vm5866, %v6150, 0.0
    %v6315 = vsel %vm5867, %v6156, 0.0
    %v6316 = vsel %vm5868, %v6162, 0.0
    %v6317 = vsel %vm5869, %v6168, 0.0
    %v6318 = vsel %vm5870, %v6174, 0.0
    %v6319 = vsel %vm5871, %v6180, 0.0
    %v6320 = vsel %vm5872, %v6186, 0.0
    %v6321 = vsel %vm5873, %v6192, 0.0
    %v6322 = vsel %vm5874, %v6198, 0.0
    %v6323 = vsel %vm5875, %v6204, 0.0
    %v6324 = vsel %vm5876, %v6210, 0.0
    %v6325 = vsel %vm5877, %v6216, 0.0
    %v6326 = vsel %vm5878, %v6222, 0.0
    %v6327 = vsel %vm5879, %v6228, 0.0
    %v6328 = vsel %vm5880, %v6234, 0.0
    %v6329 = vsel %vm5881, %v6240, 0.0
    %v6330 = vsel %vm5882, %v6246, 0.0
    %v6331 = vsel %vm5883, %v6252, 0.0
    %v6332 = vsel %vm5884, %v6258, 0.0
    %v6333 = vsel %vm5885, %v6264, 0.0
    %v6334 = vsel %vm5886, %v6270, 0.0
    %v6335 = vadd.f32 %v6271, %v6272
    %v6336 = vadd.f32 %v6335, %v6273
    %v6337 = vadd.f32 %v6336, %v6274
    %v6338 = vrot.slane %v6337, 4
    %v6339 = vadd.f32 %v6337, %v6338
    %v6340 = vrot.slane %v6339, 2
    %v6341 = vadd.f32 %v6339, %v6340
    %v6342 = vrot.slane %v6341, 1
    %v6343 = vadd.f32 %v6341, %v6342
    %v6344 = vadd.f32 %v6275, %v6276
    %v6345 = vadd.f32 %v6344, %v6277
    %v6346 = vadd.f32 %v6345, %v6278
    %v6347 = vrot.slane %v6346, 4
    %v6348 = vadd.f32 %v6346, %v6347
    %v6349 = vrot.slane %v6348, 2
    %v6350 = vadd.f32 %v6348, %v6349
    %v6351 = vrot.slane %v6350, 1
    %v6352 = vadd.f32 %v6350, %v6351
    %v6353 = vadd.f32 %v6279, %v6280
    %v6354 = vadd.f32 %v6353, %v6281
    %v6355 = vadd.f32 %v6354, %v6282
    %v6356 = vrot.slane %v6355, 4
    %v6357 = vadd.f32 %v6355, %v6356
    %v6358 = vrot.slane %v6357, 2
    %v6359 = vadd.f32 %v6357, %v6358
    %v6360 = vrot.slane %v6359, 1
    %v6361 = vadd.f32 %v6359, %v6360
    %v6362 = vadd.f32 %v6283, %v6284
    %v6363 = vadd.f32 %v6362, %v6285
    %v6364 = vadd.f32 %v6363, %v6286
    %v6365 = vrot.slane %v6364, 4
    %v6366 = vadd.f32 %v6364, %v6365
    %v6367 = vrot.slane %v6366, 2
    %v6368 = vadd.f32 %v6366, %v6367
    %v6369 = vrot.slane %v6368, 1
    %v6370 = vadd.f32 %v6368, %v6369
    %v6371 = vadd.f32 %v6287, %v6288
    %v6372 = vadd.f32 %v6371, %v6289
    %v6373 = vadd.f32 %v6372, %v6290
    %v6374 = vrot.slane %v6373, 4
    %v6375 = vadd.f32 %v6373, %v6374
    %v6376 = vrot.slane %v6375, 2
    %v6377 = vadd.f32 %v6375, %v6376
    %v6378 = vrot.slane %v6377, 1
    %v6379 = vadd.f32 %v6377, %v6378
    %v6380 = vadd.f32 %v6291, %v6292
    %v6381 = vadd.f32 %v6380, %v6293
    %v6382 = vadd.f32 %v6381, %v6294
    %v6383 = vrot.slane %v6382, 4
    %v6384 = vadd.f32 %v6382, %v6383
    %v6385 = vrot.slane %v6384, 2
    %v6386 = vadd.f32 %v6384, %v6385
    %v6387 = vrot.slane %v6386, 1
    %v6388 = vadd.f32 %v6386, %v6387
    %v6389 = vadd.f32 %v6295, %v6296
    %v6390 = vadd.f32 %v6389, %v6297
    %v6391 = vadd.f32 %v6390, %v6298
    %v6392 = vrot.slane %v6391, 4
    %v6393 = vadd.f32 %v6391, %v6392
    %v6394 = vrot.slane %v6393, 2
    %v6395 = vadd.f32 %v6393, %v6394
    %v6396 = vrot.slane %v6395, 1
    %v6397 = vadd.f32 %v6395, %v6396
    %v6398 = vadd.f32 %v6299, %v6300
    %v6399 = vadd.f32 %v6398, %v6301
    %v6400 = vadd.f32 %v6399, %v6302
    %v6401 = vrot.slane %v6400, 4
    %v6402 = vadd.f32 %v6400, %v6401
    %v6403 = vrot.slane %v6402, 2
    %v6404 = vadd.f32 %v6402, %v6403
    %v6405 = vrot.slane %v6404, 1
    %v6406 = vadd.f32 %v6404, %v6405
    %v6407 = vadd.f32 %v6303, %v6304
    %v6408 = vadd.f32 %v6407, %v6305
    %v6409 = vadd.f32 %v6408, %v6306
    %v6410 = vrot.slane %v6409, 4
    %v6411 = vadd.f32 %v6409, %v6410
    %v6412 = vrot.slane %v6411, 2
    %v6413 = vadd.f32 %v6411, %v6412
    %v6414 = vrot.slane %v6413, 1
    %v6415 = vadd.f32 %v6413, %v6414
    %v6416 = vadd.f32 %v6307, %v6308
    %v6417 = vadd.f32 %v6416, %v6309
    %v6418 = vadd.f32 %v6417, %v6310
    %v6419 = vrot.slane %v6418, 4
    %v6420 = vadd.f32 %v6418, %v6419
    %v6421 = vrot.slane %v6420, 2
    %v6422 = vadd.f32 %v6420, %v6421
    %v6423 = vrot.slane %v6422, 1
    %v6424 = vadd.f32 %v6422, %v6423
    %v6425 = vadd.f32 %v6311, %v6312
    %v6426 = vadd.f32 %v6425, %v6313
    %v6427 = vadd.f32 %v6426, %v6314
    %v6428 = vrot.slane %v6427, 4
    %v6429 = vadd.f32 %v6427, %v6428
    %v6430 = vrot.slane %v6429, 2
    %v6431 = vadd.f32 %v6429, %v6430
    %v6432 = vrot.slane %v6431, 1
    %v6433 = vadd.f32 %v6431, %v6432
    %v6434 = vadd.f32 %v6315, %v6316
    %v6435 = vadd.f32 %v6434, %v6317
    %v6436 = vadd.f32 %v6435, %v6318
    %v6437 = vrot.slane %v6436, 4
    %v6438 = vadd.f32 %v6436, %v6437
    %v6439 = vrot.slane %v6438, 2
    %v6440 = vadd.f32 %v6438, %v6439
    %v6441 = vrot.slane %v6440, 1
    %v6442 = vadd.f32 %v6440, %v6441
    %v6443 = vadd.f32 %v6319, %v6320
    %v6444 = vadd.f32 %v6443, %v6321
    %v6445 = vadd.f32 %v6444, %v6322
    %v6446 = vrot.slane %v6445, 4
    %v6447 = vadd.f32 %v6445, %v6446
    %v6448 = vrot.slane %v6447, 2
    %v6449 = vadd.f32 %v6447, %v6448
    %v6450 = vrot.slane %v6449, 1
    %v6451 = vadd.f32 %v6449, %v6450
    %v6452 = vadd.f32 %v6323, %v6324
    %v6453 = vadd.f32 %v6452, %v6325
    %v6454 = vadd.f32 %v6453, %v6326
    %v6455 = vrot.slane %v6454, 4
    %v6456 = vadd.f32 %v6454, %v6455
    %v6457 = vrot.slane %v6456, 2
    %v6458 = vadd.f32 %v6456, %v6457
    %v6459 = vrot.slane %v6458, 1
    %v6460 = vadd.f32 %v6458, %v6459
    %v6461 = vadd.f32 %v6327, %v6328
    %v6462 = vadd.f32 %v6461, %v6329
    %v6463 = vadd.f32 %v6462, %v6330
    %v6464 = vrot.slane %v6463, 4
    %v6465 = vadd.f32 %v6463, %v6464
    %v6466 = vrot.slane %v6465, 2
    %v6467 = vadd.f32 %v6465, %v6466
    %v6468 = vrot.slane %v6467, 1
    %v6469 = vadd.f32 %v6467, %v6468
    %v6470 = vadd.f32 %v6331, %v6332
    %v6471 = vadd.f32 %v6470, %v6333
    %v6472 = vadd.f32 %v6471, %v6334
    %v6473 = vrot.slane %v6472, 4
    %v6474 = vadd.f32 %v6472, %v6473
    %v6475 = vrot.slane %v6474, 2
    %v6476 = vadd.f32 %v6474, %v6475
    %v6477 = vrot.slane %v6476, 1
    %v6478 = vadd.f32 %v6476, %v6477
    %v6479 = vadd.f32 %v5423, %v6343
    %v6480 = vadd.f32 %v5424, %v6352
    %v6481 = vadd.f32 %v5425, %v6361
    %v6482 = vadd.f32 %v5426, %v6370
    %v6483 = vadd.f32 %v5427, %v6379
    %v6484 = vadd.f32 %v5428, %v6388
    %v6485 = vadd.f32 %v5429, %v6397
    %v6486 = vadd.f32 %v5430, %v6406
    %v6487 = vadd.f32 %v5431, %v6415
    %v6488 = vadd.f32 %v5432, %v6424
    %v6489 = vadd.f32 %v5433, %v6433
    %v6490 = vadd.f32 %v5434, %v6442
    %v6491 = vadd.f32 %v5435, %v6451
    %v6492 = vadd.f32 %v5436, %v6460
    %v6493 = vadd.f32 %v5437, %v6469
    %v6494 = vadd.f32 %v5438, %v6478
    %v6495 = vlaneseq
    %v6496 = vshrl.u32 %v6495, 7
    %v6497 = vadd.s32 %v6496, 64
    %6498 = vset.pattern.permute.xlu0 %v6497
    %6499 = vperm.xlu0 %6498, %v4351
    %v6500 = vpop.permute.xlu0 %6499
    %v6501 = vlaneseq
    %v6502 = vshrl.u32 %v6501, 7
    %v6503 = vadd.s32 %v6502, 72
    %6504 = vset.pattern.permute.xlu0 %v6503
    %6505 = vperm.xlu0 %6504, %v4351
    %v6506 = vpop.permute.xlu0 %6505
    %v6507 = vlaneseq
    %v6508 = vshrl.u32 %v6507, 7
    %v6509 = vadd.s32 %v6508, 80
    %6510 = vset.pattern.permute.xlu0 %v6509
    %6511 = vperm.xlu0 %6510, %v4351
    %v6512 = vpop.permute.xlu0 %6511
    %v6513 = vlaneseq
    %v6514 = vshrl.u32 %v6513, 7
    %v6515 = vadd.s32 %v6514, 88
    %6516 = vset.pattern.permute.xlu0 %v6515
    %6517 = vperm.xlu0 %6516, %v4351
    %v6518 = vpop.permute.xlu0 %6517
    %v6519 = vlaneseq
    %v6520 = vshrl.u32 %v6519, 7
    %v6521 = vadd.s32 %v6520, 64
    %6522 = vset.pattern.permute.xlu0 %v6521
    %6523 = vperm.xlu0 %6522, %v4376
    %v6524 = vpop.permute.xlu0 %6523
    %v6525 = vlaneseq
    %v6526 = vshrl.u32 %v6525, 7
    %v6527 = vadd.s32 %v6526, 72
    %6528 = vset.pattern.permute.xlu0 %v6527
    %6529 = vperm.xlu0 %6528, %v4376
    %v6530 = vpop.permute.xlu0 %6529
    %v6531 = vlaneseq
    %v6532 = vshrl.u32 %v6531, 7
    %v6533 = vadd.s32 %v6532, 80
    %6534 = vset.pattern.permute.xlu0 %v6533
    %6535 = vperm.xlu0 %6534, %v4376
    %v6536 = vpop.permute.xlu0 %6535
    %v6537 = vlaneseq
    %v6538 = vshrl.u32 %v6537, 7
    %v6539 = vadd.s32 %v6538, 88
    %6540 = vset.pattern.permute.xlu0 %v6539
    %6541 = vperm.xlu0 %6540, %v4376
    %v6542 = vpop.permute.xlu0 %6541
    %v6543 = vlaneseq
    %v6544 = vshrl.u32 %v6543, 7
    %v6545 = vadd.s32 %v6544, 64
    %6546 = vset.pattern.permute.xlu0 %v6545
    %6547 = vperm.xlu0 %6546, %v4401
    %v6548 = vpop.permute.xlu0 %6547
    %v6549 = vlaneseq
    %v6550 = vshrl.u32 %v6549, 7
    %v6551 = vadd.s32 %v6550, 72
    %6552 = vset.pattern.permute.xlu0 %v6551
    %6553 = vperm.xlu0 %6552, %v4401
    %v6554 = vpop.permute.xlu0 %6553
    %v6555 = vlaneseq
    %v6556 = vshrl.u32 %v6555, 7
    %v6557 = vadd.s32 %v6556, 80
    %6558 = vset.pattern.permute.xlu0 %v6557
    %6559 = vperm.xlu0 %6558, %v4401
    %v6560 = vpop.permute.xlu0 %6559
    %v6561 = vlaneseq
    %v6562 = vshrl.u32 %v6561, 7
    %v6563 = vadd.s32 %v6562, 88
    %6564 = vset.pattern.permute.xlu0 %v6563
    %6565 = vperm.xlu0 %6564, %v4401
    %v6566 = vpop.permute.xlu0 %6565
    %v6567 = vlaneseq
    %v6568 = vshrl.u32 %v6567, 7
    %v6569 = vadd.s32 %v6568, 64
    %6570 = vset.pattern.permute.xlu0 %v6569
    %6571 = vperm.xlu0 %6570, %v4426
    %v6572 = vpop.permute.xlu0 %6571
    %v6573 = vlaneseq
    %v6574 = vshrl.u32 %v6573, 7
    %v6575 = vadd.s32 %v6574, 72
    %6576 = vset.pattern.permute.xlu0 %v6575
    %6577 = vperm.xlu0 %6576, %v4426
    %v6578 = vpop.permute.xlu0 %6577
    %v6579 = vlaneseq
    %v6580 = vshrl.u32 %v6579, 7
    %v6581 = vadd.s32 %v6580, 80
    %6582 = vset.pattern.permute.xlu0 %v6581
    %6583 = vperm.xlu0 %6582, %v4426
    %v6584 = vpop.permute.xlu0 %6583
    %v6585 = vlaneseq
    %v6586 = vshrl.u32 %v6585, 7
    %v6587 = vadd.s32 %v6586, 88
    %6588 = vset.pattern.permute.xlu0 %v6587
    %6589 = vperm.xlu0 %6588, %v4426
    %v6590 = vpop.permute.xlu0 %6589
    %v6591 = vlaneseq
    %v6592 = vshrl.u32 %v6591, 7
    %v6593 = vadd.s32 %v6592, 64
    %6594 = vset.pattern.permute.xlu0 %v6593
    %6595 = vperm.xlu0 %6594, %v4451
    %v6596 = vpop.permute.xlu0 %6595
    %v6597 = vlaneseq
    %v6598 = vshrl.u32 %v6597, 7
    %v6599 = vadd.s32 %v6598, 72
    %6600 = vset.pattern.permute.xlu0 %v6599
    %6601 = vperm.xlu0 %6600, %v4451
    %v6602 = vpop.permute.xlu0 %6601
    %v6603 = vlaneseq
    %v6604 = vshrl.u32 %v6603, 7
    %v6605 = vadd.s32 %v6604, 80
    %6606 = vset.pattern.permute.xlu0 %v6605
    %6607 = vperm.xlu0 %6606, %v4451
    %v6608 = vpop.permute.xlu0 %6607
    %v6609 = vlaneseq
    %v6610 = vshrl.u32 %v6609, 7
    %v6611 = vadd.s32 %v6610, 88
    %6612 = vset.pattern.permute.xlu0 %v6611
    %6613 = vperm.xlu0 %6612, %v4451
    %v6614 = vpop.permute.xlu0 %6613
    %v6615 = vlaneseq
    %v6616 = vshrl.u32 %v6615, 7
    %v6617 = vadd.s32 %v6616, 64
    %6618 = vset.pattern.permute.xlu0 %v6617
    %6619 = vperm.xlu0 %6618, %v4476
    %v6620 = vpop.permute.xlu0 %6619
    %v6621 = vlaneseq
    %v6622 = vshrl.u32 %v6621, 7
    %v6623 = vadd.s32 %v6622, 72
    %6624 = vset.pattern.permute.xlu0 %v6623
    %6625 = vperm.xlu0 %6624, %v4476
    %v6626 = vpop.permute.xlu0 %6625
    %v6627 = vlaneseq
    %v6628 = vshrl.u32 %v6627, 7
    %v6629 = vadd.s32 %v6628, 80
    %6630 = vset.pattern.permute.xlu0 %v6629
    %6631 = vperm.xlu0 %6630, %v4476
    %v6632 = vpop.permute.xlu0 %6631
    %v6633 = vlaneseq
    %v6634 = vshrl.u32 %v6633, 7
    %v6635 = vadd.s32 %v6634, 88
    %6636 = vset.pattern.permute.xlu0 %v6635
    %6637 = vperm.xlu0 %6636, %v4476
    %v6638 = vpop.permute.xlu0 %6637
    %v6639 = vlaneseq
    %v6640 = vshrl.u32 %v6639, 7
    %v6641 = vadd.s32 %v6640, 64
    %6642 = vset.pattern.permute.xlu0 %v6641
    %6643 = vperm.xlu0 %6642, %v4501
    %v6644 = vpop.permute.xlu0 %6643
    %v6645 = vlaneseq
    %v6646 = vshrl.u32 %v6645, 7
    %v6647 = vadd.s32 %v6646, 72
    %6648 = vset.pattern.permute.xlu0 %v6647
    %6649 = vperm.xlu0 %6648, %v4501
    %v6650 = vpop.permute.xlu0 %6649
    %v6651 = vlaneseq
    %v6652 = vshrl.u32 %v6651, 7
    %v6653 = vadd.s32 %v6652, 80
    %6654 = vset.pattern.permute.xlu0 %v6653
    %6655 = vperm.xlu0 %6654, %v4501
    %v6656 = vpop.permute.xlu0 %6655
    %v6657 = vlaneseq
    %v6658 = vshrl.u32 %v6657, 7
    %v6659 = vadd.s32 %v6658, 88
    %6660 = vset.pattern.permute.xlu0 %v6659
    %6661 = vperm.xlu0 %6660, %v4501
    %v6662 = vpop.permute.xlu0 %6661
    %v6663 = vlaneseq
    %v6664 = vshrl.u32 %v6663, 7
    %v6665 = vadd.s32 %v6664, 64
    %6666 = vset.pattern.permute.xlu0 %v6665
    %6667 = vperm.xlu0 %6666, %v4526
    %v6668 = vpop.permute.xlu0 %6667
    %v6669 = vlaneseq
    %v6670 = vshrl.u32 %v6669, 7
    %v6671 = vadd.s32 %v6670, 72
    %6672 = vset.pattern.permute.xlu0 %v6671
    %6673 = vperm.xlu0 %6672, %v4526
    %v6674 = vpop.permute.xlu0 %6673
    %v6675 = vlaneseq
    %v6676 = vshrl.u32 %v6675, 7
    %v6677 = vadd.s32 %v6676, 80
    %6678 = vset.pattern.permute.xlu0 %v6677
    %6679 = vperm.xlu0 %6678, %v4526
    %v6680 = vpop.permute.xlu0 %6679
    %v6681 = vlaneseq
    %v6682 = vshrl.u32 %v6681, 7
    %v6683 = vadd.s32 %v6682, 88
    %6684 = vset.pattern.permute.xlu0 %v6683
    %6685 = vperm.xlu0 %6684, %v4526
    %v6686 = vpop.permute.xlu0 %6685
    %v6687 = vlaneseq
    %v6688 = vshrl.u32 %v6687, 7
    %v6689 = vadd.s32 %v6688, 64
    %6690 = vset.pattern.permute.xlu0 %v6689
    %6691 = vperm.xlu0 %6690, %v4551
    %v6692 = vpop.permute.xlu0 %6691
    %v6693 = vlaneseq
    %v6694 = vshrl.u32 %v6693, 7
    %v6695 = vadd.s32 %v6694, 72
    %6696 = vset.pattern.permute.xlu0 %v6695
    %6697 = vperm.xlu0 %6696, %v4551
    %v6698 = vpop.permute.xlu0 %6697
    %v6699 = vlaneseq
    %v6700 = vshrl.u32 %v6699, 7
    %v6701 = vadd.s32 %v6700, 80
    %6702 = vset.pattern.permute.xlu0 %v6701
    %6703 = vperm.xlu0 %6702, %v4551
    %v6704 = vpop.permute.xlu0 %6703
    %v6705 = vlaneseq
    %v6706 = vshrl.u32 %v6705, 7
    %v6707 = vadd.s32 %v6706, 88
    %6708 = vset.pattern.permute.xlu0 %v6707
    %6709 = vperm.xlu0 %6708, %v4551
    %v6710 = vpop.permute.xlu0 %6709
    %v6711 = vlaneseq
    %v6712 = vshrl.u32 %v6711, 7
    %v6713 = vadd.s32 %v6712, 64
    %6714 = vset.pattern.permute.xlu0 %v6713
    %6715 = vperm.xlu0 %6714, %v4576
    %v6716 = vpop.permute.xlu0 %6715
    %v6717 = vlaneseq
    %v6718 = vshrl.u32 %v6717, 7
    %v6719 = vadd.s32 %v6718, 72
    %6720 = vset.pattern.permute.xlu0 %v6719
    %6721 = vperm.xlu0 %6720, %v4576
    %v6722 = vpop.permute.xlu0 %6721
    %v6723 = vlaneseq
    %v6724 = vshrl.u32 %v6723, 7
    %v6725 = vadd.s32 %v6724, 80
    %6726 = vset.pattern.permute.xlu0 %v6725
    %6727 = vperm.xlu0 %6726, %v4576
    %v6728 = vpop.permute.xlu0 %6727
    %v6729 = vlaneseq
    %v6730 = vshrl.u32 %v6729, 7
    %v6731 = vadd.s32 %v6730, 88
    %6732 = vset.pattern.permute.xlu0 %v6731
    %6733 = vperm.xlu0 %6732, %v4576
    %v6734 = vpop.permute.xlu0 %6733
    %v6735 = vlaneseq
    %v6736 = vshrl.u32 %v6735, 7
    %v6737 = vadd.s32 %v6736, 64
    %6738 = vset.pattern.permute.xlu0 %v6737
    %6739 = vperm.xlu0 %6738, %v4601
    %v6740 = vpop.permute.xlu0 %6739
    %v6741 = vlaneseq
    %v6742 = vshrl.u32 %v6741, 7
    %v6743 = vadd.s32 %v6742, 72
    %6744 = vset.pattern.permute.xlu0 %v6743
    %6745 = vperm.xlu0 %6744, %v4601
    %v6746 = vpop.permute.xlu0 %6745
    %v6747 = vlaneseq
    %v6748 = vshrl.u32 %v6747, 7
    %v6749 = vadd.s32 %v6748, 80
    %6750 = vset.pattern.permute.xlu0 %v6749
    %6751 = vperm.xlu0 %6750, %v4601
    %v6752 = vpop.permute.xlu0 %6751
    %v6753 = vlaneseq
    %v6754 = vshrl.u32 %v6753, 7
    %v6755 = vadd.s32 %v6754, 88
    %6756 = vset.pattern.permute.xlu0 %v6755
    %6757 = vperm.xlu0 %6756, %v4601
    %v6758 = vpop.permute.xlu0 %6757
    %v6759 = vlaneseq
    %v6760 = vshrl.u32 %v6759, 7
    %v6761 = vadd.s32 %v6760, 64
    %6762 = vset.pattern.permute.xlu0 %v6761
    %6763 = vperm.xlu0 %6762, %v4626
    %v6764 = vpop.permute.xlu0 %6763
    %v6765 = vlaneseq
    %v6766 = vshrl.u32 %v6765, 7
    %v6767 = vadd.s32 %v6766, 72
    %6768 = vset.pattern.permute.xlu0 %v6767
    %6769 = vperm.xlu0 %6768, %v4626
    %v6770 = vpop.permute.xlu0 %6769
    %v6771 = vlaneseq
    %v6772 = vshrl.u32 %v6771, 7
    %v6773 = vadd.s32 %v6772, 80
    %6774 = vset.pattern.permute.xlu0 %v6773
    %6775 = vperm.xlu0 %6774, %v4626
    %v6776 = vpop.permute.xlu0 %6775
    %v6777 = vlaneseq
    %v6778 = vshrl.u32 %v6777, 7
    %v6779 = vadd.s32 %v6778, 88
    %6780 = vset.pattern.permute.xlu0 %v6779
    %6781 = vperm.xlu0 %6780, %v4626
    %v6782 = vpop.permute.xlu0 %6781
    %v6783 = vlaneseq
    %v6784 = vshrl.u32 %v6783, 7
    %v6785 = vadd.s32 %v6784, 64
    %6786 = vset.pattern.permute.xlu0 %v6785
    %6787 = vperm.xlu0 %6786, %v4651
    %v6788 = vpop.permute.xlu0 %6787
    %v6789 = vlaneseq
    %v6790 = vshrl.u32 %v6789, 7
    %v6791 = vadd.s32 %v6790, 72
    %6792 = vset.pattern.permute.xlu0 %v6791
    %6793 = vperm.xlu0 %6792, %v4651
    %v6794 = vpop.permute.xlu0 %6793
    %v6795 = vlaneseq
    %v6796 = vshrl.u32 %v6795, 7
    %v6797 = vadd.s32 %v6796, 80
    %6798 = vset.pattern.permute.xlu0 %v6797
    %6799 = vperm.xlu0 %6798, %v4651
    %v6800 = vpop.permute.xlu0 %6799
    %v6801 = vlaneseq
    %v6802 = vshrl.u32 %v6801, 7
    %v6803 = vadd.s32 %v6802, 88
    %6804 = vset.pattern.permute.xlu0 %v6803
    %6805 = vperm.xlu0 %6804, %v4651
    %v6806 = vpop.permute.xlu0 %6805
    %v6807 = vlaneseq
    %v6808 = vshrl.u32 %v6807, 7
    %v6809 = vadd.s32 %v6808, 64
    %6810 = vset.pattern.permute.xlu0 %v6809
    %6811 = vperm.xlu0 %6810, %v4676
    %v6812 = vpop.permute.xlu0 %6811
    %v6813 = vlaneseq
    %v6814 = vshrl.u32 %v6813, 7
    %v6815 = vadd.s32 %v6814, 72
    %6816 = vset.pattern.permute.xlu0 %v6815
    %6817 = vperm.xlu0 %6816, %v4676
    %v6818 = vpop.permute.xlu0 %6817
    %v6819 = vlaneseq
    %v6820 = vshrl.u32 %v6819, 7
    %v6821 = vadd.s32 %v6820, 80
    %6822 = vset.pattern.permute.xlu0 %v6821
    %6823 = vperm.xlu0 %6822, %v4676
    %v6824 = vpop.permute.xlu0 %6823
    %v6825 = vlaneseq
    %v6826 = vshrl.u32 %v6825, 7
    %v6827 = vadd.s32 %v6826, 88
    %6828 = vset.pattern.permute.xlu0 %v6827
    %6829 = vperm.xlu0 %6828, %v4676
    %v6830 = vpop.permute.xlu0 %6829
    %v6831 = vlaneseq
    %v6832 = vshrl.u32 %v6831, 7
    %v6833 = vadd.s32 %v6832, 64
    %6834 = vset.pattern.permute.xlu0 %v6833
    %6835 = vperm.xlu0 %6834, %v4701
    %v6836 = vpop.permute.xlu0 %6835
    %v6837 = vlaneseq
    %v6838 = vshrl.u32 %v6837, 7
    %v6839 = vadd.s32 %v6838, 72
    %6840 = vset.pattern.permute.xlu0 %v6839
    %6841 = vperm.xlu0 %6840, %v4701
    %v6842 = vpop.permute.xlu0 %6841
    %v6843 = vlaneseq
    %v6844 = vshrl.u32 %v6843, 7
    %v6845 = vadd.s32 %v6844, 80
    %6846 = vset.pattern.permute.xlu0 %v6845
    %6847 = vperm.xlu0 %6846, %v4701
    %v6848 = vpop.permute.xlu0 %6847
    %v6849 = vlaneseq
    %v6850 = vshrl.u32 %v6849, 7
    %v6851 = vadd.s32 %v6850, 88
    %6852 = vset.pattern.permute.xlu0 %v6851
    %6853 = vperm.xlu0 %6852, %v4701
    %v6854 = vpop.permute.xlu0 %6853
    %v6855 = vlaneseq
    %v6856 = vshrl.u32 %v6855, 7
    %v6857 = vadd.s32 %v6856, 64
    %6858 = vset.pattern.permute.xlu0 %v6857
    %6859 = vperm.xlu0 %6858, %v4726
    %v6860 = vpop.permute.xlu0 %6859
    %v6861 = vlaneseq
    %v6862 = vshrl.u32 %v6861, 7
    %v6863 = vadd.s32 %v6862, 72
    %6864 = vset.pattern.permute.xlu0 %v6863
    %6865 = vperm.xlu0 %6864, %v4726
    %v6866 = vpop.permute.xlu0 %6865
    %v6867 = vlaneseq
    %v6868 = vshrl.u32 %v6867, 7
    %v6869 = vadd.s32 %v6868, 80
    %6870 = vset.pattern.permute.xlu0 %v6869
    %6871 = vperm.xlu0 %6870, %v4726
    %v6872 = vpop.permute.xlu0 %6871
    %v6873 = vlaneseq
    %v6874 = vshrl.u32 %v6873, 7
    %v6875 = vadd.s32 %v6874, 88
    %6876 = vset.pattern.permute.xlu0 %v6875
    %6877 = vperm.xlu0 %6876, %v4726
    %v6878 = vpop.permute.xlu0 %6877
    %vm6879 = vcmp.eq.s32.totalorder %v6500, %v78
    %vm6880 = vcmp.eq.s32.totalorder %v6506, %v78
    %vm6881 = vcmp.eq.s32.totalorder %v6512, %v78
    %vm6882 = vcmp.eq.s32.totalorder %v6518, %v78
    %vm6883 = vcmp.eq.s32.totalorder %v6524, %v78
    %vm6884 = vcmp.eq.s32.totalorder %v6530, %v78
    %vm6885 = vcmp.eq.s32.totalorder %v6536, %v78
    %vm6886 = vcmp.eq.s32.totalorder %v6542, %v78
    %vm6887 = vcmp.eq.s32.totalorder %v6548, %v78
    %vm6888 = vcmp.eq.s32.totalorder %v6554, %v78
    %vm6889 = vcmp.eq.s32.totalorder %v6560, %v78
    %vm6890 = vcmp.eq.s32.totalorder %v6566, %v78
    %vm6891 = vcmp.eq.s32.totalorder %v6572, %v78
    %vm6892 = vcmp.eq.s32.totalorder %v6578, %v78
    %vm6893 = vcmp.eq.s32.totalorder %v6584, %v78
    %vm6894 = vcmp.eq.s32.totalorder %v6590, %v78
    %vm6895 = vcmp.eq.s32.totalorder %v6596, %v78
    %vm6896 = vcmp.eq.s32.totalorder %v6602, %v78
    %vm6897 = vcmp.eq.s32.totalorder %v6608, %v78
    %vm6898 = vcmp.eq.s32.totalorder %v6614, %v78
    %vm6899 = vcmp.eq.s32.totalorder %v6620, %v78
    %vm6900 = vcmp.eq.s32.totalorder %v6626, %v78
    %vm6901 = vcmp.eq.s32.totalorder %v6632, %v78
    %vm6902 = vcmp.eq.s32.totalorder %v6638, %v78
    %vm6903 = vcmp.eq.s32.totalorder %v6644, %v78
    %vm6904 = vcmp.eq.s32.totalorder %v6650, %v78
    %vm6905 = vcmp.eq.s32.totalorder %v6656, %v78
    %vm6906 = vcmp.eq.s32.totalorder %v6662, %v78
    %vm6907 = vcmp.eq.s32.totalorder %v6668, %v78
    %vm6908 = vcmp.eq.s32.totalorder %v6674, %v78
    %vm6909 = vcmp.eq.s32.totalorder %v6680, %v78
    %vm6910 = vcmp.eq.s32.totalorder %v6686, %v78
    %vm6911 = vcmp.eq.s32.totalorder %v6692, %v78
    %vm6912 = vcmp.eq.s32.totalorder %v6698, %v78
    %vm6913 = vcmp.eq.s32.totalorder %v6704, %v78
    %vm6914 = vcmp.eq.s32.totalorder %v6710, %v78
    %vm6915 = vcmp.eq.s32.totalorder %v6716, %v78
    %vm6916 = vcmp.eq.s32.totalorder %v6722, %v78
    %vm6917 = vcmp.eq.s32.totalorder %v6728, %v78
    %vm6918 = vcmp.eq.s32.totalorder %v6734, %v78
    %vm6919 = vcmp.eq.s32.totalorder %v6740, %v78
    %vm6920 = vcmp.eq.s32.totalorder %v6746, %v78
    %vm6921 = vcmp.eq.s32.totalorder %v6752, %v78
    %vm6922 = vcmp.eq.s32.totalorder %v6758, %v78
    %vm6923 = vcmp.eq.s32.totalorder %v6764, %v78
    %vm6924 = vcmp.eq.s32.totalorder %v6770, %v78
    %vm6925 = vcmp.eq.s32.totalorder %v6776, %v78
    %vm6926 = vcmp.eq.s32.totalorder %v6782, %v78
    %vm6927 = vcmp.eq.s32.totalorder %v6788, %v78
    %vm6928 = vcmp.eq.s32.totalorder %v6794, %v78
    %vm6929 = vcmp.eq.s32.totalorder %v6800, %v78
    %vm6930 = vcmp.eq.s32.totalorder %v6806, %v78
    %vm6931 = vcmp.eq.s32.totalorder %v6812, %v78
    %vm6932 = vcmp.eq.s32.totalorder %v6818, %v78
    %vm6933 = vcmp.eq.s32.totalorder %v6824, %v78
    %vm6934 = vcmp.eq.s32.totalorder %v6830, %v78
    %vm6935 = vcmp.eq.s32.totalorder %v6836, %v78
    %vm6936 = vcmp.eq.s32.totalorder %v6842, %v78
    %vm6937 = vcmp.eq.s32.totalorder %v6848, %v78
    %vm6938 = vcmp.eq.s32.totalorder %v6854, %v78
    %vm6939 = vcmp.eq.s32.totalorder %v6860, %v78
    %vm6940 = vcmp.eq.s32.totalorder %v6866, %v78
    %vm6941 = vcmp.eq.s32.totalorder %v6872, %v78
    %vm6942 = vcmp.eq.s32.totalorder %v6878, %v78
    %v6943 = vlaneseq
    %v6944 = vshrl.u32 %v6943, 7
    %v6945 = vadd.s32 %v6944, 64
    %6946 = vset.pattern.permute.xlu0 %v6945
    %6947 = vperm.xlu0 %6946, %v4815
    %v6948 = vpop.permute.xlu0 %6947
    %v6949 = vlaneseq
    %v6950 = vshrl.u32 %v6949, 7
    %v6951 = vadd.s32 %v6950, 72
    %6952 = vset.pattern.permute.xlu0 %v6951
    %6953 = vperm.xlu0 %6952, %v4815
    %v6954 = vpop.permute.xlu0 %6953
    %v6955 = vlaneseq
    %v6956 = vshrl.u32 %v6955, 7
    %v6957 = vadd.s32 %v6956, 80
    %6958 = vset.pattern.permute.xlu0 %v6957
    %6959 = vperm.xlu0 %6958, %v4815
    %v6960 = vpop.permute.xlu0 %6959
    %v6961 = vlaneseq
    %v6962 = vshrl.u32 %v6961, 7
    %v6963 = vadd.s32 %v6962, 88
    %6964 = vset.pattern.permute.xlu0 %v6963
    %6965 = vperm.xlu0 %6964, %v4815
    %v6966 = vpop.permute.xlu0 %6965
    %v6967 = vlaneseq
    %v6968 = vshrl.u32 %v6967, 7
    %v6969 = vadd.s32 %v6968, 64
    %6970 = vset.pattern.permute.xlu0 %v6969
    %6971 = vperm.xlu0 %6970, %v4840
    %v6972 = vpop.permute.xlu0 %6971
    %v6973 = vlaneseq
    %v6974 = vshrl.u32 %v6973, 7
    %v6975 = vadd.s32 %v6974, 72
    %6976 = vset.pattern.permute.xlu0 %v6975
    %6977 = vperm.xlu0 %6976, %v4840
    %v6978 = vpop.permute.xlu0 %6977
    %v6979 = vlaneseq
    %v6980 = vshrl.u32 %v6979, 7
    %v6981 = vadd.s32 %v6980, 80
    %6982 = vset.pattern.permute.xlu0 %v6981
    %6983 = vperm.xlu0 %6982, %v4840
    %v6984 = vpop.permute.xlu0 %6983
    %v6985 = vlaneseq
    %v6986 = vshrl.u32 %v6985, 7
    %v6987 = vadd.s32 %v6986, 88
    %6988 = vset.pattern.permute.xlu0 %v6987
    %6989 = vperm.xlu0 %6988, %v4840
    %v6990 = vpop.permute.xlu0 %6989
    %v6991 = vlaneseq
    %v6992 = vshrl.u32 %v6991, 7
    %v6993 = vadd.s32 %v6992, 64
    %6994 = vset.pattern.permute.xlu0 %v6993
    %6995 = vperm.xlu0 %6994, %v4865
    %v6996 = vpop.permute.xlu0 %6995
    %v6997 = vlaneseq
    %v6998 = vshrl.u32 %v6997, 7
    %v6999 = vadd.s32 %v6998, 72
    %7000 = vset.pattern.permute.xlu0 %v6999
    %7001 = vperm.xlu0 %7000, %v4865
    %v7002 = vpop.permute.xlu0 %7001
    %v7003 = vlaneseq
    %v7004 = vshrl.u32 %v7003, 7
    %v7005 = vadd.s32 %v7004, 80
    %7006 = vset.pattern.permute.xlu0 %v7005
    %7007 = vperm.xlu0 %7006, %v4865
    %v7008 = vpop.permute.xlu0 %7007
    %v7009 = vlaneseq
    %v7010 = vshrl.u32 %v7009, 7
    %v7011 = vadd.s32 %v7010, 88
    %7012 = vset.pattern.permute.xlu0 %v7011
    %7013 = vperm.xlu0 %7012, %v4865
    %v7014 = vpop.permute.xlu0 %7013
    %v7015 = vlaneseq
    %v7016 = vshrl.u32 %v7015, 7
    %v7017 = vadd.s32 %v7016, 64
    %7018 = vset.pattern.permute.xlu0 %v7017
    %7019 = vperm.xlu0 %7018, %v4890
    %v7020 = vpop.permute.xlu0 %7019
    %v7021 = vlaneseq
    %v7022 = vshrl.u32 %v7021, 7
    %v7023 = vadd.s32 %v7022, 72
    %7024 = vset.pattern.permute.xlu0 %v7023
    %7025 = vperm.xlu0 %7024, %v4890
    %v7026 = vpop.permute.xlu0 %7025
    %v7027 = vlaneseq
    %v7028 = vshrl.u32 %v7027, 7
    %v7029 = vadd.s32 %v7028, 80
    %7030 = vset.pattern.permute.xlu0 %v7029
    %7031 = vperm.xlu0 %7030, %v4890
    %v7032 = vpop.permute.xlu0 %7031
    %v7033 = vlaneseq
    %v7034 = vshrl.u32 %v7033, 7
    %v7035 = vadd.s32 %v7034, 88
    %7036 = vset.pattern.permute.xlu0 %v7035
    %7037 = vperm.xlu0 %7036, %v4890
    %v7038 = vpop.permute.xlu0 %7037
    %v7039 = vlaneseq
    %v7040 = vshrl.u32 %v7039, 7
    %v7041 = vadd.s32 %v7040, 64
    %7042 = vset.pattern.permute.xlu0 %v7041
    %7043 = vperm.xlu0 %7042, %v4915
    %v7044 = vpop.permute.xlu0 %7043
    %v7045 = vlaneseq
    %v7046 = vshrl.u32 %v7045, 7
    %v7047 = vadd.s32 %v7046, 72
    %7048 = vset.pattern.permute.xlu0 %v7047
    %7049 = vperm.xlu0 %7048, %v4915
    %v7050 = vpop.permute.xlu0 %7049
    %v7051 = vlaneseq
    %v7052 = vshrl.u32 %v7051, 7
    %v7053 = vadd.s32 %v7052, 80
    %7054 = vset.pattern.permute.xlu0 %v7053
    %7055 = vperm.xlu0 %7054, %v4915
    %v7056 = vpop.permute.xlu0 %7055
    %v7057 = vlaneseq
    %v7058 = vshrl.u32 %v7057, 7
    %v7059 = vadd.s32 %v7058, 88
    %7060 = vset.pattern.permute.xlu0 %v7059
    %7061 = vperm.xlu0 %7060, %v4915
    %v7062 = vpop.permute.xlu0 %7061
    %v7063 = vlaneseq
    %v7064 = vshrl.u32 %v7063, 7
    %v7065 = vadd.s32 %v7064, 64
    %7066 = vset.pattern.permute.xlu0 %v7065
    %7067 = vperm.xlu0 %7066, %v4940
    %v7068 = vpop.permute.xlu0 %7067
    %v7069 = vlaneseq
    %v7070 = vshrl.u32 %v7069, 7
    %v7071 = vadd.s32 %v7070, 72
    %7072 = vset.pattern.permute.xlu0 %v7071
    %7073 = vperm.xlu0 %7072, %v4940
    %v7074 = vpop.permute.xlu0 %7073
    %v7075 = vlaneseq
    %v7076 = vshrl.u32 %v7075, 7
    %v7077 = vadd.s32 %v7076, 80
    %7078 = vset.pattern.permute.xlu0 %v7077
    %7079 = vperm.xlu0 %7078, %v4940
    %v7080 = vpop.permute.xlu0 %7079
    %v7081 = vlaneseq
    %v7082 = vshrl.u32 %v7081, 7
    %v7083 = vadd.s32 %v7082, 88
    %7084 = vset.pattern.permute.xlu0 %v7083
    %7085 = vperm.xlu0 %7084, %v4940
    %v7086 = vpop.permute.xlu0 %7085
    %v7087 = vlaneseq
    %v7088 = vshrl.u32 %v7087, 7
    %v7089 = vadd.s32 %v7088, 64
    %7090 = vset.pattern.permute.xlu0 %v7089
    %7091 = vperm.xlu0 %7090, %v4965
    %v7092 = vpop.permute.xlu0 %7091
    %v7093 = vlaneseq
    %v7094 = vshrl.u32 %v7093, 7
    %v7095 = vadd.s32 %v7094, 72
    %7096 = vset.pattern.permute.xlu0 %v7095
    %7097 = vperm.xlu0 %7096, %v4965
    %v7098 = vpop.permute.xlu0 %7097
    %v7099 = vlaneseq
    %v7100 = vshrl.u32 %v7099, 7
    %v7101 = vadd.s32 %v7100, 80
    %7102 = vset.pattern.permute.xlu0 %v7101
    %7103 = vperm.xlu0 %7102, %v4965
    %v7104 = vpop.permute.xlu0 %7103
    %v7105 = vlaneseq
    %v7106 = vshrl.u32 %v7105, 7
    %v7107 = vadd.s32 %v7106, 88
    %7108 = vset.pattern.permute.xlu0 %v7107
    %7109 = vperm.xlu0 %7108, %v4965
    %v7110 = vpop.permute.xlu0 %7109
    %v7111 = vlaneseq
    %v7112 = vshrl.u32 %v7111, 7
    %v7113 = vadd.s32 %v7112, 64
    %7114 = vset.pattern.permute.xlu0 %v7113
    %7115 = vperm.xlu0 %7114, %v4990
    %v7116 = vpop.permute.xlu0 %7115
    %v7117 = vlaneseq
    %v7118 = vshrl.u32 %v7117, 7
    %v7119 = vadd.s32 %v7118, 72
    %7120 = vset.pattern.permute.xlu0 %v7119
    %7121 = vperm.xlu0 %7120, %v4990
    %v7122 = vpop.permute.xlu0 %7121
    %v7123 = vlaneseq
    %v7124 = vshrl.u32 %v7123, 7
    %v7125 = vadd.s32 %v7124, 80
    %7126 = vset.pattern.permute.xlu0 %v7125
    %7127 = vperm.xlu0 %7126, %v4990
    %v7128 = vpop.permute.xlu0 %7127
    %v7129 = vlaneseq
    %v7130 = vshrl.u32 %v7129, 7
    %v7131 = vadd.s32 %v7130, 88
    %7132 = vset.pattern.permute.xlu0 %v7131
    %7133 = vperm.xlu0 %7132, %v4990
    %v7134 = vpop.permute.xlu0 %7133
    %v7135 = vlaneseq
    %v7136 = vshrl.u32 %v7135, 7
    %v7137 = vadd.s32 %v7136, 64
    %7138 = vset.pattern.permute.xlu0 %v7137
    %7139 = vperm.xlu0 %7138, %v5015
    %v7140 = vpop.permute.xlu0 %7139
    %v7141 = vlaneseq
    %v7142 = vshrl.u32 %v7141, 7
    %v7143 = vadd.s32 %v7142, 72
    %7144 = vset.pattern.permute.xlu0 %v7143
    %7145 = vperm.xlu0 %7144, %v5015
    %v7146 = vpop.permute.xlu0 %7145
    %v7147 = vlaneseq
    %v7148 = vshrl.u32 %v7147, 7
    %v7149 = vadd.s32 %v7148, 80
    %7150 = vset.pattern.permute.xlu0 %v7149
    %7151 = vperm.xlu0 %7150, %v5015
    %v7152 = vpop.permute.xlu0 %7151
    %v7153 = vlaneseq
    %v7154 = vshrl.u32 %v7153, 7
    %v7155 = vadd.s32 %v7154, 88
    %7156 = vset.pattern.permute.xlu0 %v7155
    %7157 = vperm.xlu0 %7156, %v5015
    %v7158 = vpop.permute.xlu0 %7157
    %v7159 = vlaneseq
    %v7160 = vshrl.u32 %v7159, 7
    %v7161 = vadd.s32 %v7160, 64
    %7162 = vset.pattern.permute.xlu0 %v7161
    %7163 = vperm.xlu0 %7162, %v5040
    %v7164 = vpop.permute.xlu0 %7163
    %v7165 = vlaneseq
    %v7166 = vshrl.u32 %v7165, 7
    %v7167 = vadd.s32 %v7166, 72
    %7168 = vset.pattern.permute.xlu0 %v7167
    %7169 = vperm.xlu0 %7168, %v5040
    %v7170 = vpop.permute.xlu0 %7169
    %v7171 = vlaneseq
    %v7172 = vshrl.u32 %v7171, 7
    %v7173 = vadd.s32 %v7172, 80
    %7174 = vset.pattern.permute.xlu0 %v7173
    %7175 = vperm.xlu0 %7174, %v5040
    %v7176 = vpop.permute.xlu0 %7175
    %v7177 = vlaneseq
    %v7178 = vshrl.u32 %v7177, 7
    %v7179 = vadd.s32 %v7178, 88
    %7180 = vset.pattern.permute.xlu0 %v7179
    %7181 = vperm.xlu0 %7180, %v5040
    %v7182 = vpop.permute.xlu0 %7181
    %v7183 = vlaneseq
    %v7184 = vshrl.u32 %v7183, 7
    %v7185 = vadd.s32 %v7184, 64
    %7186 = vset.pattern.permute.xlu0 %v7185
    %7187 = vperm.xlu0 %7186, %v5065
    %v7188 = vpop.permute.xlu0 %7187
    %v7189 = vlaneseq
    %v7190 = vshrl.u32 %v7189, 7
    %v7191 = vadd.s32 %v7190, 72
    %7192 = vset.pattern.permute.xlu0 %v7191
    %7193 = vperm.xlu0 %7192, %v5065
    %v7194 = vpop.permute.xlu0 %7193
    %v7195 = vlaneseq
    %v7196 = vshrl.u32 %v7195, 7
    %v7197 = vadd.s32 %v7196, 80
    %7198 = vset.pattern.permute.xlu0 %v7197
    %7199 = vperm.xlu0 %7198, %v5065
    %v7200 = vpop.permute.xlu0 %7199
    %v7201 = vlaneseq
    %v7202 = vshrl.u32 %v7201, 7
    %v7203 = vadd.s32 %v7202, 88
    %7204 = vset.pattern.permute.xlu0 %v7203
    %7205 = vperm.xlu0 %7204, %v5065
    %v7206 = vpop.permute.xlu0 %7205
    %v7207 = vlaneseq
    %v7208 = vshrl.u32 %v7207, 7
    %v7209 = vadd.s32 %v7208, 64
    %7210 = vset.pattern.permute.xlu0 %v7209
    %7211 = vperm.xlu0 %7210, %v5090
    %v7212 = vpop.permute.xlu0 %7211
    %v7213 = vlaneseq
    %v7214 = vshrl.u32 %v7213, 7
    %v7215 = vadd.s32 %v7214, 72
    %7216 = vset.pattern.permute.xlu0 %v7215
    %7217 = vperm.xlu0 %7216, %v5090
    %v7218 = vpop.permute.xlu0 %7217
    %v7219 = vlaneseq
    %v7220 = vshrl.u32 %v7219, 7
    %v7221 = vadd.s32 %v7220, 80
    %7222 = vset.pattern.permute.xlu0 %v7221
    %7223 = vperm.xlu0 %7222, %v5090
    %v7224 = vpop.permute.xlu0 %7223
    %v7225 = vlaneseq
    %v7226 = vshrl.u32 %v7225, 7
    %v7227 = vadd.s32 %v7226, 88
    %7228 = vset.pattern.permute.xlu0 %v7227
    %7229 = vperm.xlu0 %7228, %v5090
    %v7230 = vpop.permute.xlu0 %7229
    %v7231 = vlaneseq
    %v7232 = vshrl.u32 %v7231, 7
    %v7233 = vadd.s32 %v7232, 64
    %7234 = vset.pattern.permute.xlu0 %v7233
    %7235 = vperm.xlu0 %7234, %v5115
    %v7236 = vpop.permute.xlu0 %7235
    %v7237 = vlaneseq
    %v7238 = vshrl.u32 %v7237, 7
    %v7239 = vadd.s32 %v7238, 72
    %7240 = vset.pattern.permute.xlu0 %v7239
    %7241 = vperm.xlu0 %7240, %v5115
    %v7242 = vpop.permute.xlu0 %7241
    %v7243 = vlaneseq
    %v7244 = vshrl.u32 %v7243, 7
    %v7245 = vadd.s32 %v7244, 80
    %7246 = vset.pattern.permute.xlu0 %v7245
    %7247 = vperm.xlu0 %7246, %v5115
    %v7248 = vpop.permute.xlu0 %7247
    %v7249 = vlaneseq
    %v7250 = vshrl.u32 %v7249, 7
    %v7251 = vadd.s32 %v7250, 88
    %7252 = vset.pattern.permute.xlu0 %v7251
    %7253 = vperm.xlu0 %7252, %v5115
    %v7254 = vpop.permute.xlu0 %7253
    %v7255 = vlaneseq
    %v7256 = vshrl.u32 %v7255, 7
    %v7257 = vadd.s32 %v7256, 64
    %7258 = vset.pattern.permute.xlu0 %v7257
    %7259 = vperm.xlu0 %7258, %v5140
    %v7260 = vpop.permute.xlu0 %7259
    %v7261 = vlaneseq
    %v7262 = vshrl.u32 %v7261, 7
    %v7263 = vadd.s32 %v7262, 72
    %7264 = vset.pattern.permute.xlu0 %v7263
    %7265 = vperm.xlu0 %7264, %v5140
    %v7266 = vpop.permute.xlu0 %7265
    %v7267 = vlaneseq
    %v7268 = vshrl.u32 %v7267, 7
    %v7269 = vadd.s32 %v7268, 80
    %7270 = vset.pattern.permute.xlu0 %v7269
    %7271 = vperm.xlu0 %7270, %v5140
    %v7272 = vpop.permute.xlu0 %7271
    %v7273 = vlaneseq
    %v7274 = vshrl.u32 %v7273, 7
    %v7275 = vadd.s32 %v7274, 88
    %7276 = vset.pattern.permute.xlu0 %v7275
    %7277 = vperm.xlu0 %7276, %v5140
    %v7278 = vpop.permute.xlu0 %7277
    %v7279 = vlaneseq
    %v7280 = vshrl.u32 %v7279, 7
    %v7281 = vadd.s32 %v7280, 64
    %7282 = vset.pattern.permute.xlu0 %v7281
    %7283 = vperm.xlu0 %7282, %v5165
    %v7284 = vpop.permute.xlu0 %7283
    %v7285 = vlaneseq
    %v7286 = vshrl.u32 %v7285, 7
    %v7287 = vadd.s32 %v7286, 72
    %7288 = vset.pattern.permute.xlu0 %v7287
    %7289 = vperm.xlu0 %7288, %v5165
    %v7290 = vpop.permute.xlu0 %7289
    %v7291 = vlaneseq
    %v7292 = vshrl.u32 %v7291, 7
    %v7293 = vadd.s32 %v7292, 80
    %7294 = vset.pattern.permute.xlu0 %v7293
    %7295 = vperm.xlu0 %7294, %v5165
    %v7296 = vpop.permute.xlu0 %7295
    %v7297 = vlaneseq
    %v7298 = vshrl.u32 %v7297, 7
    %v7299 = vadd.s32 %v7298, 88
    %7300 = vset.pattern.permute.xlu0 %v7299
    %7301 = vperm.xlu0 %7300, %v5165
    %v7302 = vpop.permute.xlu0 %7301
    %v7303 = vlaneseq
    %v7304 = vshrl.u32 %v7303, 7
    %v7305 = vadd.s32 %v7304, 64
    %7306 = vset.pattern.permute.xlu0 %v7305
    %7307 = vperm.xlu0 %7306, %v5190
    %v7308 = vpop.permute.xlu0 %7307
    %v7309 = vlaneseq
    %v7310 = vshrl.u32 %v7309, 7
    %v7311 = vadd.s32 %v7310, 72
    %7312 = vset.pattern.permute.xlu0 %v7311
    %7313 = vperm.xlu0 %7312, %v5190
    %v7314 = vpop.permute.xlu0 %7313
    %v7315 = vlaneseq
    %v7316 = vshrl.u32 %v7315, 7
    %v7317 = vadd.s32 %v7316, 80
    %7318 = vset.pattern.permute.xlu0 %v7317
    %7319 = vperm.xlu0 %7318, %v5190
    %v7320 = vpop.permute.xlu0 %7319
    %v7321 = vlaneseq
    %v7322 = vshrl.u32 %v7321, 7
    %v7323 = vadd.s32 %v7322, 88
    %7324 = vset.pattern.permute.xlu0 %v7323
    %7325 = vperm.xlu0 %7324, %v5190
    %v7326 = vpop.permute.xlu0 %7325
    %v7327 = vsel %vm6879, %v6948, 0.0
    %v7328 = vsel %vm6880, %v6954, 0.0
    %v7329 = vsel %vm6881, %v6960, 0.0
    %v7330 = vsel %vm6882, %v6966, 0.0
    %v7331 = vsel %vm6883, %v6972, 0.0
    %v7332 = vsel %vm6884, %v6978, 0.0
    %v7333 = vsel %vm6885, %v6984, 0.0
    %v7334 = vsel %vm6886, %v6990, 0.0
    %v7335 = vsel %vm6887, %v6996, 0.0
    %v7336 = vsel %vm6888, %v7002, 0.0
    %v7337 = vsel %vm6889, %v7008, 0.0
    %v7338 = vsel %vm6890, %v7014, 0.0
    %v7339 = vsel %vm6891, %v7020, 0.0
    %v7340 = vsel %vm6892, %v7026, 0.0
    %v7341 = vsel %vm6893, %v7032, 0.0
    %v7342 = vsel %vm6894, %v7038, 0.0
    %v7343 = vsel %vm6895, %v7044, 0.0
    %v7344 = vsel %vm6896, %v7050, 0.0
    %v7345 = vsel %vm6897, %v7056, 0.0
    %v7346 = vsel %vm6898, %v7062, 0.0
    %v7347 = vsel %vm6899, %v7068, 0.0
    %v7348 = vsel %vm6900, %v7074, 0.0
    %v7349 = vsel %vm6901, %v7080, 0.0
    %v7350 = vsel %vm6902, %v7086, 0.0
    %v7351 = vsel %vm6903, %v7092, 0.0
    %v7352 = vsel %vm6904, %v7098, 0.0
    %v7353 = vsel %vm6905, %v7104, 0.0
    %v7354 = vsel %vm6906, %v7110, 0.0
    %v7355 = vsel %vm6907, %v7116, 0.0
    %v7356 = vsel %vm6908, %v7122, 0.0
    %v7357 = vsel %vm6909, %v7128, 0.0
    %v7358 = vsel %vm6910, %v7134, 0.0
    %v7359 = vsel %vm6911, %v7140, 0.0
    %v7360 = vsel %vm6912, %v7146, 0.0
    %v7361 = vsel %vm6913, %v7152, 0.0
    %v7362 = vsel %vm6914, %v7158, 0.0
    %v7363 = vsel %vm6915, %v7164, 0.0
    %v7364 = vsel %vm6916, %v7170, 0.0
    %v7365 = vsel %vm6917, %v7176, 0.0
    %v7366 = vsel %vm6918, %v7182, 0.0
    %v7367 = vsel %vm6919, %v7188, 0.0
    %v7368 = vsel %vm6920, %v7194, 0.0
    %v7369 = vsel %vm6921, %v7200, 0.0
    %v7370 = vsel %vm6922, %v7206, 0.0
    %v7371 = vsel %vm6923, %v7212, 0.0
    %v7372 = vsel %vm6924, %v7218, 0.0
    %v7373 = vsel %vm6925, %v7224, 0.0
    %v7374 = vsel %vm6926, %v7230, 0.0
    %v7375 = vsel %vm6927, %v7236, 0.0
    %v7376 = vsel %vm6928, %v7242, 0.0
    %v7377 = vsel %vm6929, %v7248, 0.0
    %v7378 = vsel %vm6930, %v7254, 0.0
    %v7379 = vsel %vm6931, %v7260, 0.0
    %v7380 = vsel %vm6932, %v7266, 0.0
    %v7381 = vsel %vm6933, %v7272, 0.0
    %v7382 = vsel %vm6934, %v7278, 0.0
    %v7383 = vsel %vm6935, %v7284, 0.0
    %v7384 = vsel %vm6936, %v7290, 0.0
    %v7385 = vsel %vm6937, %v7296, 0.0
    %v7386 = vsel %vm6938, %v7302, 0.0
    %v7387 = vsel %vm6939, %v7308, 0.0
    %v7388 = vsel %vm6940, %v7314, 0.0
    %v7389 = vsel %vm6941, %v7320, 0.0
    %v7390 = vsel %vm6942, %v7326, 0.0
    %v7391 = vadd.f32 %v7327, %v7328
    %v7392 = vadd.f32 %v7391, %v7329
    %v7393 = vadd.f32 %v7392, %v7330
    %v7394 = vrot.slane %v7393, 4
    %v7395 = vadd.f32 %v7393, %v7394
    %v7396 = vrot.slane %v7395, 2
    %v7397 = vadd.f32 %v7395, %v7396
    %v7398 = vrot.slane %v7397, 1
    %v7399 = vadd.f32 %v7397, %v7398
    %v7400 = vadd.f32 %v7331, %v7332
    %v7401 = vadd.f32 %v7400, %v7333
    %v7402 = vadd.f32 %v7401, %v7334
    %v7403 = vrot.slane %v7402, 4
    %v7404 = vadd.f32 %v7402, %v7403
    %v7405 = vrot.slane %v7404, 2
    %v7406 = vadd.f32 %v7404, %v7405
    %v7407 = vrot.slane %v7406, 1
    %v7408 = vadd.f32 %v7406, %v7407
    %v7409 = vadd.f32 %v7335, %v7336
    %v7410 = vadd.f32 %v7409, %v7337
    %v7411 = vadd.f32 %v7410, %v7338
    %v7412 = vrot.slane %v7411, 4
    %v7413 = vadd.f32 %v7411, %v7412
    %v7414 = vrot.slane %v7413, 2
    %v7415 = vadd.f32 %v7413, %v7414
    %v7416 = vrot.slane %v7415, 1
    %v7417 = vadd.f32 %v7415, %v7416
    %v7418 = vadd.f32 %v7339, %v7340
    %v7419 = vadd.f32 %v7418, %v7341
    %v7420 = vadd.f32 %v7419, %v7342
    %v7421 = vrot.slane %v7420, 4
    %v7422 = vadd.f32 %v7420, %v7421
    %v7423 = vrot.slane %v7422, 2
    %v7424 = vadd.f32 %v7422, %v7423
    %v7425 = vrot.slane %v7424, 1
    %v7426 = vadd.f32 %v7424, %v7425
    %v7427 = vadd.f32 %v7343, %v7344
    %v7428 = vadd.f32 %v7427, %v7345
    %v7429 = vadd.f32 %v7428, %v7346
    %v7430 = vrot.slane %v7429, 4
    %v7431 = vadd.f32 %v7429, %v7430
    %v7432 = vrot.slane %v7431, 2
    %v7433 = vadd.f32 %v7431, %v7432
    %v7434 = vrot.slane %v7433, 1
    %v7435 = vadd.f32 %v7433, %v7434
    %v7436 = vadd.f32 %v7347, %v7348
    %v7437 = vadd.f32 %v7436, %v7349
    %v7438 = vadd.f32 %v7437, %v7350
    %v7439 = vrot.slane %v7438, 4
    %v7440 = vadd.f32 %v7438, %v7439
    %v7441 = vrot.slane %v7440, 2
    %v7442 = vadd.f32 %v7440, %v7441
    %v7443 = vrot.slane %v7442, 1
    %v7444 = vadd.f32 %v7442, %v7443
    %v7445 = vadd.f32 %v7351, %v7352
    %v7446 = vadd.f32 %v7445, %v7353
    %v7447 = vadd.f32 %v7446, %v7354
    %v7448 = vrot.slane %v7447, 4
    %v7449 = vadd.f32 %v7447, %v7448
    %v7450 = vrot.slane %v7449, 2
    %v7451 = vadd.f32 %v7449, %v7450
    %v7452 = vrot.slane %v7451, 1
    %v7453 = vadd.f32 %v7451, %v7452
    %v7454 = vadd.f32 %v7355, %v7356
    %v7455 = vadd.f32 %v7454, %v7357
    %v7456 = vadd.f32 %v7455, %v7358
    %v7457 = vrot.slane %v7456, 4
    %v7458 = vadd.f32 %v7456, %v7457
    %v7459 = vrot.slane %v7458, 2
    %v7460 = vadd.f32 %v7458, %v7459
    %v7461 = vrot.slane %v7460, 1
    %v7462 = vadd.f32 %v7460, %v7461
    %v7463 = vadd.f32 %v7359, %v7360
    %v7464 = vadd.f32 %v7463, %v7361
    %v7465 = vadd.f32 %v7464, %v7362
    %v7466 = vrot.slane %v7465, 4
    %v7467 = vadd.f32 %v7465, %v7466
    %v7468 = vrot.slane %v7467, 2
    %v7469 = vadd.f32 %v7467, %v7468
    %v7470 = vrot.slane %v7469, 1
    %v7471 = vadd.f32 %v7469, %v7470
    %v7472 = vadd.f32 %v7363, %v7364
    %v7473 = vadd.f32 %v7472, %v7365
    %v7474 = vadd.f32 %v7473, %v7366
    %v7475 = vrot.slane %v7474, 4
    %v7476 = vadd.f32 %v7474, %v7475
    %v7477 = vrot.slane %v7476, 2
    %v7478 = vadd.f32 %v7476, %v7477
    %v7479 = vrot.slane %v7478, 1
    %v7480 = vadd.f32 %v7478, %v7479
    %v7481 = vadd.f32 %v7367, %v7368
    %v7482 = vadd.f32 %v7481, %v7369
    %v7483 = vadd.f32 %v7482, %v7370
    %v7484 = vrot.slane %v7483, 4
    %v7485 = vadd.f32 %v7483, %v7484
    %v7486 = vrot.slane %v7485, 2
    %v7487 = vadd.f32 %v7485, %v7486
    %v7488 = vrot.slane %v7487, 1
    %v7489 = vadd.f32 %v7487, %v7488
    %v7490 = vadd.f32 %v7371, %v7372
    %v7491 = vadd.f32 %v7490, %v7373
    %v7492 = vadd.f32 %v7491, %v7374
    %v7493 = vrot.slane %v7492, 4
    %v7494 = vadd.f32 %v7492, %v7493
    %v7495 = vrot.slane %v7494, 2
    %v7496 = vadd.f32 %v7494, %v7495
    %v7497 = vrot.slane %v7496, 1
    %v7498 = vadd.f32 %v7496, %v7497
    %v7499 = vadd.f32 %v7375, %v7376
    %v7500 = vadd.f32 %v7499, %v7377
    %v7501 = vadd.f32 %v7500, %v7378
    %v7502 = vrot.slane %v7501, 4
    %v7503 = vadd.f32 %v7501, %v7502
    %v7504 = vrot.slane %v7503, 2
    %v7505 = vadd.f32 %v7503, %v7504
    %v7506 = vrot.slane %v7505, 1
    %v7507 = vadd.f32 %v7505, %v7506
    %v7508 = vadd.f32 %v7379, %v7380
    %v7509 = vadd.f32 %v7508, %v7381
    %v7510 = vadd.f32 %v7509, %v7382
    %v7511 = vrot.slane %v7510, 4
    %v7512 = vadd.f32 %v7510, %v7511
    %v7513 = vrot.slane %v7512, 2
    %v7514 = vadd.f32 %v7512, %v7513
    %v7515 = vrot.slane %v7514, 1
    %v7516 = vadd.f32 %v7514, %v7515
    %v7517 = vadd.f32 %v7383, %v7384
    %v7518 = vadd.f32 %v7517, %v7385
    %v7519 = vadd.f32 %v7518, %v7386
    %v7520 = vrot.slane %v7519, 4
    %v7521 = vadd.f32 %v7519, %v7520
    %v7522 = vrot.slane %v7521, 2
    %v7523 = vadd.f32 %v7521, %v7522
    %v7524 = vrot.slane %v7523, 1
    %v7525 = vadd.f32 %v7523, %v7524
    %v7526 = vadd.f32 %v7387, %v7388
    %v7527 = vadd.f32 %v7526, %v7389
    %v7528 = vadd.f32 %v7527, %v7390
    %v7529 = vrot.slane %v7528, 4
    %v7530 = vadd.f32 %v7528, %v7529
    %v7531 = vrot.slane %v7530, 2
    %v7532 = vadd.f32 %v7530, %v7531
    %v7533 = vrot.slane %v7532, 1
    %v7534 = vadd.f32 %v7532, %v7533
    %v7535 = vadd.f32 %v6479, %v7399
    %v7536 = vadd.f32 %v6480, %v7408
    %v7537 = vadd.f32 %v6481, %v7417
    %v7538 = vadd.f32 %v6482, %v7426
    %v7539 = vadd.f32 %v6483, %v7435
    %v7540 = vadd.f32 %v6484, %v7444
    %v7541 = vadd.f32 %v6485, %v7453
    %v7542 = vadd.f32 %v6486, %v7462
    %v7543 = vadd.f32 %v6487, %v7471
    %v7544 = vadd.f32 %v6488, %v7480
    %v7545 = vadd.f32 %v6489, %v7489
    %v7546 = vadd.f32 %v6490, %v7498
    %v7547 = vadd.f32 %v6491, %v7507
    %v7548 = vadd.f32 %v6492, %v7516
    %v7549 = vadd.f32 %v6493, %v7525
    %v7550 = vadd.f32 %v6494, %v7534
    %v7551 = vlaneseq
    %v7552 = vshrl.u32 %v7551, 7
    %v7553 = vadd.s32 %v7552, 96
    %7554 = vset.pattern.permute.xlu0 %v7553
    %7555 = vperm.xlu0 %7554, %v4351
    %v7556 = vpop.permute.xlu0 %7555
    %v7557 = vlaneseq
    %v7558 = vshrl.u32 %v7557, 7
    %v7559 = vadd.s32 %v7558, 104
    %7560 = vset.pattern.permute.xlu0 %v7559
    %7561 = vperm.xlu0 %7560, %v4351
    %v7562 = vpop.permute.xlu0 %7561
    %v7563 = vlaneseq
    %v7564 = vshrl.u32 %v7563, 7
    %v7565 = vadd.s32 %v7564, 112
    %7566 = vset.pattern.permute.xlu0 %v7565
    %7567 = vperm.xlu0 %7566, %v4351
    %v7568 = vpop.permute.xlu0 %7567
    %v7569 = vlaneseq
    %v7570 = vshrl.u32 %v7569, 7
    %v7571 = vadd.s32 %v7570, 120
    %7572 = vset.pattern.permute.xlu0 %v7571
    %7573 = vperm.xlu0 %7572, %v4351
    %v7574 = vpop.permute.xlu0 %7573
    %v7575 = vlaneseq
    %v7576 = vshrl.u32 %v7575, 7
    %v7577 = vadd.s32 %v7576, 96
    %7578 = vset.pattern.permute.xlu0 %v7577
    %7579 = vperm.xlu0 %7578, %v4376
    %v7580 = vpop.permute.xlu0 %7579
    %v7581 = vlaneseq
    %v7582 = vshrl.u32 %v7581, 7
    %v7583 = vadd.s32 %v7582, 104
    %7584 = vset.pattern.permute.xlu0 %v7583
    %7585 = vperm.xlu0 %7584, %v4376
    %v7586 = vpop.permute.xlu0 %7585
    %v7587 = vlaneseq
    %v7588 = vshrl.u32 %v7587, 7
    %v7589 = vadd.s32 %v7588, 112
    %7590 = vset.pattern.permute.xlu0 %v7589
    %7591 = vperm.xlu0 %7590, %v4376
    %v7592 = vpop.permute.xlu0 %7591
    %v7593 = vlaneseq
    %v7594 = vshrl.u32 %v7593, 7
    %v7595 = vadd.s32 %v7594, 120
    %7596 = vset.pattern.permute.xlu0 %v7595
    %7597 = vperm.xlu0 %7596, %v4376
    %v7598 = vpop.permute.xlu0 %7597
    %v7599 = vlaneseq
    %v7600 = vshrl.u32 %v7599, 7
    %v7601 = vadd.s32 %v7600, 96
    %7602 = vset.pattern.permute.xlu0 %v7601
    %7603 = vperm.xlu0 %7602, %v4401
    %v7604 = vpop.permute.xlu0 %7603
    %v7605 = vlaneseq
    %v7606 = vshrl.u32 %v7605, 7
    %v7607 = vadd.s32 %v7606, 104
    %7608 = vset.pattern.permute.xlu0 %v7607
    %7609 = vperm.xlu0 %7608, %v4401
    %v7610 = vpop.permute.xlu0 %7609
    %v7611 = vlaneseq
    %v7612 = vshrl.u32 %v7611, 7
    %v7613 = vadd.s32 %v7612, 112
    %7614 = vset.pattern.permute.xlu0 %v7613
    %7615 = vperm.xlu0 %7614, %v4401
    %v7616 = vpop.permute.xlu0 %7615
    %v7617 = vlaneseq
    %v7618 = vshrl.u32 %v7617, 7
    %v7619 = vadd.s32 %v7618, 120
    %7620 = vset.pattern.permute.xlu0 %v7619
    %7621 = vperm.xlu0 %7620, %v4401
    %v7622 = vpop.permute.xlu0 %7621
    %v7623 = vlaneseq
    %v7624 = vshrl.u32 %v7623, 7
    %v7625 = vadd.s32 %v7624, 96
    %7626 = vset.pattern.permute.xlu0 %v7625
    %7627 = vperm.xlu0 %7626, %v4426
    %v7628 = vpop.permute.xlu0 %7627
    %v7629 = vlaneseq
    %v7630 = vshrl.u32 %v7629, 7
    %v7631 = vadd.s32 %v7630, 104
    %7632 = vset.pattern.permute.xlu0 %v7631
    %7633 = vperm.xlu0 %7632, %v4426
    %v7634 = vpop.permute.xlu0 %7633
    %v7635 = vlaneseq
    %v7636 = vshrl.u32 %v7635, 7
    %v7637 = vadd.s32 %v7636, 112
    %7638 = vset.pattern.permute.xlu0 %v7637
    %7639 = vperm.xlu0 %7638, %v4426
    %v7640 = vpop.permute.xlu0 %7639
    %v7641 = vlaneseq
    %v7642 = vshrl.u32 %v7641, 7
    %v7643 = vadd.s32 %v7642, 120
    %7644 = vset.pattern.permute.xlu0 %v7643
    %7645 = vperm.xlu0 %7644, %v4426
    %v7646 = vpop.permute.xlu0 %7645
    %v7647 = vlaneseq
    %v7648 = vshrl.u32 %v7647, 7
    %v7649 = vadd.s32 %v7648, 96
    %7650 = vset.pattern.permute.xlu0 %v7649
    %7651 = vperm.xlu0 %7650, %v4451
    %v7652 = vpop.permute.xlu0 %7651
    %v7653 = vlaneseq
    %v7654 = vshrl.u32 %v7653, 7
    %v7655 = vadd.s32 %v7654, 104
    %7656 = vset.pattern.permute.xlu0 %v7655
    %7657 = vperm.xlu0 %7656, %v4451
    %v7658 = vpop.permute.xlu0 %7657
    %v7659 = vlaneseq
    %v7660 = vshrl.u32 %v7659, 7
    %v7661 = vadd.s32 %v7660, 112
    %7662 = vset.pattern.permute.xlu0 %v7661
    %7663 = vperm.xlu0 %7662, %v4451
    %v7664 = vpop.permute.xlu0 %7663
    %v7665 = vlaneseq
    %v7666 = vshrl.u32 %v7665, 7
    %v7667 = vadd.s32 %v7666, 120
    %7668 = vset.pattern.permute.xlu0 %v7667
    %7669 = vperm.xlu0 %7668, %v4451
    %v7670 = vpop.permute.xlu0 %7669
    %v7671 = vlaneseq
    %v7672 = vshrl.u32 %v7671, 7
    %v7673 = vadd.s32 %v7672, 96
    %7674 = vset.pattern.permute.xlu0 %v7673
    %7675 = vperm.xlu0 %7674, %v4476
    %v7676 = vpop.permute.xlu0 %7675
    %v7677 = vlaneseq
    %v7678 = vshrl.u32 %v7677, 7
    %v7679 = vadd.s32 %v7678, 104
    %7680 = vset.pattern.permute.xlu0 %v7679
    %7681 = vperm.xlu0 %7680, %v4476
    %v7682 = vpop.permute.xlu0 %7681
    %v7683 = vlaneseq
    %v7684 = vshrl.u32 %v7683, 7
    %v7685 = vadd.s32 %v7684, 112
    %7686 = vset.pattern.permute.xlu0 %v7685
    %7687 = vperm.xlu0 %7686, %v4476
    %v7688 = vpop.permute.xlu0 %7687
    %v7689 = vlaneseq
    %v7690 = vshrl.u32 %v7689, 7
    %v7691 = vadd.s32 %v7690, 120
    %7692 = vset.pattern.permute.xlu0 %v7691
    %7693 = vperm.xlu0 %7692, %v4476
    %v7694 = vpop.permute.xlu0 %7693
    %v7695 = vlaneseq
    %v7696 = vshrl.u32 %v7695, 7
    %v7697 = vadd.s32 %v7696, 96
    %7698 = vset.pattern.permute.xlu0 %v7697
    %7699 = vperm.xlu0 %7698, %v4501
    %v7700 = vpop.permute.xlu0 %7699
    %v7701 = vlaneseq
    %v7702 = vshrl.u32 %v7701, 7
    %v7703 = vadd.s32 %v7702, 104
    %7704 = vset.pattern.permute.xlu0 %v7703
    %7705 = vperm.xlu0 %7704, %v4501
    %v7706 = vpop.permute.xlu0 %7705
    %v7707 = vlaneseq
    %v7708 = vshrl.u32 %v7707, 7
    %v7709 = vadd.s32 %v7708, 112
    %7710 = vset.pattern.permute.xlu0 %v7709
    %7711 = vperm.xlu0 %7710, %v4501
    %v7712 = vpop.permute.xlu0 %7711
    %v7713 = vlaneseq
    %v7714 = vshrl.u32 %v7713, 7
    %v7715 = vadd.s32 %v7714, 120
    %7716 = vset.pattern.permute.xlu0 %v7715
    %7717 = vperm.xlu0 %7716, %v4501
    %v7718 = vpop.permute.xlu0 %7717
    %v7719 = vlaneseq
    %v7720 = vshrl.u32 %v7719, 7
    %v7721 = vadd.s32 %v7720, 96
    %7722 = vset.pattern.permute.xlu0 %v7721
    %7723 = vperm.xlu0 %7722, %v4526
    %v7724 = vpop.permute.xlu0 %7723
    %v7725 = vlaneseq
    %v7726 = vshrl.u32 %v7725, 7
    %v7727 = vadd.s32 %v7726, 104
    %7728 = vset.pattern.permute.xlu0 %v7727
    %7729 = vperm.xlu0 %7728, %v4526
    %v7730 = vpop.permute.xlu0 %7729
    %v7731 = vlaneseq
    %v7732 = vshrl.u32 %v7731, 7
    %v7733 = vadd.s32 %v7732, 112
    %7734 = vset.pattern.permute.xlu0 %v7733
    %7735 = vperm.xlu0 %7734, %v4526
    %v7736 = vpop.permute.xlu0 %7735
    %v7737 = vlaneseq
    %v7738 = vshrl.u32 %v7737, 7
    %v7739 = vadd.s32 %v7738, 120
    %7740 = vset.pattern.permute.xlu0 %v7739
    %7741 = vperm.xlu0 %7740, %v4526
    %v7742 = vpop.permute.xlu0 %7741
    %v7743 = vlaneseq
    %v7744 = vshrl.u32 %v7743, 7
    %v7745 = vadd.s32 %v7744, 96
    %7746 = vset.pattern.permute.xlu0 %v7745
    %7747 = vperm.xlu0 %7746, %v4551
    %v7748 = vpop.permute.xlu0 %7747
    %v7749 = vlaneseq
    %v7750 = vshrl.u32 %v7749, 7
    %v7751 = vadd.s32 %v7750, 104
    %7752 = vset.pattern.permute.xlu0 %v7751
    %7753 = vperm.xlu0 %7752, %v4551
    %v7754 = vpop.permute.xlu0 %7753
    %v7755 = vlaneseq
    %v7756 = vshrl.u32 %v7755, 7
    %v7757 = vadd.s32 %v7756, 112
    %7758 = vset.pattern.permute.xlu0 %v7757
    %7759 = vperm.xlu0 %7758, %v4551
    %v7760 = vpop.permute.xlu0 %7759
    %v7761 = vlaneseq
    %v7762 = vshrl.u32 %v7761, 7
    %v7763 = vadd.s32 %v7762, 120
    %7764 = vset.pattern.permute.xlu0 %v7763
    %7765 = vperm.xlu0 %7764, %v4551
    %v7766 = vpop.permute.xlu0 %7765
    %v7767 = vlaneseq
    %v7768 = vshrl.u32 %v7767, 7
    %v7769 = vadd.s32 %v7768, 96
    %7770 = vset.pattern.permute.xlu0 %v7769
    %7771 = vperm.xlu0 %7770, %v4576
    %v7772 = vpop.permute.xlu0 %7771
    %v7773 = vlaneseq
    %v7774 = vshrl.u32 %v7773, 7
    %v7775 = vadd.s32 %v7774, 104
    %7776 = vset.pattern.permute.xlu0 %v7775
    %7777 = vperm.xlu0 %7776, %v4576
    %v7778 = vpop.permute.xlu0 %7777
    %v7779 = vlaneseq
    %v7780 = vshrl.u32 %v7779, 7
    %v7781 = vadd.s32 %v7780, 112
    %7782 = vset.pattern.permute.xlu0 %v7781
    %7783 = vperm.xlu0 %7782, %v4576
    %v7784 = vpop.permute.xlu0 %7783
    %v7785 = vlaneseq
    %v7786 = vshrl.u32 %v7785, 7
    %v7787 = vadd.s32 %v7786, 120
    %7788 = vset.pattern.permute.xlu0 %v7787
    %7789 = vperm.xlu0 %7788, %v4576
    %v7790 = vpop.permute.xlu0 %7789
    %v7791 = vlaneseq
    %v7792 = vshrl.u32 %v7791, 7
    %v7793 = vadd.s32 %v7792, 96
    %7794 = vset.pattern.permute.xlu0 %v7793
    %7795 = vperm.xlu0 %7794, %v4601
    %v7796 = vpop.permute.xlu0 %7795
    %v7797 = vlaneseq
    %v7798 = vshrl.u32 %v7797, 7
    %v7799 = vadd.s32 %v7798, 104
    %7800 = vset.pattern.permute.xlu0 %v7799
    %7801 = vperm.xlu0 %7800, %v4601
    %v7802 = vpop.permute.xlu0 %7801
    %v7803 = vlaneseq
    %v7804 = vshrl.u32 %v7803, 7
    %v7805 = vadd.s32 %v7804, 112
    %7806 = vset.pattern.permute.xlu0 %v7805
    %7807 = vperm.xlu0 %7806, %v4601
    %v7808 = vpop.permute.xlu0 %7807
    %v7809 = vlaneseq
    %v7810 = vshrl.u32 %v7809, 7
    %v7811 = vadd.s32 %v7810, 120
    %7812 = vset.pattern.permute.xlu0 %v7811
    %7813 = vperm.xlu0 %7812, %v4601
    %v7814 = vpop.permute.xlu0 %7813
    %v7815 = vlaneseq
    %v7816 = vshrl.u32 %v7815, 7
    %v7817 = vadd.s32 %v7816, 96
    %7818 = vset.pattern.permute.xlu0 %v7817
    %7819 = vperm.xlu0 %7818, %v4626
    %v7820 = vpop.permute.xlu0 %7819
    %v7821 = vlaneseq
    %v7822 = vshrl.u32 %v7821, 7
    %v7823 = vadd.s32 %v7822, 104
    %7824 = vset.pattern.permute.xlu0 %v7823
    %7825 = vperm.xlu0 %7824, %v4626
    %v7826 = vpop.permute.xlu0 %7825
    %v7827 = vlaneseq
    %v7828 = vshrl.u32 %v7827, 7
    %v7829 = vadd.s32 %v7828, 112
    %7830 = vset.pattern.permute.xlu0 %v7829
    %7831 = vperm.xlu0 %7830, %v4626
    %v7832 = vpop.permute.xlu0 %7831
    %v7833 = vlaneseq
    %v7834 = vshrl.u32 %v7833, 7
    %v7835 = vadd.s32 %v7834, 120
    %7836 = vset.pattern.permute.xlu0 %v7835
    %7837 = vperm.xlu0 %7836, %v4626
    %v7838 = vpop.permute.xlu0 %7837
    %v7839 = vlaneseq
    %v7840 = vshrl.u32 %v7839, 7
    %v7841 = vadd.s32 %v7840, 96
    %7842 = vset.pattern.permute.xlu0 %v7841
    %7843 = vperm.xlu0 %7842, %v4651
    %v7844 = vpop.permute.xlu0 %7843
    %v7845 = vlaneseq
    %v7846 = vshrl.u32 %v7845, 7
    %v7847 = vadd.s32 %v7846, 104
    %7848 = vset.pattern.permute.xlu0 %v7847
    %7849 = vperm.xlu0 %7848, %v4651
    %v7850 = vpop.permute.xlu0 %7849
    %v7851 = vlaneseq
    %v7852 = vshrl.u32 %v7851, 7
    %v7853 = vadd.s32 %v7852, 112
    %7854 = vset.pattern.permute.xlu0 %v7853
    %7855 = vperm.xlu0 %7854, %v4651
    %v7856 = vpop.permute.xlu0 %7855
    %v7857 = vlaneseq
    %v7858 = vshrl.u32 %v7857, 7
    %v7859 = vadd.s32 %v7858, 120
    %7860 = vset.pattern.permute.xlu0 %v7859
    %7861 = vperm.xlu0 %7860, %v4651
    %v7862 = vpop.permute.xlu0 %7861
    %v7863 = vlaneseq
    %v7864 = vshrl.u32 %v7863, 7
    %v7865 = vadd.s32 %v7864, 96
    %7866 = vset.pattern.permute.xlu0 %v7865
    %7867 = vperm.xlu0 %7866, %v4676
    %v7868 = vpop.permute.xlu0 %7867
    %v7869 = vlaneseq
    %v7870 = vshrl.u32 %v7869, 7
    %v7871 = vadd.s32 %v7870, 104
    %7872 = vset.pattern.permute.xlu0 %v7871
    %7873 = vperm.xlu0 %7872, %v4676
    %v7874 = vpop.permute.xlu0 %7873
    %v7875 = vlaneseq
    %v7876 = vshrl.u32 %v7875, 7
    %v7877 = vadd.s32 %v7876, 112
    %7878 = vset.pattern.permute.xlu0 %v7877
    %7879 = vperm.xlu0 %7878, %v4676
    %v7880 = vpop.permute.xlu0 %7879
    %v7881 = vlaneseq
    %v7882 = vshrl.u32 %v7881, 7
    %v7883 = vadd.s32 %v7882, 120
    %7884 = vset.pattern.permute.xlu0 %v7883
    %7885 = vperm.xlu0 %7884, %v4676
    %v7886 = vpop.permute.xlu0 %7885
    %v7887 = vlaneseq
    %v7888 = vshrl.u32 %v7887, 7
    %v7889 = vadd.s32 %v7888, 96
    %7890 = vset.pattern.permute.xlu0 %v7889
    %7891 = vperm.xlu0 %7890, %v4701
    %v7892 = vpop.permute.xlu0 %7891
    %v7893 = vlaneseq
    %v7894 = vshrl.u32 %v7893, 7
    %v7895 = vadd.s32 %v7894, 104
    %7896 = vset.pattern.permute.xlu0 %v7895
    %7897 = vperm.xlu0 %7896, %v4701
    %v7898 = vpop.permute.xlu0 %7897
    %v7899 = vlaneseq
    %v7900 = vshrl.u32 %v7899, 7
    %v7901 = vadd.s32 %v7900, 112
    %7902 = vset.pattern.permute.xlu0 %v7901
    %7903 = vperm.xlu0 %7902, %v4701
    %v7904 = vpop.permute.xlu0 %7903
    %v7905 = vlaneseq
    %v7906 = vshrl.u32 %v7905, 7
    %v7907 = vadd.s32 %v7906, 120
    %7908 = vset.pattern.permute.xlu0 %v7907
    %7909 = vperm.xlu0 %7908, %v4701
    %v7910 = vpop.permute.xlu0 %7909
    %v7911 = vlaneseq
    %v7912 = vshrl.u32 %v7911, 7
    %v7913 = vadd.s32 %v7912, 96
    %7914 = vset.pattern.permute.xlu0 %v7913
    %7915 = vperm.xlu0 %7914, %v4726
    %v7916 = vpop.permute.xlu0 %7915
    %v7917 = vlaneseq
    %v7918 = vshrl.u32 %v7917, 7
    %v7919 = vadd.s32 %v7918, 104
    %7920 = vset.pattern.permute.xlu0 %v7919
    %7921 = vperm.xlu0 %7920, %v4726
    %v7922 = vpop.permute.xlu0 %7921
    %v7923 = vlaneseq
    %v7924 = vshrl.u32 %v7923, 7
    %v7925 = vadd.s32 %v7924, 112
    %7926 = vset.pattern.permute.xlu0 %v7925
    %7927 = vperm.xlu0 %7926, %v4726
    %v7928 = vpop.permute.xlu0 %7927
    %v7929 = vlaneseq
    %v7930 = vshrl.u32 %v7929, 7
    %v7931 = vadd.s32 %v7930, 120
    %7932 = vset.pattern.permute.xlu0 %v7931
    %7933 = vperm.xlu0 %7932, %v4726
    %v7934 = vpop.permute.xlu0 %7933
    %vm7935 = vcmp.eq.s32.totalorder %v7556, %v78
    %vm7936 = vcmp.eq.s32.totalorder %v7562, %v78
    %vm7937 = vcmp.eq.s32.totalorder %v7568, %v78
    %vm7938 = vcmp.eq.s32.totalorder %v7574, %v78
    %vm7939 = vcmp.eq.s32.totalorder %v7580, %v78
    %vm7940 = vcmp.eq.s32.totalorder %v7586, %v78
    %vm7941 = vcmp.eq.s32.totalorder %v7592, %v78
    %vm7942 = vcmp.eq.s32.totalorder %v7598, %v78
    %vm7943 = vcmp.eq.s32.totalorder %v7604, %v78
    %vm7944 = vcmp.eq.s32.totalorder %v7610, %v78
    %vm7945 = vcmp.eq.s32.totalorder %v7616, %v78
    %vm7946 = vcmp.eq.s32.totalorder %v7622, %v78
    %vm7947 = vcmp.eq.s32.totalorder %v7628, %v78
    %vm7948 = vcmp.eq.s32.totalorder %v7634, %v78
    %vm7949 = vcmp.eq.s32.totalorder %v7640, %v78
    %vm7950 = vcmp.eq.s32.totalorder %v7646, %v78
    %vm7951 = vcmp.eq.s32.totalorder %v7652, %v78
    %vm7952 = vcmp.eq.s32.totalorder %v7658, %v78
    %vm7953 = vcmp.eq.s32.totalorder %v7664, %v78
    %vm7954 = vcmp.eq.s32.totalorder %v7670, %v78
    %vm7955 = vcmp.eq.s32.totalorder %v7676, %v78
    %vm7956 = vcmp.eq.s32.totalorder %v7682, %v78
    %vm7957 = vcmp.eq.s32.totalorder %v7688, %v78
    %vm7958 = vcmp.eq.s32.totalorder %v7694, %v78
    %vm7959 = vcmp.eq.s32.totalorder %v7700, %v78
    %vm7960 = vcmp.eq.s32.totalorder %v7706, %v78
    %vm7961 = vcmp.eq.s32.totalorder %v7712, %v78
    %vm7962 = vcmp.eq.s32.totalorder %v7718, %v78
    %vm7963 = vcmp.eq.s32.totalorder %v7724, %v78
    %vm7964 = vcmp.eq.s32.totalorder %v7730, %v78
    %vm7965 = vcmp.eq.s32.totalorder %v7736, %v78
    %vm7966 = vcmp.eq.s32.totalorder %v7742, %v78
    %vm7967 = vcmp.eq.s32.totalorder %v7748, %v78
    %vm7968 = vcmp.eq.s32.totalorder %v7754, %v78
    %vm7969 = vcmp.eq.s32.totalorder %v7760, %v78
    %vm7970 = vcmp.eq.s32.totalorder %v7766, %v78
    %vm7971 = vcmp.eq.s32.totalorder %v7772, %v78
    %vm7972 = vcmp.eq.s32.totalorder %v7778, %v78
    %vm7973 = vcmp.eq.s32.totalorder %v7784, %v78
    %vm7974 = vcmp.eq.s32.totalorder %v7790, %v78
    %vm7975 = vcmp.eq.s32.totalorder %v7796, %v78
    %vm7976 = vcmp.eq.s32.totalorder %v7802, %v78
    %vm7977 = vcmp.eq.s32.totalorder %v7808, %v78
    %vm7978 = vcmp.eq.s32.totalorder %v7814, %v78
    %vm7979 = vcmp.eq.s32.totalorder %v7820, %v78
    %vm7980 = vcmp.eq.s32.totalorder %v7826, %v78
    %vm7981 = vcmp.eq.s32.totalorder %v7832, %v78
    %vm7982 = vcmp.eq.s32.totalorder %v7838, %v78
    %vm7983 = vcmp.eq.s32.totalorder %v7844, %v78
    %vm7984 = vcmp.eq.s32.totalorder %v7850, %v78
    %vm7985 = vcmp.eq.s32.totalorder %v7856, %v78
    %vm7986 = vcmp.eq.s32.totalorder %v7862, %v78
    %vm7987 = vcmp.eq.s32.totalorder %v7868, %v78
    %vm7988 = vcmp.eq.s32.totalorder %v7874, %v78
    %vm7989 = vcmp.eq.s32.totalorder %v7880, %v78
    %vm7990 = vcmp.eq.s32.totalorder %v7886, %v78
    %vm7991 = vcmp.eq.s32.totalorder %v7892, %v78
    %vm7992 = vcmp.eq.s32.totalorder %v7898, %v78
    %vm7993 = vcmp.eq.s32.totalorder %v7904, %v78
    %vm7994 = vcmp.eq.s32.totalorder %v7910, %v78
    %vm7995 = vcmp.eq.s32.totalorder %v7916, %v78
    %vm7996 = vcmp.eq.s32.totalorder %v7922, %v78
    %vm7997 = vcmp.eq.s32.totalorder %v7928, %v78
    %vm7998 = vcmp.eq.s32.totalorder %v7934, %v78
    %v7999 = vlaneseq
    %v8000 = vshrl.u32 %v7999, 7
    %v8001 = vadd.s32 %v8000, 96
    %8002 = vset.pattern.permute.xlu0 %v8001
    %8003 = vperm.xlu0 %8002, %v4815
    %v8004 = vpop.permute.xlu0 %8003
    %v8005 = vlaneseq
    %v8006 = vshrl.u32 %v8005, 7
    %v8007 = vadd.s32 %v8006, 104
    %8008 = vset.pattern.permute.xlu0 %v8007
    %8009 = vperm.xlu0 %8008, %v4815
    %v8010 = vpop.permute.xlu0 %8009
    %v8011 = vlaneseq
    %v8012 = vshrl.u32 %v8011, 7
    %v8013 = vadd.s32 %v8012, 112
    %8014 = vset.pattern.permute.xlu0 %v8013
    %8015 = vperm.xlu0 %8014, %v4815
    %v8016 = vpop.permute.xlu0 %8015
    %v8017 = vlaneseq
    %v8018 = vshrl.u32 %v8017, 7
    %v8019 = vadd.s32 %v8018, 120
    %8020 = vset.pattern.permute.xlu0 %v8019
    %8021 = vperm.xlu0 %8020, %v4815
    %v8022 = vpop.permute.xlu0 %8021
    %v8023 = vlaneseq
    %v8024 = vshrl.u32 %v8023, 7
    %v8025 = vadd.s32 %v8024, 96
    %8026 = vset.pattern.permute.xlu0 %v8025
    %8027 = vperm.xlu0 %8026, %v4840
    %v8028 = vpop.permute.xlu0 %8027
    %v8029 = vlaneseq
    %v8030 = vshrl.u32 %v8029, 7
    %v8031 = vadd.s32 %v8030, 104
    %8032 = vset.pattern.permute.xlu0 %v8031
    %8033 = vperm.xlu0 %8032, %v4840
    %v8034 = vpop.permute.xlu0 %8033
    %v8035 = vlaneseq
    %v8036 = vshrl.u32 %v8035, 7
    %v8037 = vadd.s32 %v8036, 112
    %8038 = vset.pattern.permute.xlu0 %v8037
    %8039 = vperm.xlu0 %8038, %v4840
    %v8040 = vpop.permute.xlu0 %8039
    %v8041 = vlaneseq
    %v8042 = vshrl.u32 %v8041, 7
    %v8043 = vadd.s32 %v8042, 120
    %8044 = vset.pattern.permute.xlu0 %v8043
    %8045 = vperm.xlu0 %8044, %v4840
    %v8046 = vpop.permute.xlu0 %8045
    %v8047 = vlaneseq
    %v8048 = vshrl.u32 %v8047, 7
    %v8049 = vadd.s32 %v8048, 96
    %8050 = vset.pattern.permute.xlu0 %v8049
    %8051 = vperm.xlu0 %8050, %v4865
    %v8052 = vpop.permute.xlu0 %8051
    %v8053 = vlaneseq
    %v8054 = vshrl.u32 %v8053, 7
    %v8055 = vadd.s32 %v8054, 104
    %8056 = vset.pattern.permute.xlu0 %v8055
    %8057 = vperm.xlu0 %8056, %v4865
    %v8058 = vpop.permute.xlu0 %8057
    %v8059 = vlaneseq
    %v8060 = vshrl.u32 %v8059, 7
    %v8061 = vadd.s32 %v8060, 112
    %8062 = vset.pattern.permute.xlu0 %v8061
    %8063 = vperm.xlu0 %8062, %v4865
    %v8064 = vpop.permute.xlu0 %8063
    %v8065 = vlaneseq
    %v8066 = vshrl.u32 %v8065, 7
    %v8067 = vadd.s32 %v8066, 120
    %8068 = vset.pattern.permute.xlu0 %v8067
    %8069 = vperm.xlu0 %8068, %v4865
    %v8070 = vpop.permute.xlu0 %8069
    %v8071 = vlaneseq
    %v8072 = vshrl.u32 %v8071, 7
    %v8073 = vadd.s32 %v8072, 96
    %8074 = vset.pattern.permute.xlu0 %v8073
    %8075 = vperm.xlu0 %8074, %v4890
    %v8076 = vpop.permute.xlu0 %8075
    %v8077 = vlaneseq
    %v8078 = vshrl.u32 %v8077, 7
    %v8079 = vadd.s32 %v8078, 104
    %8080 = vset.pattern.permute.xlu0 %v8079
    %8081 = vperm.xlu0 %8080, %v4890
    %v8082 = vpop.permute.xlu0 %8081
    %v8083 = vlaneseq
    %v8084 = vshrl.u32 %v8083, 7
    %v8085 = vadd.s32 %v8084, 112
    %8086 = vset.pattern.permute.xlu0 %v8085
    %8087 = vperm.xlu0 %8086, %v4890
    %v8088 = vpop.permute.xlu0 %8087
    %v8089 = vlaneseq
    %v8090 = vshrl.u32 %v8089, 7
    %v8091 = vadd.s32 %v8090, 120
    %8092 = vset.pattern.permute.xlu0 %v8091
    %8093 = vperm.xlu0 %8092, %v4890
    %v8094 = vpop.permute.xlu0 %8093
    %v8095 = vlaneseq
    %v8096 = vshrl.u32 %v8095, 7
    %v8097 = vadd.s32 %v8096, 96
    %8098 = vset.pattern.permute.xlu0 %v8097
    %8099 = vperm.xlu0 %8098, %v4915
    %v8100 = vpop.permute.xlu0 %8099
    %v8101 = vlaneseq
    %v8102 = vshrl.u32 %v8101, 7
    %v8103 = vadd.s32 %v8102, 104
    %8104 = vset.pattern.permute.xlu0 %v8103
    %8105 = vperm.xlu0 %8104, %v4915
    %v8106 = vpop.permute.xlu0 %8105
    %v8107 = vlaneseq
    %v8108 = vshrl.u32 %v8107, 7
    %v8109 = vadd.s32 %v8108, 112
    %8110 = vset.pattern.permute.xlu0 %v8109
    %8111 = vperm.xlu0 %8110, %v4915
    %v8112 = vpop.permute.xlu0 %8111
    %v8113 = vlaneseq
    %v8114 = vshrl.u32 %v8113, 7
    %v8115 = vadd.s32 %v8114, 120
    %8116 = vset.pattern.permute.xlu0 %v8115
    %8117 = vperm.xlu0 %8116, %v4915
    %v8118 = vpop.permute.xlu0 %8117
    %v8119 = vlaneseq
    %v8120 = vshrl.u32 %v8119, 7
    %v8121 = vadd.s32 %v8120, 96
    %8122 = vset.pattern.permute.xlu0 %v8121
    %8123 = vperm.xlu0 %8122, %v4940
    %v8124 = vpop.permute.xlu0 %8123
    %v8125 = vlaneseq
    %v8126 = vshrl.u32 %v8125, 7
    %v8127 = vadd.s32 %v8126, 104
    %8128 = vset.pattern.permute.xlu0 %v8127
    %8129 = vperm.xlu0 %8128, %v4940
    %v8130 = vpop.permute.xlu0 %8129
    %v8131 = vlaneseq
    %v8132 = vshrl.u32 %v8131, 7
    %v8133 = vadd.s32 %v8132, 112
    %8134 = vset.pattern.permute.xlu0 %v8133
    %8135 = vperm.xlu0 %8134, %v4940
    %v8136 = vpop.permute.xlu0 %8135
    %v8137 = vlaneseq
    %v8138 = vshrl.u32 %v8137, 7
    %v8139 = vadd.s32 %v8138, 120
    %8140 = vset.pattern.permute.xlu0 %v8139
    %8141 = vperm.xlu0 %8140, %v4940
    %v8142 = vpop.permute.xlu0 %8141
    %v8143 = vlaneseq
    %v8144 = vshrl.u32 %v8143, 7
    %v8145 = vadd.s32 %v8144, 96
    %8146 = vset.pattern.permute.xlu0 %v8145
    %8147 = vperm.xlu0 %8146, %v4965
    %v8148 = vpop.permute.xlu0 %8147
    %v8149 = vlaneseq
    %v8150 = vshrl.u32 %v8149, 7
    %v8151 = vadd.s32 %v8150, 104
    %8152 = vset.pattern.permute.xlu0 %v8151
    %8153 = vperm.xlu0 %8152, %v4965
    %v8154 = vpop.permute.xlu0 %8153
    %v8155 = vlaneseq
    %v8156 = vshrl.u32 %v8155, 7
    %v8157 = vadd.s32 %v8156, 112
    %8158 = vset.pattern.permute.xlu0 %v8157
    %8159 = vperm.xlu0 %8158, %v4965
    %v8160 = vpop.permute.xlu0 %8159
    %v8161 = vlaneseq
    %v8162 = vshrl.u32 %v8161, 7
    %v8163 = vadd.s32 %v8162, 120
    %8164 = vset.pattern.permute.xlu0 %v8163
    %8165 = vperm.xlu0 %8164, %v4965
    %v8166 = vpop.permute.xlu0 %8165
    %v8167 = vlaneseq
    %v8168 = vshrl.u32 %v8167, 7
    %v8169 = vadd.s32 %v8168, 96
    %8170 = vset.pattern.permute.xlu0 %v8169
    %8171 = vperm.xlu0 %8170, %v4990
    %v8172 = vpop.permute.xlu0 %8171
    %v8173 = vlaneseq
    %v8174 = vshrl.u32 %v8173, 7
    %v8175 = vadd.s32 %v8174, 104
    %8176 = vset.pattern.permute.xlu0 %v8175
    %8177 = vperm.xlu0 %8176, %v4990
    %v8178 = vpop.permute.xlu0 %8177
    %v8179 = vlaneseq
    %v8180 = vshrl.u32 %v8179, 7
    %v8181 = vadd.s32 %v8180, 112
    %8182 = vset.pattern.permute.xlu0 %v8181
    %8183 = vperm.xlu0 %8182, %v4990
    %v8184 = vpop.permute.xlu0 %8183
    %v8185 = vlaneseq
    %v8186 = vshrl.u32 %v8185, 7
    %v8187 = vadd.s32 %v8186, 120
    %8188 = vset.pattern.permute.xlu0 %v8187
    %8189 = vperm.xlu0 %8188, %v4990
    %v8190 = vpop.permute.xlu0 %8189
    %v8191 = vlaneseq
    %v8192 = vshrl.u32 %v8191, 7
    %v8193 = vadd.s32 %v8192, 96
    %8194 = vset.pattern.permute.xlu0 %v8193
    %8195 = vperm.xlu0 %8194, %v5015
    %v8196 = vpop.permute.xlu0 %8195
    %v8197 = vlaneseq
    %v8198 = vshrl.u32 %v8197, 7
    %v8199 = vadd.s32 %v8198, 104
    %8200 = vset.pattern.permute.xlu0 %v8199
    %8201 = vperm.xlu0 %8200, %v5015
    %v8202 = vpop.permute.xlu0 %8201
    %v8203 = vlaneseq
    %v8204 = vshrl.u32 %v8203, 7
    %v8205 = vadd.s32 %v8204, 112
    %8206 = vset.pattern.permute.xlu0 %v8205
    %8207 = vperm.xlu0 %8206, %v5015
    %v8208 = vpop.permute.xlu0 %8207
    %v8209 = vlaneseq
    %v8210 = vshrl.u32 %v8209, 7
    %v8211 = vadd.s32 %v8210, 120
    %8212 = vset.pattern.permute.xlu0 %v8211
    %8213 = vperm.xlu0 %8212, %v5015
    %v8214 = vpop.permute.xlu0 %8213
    %v8215 = vlaneseq
    %v8216 = vshrl.u32 %v8215, 7
    %v8217 = vadd.s32 %v8216, 96
    %8218 = vset.pattern.permute.xlu0 %v8217
    %8219 = vperm.xlu0 %8218, %v5040
    %v8220 = vpop.permute.xlu0 %8219
    %v8221 = vlaneseq
    %v8222 = vshrl.u32 %v8221, 7
    %v8223 = vadd.s32 %v8222, 104
    %8224 = vset.pattern.permute.xlu0 %v8223
    %8225 = vperm.xlu0 %8224, %v5040
    %v8226 = vpop.permute.xlu0 %8225
    %v8227 = vlaneseq
    %v8228 = vshrl.u32 %v8227, 7
    %v8229 = vadd.s32 %v8228, 112
    %8230 = vset.pattern.permute.xlu0 %v8229
    %8231 = vperm.xlu0 %8230, %v5040
    %v8232 = vpop.permute.xlu0 %8231
    %v8233 = vlaneseq
    %v8234 = vshrl.u32 %v8233, 7
    %v8235 = vadd.s32 %v8234, 120
    %8236 = vset.pattern.permute.xlu0 %v8235
    %8237 = vperm.xlu0 %8236, %v5040
    %v8238 = vpop.permute.xlu0 %8237
    %v8239 = vlaneseq
    %v8240 = vshrl.u32 %v8239, 7
    %v8241 = vadd.s32 %v8240, 96
    %8242 = vset.pattern.permute.xlu0 %v8241
    %8243 = vperm.xlu0 %8242, %v5065
    %v8244 = vpop.permute.xlu0 %8243
    %v8245 = vlaneseq
    %v8246 = vshrl.u32 %v8245, 7
    %v8247 = vadd.s32 %v8246, 104
    %8248 = vset.pattern.permute.xlu0 %v8247
    %8249 = vperm.xlu0 %8248, %v5065
    %v8250 = vpop.permute.xlu0 %8249
    %v8251 = vlaneseq
    %v8252 = vshrl.u32 %v8251, 7
    %v8253 = vadd.s32 %v8252, 112
    %8254 = vset.pattern.permute.xlu0 %v8253
    %8255 = vperm.xlu0 %8254, %v5065
    %v8256 = vpop.permute.xlu0 %8255
    %v8257 = vlaneseq
    %v8258 = vshrl.u32 %v8257, 7
    %v8259 = vadd.s32 %v8258, 120
    %8260 = vset.pattern.permute.xlu0 %v8259
    %8261 = vperm.xlu0 %8260, %v5065
    %v8262 = vpop.permute.xlu0 %8261
    %v8263 = vlaneseq
    %v8264 = vshrl.u32 %v8263, 7
    %v8265 = vadd.s32 %v8264, 96
    %8266 = vset.pattern.permute.xlu0 %v8265
    %8267 = vperm.xlu0 %8266, %v5090
    %v8268 = vpop.permute.xlu0 %8267
    %v8269 = vlaneseq
    %v8270 = vshrl.u32 %v8269, 7
    %v8271 = vadd.s32 %v8270, 104
    %8272 = vset.pattern.permute.xlu0 %v8271
    %8273 = vperm.xlu0 %8272, %v5090
    %v8274 = vpop.permute.xlu0 %8273
    %v8275 = vlaneseq
    %v8276 = vshrl.u32 %v8275, 7
    %v8277 = vadd.s32 %v8276, 112
    %8278 = vset.pattern.permute.xlu0 %v8277
    %8279 = vperm.xlu0 %8278, %v5090
    %v8280 = vpop.permute.xlu0 %8279
    %v8281 = vlaneseq
    %v8282 = vshrl.u32 %v8281, 7
    %v8283 = vadd.s32 %v8282, 120
    %8284 = vset.pattern.permute.xlu0 %v8283
    %8285 = vperm.xlu0 %8284, %v5090
    %v8286 = vpop.permute.xlu0 %8285
    %v8287 = vlaneseq
    %v8288 = vshrl.u32 %v8287, 7
    %v8289 = vadd.s32 %v8288, 96
    %8290 = vset.pattern.permute.xlu0 %v8289
    %8291 = vperm.xlu0 %8290, %v5115
    %v8292 = vpop.permute.xlu0 %8291
    %v8293 = vlaneseq
    %v8294 = vshrl.u32 %v8293, 7
    %v8295 = vadd.s32 %v8294, 104
    %8296 = vset.pattern.permute.xlu0 %v8295
    %8297 = vperm.xlu0 %8296, %v5115
    %v8298 = vpop.permute.xlu0 %8297
    %v8299 = vlaneseq
    %v8300 = vshrl.u32 %v8299, 7
    %v8301 = vadd.s32 %v8300, 112
    %8302 = vset.pattern.permute.xlu0 %v8301
    %8303 = vperm.xlu0 %8302, %v5115
    %v8304 = vpop.permute.xlu0 %8303
    %v8305 = vlaneseq
    %v8306 = vshrl.u32 %v8305, 7
    %v8307 = vadd.s32 %v8306, 120
    %8308 = vset.pattern.permute.xlu0 %v8307
    %8309 = vperm.xlu0 %8308, %v5115
    %v8310 = vpop.permute.xlu0 %8309
    %v8311 = vlaneseq
    %v8312 = vshrl.u32 %v8311, 7
    %v8313 = vadd.s32 %v8312, 96
    %8314 = vset.pattern.permute.xlu0 %v8313
    %8315 = vperm.xlu0 %8314, %v5140
    %v8316 = vpop.permute.xlu0 %8315
    %v8317 = vlaneseq
    %v8318 = vshrl.u32 %v8317, 7
    %v8319 = vadd.s32 %v8318, 104
    %8320 = vset.pattern.permute.xlu0 %v8319
    %8321 = vperm.xlu0 %8320, %v5140
    %v8322 = vpop.permute.xlu0 %8321
    %v8323 = vlaneseq
    %v8324 = vshrl.u32 %v8323, 7
    %v8325 = vadd.s32 %v8324, 112
    %8326 = vset.pattern.permute.xlu0 %v8325
    %8327 = vperm.xlu0 %8326, %v5140
    %v8328 = vpop.permute.xlu0 %8327
    %v8329 = vlaneseq
    %v8330 = vshrl.u32 %v8329, 7
    %v8331 = vadd.s32 %v8330, 120
    %8332 = vset.pattern.permute.xlu0 %v8331
    %8333 = vperm.xlu0 %8332, %v5140
    %v8334 = vpop.permute.xlu0 %8333
    %v8335 = vlaneseq
    %v8336 = vshrl.u32 %v8335, 7
    %v8337 = vadd.s32 %v8336, 96
    %8338 = vset.pattern.permute.xlu0 %v8337
    %8339 = vperm.xlu0 %8338, %v5165
    %v8340 = vpop.permute.xlu0 %8339
    %v8341 = vlaneseq
    %v8342 = vshrl.u32 %v8341, 7
    %v8343 = vadd.s32 %v8342, 104
    %8344 = vset.pattern.permute.xlu0 %v8343
    %8345 = vperm.xlu0 %8344, %v5165
    %v8346 = vpop.permute.xlu0 %8345
    %v8347 = vlaneseq
    %v8348 = vshrl.u32 %v8347, 7
    %v8349 = vadd.s32 %v8348, 112
    %8350 = vset.pattern.permute.xlu0 %v8349
    %8351 = vperm.xlu0 %8350, %v5165
    %v8352 = vpop.permute.xlu0 %8351
    %v8353 = vlaneseq
    %v8354 = vshrl.u32 %v8353, 7
    %v8355 = vadd.s32 %v8354, 120
    %8356 = vset.pattern.permute.xlu0 %v8355
    %8357 = vperm.xlu0 %8356, %v5165
    %v8358 = vpop.permute.xlu0 %8357
    %v8359 = vlaneseq
    %v8360 = vshrl.u32 %v8359, 7
    %v8361 = vadd.s32 %v8360, 96
    %8362 = vset.pattern.permute.xlu0 %v8361
    %8363 = vperm.xlu0 %8362, %v5190
    %v8364 = vpop.permute.xlu0 %8363
    %v8365 = vlaneseq
    %v8366 = vshrl.u32 %v8365, 7
    %v8367 = vadd.s32 %v8366, 104
    %8368 = vset.pattern.permute.xlu0 %v8367
    %8369 = vperm.xlu0 %8368, %v5190
    %v8370 = vpop.permute.xlu0 %8369
    %v8371 = vlaneseq
    %v8372 = vshrl.u32 %v8371, 7
    %v8373 = vadd.s32 %v8372, 112
    %8374 = vset.pattern.permute.xlu0 %v8373
    %8375 = vperm.xlu0 %8374, %v5190
    %v8376 = vpop.permute.xlu0 %8375
    %v8377 = vlaneseq
    %v8378 = vshrl.u32 %v8377, 7
    %v8379 = vadd.s32 %v8378, 120
    %8380 = vset.pattern.permute.xlu0 %v8379
    %8381 = vperm.xlu0 %8380, %v5190
    %v8382 = vpop.permute.xlu0 %8381
    %v8383 = vsel %vm7935, %v8004, 0.0
    %v8384 = vsel %vm7936, %v8010, 0.0
    %v8385 = vsel %vm7937, %v8016, 0.0
    %v8386 = vsel %vm7938, %v8022, 0.0
    %v8387 = vsel %vm7939, %v8028, 0.0
    %v8388 = vsel %vm7940, %v8034, 0.0
    %v8389 = vsel %vm7941, %v8040, 0.0
    %v8390 = vsel %vm7942, %v8046, 0.0
    %v8391 = vsel %vm7943, %v8052, 0.0
    %v8392 = vsel %vm7944, %v8058, 0.0
    %v8393 = vsel %vm7945, %v8064, 0.0
    %v8394 = vsel %vm7946, %v8070, 0.0
    %v8395 = vsel %vm7947, %v8076, 0.0
    %v8396 = vsel %vm7948, %v8082, 0.0
    %v8397 = vsel %vm7949, %v8088, 0.0
    %v8398 = vsel %vm7950, %v8094, 0.0
    %v8399 = vsel %vm7951, %v8100, 0.0
    %v8400 = vsel %vm7952, %v8106, 0.0
    %v8401 = vsel %vm7953, %v8112, 0.0
    %v8402 = vsel %vm7954, %v8118, 0.0
    %v8403 = vsel %vm7955, %v8124, 0.0
    %v8404 = vsel %vm7956, %v8130, 0.0
    %v8405 = vsel %vm7957, %v8136, 0.0
    %v8406 = vsel %vm7958, %v8142, 0.0
    %v8407 = vsel %vm7959, %v8148, 0.0
    %v8408 = vsel %vm7960, %v8154, 0.0
    %v8409 = vsel %vm7961, %v8160, 0.0
    %v8410 = vsel %vm7962, %v8166, 0.0
    %v8411 = vsel %vm7963, %v8172, 0.0
    %v8412 = vsel %vm7964, %v8178, 0.0
    %v8413 = vsel %vm7965, %v8184, 0.0
    %v8414 = vsel %vm7966, %v8190, 0.0
    %v8415 = vsel %vm7967, %v8196, 0.0
    %v8416 = vsel %vm7968, %v8202, 0.0
    %v8417 = vsel %vm7969, %v8208, 0.0
    %v8418 = vsel %vm7970, %v8214, 0.0
    %v8419 = vsel %vm7971, %v8220, 0.0
    %v8420 = vsel %vm7972, %v8226, 0.0
    %v8421 = vsel %vm7973, %v8232, 0.0
    %v8422 = vsel %vm7974, %v8238, 0.0
    %v8423 = vsel %vm7975, %v8244, 0.0
    %v8424 = vsel %vm7976, %v8250, 0.0
    %v8425 = vsel %vm7977, %v8256, 0.0
    %v8426 = vsel %vm7978, %v8262, 0.0
    %v8427 = vsel %vm7979, %v8268, 0.0
    %v8428 = vsel %vm7980, %v8274, 0.0
    %v8429 = vsel %vm7981, %v8280, 0.0
    %v8430 = vsel %vm7982, %v8286, 0.0
    %v8431 = vsel %vm7983, %v8292, 0.0
    %v8432 = vsel %vm7984, %v8298, 0.0
    %v8433 = vsel %vm7985, %v8304, 0.0
    %v8434 = vsel %vm7986, %v8310, 0.0
    %v8435 = vsel %vm7987, %v8316, 0.0
    %v8436 = vsel %vm7988, %v8322, 0.0
    %v8437 = vsel %vm7989, %v8328, 0.0
    %v8438 = vsel %vm7990, %v8334, 0.0
    %v8439 = vsel %vm7991, %v8340, 0.0
    %v8440 = vsel %vm7992, %v8346, 0.0
    %v8441 = vsel %vm7993, %v8352, 0.0
    %v8442 = vsel %vm7994, %v8358, 0.0
    %v8443 = vsel %vm7995, %v8364, 0.0
    %v8444 = vsel %vm7996, %v8370, 0.0
    %v8445 = vsel %vm7997, %v8376, 0.0
    %v8446 = vsel %vm7998, %v8382, 0.0
    %v8447 = vadd.f32 %v8383, %v8384
    %v8448 = vadd.f32 %v8447, %v8385
    %v8449 = vadd.f32 %v8448, %v8386
    %v8450 = vrot.slane %v8449, 4
    %v8451 = vadd.f32 %v8449, %v8450
    %v8452 = vrot.slane %v8451, 2
    %v8453 = vadd.f32 %v8451, %v8452
    %v8454 = vrot.slane %v8453, 1
    %v8455 = vadd.f32 %v8453, %v8454
    %v8456 = vadd.f32 %v8387, %v8388
    %v8457 = vadd.f32 %v8456, %v8389
    %v8458 = vadd.f32 %v8457, %v8390
    %v8459 = vrot.slane %v8458, 4
    %v8460 = vadd.f32 %v8458, %v8459
    %v8461 = vrot.slane %v8460, 2
    %v8462 = vadd.f32 %v8460, %v8461
    %v8463 = vrot.slane %v8462, 1
    %v8464 = vadd.f32 %v8462, %v8463
    %v8465 = vadd.f32 %v8391, %v8392
    %v8466 = vadd.f32 %v8465, %v8393
    %v8467 = vadd.f32 %v8466, %v8394
    %v8468 = vrot.slane %v8467, 4
    %v8469 = vadd.f32 %v8467, %v8468
    %v8470 = vrot.slane %v8469, 2
    %v8471 = vadd.f32 %v8469, %v8470
    %v8472 = vrot.slane %v8471, 1
    %v8473 = vadd.f32 %v8471, %v8472
    %v8474 = vadd.f32 %v8395, %v8396
    %v8475 = vadd.f32 %v8474, %v8397
    %v8476 = vadd.f32 %v8475, %v8398
    %v8477 = vrot.slane %v8476, 4
    %v8478 = vadd.f32 %v8476, %v8477
    %v8479 = vrot.slane %v8478, 2
    %v8480 = vadd.f32 %v8478, %v8479
    %v8481 = vrot.slane %v8480, 1
    %v8482 = vadd.f32 %v8480, %v8481
    %v8483 = vadd.f32 %v8399, %v8400
    %v8484 = vadd.f32 %v8483, %v8401
    %v8485 = vadd.f32 %v8484, %v8402
    %v8486 = vrot.slane %v8485, 4
    %v8487 = vadd.f32 %v8485, %v8486
    %v8488 = vrot.slane %v8487, 2
    %v8489 = vadd.f32 %v8487, %v8488
    %v8490 = vrot.slane %v8489, 1
    %v8491 = vadd.f32 %v8489, %v8490
    %v8492 = vadd.f32 %v8403, %v8404
    %v8493 = vadd.f32 %v8492, %v8405
    %v8494 = vadd.f32 %v8493, %v8406
    %v8495 = vrot.slane %v8494, 4
    %v8496 = vadd.f32 %v8494, %v8495
    %v8497 = vrot.slane %v8496, 2
    %v8498 = vadd.f32 %v8496, %v8497
    %v8499 = vrot.slane %v8498, 1
    %v8500 = vadd.f32 %v8498, %v8499
    %v8501 = vadd.f32 %v8407, %v8408
    %v8502 = vadd.f32 %v8501, %v8409
    %v8503 = vadd.f32 %v8502, %v8410
    %v8504 = vrot.slane %v8503, 4
    %v8505 = vadd.f32 %v8503, %v8504
    %v8506 = vrot.slane %v8505, 2
    %v8507 = vadd.f32 %v8505, %v8506
    %v8508 = vrot.slane %v8507, 1
    %v8509 = vadd.f32 %v8507, %v8508
    %v8510 = vadd.f32 %v8411, %v8412
    %v8511 = vadd.f32 %v8510, %v8413
    %v8512 = vadd.f32 %v8511, %v8414
    %v8513 = vrot.slane %v8512, 4
    %v8514 = vadd.f32 %v8512, %v8513
    %v8515 = vrot.slane %v8514, 2
    %v8516 = vadd.f32 %v8514, %v8515
    %v8517 = vrot.slane %v8516, 1
    %v8518 = vadd.f32 %v8516, %v8517
    %v8519 = vadd.f32 %v8415, %v8416
    %v8520 = vadd.f32 %v8519, %v8417
    %v8521 = vadd.f32 %v8520, %v8418
    %v8522 = vrot.slane %v8521, 4
    %v8523 = vadd.f32 %v8521, %v8522
    %v8524 = vrot.slane %v8523, 2
    %v8525 = vadd.f32 %v8523, %v8524
    %v8526 = vrot.slane %v8525, 1
    %v8527 = vadd.f32 %v8525, %v8526
    %v8528 = vadd.f32 %v8419, %v8420
    %v8529 = vadd.f32 %v8528, %v8421
    %v8530 = vadd.f32 %v8529, %v8422
    %v8531 = vrot.slane %v8530, 4
    %v8532 = vadd.f32 %v8530, %v8531
    %v8533 = vrot.slane %v8532, 2
    %v8534 = vadd.f32 %v8532, %v8533
    %v8535 = vrot.slane %v8534, 1
    %v8536 = vadd.f32 %v8534, %v8535
    %v8537 = vadd.f32 %v8423, %v8424
    %v8538 = vadd.f32 %v8537, %v8425
    %v8539 = vadd.f32 %v8538, %v8426
    %v8540 = vrot.slane %v8539, 4
    %v8541 = vadd.f32 %v8539, %v8540
    %v8542 = vrot.slane %v8541, 2
    %v8543 = vadd.f32 %v8541, %v8542
    %v8544 = vrot.slane %v8543, 1
    %v8545 = vadd.f32 %v8543, %v8544
    %v8546 = vadd.f32 %v8427, %v8428
    %v8547 = vadd.f32 %v8546, %v8429
    %v8548 = vadd.f32 %v8547, %v8430
    %v8549 = vrot.slane %v8548, 4
    %v8550 = vadd.f32 %v8548, %v8549
    %v8551 = vrot.slane %v8550, 2
    %v8552 = vadd.f32 %v8550, %v8551
    %v8553 = vrot.slane %v8552, 1
    %v8554 = vadd.f32 %v8552, %v8553
    %v8555 = vadd.f32 %v8431, %v8432
    %v8556 = vadd.f32 %v8555, %v8433
    %v8557 = vadd.f32 %v8556, %v8434
    %v8558 = vrot.slane %v8557, 4
    %v8559 = vadd.f32 %v8557, %v8558
    %v8560 = vrot.slane %v8559, 2
    %v8561 = vadd.f32 %v8559, %v8560
    %v8562 = vrot.slane %v8561, 1
    %v8563 = vadd.f32 %v8561, %v8562
    %v8564 = vadd.f32 %v8435, %v8436
    %v8565 = vadd.f32 %v8564, %v8437
    %v8566 = vadd.f32 %v8565, %v8438
    %v8567 = vrot.slane %v8566, 4
    %v8568 = vadd.f32 %v8566, %v8567
    %v8569 = vrot.slane %v8568, 2
    %v8570 = vadd.f32 %v8568, %v8569
    %v8571 = vrot.slane %v8570, 1
    %v8572 = vadd.f32 %v8570, %v8571
    %v8573 = vadd.f32 %v8439, %v8440
    %v8574 = vadd.f32 %v8573, %v8441
    %v8575 = vadd.f32 %v8574, %v8442
    %v8576 = vrot.slane %v8575, 4
    %v8577 = vadd.f32 %v8575, %v8576
    %v8578 = vrot.slane %v8577, 2
    %v8579 = vadd.f32 %v8577, %v8578
    %v8580 = vrot.slane %v8579, 1
    %v8581 = vadd.f32 %v8579, %v8580
    %v8582 = vadd.f32 %v8443, %v8444
    %v8583 = vadd.f32 %v8582, %v8445
    %v8584 = vadd.f32 %v8583, %v8446
    %v8585 = vrot.slane %v8584, 4
    %v8586 = vadd.f32 %v8584, %v8585
    %v8587 = vrot.slane %v8586, 2
    %v8588 = vadd.f32 %v8586, %v8587
    %v8589 = vrot.slane %v8588, 1
    %v8590 = vadd.f32 %v8588, %v8589
    %v8591 = vadd.f32 %v7535, %v8455
    %v8592 = vadd.f32 %v7536, %v8464
    %v8593 = vadd.f32 %v7537, %v8473
    %v8594 = vadd.f32 %v7538, %v8482
    %v8595 = vadd.f32 %v7539, %v8491
    %v8596 = vadd.f32 %v7540, %v8500
    %v8597 = vadd.f32 %v7541, %v8509
    %v8598 = vadd.f32 %v7542, %v8518
    %v8599 = vadd.f32 %v7543, %v8527
    %v8600 = vadd.f32 %v7544, %v8536
    %v8601 = vadd.f32 %v7545, %v8545
    %v8602 = vadd.f32 %v7546, %v8554
    %v8603 = vadd.f32 %v7547, %v8563
    %v8604 = vadd.f32 %v7548, %v8572
    %v8605 = vadd.f32 %v7549, %v8581
    %v8606 = vadd.f32 %v7550, %v8590
    %v8607 = vld [vmem:[#allocation2] sm:$0xff]
    %v8608 = vld [vmem:[#allocation2 + $0x8] sm:$0xff]
    %v8609 = vpack.c.bf16 %v8591, %v8591
    %v8610 = vpack.c.bf16 %v8592, %v8592
    %v8611 = vpack.c.bf16 %v8593, %v8593
    %v8612 = vpack.c.bf16 %v8594, %v8594
    %v8613 = vpack.c.bf16 %v8595, %v8595
    %v8614 = vpack.c.bf16 %v8596, %v8596
    %v8615 = vpack.c.bf16 %v8597, %v8597
    %v8616 = vpack.c.bf16 %v8598, %v8598
    %v8617 = vpack.c.bf16 %v8599, %v8599
    %v8618 = vpack.c.bf16 %v8600, %v8600
    %v8619 = vpack.c.bf16 %v8601, %v8601
    %v8620 = vpack.c.bf16 %v8602, %v8602
    %v8621 = vpack.c.bf16 %v8603, %v8603
    %v8622 = vpack.c.bf16 %v8604, %v8604
    %v8623 = vpack.c.bf16 %v8605, %v8605
    %v8624 = vpack.c.bf16 %v8606, %v8606
    %v8625 = vld [vmem:[#allocation7] sm:$0xf]
    %v8626 = vld [vmem:[#allocation7 + $0x4] sm:$0xf]
    %v8627 = vld [vmem:[#allocation7 + $0x8] sm:$0xf]
    %v8628 = vld [vmem:[#allocation7 + $0xc] sm:$0xf]
    %v8629 = vld [vmem:[#allocation7 + $0x10] sm:$0xf]
    %v8630 = vld [vmem:[#allocation7 + $0x14] sm:$0xf]
    %v8631 = vld [vmem:[#allocation7 + $0x18] sm:$0xf]
    %v8632 = vld [vmem:[#allocation7 + $0x1c] sm:$0xf]
    %v8633 = vld [vmem:[#allocation7 + $0x20] sm:$0xf]
    %v8634 = vld [vmem:[#allocation7 + $0x24] sm:$0xf]
    %v8635 = vld [vmem:[#allocation7 + $0x28] sm:$0xf]
    %v8636 = vld [vmem:[#allocation7 + $0x2c] sm:$0xf]
    %v8637 = vld [vmem:[#allocation7 + $0x30] sm:$0xf]
    %v8638 = vld [vmem:[#allocation7 + $0x34] sm:$0xf]
    %v8639 = vld [vmem:[#allocation7 + $0x38] sm:$0xf]
    %v8640 = vld [vmem:[#allocation7 + $0x3c] sm:$0xf]
    %v8657 = vunpack.c.l.b16 %v8609
    %v8658 = vunpack.c.l.b16 %v8610
    %v8659 = vunpack.c.l.b16 %v8611
    %v8660 = vunpack.c.l.b16 %v8612
    %v8661 = vunpack.c.l.b16 %v8613
    %v8662 = vunpack.c.l.b16 %v8614
    %v8663 = vunpack.c.l.b16 %v8615
    %v8664 = vunpack.c.l.b16 %v8616
    %v8665 = vunpack.c.l.b16 %v8617
    %v8666 = vunpack.c.l.b16 %v8618
    %v8667 = vunpack.c.l.b16 %v8619
    %v8668 = vunpack.c.l.b16 %v8620
    %v8669 = vunpack.c.l.b16 %v8621
    %v8670 = vunpack.c.l.b16 %v8622
    %v8671 = vunpack.c.l.b16 %v8623
    %v8672 = vunpack.c.l.b16 %v8624
    %vm8673 = vcmask 1041409
    %v8674 = vsel %vm8673, %v8658, %v8657
    %vm8675 = vcmask 1042434
    %v8676 = vsel %vm8675, %v8659, %v8674
    %vm8677 = vcmask 1043459
    %v8678 = vsel %vm8677, %v8660, %v8676
    %vm8679 = vcmask 1044484
    %v8680 = vsel %vm8679, %v8661, %v8678
    %vm8681 = vcmask 1045509
    %v8682 = vsel %vm8681, %v8662, %v8680
    %vm8683 = vcmask 1046534
    %v8684 = vsel %vm8683, %v8663, %v8682
    %vm8685 = vcmask 1047559
    %v8686 = vsel %vm8685, %v8664, %v8684
    %v8687 = vsel %vm8673, %v8666, %v8665
    %v8688 = vsel %vm8675, %v8667, %v8687
    %v8689 = vsel %vm8677, %v8668, %v8688
    %v8690 = vsel %vm8679, %v8669, %v8689
    %v8691 = vsel %vm8681, %v8670, %v8690
    %v8692 = vsel %vm8683, %v8671, %v8691
    %v8693 = vsel %vm8685, %v8672, %v8692
    %v8694 = vpack.c.b16 %v8693, %v8686
    %v8712 = vunpack.c.l.b16 %v8625
    %v8713 = vunpack.c.l.b16 %v8626
    %v8714 = vunpack.c.l.b16 %v8627
    %v8715 = vunpack.c.l.b16 %v8628
    %v8716 = vunpack.c.l.b16 %v8629
    %v8717 = vunpack.c.l.b16 %v8630
    %v8718 = vunpack.c.l.b16 %v8631
    %v8719 = vunpack.c.l.b16 %v8632
    %v8720 = vunpack.c.l.b16 %v8633
    %v8721 = vunpack.c.l.b16 %v8634
    %v8722 = vunpack.c.l.b16 %v8635
    %v8723 = vunpack.c.l.b16 %v8636
    %v8724 = vunpack.c.l.b16 %v8637
    %v8725 = vunpack.c.l.b16 %v8638
    %v8726 = vunpack.c.l.b16 %v8639
    %v8727 = vunpack.c.l.b16 %v8640
    %v8728 = vpack.c.b16 %v8713, %v8712
    %v8729 = vpack.c.b16 %v8715, %v8714
    %v8730 = vpack.c.b16 %v8717, %v8716
    %v8731 = vpack.c.b16 %v8719, %v8718
    %v8732 = vpack.c.b16 %v8721, %v8720
    %v8733 = vpack.c.b16 %v8723, %v8722
    %v8734 = vpack.c.b16 %v8725, %v8724
    %v8735 = vpack.c.b16 %v8727, %v8726
    %8744 = vmatpush.bf16.msra.mxu0 %v8735
    %8745 = vmatpush.bf16.msra.mxu0 %v8734
    %8746 = vmatpush.bf16.msra.mxu0 %v8733
    %8747 = vmatpush.bf16.msra.mxu0 %v8732
    %8748 = vmatpush.bf16.msra.mxu0 %v8731
    %8749 = vmatpush.bf16.msra.mxu0 %v8730
    %8750 = vmatpush.bf16.msra.mxu0 %v8729
    %8751 = vmatpush.bf16.msra.mxu0 %v8728
    %8752 = vmatmul.bf16.gmra.mxu0 %v8694
    %v8753 = vpop.f32.mrf.mxu0
    %v8754 = vadd.f32 0.0, %v8753
    %v8755 = vpop.f32.mrf.mxu0
    %v8756 = vadd.f32 0.0, %v8755
    %8757 = vdwg.mxu0
    %v8758 = vadd.f32 %v8607, %v8754
    %v8759 = vadd.f32 %v8608, %v8756
    %8760 = vst [vmem:[#allocation2] sm:$0xff] %v8758
    %8761 = vst [vmem:[#allocation2 + $0x8] sm:$0xff] %v8759
    %v8762 = vld [vmem:[#allocation3] sm:$0xff]
    %v8763 = vld [vmem:[#allocation3 + $0x8] sm:$0xff]
    %v8780 = vsel %vm8673, %v8592, %v8591
    %v8781 = vsel %vm8675, %v8593, %v8780
    %v8782 = vsel %vm8677, %v8594, %v8781
    %v8783 = vsel %vm8679, %v8595, %v8782
    %v8784 = vsel %vm8681, %v8596, %v8783
    %v8785 = vsel %vm8683, %v8597, %v8784
    %v8786 = vsel %vm8685, %v8598, %v8785
    %v8787 = vsel %vm8673, %v8600, %v8599
    %v8788 = vsel %vm8675, %v8601, %v8787
    %v8789 = vsel %vm8677, %v8602, %v8788
    %v8790 = vsel %vm8679, %v8603, %v8789
    %v8791 = vsel %vm8681, %v8604, %v8790
    %v8792 = vsel %vm8683, %v8605, %v8791
    %v8793 = vsel %vm8685, %v8606, %v8792
    %8796 = vadd.xlane.f32.xlu0 %v8786
    %v8797 = vpop.xlane.xlu0 %8796
    %8798 = vadd.xlane.f32.xlu0 %v8793
    %v8799 = vpop.xlane.xlu0 %8798
    %v8800 = vadd.f32 %v8762, %v8797
    %v8801 = vadd.f32 %v8763, %v8799
    %vm8802 = vcmask 7168
    %8803 = vst.msk [vmem:[#allocation3] sm:$0xff] %vm8802, %v8800
    %8804 = vst.msk [vmem:[#allocation3 + $0x8] sm:$0xff] %vm8802, %v8801
    // Predicated region
    $region34: #{tpu_custom_call.1} parent=1 // pred_check
      %p8805 = pneg %p68
    $region35: #{tpu_custom_call.1} parent=1 // pred_check_branch
      %8807 = sbr.rel (%p8805) target = $region37
    $region36: #{tpu_custom_call.1} parent=1 // pred_region
      %v8808 = vld [vmem:[#allocation2] sm:$0xff]
      %v8809 = vld [vmem:[#allocation2 + $0x8] sm:$0xff]
      %v8810 = vld [vmem:[#allocation3] sm:$0xff]
      %v8811 = vld [vmem:[#allocation3 + $0x8] sm:$0xff]
      %v8812 = vmax.f32 %v8810, 1.0
      %v8813 = vmax.f32 %v8811, 1.0
      %8815 = vset.pattern.permute.xlu0 0
      %8816 = vperm.xlu0 %8815, %v8812
      %v8817 = vpop.permute.xlu0 %8816
      %8820 = vset.pattern.permute.xlu0 0
      %8821 = vperm.xlu0 %8820, %v8813
      %v8822 = vpop.permute.xlu0 %8821
      %v8824 = vrcp.pop %v8817
      %v8825 = vmul.f32 %v8817, %v8824
      %v8826 = vsub.f32 1.0, %v8825
      %v8827 = vmul.f32 %v8824, %v8826
      %v8828 = vadd.f32 %v8824, %v8827
      %vm8829 = vweird.f32 %v8817
      %vm8830 = vweird.f32 %v8824
      %vm8831 = vmor %vm8829, %vm8830
      %v8832 = vsel %vm8831, %v8824, %v8828
      %v8833 = vand.u32 2147483647, %v8817
      %vm8834 = vcmp.eq.f32.partialorder %v8833, 8.507059e+37
      %v8835 = vand.u32 %v8817, 2147483648
      %v8836 = vor.u32 1.1754944e-38, %v8835
      %v8837 = vsel %vm8834, %v8836, %v8832
      %v8838 = vmul.f32 %v8808, %v8837
      %v8839 = vrcp.pop %v8822
      %v8840 = vmul.f32 %v8822, %v8839
      %v8841 = vsub.f32 1.0, %v8840
      %v8842 = vmul.f32 %v8839, %v8841
      %v8843 = vadd.f32 %v8839, %v8842
      %vm8844 = vweird.f32 %v8822
      %vm8845 = vweird.f32 %v8839
      %vm8846 = vmor %vm8844, %vm8845
      %v8847 = vsel %vm8846, %v8839, %v8843
      %v8848 = vand.u32 2147483647, %v8822
      %vm8849 = vcmp.eq.f32.partialorder %v8848, 8.507059e+37
      %v8850 = vand.u32 %v8822, 2147483648
      %v8851 = vor.u32 1.1754944e-38, %v8850
      %v8852 = vsel %vm8849, %v8851, %v8847
      %v8853 = vmul.f32 %v8809, %v8852
      %v8854 = vld [vmem:[#allocation9] sm:$0xf]
      %v8855 = vld [vmem:[#allocation9 + $0x4] sm:$0xf]
      %v8856 = vld [vmem:[#allocation9 + $0x8] sm:$0xf]
      %v8857 = vld [vmem:[#allocation9 + $0xc] sm:$0xf]
      %v8858 = vld [vmem:[#allocation9 + $0x10] sm:$0xf]
      %v8859 = vld [vmem:[#allocation9 + $0x14] sm:$0xf]
      %v8860 = vld [vmem:[#allocation9 + $0x18] sm:$0xf]
      %v8861 = vld [vmem:[#allocation9 + $0x1c] sm:$0xf]
      %v8862 = vld [vmem:[#allocation9 + $0x20] sm:$0xf]
      %v8863 = vld [vmem:[#allocation9 + $0x24] sm:$0xf]
      %v8864 = vld [vmem:[#allocation9 + $0x28] sm:$0xf]
      %v8865 = vld [vmem:[#allocation9 + $0x2c] sm:$0xf]
      %v8866 = vld [vmem:[#allocation9 + $0x30] sm:$0xf]
      %v8867 = vld [vmem:[#allocation9 + $0x34] sm:$0xf]
      %v8868 = vld [vmem:[#allocation9 + $0x38] sm:$0xf]
      %v8869 = vld [vmem:[#allocation9 + $0x3c] sm:$0xf]
      %v8870 = vunpack.c.l.bf16 %v8854
      %v8871 = vunpack.c.l.bf16 %v8855
      %v8872 = vunpack.c.l.bf16 %v8856
      %v8873 = vunpack.c.l.bf16 %v8857
      %v8874 = vunpack.c.l.bf16 %v8858
      %v8875 = vunpack.c.l.bf16 %v8859
      %v8876 = vunpack.c.l.bf16 %v8860
      %v8877 = vunpack.c.l.bf16 %v8861
      %v8878 = vunpack.c.l.bf16 %v8862
      %v8879 = vunpack.c.l.bf16 %v8863
      %v8880 = vunpack.c.l.bf16 %v8864
      %v8881 = vunpack.c.l.bf16 %v8865
      %v8882 = vunpack.c.l.bf16 %v8866
      %v8883 = vunpack.c.l.bf16 %v8867
      %v8884 = vunpack.c.l.bf16 %v8868
      %v8885 = vunpack.c.l.bf16 %v8869
      %v8886 = vld [vmem:[%s3] sm:$0x1]
      %v8888 = vperm.slane %v8886, 0
      %8890 = vmatpush.msra.mxu0 %v8885
      %8891 = vmatpush.msra.mxu0 %v8884
      %8892 = vmatpush.msra.mxu0 %v8883
      %8893 = vmatpush.msra.mxu0 %v8882
      %8894 = vmatpush.msra.mxu0 %v8881
      %8895 = vmatpush.msra.mxu0 %v8880
      %8896 = vmatpush.msra.mxu0 %v8879
      %8897 = vmatpush.msra.mxu0 %v8878
      %8898 = vmatpush.msra.mxu0 %v8877
      %8899 = vmatpush.msra.mxu0 %v8876
      %8900 = vmatpush.msra.mxu0 %v8875
      %8901 = vmatpush.msra.mxu0 %v8874
      %8902 = vmatpush.msra.mxu0 %v8873
      %8903 = vmatpush.msra.mxu0 %v8872
      %8904 = vmatpush.msra.mxu0 %v8871
      %8905 = vmatpush.msra.mxu0 %v8870
      %8906 = vmatmul.f32.gmra.mxu0 %v8838
      %v8907 = vpop.f32.mrf.mxu0
      %v8908 = vadd.f32 %v8888, %v8907
      %8909 = vmatmul.f32.gmra.mxu0 %v8853
      %v8910 = vpop.f32.mrf.mxu0
      %v8911 = vadd.f32 %v8888, %v8910
      %8912 = vdwg.mxu0
      %v8913 = vtanh.pop %v8908
      %v8914 = vtanh.pop %v8911
      %8915 = vst [vmem:[#allocation10] sm:$0xff] %v8913
      %8916 = vst [vmem:[#allocation10 + $0x8] sm:$0xff] %v8914
      %8917 = vmatpush.xpose.msra.mxu0 0.0
      %8918 = vmatpush.xpose.msra.mxu0 0.0
      %8919 = vmatpush.xpose.msra.mxu0 0.0
      %8920 = vmatpush.xpose.msra.mxu0 0.0
      %8921 = vmatpush.xpose.msra.mxu0 0.0
      %8922 = vmatpush.xpose.msra.mxu0 0.0
      %8923 = vmatpush.xpose.msra.mxu0 0.0
      %8924 = vmatpush.xpose.msra.mxu0 0.0
      %8925 = vmatpush.xpose.msra.mxu0 0.0
      %8926 = vmatpush.xpose.msra.mxu0 0.0
      %8927 = vmatpush.xpose.msra.mxu0 0.0
      %8928 = vmatpush.xpose.msra.mxu0 0.0
      %8929 = vmatpush.xpose.msra.mxu0 0.0
      %8930 = vmatpush.xpose.msra.mxu0 0.0
      %8931 = vmatpush.xpose.msra.mxu0 0.0
      %8932 = vmatpush.xpose.msra.mxu0 %v8913
      %8933 = vmatmul.f32.gmra.mxu0 %v8914
      %v8934 = vpop.f32.mrf.mxu0
      %v8935 = vadd.f32 0.0, %v8934
      %8936 = vdwg.mxu0
      %vm8937 = vcmask 64512
      %v8938 = vsel %vm8937, %v8935, -inf
      %8939 = vmax.xlane.f32.xlu0 %v8938
      %v8940 = vpop.xlane.xlu0 %8939
      %v8941 = vsub.f32 %v8935, %v8940
      %v8942 = vmul.f32 %v8941, 1.442695
      %v8943 = vpow.pop %v8942
      %v8944 = vsel %vm8937, %v8943, 0.0
      %8945 = vadd.xlane.f32.xlu0 %v8944
      %v8946 = vpop.xlane.xlu0 %8945
      %v8947 = vlog2.pop %v8946
      %v8948 = vmul.f32 %v8947, 0.6931472
      %v8949 = vadd.f32 %v8940, %v8948
      %v8950 = vlaneseq
      %v8951 = vshrl.u32 %v8950, 7
      %vm8952 = vcmp.eq.s32.totalorder %v8951, %v78
      %v8953 = vsel %vm8952, %v8935, 0.0
      %v8954 = vsel %vm8937, %v8953, 0.0
      %8955 = vadd.xlane.f32.xlu0 %v8954
      %v8956 = vpop.xlane.xlu0 %8955
      %v8957 = vsub.f32 %v8949, %v8956
      %v8958 = vsel %vm8802, %v8957, 0.0
      %8959 = vadd.xlane.f32.xlu0 %v8958
      %v8960 = vpop.xlane.xlu0 %8959
      %v8961 = vrot.slane %v8960, 4
      %v8962 = vadd.f32 %v8960, %v8961
      %v8963 = vrot.slane %v8962, 2
      %v8964 = vadd.f32 %v8962, %v8963
      %v8965 = vrot.slane %v8964, 1
      %v8966 = vadd.f32 %v8964, %v8965
      %s8967 = vtos %v8966
      %v8968 = vstv %s8967
      %v8969 = vrcp.pop 8.0
      %v8970 = vmul.f32 8.0, %v8969
      %v8971 = vsub.f32 1.0, %v8970
      %v8972 = vmul.f32 %v8969, %v8971
      %v8973 = vadd.f32 %v8969, %v8972
      %vm8974 = vweird.f32 %v8969
      %v8975 = vsel %vm8974, %v8969, %v8973
      %v8976 = vmul.f32 %v8968, %v8975
      %vm8977 = vcmask 0
      %8978 = vst.msk [vmem:[#allocation11] sm:$0x1] %vm8977, %v8976
    $region37: #{tpu_custom_call.1} parent=1 // pred_fallthru
      _
    // Predicated region
    $region38: #{tpu_custom_call.1} parent=1 // pred_check
      _
    $region39: #{tpu_custom_call.1} parent=1 // pred_check_branch
      %8980 = sbr.rel (0) target = $region41
    $region40: #{tpu_custom_call.1} parent=1 // pred_region
      %8982 = vsyncadd [#allocation6], 0
      %s8983 = sshll.u32 [#allocation10], 4
      %s8984 = int_to_ptr.vmem [resolvable:$true] %s8983
      %s8985 = sshll.u32 %s4, 4
      %s8986 = int_to_ptr.hbm [resolvable:$true] %s8985
      %8991 = dma.vmem_to_hbm [thread:$0]  %s8984, 256, %s8986, [#allocation6], 128, 128, 8
    $region41: #{tpu_custom_call.1} parent=1 // pred_fallthru
      _
    // Predicated region
    $region42: #{tpu_custom_call.1} parent=1 // pred_check
      _
    $region43: #{tpu_custom_call.1} parent=1 // pred_check_branch
      %8993 = sbr.rel (0) target = $region45
    $region44: #{tpu_custom_call.1} parent=1 // pred_region
      %8995 = vsyncadd [#allocation12], 0
      %s8997 = sshll.u32 [#allocation11], 4
      %s8998 = int_to_ptr.vmem [resolvable:$true] %s8997
      %s8999 = sshll.u32 %s5, 4
      %s9000 = int_to_ptr.hbm [resolvable:$true] %s8999
      %9002 = dma.vmem_to_hbm [thread:$0]  %s8998, 16, %s9000, [#allocation12]
    $region45: #{tpu_custom_call.1} parent=1 // pred_fallthru
      _
    // Predicated region
    $region46: #{tpu_custom_call.1} parent=1 // pred_check
      _
    $region47: #{tpu_custom_call.1} parent=1 // pred_check_branch
      %9004 = sbr.rel (0) target = $region49
    $region48: #{tpu_custom_call.1} parent=1 // pred_region
      %9006 = dma.done [#allocation6], 256
    $region49: #{tpu_custom_call.1} parent=1 // pred_fallthru
      _
    // Predicated region
    $region50: #{tpu_custom_call.1} parent=1 // pred_check
      _
    $region51: #{tpu_custom_call.1} parent=1 // pred_check_branch
      %9008 = sbr.rel (0) target = $region53
    $region52: #{tpu_custom_call.1} parent=1 // pred_region
      %9010 = dma.done [#allocation12], 16
    $region53: #{tpu_custom_call.1} parent=1 // pred_fallthru
      _
    %9011 = vsyncpa [#allocation5], 1
    %9012 = vsyncpa [#allocation8], 1
    %9013 = vsyncpa [#allocation6], 1
    %9014 = vsyncpa [#allocation12], 1

</llo_original>
